<compile_context>
chip_gen: v6e
topology: v6e:2x2x1
jax: 0.10.0
libtpu: 0.0.40
codegen_flags: <defaults>
</compile_context>

<pallas_src>
import functools

import jax
import jax.numpy as jnp
from jax import lax
from jax.experimental import pallas as pl
from jax.experimental.pallas import tpu as pltpu


# ----------------------------------------------------------------------------
# helpers
# ----------------------------------------------------------------------------
def _const_spec(shape):
    zeros = (0,) * len(shape)
    return pl.BlockSpec(shape, lambda i: zeros)


def _layernorm(z, gamma, beta):
    mu = jnp.mean(z, axis=-1, keepdims=True)
    var = jnp.mean(jnp.square(z - mu), axis=-1, keepdims=True)
    return (z - mu) * lax.rsqrt(var + 1e-5) * gamma + beta   # torch eps=1e-5


# ----------------------------------------------------------------------------
# fused compress_input + positional-embedding kernel
# ----------------------------------------------------------------------------
def _compress_pos_kernel(x_ref, w_ref, b_ref, pos_ref, o_ref):
    xb = x_ref[0]                               # (A, T, Ein) f32
    A, T, Ein = xb.shape
    Ec = w_ref.shape[1]
    x2 = xb.reshape(A * T, Ein).astype(jnp.bfloat16)
    y = jnp.dot(x2, w_ref[...], preferred_element_type=jnp.float32) + b_ref[...]
    y = y.reshape(A, T, Ec) + pos_ref[...][None, :, :]
    o_ref[0] = y


def compress_pos(x, w_comp, b_comp, pos):
    B, A, T, Ein = x.shape
    Ec = w_comp.shape[1]
    return pl.pallas_call(
        _compress_pos_kernel,
        grid=(B,),
        out_shape=jax.ShapeDtypeStruct((B, A, T, Ec), jnp.float32),
        in_specs=[
            pl.BlockSpec((1, A, T, Ein), lambda i: (i, 0, 0, 0)),
            _const_spec((Ein, Ec)),
            _const_spec((1, Ec)),
            _const_spec((T, Ec)),
        ],
        out_specs=pl.BlockSpec((1, A, T, Ec), lambda i: (i, 0, 0, 0)),
        compiler_params=pltpu.CompilerParams(dimension_semantics=("parallel",)),
    )(x, w_comp, b_comp, pos)


# ----------------------------------------------------------------------------
# fully fused transformer block kernel
#   x block per grid step: (1, A, S, E) = A independent sequences of length S
# ----------------------------------------------------------------------------
def _block_kernel(x_ref, wqkv_ref, wu_ref, bu_ref, g1_ref, be1_ref,
                  w1_ref, bh_ref, w2_ref, bo_ref, g2_ref, be2_ref, o_ref,
                  *, heads, causal):
    xb = x_ref[0]                               # (A, S, E) f32
    A, S, E = xb.shape
    h = heads
    rows = A * S

    x2 = xb.reshape(rows, E)                    # (rows, E) f32
    x_bf = x2.astype(jnp.bfloat16)

    # fused Q|K|V projection (no bias in the reference module)
    qkv = jnp.dot(x_bf, wqkv_ref[...], preferred_element_type=jnp.float32)  # (rows, 3*h*E)

    scale = 1.0 / (float(E) ** 0.5)             # == q/e^(1/4), k/e^(1/4) folded into the dot
    head_outs = []
    for he in range(h):
        q = qkv[:, he * E:(he + 1) * E].reshape(A, S, E)
        k = qkv[:, (h + he) * E:(h + he + 1) * E].reshape(A, S, E)
        v = qkv[:, (2 * h + he) * E:(2 * h + he + 1) * E].reshape(A, S, E)

        s = jnp.einsum('bqe,bke->bqk',
                       q.astype(jnp.bfloat16), k.astype(jnp.bfloat16),
                       preferred_element_type=jnp.float32) * scale          # (A, S, S)
        if causal:
            row = lax.broadcasted_iota(jnp.int32, (A, S, S), 1)
            col = lax.broadcasted_iota(jnp.int32, (A, S, S), 2)
            s = jnp.where(col <= row, s, -jnp.inf)      # mask strictly-upper triangle
        s = s - jnp.max(s, axis=-1, keepdims=True)
        p = jnp.exp(s)
        p = p * pl.reciprocal(jnp.sum(p, axis=-1, keepdims=True), approx=True)

        oh = jnp.einsum('bqk,bke->bqe',
                        p.astype(jnp.bfloat16), v.astype(jnp.bfloat16),
                        preferred_element_type=jnp.float32)                 # (A, S, E)
        head_outs.append(oh)

    att = jnp.concatenate(head_outs, axis=-1).reshape(rows, h * E)
    u = jnp.dot(att.astype(jnp.bfloat16), wu_ref[...],
                preferred_element_type=jnp.float32) + bu_ref[...]           # unify heads

    y = _layernorm(u + x2, g1_ref[...], be1_ref[...])                       # norm1(att + x)

    hdn = jnp.dot(y.astype(jnp.bfloat16), w1_ref[...],
                  preferred_element_type=jnp.float32) + bh_ref[...]
    hdn = jnp.maximum(hdn, 0.0)
    f = jnp.dot(hdn.astype(jnp.bfloat16), w2_ref[...],
                preferred_element_type=jnp.float32) + bo_ref[...]

    out = _layernorm(f + y, g2_ref[...], be2_ref[...])                      # norm2(ff + y)
    o_ref[0] = out.reshape(A, S, E)


def transformer_block(x4, p, heads, causal):
    """x4: (B, A, S, E); per grid step: A independent sequences of length S."""
    B, A, S, E = x4.shape
    h = heads
    Hf = 4 * E
    x_spec = pl.BlockSpec((1, A, S, E), lambda i: (i, 0, 0, 0))
    kern = functools.partial(_block_kernel, heads=h, causal=causal)
    return pl.pallas_call(
        kern,
        grid=(B,),
        out_shape=jax.ShapeDtypeStruct((B, A, S, E), jnp.float32),
        in_specs=[
            x_spec,
            _const_spec((E, 3 * h * E)),      # wqkv  (bf16)
            _const_spec((h * E, E)),          # wu    (bf16)
            _const_spec((1, E)),              # bu
            _const_spec((1, E)),              # ln1 gamma
            _const_spec((1, E)),              # ln1 beta
            _const_spec((E, Hf)),             # w1    (bf16)
            _const_spec((1, Hf)),             # b1
            _const_spec((Hf, E)),             # w2    (bf16)
            _const_spec((1, E)),              # b2
            _const_spec((1, E)),              # ln2 gamma
            _const_spec((1, E)),              # ln2 beta
        ],
        out_specs=x_spec,
        compiler_params=pltpu.CompilerParams(dimension_semantics=("parallel",)),
    )(x4, p["wqkv"], p["wu"], p["bu"], p["ln1_g"], p["ln1_b"],
      p["w1"], p["b1"], p["w2"], p["b2"], p["ln2_g"], p["ln2_b"])


# ----------------------------------------------------------------------------
# fused tail: collapsed rblocks + agent-sum + reward head -> x_time_wise (b, t)
# ----------------------------------------------------------------------------
def _tail_kernel(x_ref, wr_ref, br_ref, wrew_ref, brew_ref, o_ref):
    xb = x_ref[...]                              # (B, A, T, E) f32
    B, A, T, E = xb.shape
    x2 = xb.reshape(B * A * T, E)
    r = jnp.dot(x2, wr_ref[...], preferred_element_type=jnp.float32) + br_ref[...]
    r4 = r.reshape(B, A, T, 50)
    rsum = r4[:, 0]
    for a in range(1, A):                        # sum over agents (static unroll)
        rsum = rsum + r4[:, a]                   # (B, T, 50)
    xt = jnp.sum(rsum * wrew_ref[...][None, :, :], axis=-1) + brew_ref[...]  # (B, T)
    o_ref[...] = xt


def tail(xc, w_r, b_r, w_rew, b_rew):
    B, A, T, E = xc.shape
    return pl.pallas_call(
        _tail_kernel,
        grid=(1,),
        out_shape=jax.ShapeDtypeStruct((B, T), jnp.float32),
        in_specs=[
            _const_spec((B, A, T, E)),
            _const_spec((E, 50)),
            _const_spec((1, 50)),
            _const_spec((1, 50)),
            _const_spec((1, 1)),
        ],
        out_specs=_const_spec((B, T)),
    )(xc, w_r, b_r, w_rew, b_rew)


# ----------------------------------------------------------------------------
# full forward (comp=True, agent=True, wide=True, dropout=0)
# ----------------------------------------------------------------------------
def time_agent_transformer_forward(x, params, *, heads, depth, n_agents):
    b, n_a, t, e = x.shape
    assert n_a == n_agents

    # compress_input + positional embedding, canonical layout (b, n_a, t, comp_emb)
    xc = compress_pos(x, params["w_comp"], params["b_comp"], params["pos_emb"][:t])

    for d in range(depth):
        # TransformerBlock along time (causal): batch = agents, seq = time
        xc = transformer_block(xc, params["time_blocks"][d], heads, causal=True)
        # TransformerBlock_Agent along agents (no mask): batch = time, seq = agents
        xa = jnp.transpose(xc, (0, 2, 1, 3))              # (b, t, n_a, E)  (tiny copy)
        xa = transformer_block(xa, params["agent_blocks"][d], heads, causal=False)
        xc = jnp.transpose(xa, (0, 2, 1, 3))              # back to (b, n_a, t, E)

    # rblocks = Linear(comp,50) ∘ Linear(50,50) with no nonlinearity -> fold exactly
    w_r = jnp.dot(params["wr1"], params["wr2"])                               # (comp_emb, 50)
    b_r = jnp.dot(params["br1"][None, :], params["wr2"]) + params["br2"][None, :]
    w_rew = params["w_rew"].reshape(1, 50)
    b_rew = params["b_rew"].reshape(1, 1)

    x_time_wise = tail(xc, w_r, b_r, w_rew, b_rew)        # (b, t)
    x_episode_wise = x_time_wise.sum(axis=1)              # (b,)
    return x_episode_wise, x_time_wise


# ----------------------------------------------------------------------------
# deterministic parameter init (shapes from the module's __init__)
# ----------------------------------------------------------------------------
def init_params(key, emb, comp_emb, heads, depth, seq_length):
    keys = iter(jax.random.split(key, 1024))

    def nrm(shape, scale=0.1, dtype=jnp.float32):
        return (jax.random.normal(next(keys), shape, jnp.float32) * scale).astype(dtype)

    def block_params(E, h):
        wq = nrm((E, E * h))
        wk = nrm((E, E * h))
        wv = nrm((E, E * h))
        return dict(
            wqkv=jnp.concatenate([wq, wk, wv], axis=1).astype(jnp.bfloat16),
            wu=nrm((h * E, E), dtype=jnp.bfloat16),
            bu=nrm((1, E)),
            ln1_g=jnp.ones((1, E), jnp.float32), ln1_b=jnp.zeros((1, E), jnp.float32),
            ln2_g=jnp.ones((1, E), jnp.float32), ln2_b=jnp.zeros((1, E), jnp.float32),
            w1=nrm((E, 4 * E), dtype=jnp.bfloat16), b1=nrm((1, 4 * E)),
            w2=nrm((4 * E, E), dtype=jnp.bfloat16), b2=nrm((1, E)),
        )

    return dict(
        w_comp=nrm((emb, comp_emb), dtype=jnp.bfloat16), b_comp=nrm((1, comp_emb)),
        pos_emb=nrm((seq_length, comp_emb)),
        time_blocks=[block_params(comp_emb, heads) for _ in range(depth)],
        agent_blocks=[block_params(comp_emb, heads) for _ in range(depth)],
        wr1=nrm((comp_emb, 50)), br1=nrm((50,)),
        wr2=nrm((50, 50)), br2=nrm((50,)),
        w_rew=nrm((50, 1)), b_rew=nrm((1,)),
    )


# ----------------------------------------------------------------------------
if __name__ == "__main__":
    key = jax.random.PRNGKey(0)
    b, n_a, t, emb = 2, 3, 8, 32
    heads, depth = 2, 2
    comp_emb = emb if emb <= 100 else 100     # module's comp_emb rule

    pkey, xkey = jax.random.split(key)
    params = init_params(pkey, emb, comp_emb, heads, depth, seq_length=t)
    x = jax.random.normal(xkey, (b, n_a, t, emb), jnp.float32)

    fwd = jax.jit(
        functools.partial(
            time_agent_transformer_forward, heads=heads, depth=depth, n_agents=n_a
        )
    )
    x_episode_wise, x_time_wise = fwd(x, params)
    jax.block_until_ready((x_episode_wise, x_time_wise))

    assert x_episode_wise.shape == (b,)
    assert x_time_wise.shape == (b, t)
    assert bool(jnp.all(jnp.isfinite(x_episode_wise)))
    assert bool(jnp.all(jnp.isfinite(x_time_wise)))
    print("KERNEL_OK")
</pallas_src>

<mosaic_0001>
module attributes {stable_mosaic.version = 11 : i64} {
  func.func @_compress_pos_kernel(%arg0: i32, %arg1: memref<1x3x8x32xf32, #tpu.memory_space<vmem>>, %arg2: memref<32x32xbf16, #tpu.memory_space<vmem>>, %arg3: memref<1x32xf32, #tpu.memory_space<vmem>>, %arg4: memref<8x32xf32, #tpu.memory_space<vmem>>, %arg5: memref<1x3x8x32xf32, #tpu.memory_space<vmem>>) attributes {dimension_semantics = [#tpu.dimension_semantics<parallel>], iteration_bounds = array<i64: 2>, scalar_prefetch = 0 : i64, scratch_operands = 0 : i64, tpu.core_type = #tpu.core_type<tc>, window_params = [{transform_indices = @transform_0, window_bounds = array<i64: 1, 3, 8, 32>}, {pipeline_mode = #tpu.pipeline_mode<synchronous>, transform_indices = @transform_1, window_bounds = array<i64: 32, 32>}, {pipeline_mode = #tpu.pipeline_mode<synchronous>, transform_indices = @transform_2, window_bounds = array<i64: 1, 32>}, {pipeline_mode = #tpu.pipeline_mode<synchronous>, transform_indices = @transform_3, window_bounds = array<i64: 8, 32>}, {transform_indices = @transform_4, window_bounds = array<i64: 1, 3, 8, 32>}]} {
    %c0 = arith.constant 0 : index
    %c0_0 = arith.constant 0 : index
    %c0_1 = arith.constant 0 : index
    %c0_2 = arith.constant 0 : index
    %0 = vector.load %arg1[%c0, %c0_0, %c0_1, %c0_2] : memref<1x3x8x32xf32, #tpu.memory_space<vmem>>, vector<1x3x8x32xf32>
    %1 = vector.shape_cast %0 : vector<1x3x8x32xf32> to vector<3x8x32xf32>
    %2 = vector.shape_cast %1 : vector<3x8x32xf32> to vector<24x32xf32>
    %3 = arith.truncf %2 : vector<24x32xf32> to vector<24x32xbf16>
    %c0_3 = arith.constant 0 : index
    %c0_4 = arith.constant 0 : index
    %4 = vector.load %arg2[%c0_3, %c0_4] : memref<32x32xbf16, #tpu.memory_space<vmem>>, vector<32x32xbf16>
    %cst = arith.constant dense<0.000000e+00> : vector<24x32xf32>
    %5 = tpu.matmul %3, %4, %cst {dimension_numbers = #tpu.dot_dimension_numbers<[1], [0], [0], [1], [0, 0, 1, 1], [], []>} : vector<24x32xbf16>, vector<32x32xbf16>, vector<24x32xf32> -> vector<24x32xf32>
    %c0_5 = arith.constant 0 : index
    %c0_6 = arith.constant 0 : index
    %6 = vector.load %arg3[%c0_5, %c0_6] : memref<1x32xf32, #tpu.memory_space<vmem>>, vector<1x32xf32>
    %7 = vector.broadcast %6 : vector<1x32xf32> to vector<24x32xf32>
    %8 = arith.addf %5, %7 : vector<24x32xf32>
    %9 = vector.shape_cast %8 : vector<24x32xf32> to vector<3x8x32xf32>
    %c0_7 = arith.constant 0 : index
    %c0_8 = arith.constant 0 : index
    %10 = vector.load %arg4[%c0_7, %c0_8] : memref<8x32xf32, #tpu.memory_space<vmem>>, vector<8x32xf32>
    %11 = vector.shape_cast %10 : vector<8x32xf32> to vector<1x8x32xf32>
    %12 = vector.broadcast %11 : vector<1x8x32xf32> to vector<3x8x32xf32>
    %13 = arith.addf %9, %12 : vector<3x8x32xf32>
    %c0_9 = arith.constant 0 : index
    %c0_10 = arith.constant 0 : index
    %c0_11 = arith.constant 0 : index
    %c0_12 = arith.constant 0 : index
    %14 = vector.load %arg5[%c0_9, %c0_10, %c0_11, %c0_12] : memref<1x3x8x32xf32, #tpu.memory_space<vmem>>, vector<1x3x8x32xf32>
    %15 = vector.shape_cast %14 : vector<1x3x8x32xf32> to vector<3x8x32xf32>
    %16 = vector.shape_cast %13 : vector<3x8x32xf32> to vector<1x3x8x32xf32>
    tpu.vector_store %arg5[%c0_9, %c0_10, %c0_11, %c0_12], %16 {strides = array<i32>} : memref<1x3x8x32xf32, #tpu.memory_space<vmem>>, vector<1x3x8x32xf32>,
    return
  }
  func.func @transform_0(%arg0: i32) -> (i32, i32, i32, i32) {
    %c0_i32 = arith.constant 0 : i32
    %c0_i32_0 = arith.constant 0 : i32
    %c0_i32_1 = arith.constant 0 : i32
    %c0_i32_2 = arith.constant 0 : i32
    return %arg0, %c0_i32, %c0_i32_0, %c0_i32_1 : i32, i32, i32, i32
  }
  func.func @transform_1(%arg0: i32) -> (i32, i32) {
    %c0_i32 = arith.constant 0 : i32
    %c0_i32_0 = arith.constant 0 : i32
    %c0_i32_1 = arith.constant 0 : i32
    return %c0_i32, %c0_i32_0 : i32, i32
  }
  func.func @transform_2(%arg0: i32) -> (i32, i32) {
    %c0_i32 = arith.constant 0 : i32
    %c0_i32_0 = arith.constant 0 : i32
    %c0_i32_1 = arith.constant 0 : i32
    return %c0_i32, %c0_i32_0 : i32, i32
  }
  func.func @transform_3(%arg0: i32) -> (i32, i32) {
    %c0_i32 = arith.constant 0 : i32
    %c0_i32_0 = arith.constant 0 : i32
    %c0_i32_1 = arith.constant 0 : i32
    return %c0_i32, %c0_i32_0 : i32, i32
  }
  func.func @transform_4(%arg0: i32) -> (i32, i32, i32, i32) {
    %c0_i32 = arith.constant 0 : i32
    %c0_i32_0 = arith.constant 0 : i32
    %c0_i32_1 = arith.constant 0 : i32
    %c0_i32_2 = arith.constant 0 : i32
    return %arg0, %c0_i32, %c0_i32_0, %c0_i32_1 : i32, i32, i32, i32
  }
}

module attributes {stable_mosaic.version = 11 : i64} {
  func.func @_block_kernel(%arg0: i32, %arg1: memref<1x3x8x32xf32, #tpu.memory_space<vmem>>, %arg2: memref<32x192xbf16, #tpu.memory_space<vmem>>, %arg3: memref<64x32xbf16, #tpu.memory_space<vmem>>, %arg4: memref<1x32xf32, #tpu.memory_space<vmem>>, %arg5: memref<1x32xf32, #tpu.memory_space<vmem>>, %arg6: memref<1x32xf32, #tpu.memory_space<vmem>>, %arg7: memref<32x128xbf16, #tpu.memory_space<vmem>>, %arg8: memref<1x128xf32, #tpu.memory_space<vmem>>, %arg9: memref<128x32xbf16, #tpu.memory_space<vmem>>, %arg10: memref<1x32xf32, #tpu.memory_space<vmem>>, %arg11: memref<1x32xf32, #tpu.memory_space<vmem>>, %arg12: memref<1x32xf32, #tpu.memory_space<vmem>>, %arg13: memref<1x3x8x32xf32, #tpu.memory_space<vmem>>) attributes {dimension_semantics = [#tpu.dimension_semantics<parallel>], iteration_bounds = array<i64: 2>, scalar_prefetch = 0 : i64, scratch_operands = 0 : i64, tpu.core_type = #tpu.core_type<tc>, window_params = [{transform_indices = @transform_0, window_bounds = array<i64: 1, 3, 8, 32>}, {pipeline_mode = #tpu.pipeline_mode<synchronous>, transform_indices = @transform_1, window_bounds = array<i64: 32, 192>}, {pipeline_mode = #tpu.pipeline_mode<synchronous>, transform_indices = @transform_2, window_bounds = array<i64: 64, 32>}, {pipeline_mode = #tpu.pipeline_mode<synchronous>, transform_indices = @transform_3, window_bounds = array<i64: 1, 32>}, {pipeline_mode = #tpu.pipeline_mode<synchronous>, transform_indices = @transform_4, window_bounds = array<i64: 1, 32>}, {pipeline_mode = #tpu.pipeline_mode<synchronous>, transform_indices = @transform_5, window_bounds = array<i64: 1, 32>}, {pipeline_mode = #tpu.pipeline_mode<synchronous>, transform_indices = @transform_6, window_bounds = array<i64: 32, 128>}, {pipeline_mode = #tpu.pipeline_mode<synchronous>, transform_indices = @transform_7, window_bounds = array<i64: 1, 128>}, {pipeline_mode = #tpu.pipeline_mode<synchronous>, transform_indices = @transform_8, window_bounds = array<i64: 128, 32>}, {pipeline_mode = #tpu.pipeline_mode<synchronous>, transform_indices = @transform_9, window_bounds = array<i64: 1, 32>}, {pipeline_mode = #tpu.pipeline_mode<synchronous>, transform_indices = @transform_10, window_bounds = array<i64: 1, 32>}, {pipeline_mode = #tpu.pipeline_mode<synchronous>, transform_indices = @transform_11, window_bounds = array<i64: 1, 32>}, {transform_indices = @transform_12, window_bounds = array<i64: 1, 3, 8, 32>}]} {
    %c0 = arith.constant 0 : index
    %c0_0 = arith.constant 0 : index
    %c0_1 = arith.constant 0 : index
    %c0_2 = arith.constant 0 : index
    %0 = vector.load %arg1[%c0, %c0_0, %c0_1, %c0_2] : memref<1x3x8x32xf32, #tpu.memory_space<vmem>>, vector<1x3x8x32xf32>
    %1 = vector.shape_cast %0 : vector<1x3x8x32xf32> to vector<3x8x32xf32>
    %2 = vector.shape_cast %1 : vector<3x8x32xf32> to vector<24x32xf32>
    %3 = arith.truncf %2 : vector<24x32xf32> to vector<24x32xbf16>
    %c0_3 = arith.constant 0 : index
    %c0_4 = arith.constant 0 : index
    %4 = vector.load %arg2[%c0_3, %c0_4] : memref<32x192xbf16, #tpu.memory_space<vmem>>, vector<32x192xbf16>
    %cst = arith.constant dense<0.000000e+00> : vector<24x192xf32>
    %5 = tpu.matmul %3, %4, %cst {dimension_numbers = #tpu.dot_dimension_numbers<[1], [0], [0], [1], [0, 0, 1, 1], [], []>} : vector<24x32xbf16>, vector<32x192xbf16>, vector<24x192xf32> -> vector<24x192xf32>
    %6 = vector.extract_strided_slice %5 {offsets = [0, 0], sizes = [24, 32], strides = [1, 1]} : vector<24x192xf32> to vector<24x32xf32>
    %7 = vector.shape_cast %6 : vector<24x32xf32> to vector<3x8x32xf32>
    %8 = vector.extract_strided_slice %5 {offsets = [0, 64], sizes = [24, 32], strides = [1, 1]} : vector<24x192xf32> to vector<24x32xf32>
    %9 = vector.shape_cast %8 : vector<24x32xf32> to vector<3x8x32xf32>
    %10 = vector.extract_strided_slice %5 {offsets = [0, 128], sizes = [24, 32], strides = [1, 1]} : vector<24x192xf32> to vector<24x32xf32>
    %11 = vector.shape_cast %10 : vector<24x32xf32> to vector<3x8x32xf32>
    %12 = arith.truncf %7 : vector<3x8x32xf32> to vector<3x8x32xbf16>
    %13 = arith.truncf %9 : vector<3x8x32xf32> to vector<3x8x32xbf16>
    "tpu.trace_start"() <{level = 10 : i32, message = "bqe,bke->bqk"}> : () -> ()
    %cst_5 = arith.constant dense<0.000000e+00> : vector<3x8x8xf32>
    %14 = tpu.matmul %12, %13, %cst_5 {dimension_numbers = #tpu.dot_dimension_numbers<[2], [2], [1], [1], [0, 0, 0, 1, 1, 1], [0], [0]>} : vector<3x8x32xbf16>, vector<3x8x32xbf16>, vector<3x8x8xf32> -> vector<3x8x8xf32>
    "tpu.trace_stop"() : () -> ()
    %cst_6 = arith.constant 0.176776692 : f32
    %15 = vector.broadcast %cst_6 : f32 to vector<3x8x8xf32>
    %16 = arith.mulf %14, %15 : vector<3x8x8xf32>
    %17 = tpu.iota {dimensions = array<i32: 1>} : vector<3x8x8xi32>
    %18 = tpu.iota {dimensions = array<i32: 2>} : vector<3x8x8xi32>
    %19 = arith.cmpi sle, %18, %17 : vector<3x8x8xi32>
    %cst_7 = arith.constant 0xFF800000 : f32
    %20 = vector.broadcast %cst_7 : f32 to vector<3x8x8xf32>
    %21 = arith.select %19, %16, %20 : vector<3x8x8xi1>, vector<3x8x8xf32>
    %cst_8 = arith.constant dense<0xFF800000> : vector<3x8xf32>
    %22 = vector.multi_reduction <maximumf>, %21, %cst_8 [2] : vector<3x8x8xf32> to vector<3x8xf32>
    %23 = vector.shape_cast %22 : vector<3x8xf32> to vector<3x8x1xf32>
    %24 = vector.broadcast %23 : vector<3x8x1xf32> to vector<3x8x8xf32>
    %25 = arith.subf %21, %24 : vector<3x8x8xf32>
    %26 = math.exp %25 : vector<3x8x8xf32>
    %cst_9 = arith.constant dense<0.000000e+00> : vector<3x8xf32>
    %27 = vector.multi_reduction <add>, %26, %cst_9 [2] : vector<3x8x8xf32> to vector<3x8xf32>
    %28 = vector.shape_cast %27 : vector<3x8xf32> to vector<3x8x1xf32>
    %29 = tpu.reciprocal %28 {approx = true} : vector<3x8x1xf32> -> vector<3x8x1xf32>
    %30 = vector.broadcast %29 : vector<3x8x1xf32> to vector<3x8x8xf32>
    %31 = arith.mulf %26, %30 : vector<3x8x8xf32>
    %32 = arith.truncf %31 : vector<3x8x8xf32> to vector<3x8x8xbf16>
    %33 = arith.truncf %11 : vector<3x8x32xf32> to vector<3x8x32xbf16>
    "tpu.trace_start"() <{level = 10 : i32, message = "bqk,bke->bqe"}> : () -> ()
    %cst_10 = arith.constant dense<0.000000e+00> : vector<3x8x32xf32>
    %34 = tpu.matmul %32, %33, %cst_10 {dimension_numbers = #tpu.dot_dimension_numbers<[2], [1], [1], [2], [0, 0, 0, 1, 1, 2], [0], [0]>} : vector<3x8x8xbf16>, vector<3x8x32xbf16>, vector<3x8x32xf32> -> vector<3x8x32xf32>
    "tpu.trace_stop"() : () -> ()
    %35 = vector.extract_strided_slice %5 {offsets = [0, 32], sizes = [24, 32], strides = [1, 1]} : vector<24x192xf32> to vector<24x32xf32>
    %36 = vector.shape_cast %35 : vector<24x32xf32> to vector<3x8x32xf32>
    %37 = vector.extract_strided_slice %5 {offsets = [0, 96], sizes = [24, 32], strides = [1, 1]} : vector<24x192xf32> to vector<24x32xf32>
    %38 = vector.shape_cast %37 : vector<24x32xf32> to vector<3x8x32xf32>
    %39 = vector.extract_strided_slice %5 {offsets = [0, 160], sizes = [24, 32], strides = [1, 1]} : vector<24x192xf32> to vector<24x32xf32>
    %40 = vector.shape_cast %39 : vector<24x32xf32> to vector<3x8x32xf32>
    %41 = arith.truncf %36 : vector<3x8x32xf32> to vector<3x8x32xbf16>
    %42 = arith.truncf %38 : vector<3x8x32xf32> to vector<3x8x32xbf16>
    "tpu.trace_start"() <{level = 10 : i32, message = "bqe,bke->bqk"}> : () -> ()
    %cst_11 = arith.constant dense<0.000000e+00> : vector<3x8x8xf32>
    %43 = tpu.matmul %41, %42, %cst_11 {dimension_numbers = #tpu.dot_dimension_numbers<[2], [2], [1], [1], [0, 0, 0, 1, 1, 1], [0], [0]>} : vector<3x8x32xbf16>, vector<3x8x32xbf16>, vector<3x8x8xf32> -> vector<3x8x8xf32>
    "tpu.trace_stop"() : () -> ()
    %cst_12 = arith.constant 0.176776692 : f32
    %44 = vector.broadcast %cst_12 : f32 to vector<3x8x8xf32>
    %45 = arith.mulf %43, %44 : vector<3x8x8xf32>
    %46 = tpu.iota {dimensions = array<i32: 1>} : vector<3x8x8xi32>
    %47 = tpu.iota {dimensions = array<i32: 2>} : vector<3x8x8xi32>
    %48 = arith.cmpi sle, %47, %46 : vector<3x8x8xi32>
    %cst_13 = arith.constant 0xFF800000 : f32
    %49 = vector.broadcast %cst_13 : f32 to vector<3x8x8xf32>
    %50 = arith.select %48, %45, %49 : vector<3x8x8xi1>, vector<3x8x8xf32>
    %cst_14 = arith.constant dense<0xFF800000> : vector<3x8xf32>
    %51 = vector.multi_reduction <maximumf>, %50, %cst_14 [2] : vector<3x8x8xf32> to vector<3x8xf32>
    %52 = vector.shape_cast %51 : vector<3x8xf32> to vector<3x8x1xf32>
    %53 = vector.broadcast %52 : vector<3x8x1xf32> to vector<3x8x8xf32>
    %54 = arith.subf %50, %53 : vector<3x8x8xf32>
    %55 = math.exp %54 : vector<3x8x8xf32>
    %cst_15 = arith.constant dense<0.000000e+00> : vector<3x8xf32>
    %56 = vector.multi_reduction <add>, %55, %cst_15 [2] : vector<3x8x8xf32> to vector<3x8xf32>
    %57 = vector.shape_cast %56 : vector<3x8xf32> to vector<3x8x1xf32>
    %58 = tpu.reciprocal %57 {approx = true} : vector<3x8x1xf32> -> vector<3x8x1xf32>
    %59 = vector.broadcast %58 : vector<3x8x1xf32> to vector<3x8x8xf32>
    %60 = arith.mulf %55, %59 : vector<3x8x8xf32>
    %61 = arith.truncf %60 : vector<3x8x8xf32> to vector<3x8x8xbf16>
    %62 = arith.truncf %40 : vector<3x8x32xf32> to vector<3x8x32xbf16>
    "tpu.trace_start"() <{level = 10 : i32, message = "bqk,bke->bqe"}> : () -> ()
    %cst_16 = arith.constant dense<0.000000e+00> : vector<3x8x32xf32>
    %63 = tpu.matmul %61, %62, %cst_16 {dimension_numbers = #tpu.dot_dimension_numbers<[2], [1], [1], [2], [0, 0, 0, 1, 1, 2], [0], [0]>} : vector<3x8x8xbf16>, vector<3x8x32xbf16>, vector<3x8x32xf32> -> vector<3x8x32xf32>
    "tpu.trace_stop"() : () -> ()
    %64 = tpu.concatenate %34, %63 in 2 : vector<3x8x32xf32>, vector<3x8x32xf32> -> vector<3x8x64xf32>
    %65 = vector.shape_cast %64 : vector<3x8x64xf32> to vector<24x64xf32>
    %66 = arith.truncf %65 : vector<24x64xf32> to vector<24x64xbf16>
    %c0_17 = arith.constant 0 : index
    %c0_18 = arith.constant 0 : index
    %67 = vector.load %arg3[%c0_17, %c0_18] : memref<64x32xbf16, #tpu.memory_space<vmem>>, vector<64x32xbf16>
    %cst_19 = arith.constant dense<0.000000e+00> : vector<24x32xf32>
    %68 = tpu.matmul %66, %67, %cst_19 {dimension_numbers = #tpu.dot_dimension_numbers<[1], [0], [0], [1], [0, 0, 1, 1], [], []>} : vector<24x64xbf16>, vector<64x32xbf16>, vector<24x32xf32> -> vector<24x32xf32>
    %c0_20 = arith.constant 0 : index
    %c0_21 = arith.constant 0 : index
    %69 = vector.load %arg4[%c0_20, %c0_21] : memref<1x32xf32, #tpu.memory_space<vmem>>, vector<1x32xf32>
    %70 = vector.broadcast %69 : vector<1x32xf32> to vector<24x32xf32>
    %71 = arith.addf %68, %70 : vector<24x32xf32>
    %72 = arith.addf %71, %2 : vector<24x32xf32>
    %c0_22 = arith.constant 0 : index
    %c0_23 = arith.constant 0 : index
    %73 = vector.load %arg5[%c0_22, %c0_23] : memref<1x32xf32, #tpu.memory_space<vmem>>, vector<1x32xf32>
    %c0_24 = arith.constant 0 : index
    %c0_25 = arith.constant 0 : index
    %74 = vector.load %arg6[%c0_24, %c0_25] : memref<1x32xf32, #tpu.memory_space<vmem>>, vector<1x32xf32>
    %cst_26 = arith.constant dense<0.000000e+00> : vector<24xf32>
    %75 = vector.multi_reduction <add>, %72, %cst_26 [1] : vector<24x32xf32> to vector<24xf32>
    %76 = vector.shape_cast %75 : vector<24xf32> to vector<24x1xf32>
    %cst_27 = arith.constant 3.200000e+01 : f32
    %77 = vector.broadcast %cst_27 : f32 to vector<24x1xf32>
    %78 = arith.divf %76, %77 : vector<24x1xf32>
    %79 = vector.broadcast %78 : vector<24x1xf32> to vector<24x32xf32>
    %80 = arith.subf %72, %79 : vector<24x32xf32>
    %81 = arith.mulf %80, %80 : vector<24x32xf32>
    %cst_28 = arith.constant dense<0.000000e+00> : vector<24xf32>
    %82 = vector.multi_reduction <add>, %81, %cst_28 [1] : vector<24x32xf32> to vector<24xf32>
    %83 = vector.shape_cast %82 : vector<24xf32> to vector<24x1xf32>
    %cst_29 = arith.constant 3.200000e+01 : f32
    %84 = vector.broadcast %cst_29 : f32 to vector<24x1xf32>
    %85 = arith.divf %83, %84 : vector<24x1xf32>
    %86 = vector.broadcast %78 : vector<24x1xf32> to vector<24x32xf32>
    %87 = arith.subf %72, %86 : vector<24x32xf32>
    %cst_30 = arith.constant 9.99999974E-6 : f32
    %88 = vector.broadcast %cst_30 : f32 to vector<24x1xf32>
    %89 = arith.addf %85, %88 : vector<24x1xf32>
    %90 = math.rsqrt %89 : vector<24x1xf32>
    %91 = vector.broadcast %90 : vector<24x1xf32> to vector<24x32xf32>
    %92 = arith.mulf %87, %91 : vector<24x32xf32>
    %93 = vector.broadcast %73 : vector<1x32xf32> to vector<24x32xf32>
    %94 = arith.mulf %92, %93 : vector<24x32xf32>
    %95 = vector.broadcast %74 : vector<1x32xf32> to vector<24x32xf32>
    %96 = arith.addf %94, %95 : vector<24x32xf32>
    %97 = arith.truncf %96 : vector<24x32xf32> to vector<24x32xbf16>
    %c0_31 = arith.constant 0 : index
    %c0_32 = arith.constant 0 : index
    %98 = vector.load %arg7[%c0_31, %c0_32] : memref<32x128xbf16, #tpu.memory_space<vmem>>, vector<32x128xbf16>
    %cst_33 = arith.constant dense<0.000000e+00> : vector<24x128xf32>
    %99 = tpu.matmul %97, %98, %cst_33 {dimension_numbers = #tpu.dot_dimension_numbers<[1], [0], [0], [1], [0, 0, 1, 1], [], []>} : vector<24x32xbf16>, vector<32x128xbf16>, vector<24x128xf32> -> vector<24x128xf32>
    %c0_34 = arith.constant 0 : index
    %c0_35 = arith.constant 0 : index
    %100 = vector.load %arg8[%c0_34, %c0_35] : memref<1x128xf32, #tpu.memory_space<vmem>>, vector<1x128xf32>
    %101 = vector.broadcast %100 : vector<1x128xf32> to vector<24x128xf32>
    %102 = arith.addf %99, %101 : vector<24x128xf32>
    %cst_36 = arith.constant 0.000000e+00 : f32
    %103 = vector.broadcast %cst_36 : f32 to vector<24x128xf32>
    %104 = arith.maximumf %102, %103 : vector<24x128xf32>
    %105 = arith.truncf %104 : vector<24x128xf32> to vector<24x128xbf16>
    %c0_37 = arith.constant 0 : index
    %c0_38 = arith.constant 0 : index
    %106 = vector.load %arg9[%c0_37, %c0_38] : memref<128x32xbf16, #tpu.memory_space<vmem>>, vector<128x32xbf16>
    %cst_39 = arith.constant dense<0.000000e+00> : vector<24x32xf32>
    %107 = tpu.matmul %105, %106, %cst_39 {dimension_numbers = #tpu.dot_dimension_numbers<[1], [0], [0], [1], [0, 0, 1, 1], [], []>} : vector<24x128xbf16>, vector<128x32xbf16>, vector<24x32xf32> -> vector<24x32xf32>
    %c0_40 = arith.constant 0 : index
    %c0_41 = arith.constant 0 : index
    %108 = vector.load %arg10[%c0_40, %c0_41] : memref<1x32xf32, #tpu.memory_space<vmem>>, vector<1x32xf32>
    %109 = vector.broadcast %108 : vector<1x32xf32> to vector<24x32xf32>
    %110 = arith.addf %107, %109 : vector<24x32xf32>
    %111 = arith.addf %110, %96 : vector<24x32xf32>
    %c0_42 = arith.constant 0 : index
    %c0_43 = arith.constant 0 : index
    %112 = vector.load %arg11[%c0_42, %c0_43] : memref<1x32xf32, #tpu.memory_space<vmem>>, vector<1x32xf32>
    %c0_44 = arith.constant 0 : index
    %c0_45 = arith.constant 0 : index
    %113 = vector.load %arg12[%c0_44, %c0_45] : memref<1x32xf32, #tpu.memory_space<vmem>>, vector<1x32xf32>
    %cst_46 = arith.constant dense<0.000000e+00> : vector<24xf32>
    %114 = vector.multi_reduction <add>, %111, %cst_46 [1] : vector<24x32xf32> to vector<24xf32>
    %115 = vector.shape_cast %114 : vector<24xf32> to vector<24x1xf32>
    %cst_47 = arith.constant 3.200000e+01 : f32
    %116 = vector.broadcast %cst_47 : f32 to vector<24x1xf32>
    %117 = arith.divf %115, %116 : vector<24x1xf32>
    %118 = vector.broadcast %117 : vector<24x1xf32> to vector<24x32xf32>
    %119 = arith.subf %111, %118 : vector<24x32xf32>
    %120 = arith.mulf %119, %119 : vector<24x32xf32>
    %cst_48 = arith.constant dense<0.000000e+00> : vector<24xf32>
    %121 = vector.multi_reduction <add>, %120, %cst_48 [1] : vector<24x32xf32> to vector<24xf32>
    %122 = vector.shape_cast %121 : vector<24xf32> to vector<24x1xf32>
    %cst_49 = arith.constant 3.200000e+01 : f32
    %123 = vector.broadcast %cst_49 : f32 to vector<24x1xf32>
    %124 = arith.divf %122, %123 : vector<24x1xf32>
    %125 = vector.broadcast %117 : vector<24x1xf32> to vector<24x32xf32>
    %126 = arith.subf %111, %125 : vector<24x32xf32>
    %cst_50 = arith.constant 9.99999974E-6 : f32
    %127 = vector.broadcast %cst_50 : f32 to vector<24x1xf32>
    %128 = arith.addf %124, %127 : vector<24x1xf32>
    %129 = math.rsqrt %128 : vector<24x1xf32>
    %130 = vector.broadcast %129 : vector<24x1xf32> to vector<24x32xf32>
    %131 = arith.mulf %126, %130 : vector<24x32xf32>
    %132 = vector.broadcast %112 : vector<1x32xf32> to vector<24x32xf32>
    %133 = arith.mulf %131, %132 : vector<24x32xf32>
    %134 = vector.broadcast %113 : vector<1x32xf32> to vector<24x32xf32>
    %135 = arith.addf %133, %134 : vector<24x32xf32>
    %136 = vector.shape_cast %135 : vector<24x32xf32> to vector<3x8x32xf32>
    %c0_51 = arith.constant 0 : index
    %c0_52 = arith.constant 0 : index
    %c0_53 = arith.constant 0 : index
    %c0_54 = arith.constant 0 : index
    %137 = vector.load %arg13[%c0_51, %c0_52, %c0_53, %c0_54] : memref<1x3x8x32xf32, #tpu.memory_space<vmem>>, vector<1x3x8x32xf32>
    %138 = vector.shape_cast %137 : vector<1x3x8x32xf32> to vector<3x8x32xf32>
    %139 = vector.shape_cast %136 : vector<3x8x32xf32> to vector<1x3x8x32xf32>
    tpu.vector_store %arg13[%c0_51, %c0_52, %c0_53, %c0_54], %139 {strides = array<i32>} : memref<1x3x8x32xf32, #tpu.memory_space<vmem>>, vector<1x3x8x32xf32>,
    return
  }
  func.func @transform_0(%arg0: i32) -> (i32, i32, i32, i32) {
    %c0_i32 = arith.constant 0 : i32
    %c0_i32_0 = arith.constant 0 : i32
    %c0_i32_1 = arith.constant 0 : i32
    %c0_i32_2 = arith.constant 0 : i32
    return %arg0, %c0_i32, %c0_i32_0, %c0_i32_1 : i32, i32, i32, i32
  }
  func.func @transform_1(%arg0: i32) -> (i32, i32) {
    %c0_i32 = arith.constant 0 : i32
    %c0_i32_0 = arith.constant 0 : i32
    %c0_i32_1 = arith.constant 0 : i32
    return %c0_i32, %c0_i32_0 : i32, i32
  }
  func.func @transform_2(%arg0: i32) -> (i32, i32) {
    %c0_i32 = arith.constant 0 : i32
    %c0_i32_0 = arith.constant 0 : i32
    %c0_i32_1 = arith.constant 0 : i32
    return %c0_i32, %c0_i32_0 : i32, i32
  }
  func.func @transform_3(%arg0: i32) -> (i32, i32) {
    %c0_i32 = arith.constant 0 : i32
    %c0_i32_0 = arith.constant 0 : i32
    %c0_i32_1 = arith.constant 0 : i32
    return %c0_i32, %c0_i32_0 : i32, i32
  }
  func.func @transform_4(%arg0: i32) -> (i32, i32) {
    %c0_i32 = arith.constant 0 : i32
    %c0_i32_0 = arith.constant 0 : i32
    %c0_i32_1 = arith.constant 0 : i32
    return %c0_i32, %c0_i32_0 : i32, i32
  }
  func.func @transform_5(%arg0: i32) -> (i32, i32) {
    %c0_i32 = arith.constant 0 : i32
    %c0_i32_0 = arith.constant 0 : i32
    %c0_i32_1 = arith.constant 0 : i32
    return %c0_i32, %c0_i32_0 : i32, i32
  }
  func.func @transform_6(%arg0: i32) -> (i32, i32) {
    %c0_i32 = arith.constant 0 : i32
    %c0_i32_0 = arith.constant 0 : i32
    %c0_i32_1 = arith.constant 0 : i32
    return %c0_i32, %c0_i32_0 : i32, i32
  }
  func.func @transform_7(%arg0: i32) -> (i32, i32) {
    %c0_i32 = arith.constant 0 : i32
    %c0_i32_0 = arith.constant 0 : i32
    %c0_i32_1 = arith.constant 0 : i32
    return %c0_i32, %c0_i32_0 : i32, i32
  }
  func.func @transform_8(%arg0: i32) -> (i32, i32) {
    %c0_i32 = arith.constant 0 : i32
    %c0_i32_0 = arith.constant 0 : i32
    %c0_i32_1 = arith.constant 0 : i32
    return %c0_i32, %c0_i32_0 : i32, i32
  }
  func.func @transform_9(%arg0: i32) -> (i32, i32) {
    %c0_i32 = arith.constant 0 : i32
    %c0_i32_0 = arith.constant 0 : i32
    %c0_i32_1 = arith.constant 0 : i32
    return %c0_i32, %c0_i32_0 : i32, i32
  }
  func.func @transform_10(%arg0: i32) -> (i32, i32) {
    %c0_i32 = arith.constant 0 : i32
    %c0_i32_0 = arith.constant 0 : i32
    %c0_i32_1 = arith.constant 0 : i32
    return %c0_i32, %c0_i32_0 : i32, i32
  }
  func.func @transform_11(%arg0: i32) -> (i32, i32) {
    %c0_i32 = arith.constant 0 : i32
    %c0_i32_0 = arith.constant 0 : i32
    %c0_i32_1 = arith.constant 0 : i32
    return %c0_i32, %c0_i32_0 : i32, i32
  }
  func.func @transform_12(%arg0: i32) -> (i32, i32, i32, i32) {
    %c0_i32 = arith.constant 0 : i32
    %c0_i32_0 = arith.constant 0 : i32
    %c0_i32_1 = arith.constant 0 : i32
    %c0_i32_2 = arith.constant 0 : i32
    return %arg0, %c0_i32, %c0_i32_0, %c0_i32_1 : i32, i32, i32, i32
  }
}

module attributes {stable_mosaic.version = 11 : i64} {
  func.func @_block_kernel(%arg0: i32, %arg1: memref<1x8x3x32xf32, #tpu.memory_space<vmem>>, %arg2: memref<32x192xbf16, #tpu.memory_space<vmem>>, %arg3: memref<64x32xbf16, #tpu.memory_space<vmem>>, %arg4: memref<1x32xf32, #tpu.memory_space<vmem>>, %arg5: memref<1x32xf32, #tpu.memory_space<vmem>>, %arg6: memref<1x32xf32, #tpu.memory_space<vmem>>, %arg7: memref<32x128xbf16, #tpu.memory_space<vmem>>, %arg8: memref<1x128xf32, #tpu.memory_space<vmem>>, %arg9: memref<128x32xbf16, #tpu.memory_space<vmem>>, %arg10: memref<1x32xf32, #tpu.memory_space<vmem>>, %arg11: memref<1x32xf32, #tpu.memory_space<vmem>>, %arg12: memref<1x32xf32, #tpu.memory_space<vmem>>, %arg13: memref<1x8x3x32xf32, #tpu.memory_space<vmem>>) attributes {dimension_semantics = [#tpu.dimension_semantics<parallel>], iteration_bounds = array<i64: 2>, scalar_prefetch = 0 : i64, scratch_operands = 0 : i64, tpu.core_type = #tpu.core_type<tc>, window_params = [{transform_indices = @transform_0, window_bounds = array<i64: 1, 8, 3, 32>}, {pipeline_mode = #tpu.pipeline_mode<synchronous>, transform_indices = @transform_1, window_bounds = array<i64: 32, 192>}, {pipeline_mode = #tpu.pipeline_mode<synchronous>, transform_indices = @transform_2, window_bounds = array<i64: 64, 32>}, {pipeline_mode = #tpu.pipeline_mode<synchronous>, transform_indices = @transform_3, window_bounds = array<i64: 1, 32>}, {pipeline_mode = #tpu.pipeline_mode<synchronous>, transform_indices = @transform_4, window_bounds = array<i64: 1, 32>}, {pipeline_mode = #tpu.pipeline_mode<synchronous>, transform_indices = @transform_5, window_bounds = array<i64: 1, 32>}, {pipeline_mode = #tpu.pipeline_mode<synchronous>, transform_indices = @transform_6, window_bounds = array<i64: 32, 128>}, {pipeline_mode = #tpu.pipeline_mode<synchronous>, transform_indices = @transform_7, window_bounds = array<i64: 1, 128>}, {pipeline_mode = #tpu.pipeline_mode<synchronous>, transform_indices = @transform_8, window_bounds = array<i64: 128, 32>}, {pipeline_mode = #tpu.pipeline_mode<synchronous>, transform_indices = @transform_9, window_bounds = array<i64: 1, 32>}, {pipeline_mode = #tpu.pipeline_mode<synchronous>, transform_indices = @transform_10, window_bounds = array<i64: 1, 32>}, {pipeline_mode = #tpu.pipeline_mode<synchronous>, transform_indices = @transform_11, window_bounds = array<i64: 1, 32>}, {transform_indices = @transform_12, window_bounds = array<i64: 1, 8, 3, 32>}]} {
    %c0 = arith.constant 0 : index
    %c0_0 = arith.constant 0 : index
    %c0_1 = arith.constant 0 : index
    %c0_2 = arith.constant 0 : index
    %0 = vector.load %arg1[%c0, %c0_0, %c0_1, %c0_2] : memref<1x8x3x32xf32, #tpu.memory_space<vmem>>, vector<1x8x3x32xf32>
    %1 = vector.shape_cast %0 : vector<1x8x3x32xf32> to vector<8x3x32xf32>
    %2 = vector.shape_cast %1 : vector<8x3x32xf32> to vector<24x32xf32>
    %3 = arith.truncf %2 : vector<24x32xf32> to vector<24x32xbf16>
    %c0_3 = arith.constant 0 : index
    %c0_4 = arith.constant 0 : index
    %4 = vector.load %arg2[%c0_3, %c0_4] : memref<32x192xbf16, #tpu.memory_space<vmem>>, vector<32x192xbf16>
    %cst = arith.constant dense<0.000000e+00> : vector<24x192xf32>
    %5 = tpu.matmul %3, %4, %cst {dimension_numbers = #tpu.dot_dimension_numbers<[1], [0], [0], [1], [0, 0, 1, 1], [], []>} : vector<24x32xbf16>, vector<32x192xbf16>, vector<24x192xf32> -> vector<24x192xf32>
    %6 = vector.extract_strided_slice %5 {offsets = [0, 0], sizes = [24, 32], strides = [1, 1]} : vector<24x192xf32> to vector<24x32xf32>
    %7 = vector.shape_cast %6 : vector<24x32xf32> to vector<8x3x32xf32>
    %8 = vector.extract_strided_slice %5 {offsets = [0, 64], sizes = [24, 32], strides = [1, 1]} : vector<24x192xf32> to vector<24x32xf32>
    %9 = vector.shape_cast %8 : vector<24x32xf32> to vector<8x3x32xf32>
    %10 = vector.extract_strided_slice %5 {offsets = [0, 128], sizes = [24, 32], strides = [1, 1]} : vector<24x192xf32> to vector<24x32xf32>
    %11 = vector.shape_cast %10 : vector<24x32xf32> to vector<8x3x32xf32>
    %12 = arith.truncf %7 : vector<8x3x32xf32> to vector<8x3x32xbf16>
    %13 = arith.truncf %9 : vector<8x3x32xf32> to vector<8x3x32xbf16>
    "tpu.trace_start"() <{level = 10 : i32, message = "bqe,bke->bqk"}> : () -> ()
    %cst_5 = arith.constant dense<0.000000e+00> : vector<8x3x3xf32>
    %14 = tpu.matmul %12, %13, %cst_5 {dimension_numbers = #tpu.dot_dimension_numbers<[2], [2], [1], [1], [0, 0, 0, 1, 1, 1], [0], [0]>} : vector<8x3x32xbf16>, vector<8x3x32xbf16>, vector<8x3x3xf32> -> vector<8x3x3xf32>
    "tpu.trace_stop"() : () -> ()
    %cst_6 = arith.constant 0.176776692 : f32
    %15 = vector.broadcast %cst_6 : f32 to vector<8x3x3xf32>
    %16 = arith.mulf %14, %15 : vector<8x3x3xf32>
    %cst_7 = arith.constant dense<0xFF800000> : vector<8x3xf32>
    %17 = vector.multi_reduction <maximumf>, %16, %cst_7 [2] : vector<8x3x3xf32> to vector<8x3xf32>
    %18 = vector.shape_cast %17 : vector<8x3xf32> to vector<8x3x1xf32>
    %19 = vector.broadcast %18 : vector<8x3x1xf32> to vector<8x3x3xf32>
    %20 = arith.subf %16, %19 : vector<8x3x3xf32>
    %21 = math.exp %20 : vector<8x3x3xf32>
    %cst_8 = arith.constant dense<0.000000e+00> : vector<8x3xf32>
    %22 = vector.multi_reduction <add>, %21, %cst_8 [2] : vector<8x3x3xf32> to vector<8x3xf32>
    %23 = vector.shape_cast %22 : vector<8x3xf32> to vector<8x3x1xf32>
    %24 = tpu.reciprocal %23 {approx = true} : vector<8x3x1xf32> -> vector<8x3x1xf32>
    %25 = vector.broadcast %24 : vector<8x3x1xf32> to vector<8x3x3xf32>
    %26 = arith.mulf %21, %25 : vector<8x3x3xf32>
    %27 = arith.truncf %26 : vector<8x3x3xf32> to vector<8x3x3xbf16>
    %28 = arith.truncf %11 : vector<8x3x32xf32> to vector<8x3x32xbf16>
    "tpu.trace_start"() <{level = 10 : i32, message = "bqk,bke->bqe"}> : () -> ()
    %cst_9 = arith.constant dense<0.000000e+00> : vector<8x3x32xf32>
    %29 = tpu.matmul %27, %28, %cst_9 {dimension_numbers = #tpu.dot_dimension_numbers<[2], [1], [1], [2], [0, 0, 0, 1, 1, 2], [0], [0]>} : vector<8x3x3xbf16>, vector<8x3x32xbf16>, vector<8x3x32xf32> -> vector<8x3x32xf32>
    "tpu.trace_stop"() : () -> ()
    %30 = vector.extract_strided_slice %5 {offsets = [0, 32], sizes = [24, 32], strides = [1, 1]} : vector<24x192xf32> to vector<24x32xf32>
    %31 = vector.shape_cast %30 : vector<24x32xf32> to vector<8x3x32xf32>
    %32 = vector.extract_strided_slice %5 {offsets = [0, 96], sizes = [24, 32], strides = [1, 1]} : vector<24x192xf32> to vector<24x32xf32>
    %33 = vector.shape_cast %32 : vector<24x32xf32> to vector<8x3x32xf32>
    %34 = vector.extract_strided_slice %5 {offsets = [0, 160], sizes = [24, 32], strides = [1, 1]} : vector<24x192xf32> to vector<24x32xf32>
    %35 = vector.shape_cast %34 : vector<24x32xf32> to vector<8x3x32xf32>
    %36 = arith.truncf %31 : vector<8x3x32xf32> to vector<8x3x32xbf16>
    %37 = arith.truncf %33 : vector<8x3x32xf32> to vector<8x3x32xbf16>
    "tpu.trace_start"() <{level = 10 : i32, message = "bqe,bke->bqk"}> : () -> ()
    %cst_10 = arith.constant dense<0.000000e+00> : vector<8x3x3xf32>
    %38 = tpu.matmul %36, %37, %cst_10 {dimension_numbers = #tpu.dot_dimension_numbers<[2], [2], [1], [1], [0, 0, 0, 1, 1, 1], [0], [0]>} : vector<8x3x32xbf16>, vector<8x3x32xbf16>, vector<8x3x3xf32> -> vector<8x3x3xf32>
    "tpu.trace_stop"() : () -> ()
    %cst_11 = arith.constant 0.176776692 : f32
    %39 = vector.broadcast %cst_11 : f32 to vector<8x3x3xf32>
    %40 = arith.mulf %38, %39 : vector<8x3x3xf32>
    %cst_12 = arith.constant dense<0xFF800000> : vector<8x3xf32>
    %41 = vector.multi_reduction <maximumf>, %40, %cst_12 [2] : vector<8x3x3xf32> to vector<8x3xf32>
    %42 = vector.shape_cast %41 : vector<8x3xf32> to vector<8x3x1xf32>
    %43 = vector.broadcast %42 : vector<8x3x1xf32> to vector<8x3x3xf32>
    %44 = arith.subf %40, %43 : vector<8x3x3xf32>
    %45 = math.exp %44 : vector<8x3x3xf32>
    %cst_13 = arith.constant dense<0.000000e+00> : vector<8x3xf32>
    %46 = vector.multi_reduction <add>, %45, %cst_13 [2] : vector<8x3x3xf32> to vector<8x3xf32>
    %47 = vector.shape_cast %46 : vector<8x3xf32> to vector<8x3x1xf32>
    %48 = tpu.reciprocal %47 {approx = true} : vector<8x3x1xf32> -> vector<8x3x1xf32>
    %49 = vector.broadcast %48 : vector<8x3x1xf32> to vector<8x3x3xf32>
    %50 = arith.mulf %45, %49 : vector<8x3x3xf32>
    %51 = arith.truncf %50 : vector<8x3x3xf32> to vector<8x3x3xbf16>
    %52 = arith.truncf %35 : vector<8x3x32xf32> to vector<8x3x32xbf16>
    "tpu.trace_start"() <{level = 10 : i32, message = "bqk,bke->bqe"}> : () -> ()
    %cst_14 = arith.constant dense<0.000000e+00> : vector<8x3x32xf32>
    %53 = tpu.matmul %51, %52, %cst_14 {dimension_numbers = #tpu.dot_dimension_numbers<[2], [1], [1], [2], [0, 0, 0, 1, 1, 2], [0], [0]>} : vector<8x3x3xbf16>, vector<8x3x32xbf16>, vector<8x3x32xf32> -> vector<8x3x32xf32>
    "tpu.trace_stop"() : () -> ()
    %54 = tpu.concatenate %29, %53 in 2 : vector<8x3x32xf32>, vector<8x3x32xf32> -> vector<8x3x64xf32>
    %55 = vector.shape_cast %54 : vector<8x3x64xf32> to vector<24x64xf32>
    %56 = arith.truncf %55 : vector<24x64xf32> to vector<24x64xbf16>
    %c0_15 = arith.constant 0 : index
    %c0_16 = arith.constant 0 : index
    %57 = vector.load %arg3[%c0_15, %c0_16] : memref<64x32xbf16, #tpu.memory_space<vmem>>, vector<64x32xbf16>
    %cst_17 = arith.constant dense<0.000000e+00> : vector<24x32xf32>
    %58 = tpu.matmul %56, %57, %cst_17 {dimension_numbers = #tpu.dot_dimension_numbers<[1], [0], [0], [1], [0, 0, 1, 1], [], []>} : vector<24x64xbf16>, vector<64x32xbf16>, vector<24x32xf32> -> vector<24x32xf32>
    %c0_18 = arith.constant 0 : index
    %c0_19 = arith.constant 0 : index
    %59 = vector.load %arg4[%c0_18, %c0_19] : memref<1x32xf32, #tpu.memory_space<vmem>>, vector<1x32xf32>
    %60 = vector.broadcast %59 : vector<1x32xf32> to vector<24x32xf32>
    %61 = arith.addf %58, %60 : vector<24x32xf32>
    %62 = arith.addf %61, %2 : vector<24x32xf32>
    %c0_20 = arith.constant 0 : index
    %c0_21 = arith.constant 0 : index
    %63 = vector.load %arg5[%c0_20, %c0_21] : memref<1x32xf32, #tpu.memory_space<vmem>>, vector<1x32xf32>
    %c0_22 = arith.constant 0 : index
    %c0_23 = arith.constant 0 : index
    %64 = vector.load %arg6[%c0_22, %c0_23] : memref<1x32xf32, #tpu.memory_space<vmem>>, vector<1x32xf32>
    %cst_24 = arith.constant dense<0.000000e+00> : vector<24xf32>
    %65 = vector.multi_reduction <add>, %62, %cst_24 [1] : vector<24x32xf32> to vector<24xf32>
    %66 = vector.shape_cast %65 : vector<24xf32> to vector<24x1xf32>
    %cst_25 = arith.constant 3.200000e+01 : f32
    %67 = vector.broadcast %cst_25 : f32 to vector<24x1xf32>
    %68 = arith.divf %66, %67 : vector<24x1xf32>
    %69 = vector.broadcast %68 : vector<24x1xf32> to vector<24x32xf32>
    %70 = arith.subf %62, %69 : vector<24x32xf32>
    %71 = arith.mulf %70, %70 : vector<24x32xf32>
    %cst_26 = arith.constant dense<0.000000e+00> : vector<24xf32>
    %72 = vector.multi_reduction <add>, %71, %cst_26 [1] : vector<24x32xf32> to vector<24xf32>
    %73 = vector.shape_cast %72 : vector<24xf32> to vector<24x1xf32>
    %cst_27 = arith.constant 3.200000e+01 : f32
    %74 = vector.broadcast %cst_27 : f32 to vector<24x1xf32>
    %75 = arith.divf %73, %74 : vector<24x1xf32>
    %76 = vector.broadcast %68 : vector<24x1xf32> to vector<24x32xf32>
    %77 = arith.subf %62, %76 : vector<24x32xf32>
    %cst_28 = arith.constant 9.99999974E-6 : f32
    %78 = vector.broadcast %cst_28 : f32 to vector<24x1xf32>
    %79 = arith.addf %75, %78 : vector<24x1xf32>
    %80 = math.rsqrt %79 : vector<24x1xf32>
    %81 = vector.broadcast %80 : vector<24x1xf32> to vector<24x32xf32>
    %82 = arith.mulf %77, %81 : vector<24x32xf32>
    %83 = vector.broadcast %63 : vector<1x32xf32> to vector<24x32xf32>
    %84 = arith.mulf %82, %83 : vector<24x32xf32>
    %85 = vector.broadcast %64 : vector<1x32xf32> to vector<24x32xf32>
    %86 = arith.addf %84, %85 : vector<24x32xf32>
    %87 = arith.truncf %86 : vector<24x32xf32> to vector<24x32xbf16>
    %c0_29 = arith.constant 0 : index
    %c0_30 = arith.constant 0 : index
    %88 = vector.load %arg7[%c0_29, %c0_30] : memref<32x128xbf16, #tpu.memory_space<vmem>>, vector<32x128xbf16>
    %cst_31 = arith.constant dense<0.000000e+00> : vector<24x128xf32>
    %89 = tpu.matmul %87, %88, %cst_31 {dimension_numbers = #tpu.dot_dimension_numbers<[1], [0], [0], [1], [0, 0, 1, 1], [], []>} : vector<24x32xbf16>, vector<32x128xbf16>, vector<24x128xf32> -> vector<24x128xf32>
    %c0_32 = arith.constant 0 : index
    %c0_33 = arith.constant 0 : index
    %90 = vector.load %arg8[%c0_32, %c0_33] : memref<1x128xf32, #tpu.memory_space<vmem>>, vector<1x128xf32>
    %91 = vector.broadcast %90 : vector<1x128xf32> to vector<24x128xf32>
    %92 = arith.addf %89, %91 : vector<24x128xf32>
    %cst_34 = arith.constant 0.000000e+00 : f32
    %93 = vector.broadcast %cst_34 : f32 to vector<24x128xf32>
    %94 = arith.maximumf %92, %93 : vector<24x128xf32>
    %95 = arith.truncf %94 : vector<24x128xf32> to vector<24x128xbf16>
    %c0_35 = arith.constant 0 : index
    %c0_36 = arith.constant 0 : index
    %96 = vector.load %arg9[%c0_35, %c0_36] : memref<128x32xbf16, #tpu.memory_space<vmem>>, vector<128x32xbf16>
    %cst_37 = arith.constant dense<0.000000e+00> : vector<24x32xf32>
    %97 = tpu.matmul %95, %96, %cst_37 {dimension_numbers = #tpu.dot_dimension_numbers<[1], [0], [0], [1], [0, 0, 1, 1], [], []>} : vector<24x128xbf16>, vector<128x32xbf16>, vector<24x32xf32> -> vector<24x32xf32>
    %c0_38 = arith.constant 0 : index
    %c0_39 = arith.constant 0 : index
    %98 = vector.load %arg10[%c0_38, %c0_39] : memref<1x32xf32, #tpu.memory_space<vmem>>, vector<1x32xf32>
    %99 = vector.broadcast %98 : vector<1x32xf32> to vector<24x32xf32>
    %100 = arith.addf %97, %99 : vector<24x32xf32>
    %101 = arith.addf %100, %86 : vector<24x32xf32>
    %c0_40 = arith.constant 0 : index
    %c0_41 = arith.constant 0 : index
    %102 = vector.load %arg11[%c0_40, %c0_41] : memref<1x32xf32, #tpu.memory_space<vmem>>, vector<1x32xf32>
    %c0_42 = arith.constant 0 : index
    %c0_43 = arith.constant 0 : index
    %103 = vector.load %arg12[%c0_42, %c0_43] : memref<1x32xf32, #tpu.memory_space<vmem>>, vector<1x32xf32>
    %cst_44 = arith.constant dense<0.000000e+00> : vector<24xf32>
    %104 = vector.multi_reduction <add>, %101, %cst_44 [1] : vector<24x32xf32> to vector<24xf32>
    %105 = vector.shape_cast %104 : vector<24xf32> to vector<24x1xf32>
    %cst_45 = arith.constant 3.200000e+01 : f32
    %106 = vector.broadcast %cst_45 : f32 to vector<24x1xf32>
    %107 = arith.divf %105, %106 : vector<24x1xf32>
    %108 = vector.broadcast %107 : vector<24x1xf32> to vector<24x32xf32>
    %109 = arith.subf %101, %108 : vector<24x32xf32>
    %110 = arith.mulf %109, %109 : vector<24x32xf32>
    %cst_46 = arith.constant dense<0.000000e+00> : vector<24xf32>
    %111 = vector.multi_reduction <add>, %110, %cst_46 [1] : vector<24x32xf32> to vector<24xf32>
    %112 = vector.shape_cast %111 : vector<24xf32> to vector<24x1xf32>
    %cst_47 = arith.constant 3.200000e+01 : f32
    %113 = vector.broadcast %cst_47 : f32 to vector<24x1xf32>
    %114 = arith.divf %112, %113 : vector<24x1xf32>
    %115 = vector.broadcast %107 : vector<24x1xf32> to vector<24x32xf32>
    %116 = arith.subf %101, %115 : vector<24x32xf32>
    %cst_48 = arith.constant 9.99999974E-6 : f32
    %117 = vector.broadcast %cst_48 : f32 to vector<24x1xf32>
    %118 = arith.addf %114, %117 : vector<24x1xf32>
    %119 = math.rsqrt %118 : vector<24x1xf32>
    %120 = vector.broadcast %119 : vector<24x1xf32> to vector<24x32xf32>
    %121 = arith.mulf %116, %120 : vector<24x32xf32>
    %122 = vector.broadcast %102 : vector<1x32xf32> to vector<24x32xf32>
    %123 = arith.mulf %121, %122 : vector<24x32xf32>
    %124 = vector.broadcast %103 : vector<1x32xf32> to vector<24x32xf32>
    %125 = arith.addf %123, %124 : vector<24x32xf32>
    %126 = vector.shape_cast %125 : vector<24x32xf32> to vector<8x3x32xf32>
    %c0_49 = arith.constant 0 : index
    %c0_50 = arith.constant 0 : index
    %c0_51 = arith.constant 0 : index
    %c0_52 = arith.constant 0 : index
    %127 = vector.load %arg13[%c0_49, %c0_50, %c0_51, %c0_52] : memref<1x8x3x32xf32, #tpu.memory_space<vmem>>, vector<1x8x3x32xf32>
    %128 = vector.shape_cast %127 : vector<1x8x3x32xf32> to vector<8x3x32xf32>
    %129 = vector.shape_cast %126 : vector<8x3x32xf32> to vector<1x8x3x32xf32>
    tpu.vector_store %arg13[%c0_49, %c0_50, %c0_51, %c0_52], %129 {strides = array<i32>} : memref<1x8x3x32xf32, #tpu.memory_space<vmem>>, vector<1x8x3x32xf32>,
    return
  }
  func.func @transform_0(%arg0: i32) -> (i32, i32, i32, i32) {
    %c0_i32 = arith.constant 0 : i32
    %c0_i32_0 = arith.constant 0 : i32
    %c0_i32_1 = arith.constant 0 : i32
    %c0_i32_2 = arith.constant 0 : i32
    return %arg0, %c0_i32, %c0_i32_0, %c0_i32_1 : i32, i32, i32, i32
  }
  func.func @transform_1(%arg0: i32) -> (i32, i32) {
    %c0_i32 = arith.constant 0 : i32
    %c0_i32_0 = arith.constant 0 : i32
    %c0_i32_1 = arith.constant 0 : i32
    return %c0_i32, %c0_i32_0 : i32, i32
  }
  func.func @transform_2(%arg0: i32) -> (i32, i32) {
    %c0_i32 = arith.constant 0 : i32
    %c0_i32_0 = arith.constant 0 : i32
    %c0_i32_1 = arith.constant 0 : i32
    return %c0_i32, %c0_i32_0 : i32, i32
  }
  func.func @transform_3(%arg0: i32) -> (i32, i32) {
    %c0_i32 = arith.constant 0 : i32
    %c0_i32_0 = arith.constant 0 : i32
    %c0_i32_1 = arith.constant 0 : i32
    return %c0_i32, %c0_i32_0 : i32, i32
  }
  func.func @transform_4(%arg0: i32) -> (i32, i32) {
    %c0_i32 = arith.constant 0 : i32
    %c0_i32_0 = arith.constant 0 : i32
    %c0_i32_1 = arith.constant 0 : i32
    return %c0_i32, %c0_i32_0 : i32, i32
  }
  func.func @transform_5(%arg0: i32) -> (i32, i32) {
    %c0_i32 = arith.constant 0 : i32
    %c0_i32_0 = arith.constant 0 : i32
    %c0_i32_1 = arith.constant 0 : i32
    return %c0_i32, %c0_i32_0 : i32, i32
  }
  func.func @transform_6(%arg0: i32) -> (i32, i32) {
    %c0_i32 = arith.constant 0 : i32
    %c0_i32_0 = arith.constant 0 : i32
    %c0_i32_1 = arith.constant 0 : i32
    return %c0_i32, %c0_i32_0 : i32, i32
  }
  func.func @transform_7(%arg0: i32) -> (i32, i32) {
    %c0_i32 = arith.constant 0 : i32
    %c0_i32_0 = arith.constant 0 : i32
    %c0_i32_1 = arith.constant 0 : i32
    return %c0_i32, %c0_i32_0 : i32, i32
  }
  func.func @transform_8(%arg0: i32) -> (i32, i32) {
    %c0_i32 = arith.constant 0 : i32
    %c0_i32_0 = arith.constant 0 : i32
    %c0_i32_1 = arith.constant 0 : i32
    return %c0_i32, %c0_i32_0 : i32, i32
  }
  func.func @transform_9(%arg0: i32) -> (i32, i32) {
    %c0_i32 = arith.constant 0 : i32
    %c0_i32_0 = arith.constant 0 : i32
    %c0_i32_1 = arith.constant 0 : i32
    return %c0_i32, %c0_i32_0 : i32, i32
  }
  func.func @transform_10(%arg0: i32) -> (i32, i32) {
    %c0_i32 = arith.constant 0 : i32
    %c0_i32_0 = arith.constant 0 : i32
    %c0_i32_1 = arith.constant 0 : i32
    return %c0_i32, %c0_i32_0 : i32, i32
  }
  func.func @transform_11(%arg0: i32) -> (i32, i32) {
    %c0_i32 = arith.constant 0 : i32
    %c0_i32_0 = arith.constant 0 : i32
    %c0_i32_1 = arith.constant 0 : i32
    return %c0_i32, %c0_i32_0 : i32, i32
  }
  func.func @transform_12(%arg0: i32) -> (i32, i32, i32, i32) {
    %c0_i32 = arith.constant 0 : i32
    %c0_i32_0 = arith.constant 0 : i32
    %c0_i32_1 = arith.constant 0 : i32
    %c0_i32_2 = arith.constant 0 : i32
    return %arg0, %c0_i32, %c0_i32_0, %c0_i32_1 : i32, i32, i32, i32
  }
}

module attributes {stable_mosaic.version = 11 : i64} {
  func.func @_tail_kernel(%arg0: i32, %arg1: memref<2x3x8x32xf32, #tpu.memory_space<vmem>>, %arg2: memref<32x50xf32, #tpu.memory_space<vmem>>, %arg3: memref<1x50xf32, #tpu.memory_space<vmem>>, %arg4: memref<1x50xf32, #tpu.memory_space<vmem>>, %arg5: memref<1x1xf32, #tpu.memory_space<vmem>>, %arg6: memref<2x8xf32, #tpu.memory_space<vmem>>) attributes {dimension_semantics = [#tpu.dimension_semantics<arbitrary>], iteration_bounds = array<i64: 1>, scalar_prefetch = 0 : i64, scratch_operands = 0 : i64, tpu.core_type = #tpu.core_type<tc>, window_params = [{pipeline_mode = #tpu.pipeline_mode<synchronous>, transform_indices = @transform_0, window_bounds = array<i64: 2, 3, 8, 32>}, {pipeline_mode = #tpu.pipeline_mode<synchronous>, transform_indices = @transform_1, window_bounds = array<i64: 32, 50>}, {pipeline_mode = #tpu.pipeline_mode<synchronous>, transform_indices = @transform_2, window_bounds = array<i64: 1, 50>}, {pipeline_mode = #tpu.pipeline_mode<synchronous>, transform_indices = @transform_3, window_bounds = array<i64: 1, 50>}, {pipeline_mode = #tpu.pipeline_mode<synchronous>, transform_indices = @transform_4, window_bounds = array<i64: 1, 1>}, {pipeline_mode = #tpu.pipeline_mode<synchronous>, transform_indices = @transform_5, window_bounds = array<i64: 2, 8>}]} {
    %c0 = arith.constant 0 : index
    %c0_0 = arith.constant 0 : index
    %c0_1 = arith.constant 0 : index
    %c0_2 = arith.constant 0 : index
    %0 = vector.load %arg1[%c0, %c0_0, %c0_1, %c0_2] : memref<2x3x8x32xf32, #tpu.memory_space<vmem>>, vector<2x3x8x32xf32>
    %1 = vector.shape_cast %0 : vector<2x3x8x32xf32> to vector<48x32xf32>
    %c0_3 = arith.constant 0 : index
    %c0_4 = arith.constant 0 : index
    %2 = vector.load %arg2[%c0_3, %c0_4] : memref<32x50xf32, #tpu.memory_space<vmem>>, vector<32x50xf32>
    %cst = arith.constant dense<0.000000e+00> : vector<48x50xf32>
    %3 = tpu.matmul %1, %2, %cst {dimension_numbers = #tpu.dot_dimension_numbers<[1], [0], [0], [1], [0, 0, 1, 1], [], []>} : vector<48x32xf32>, vector<32x50xf32>, vector<48x50xf32> -> vector<48x50xf32>
    %c0_5 = arith.constant 0 : index
    %c0_6 = arith.constant 0 : index
    %4 = vector.load %arg3[%c0_5, %c0_6] : memref<1x50xf32, #tpu.memory_space<vmem>>, vector<1x50xf32>
    %5 = vector.broadcast %4 : vector<1x50xf32> to vector<48x50xf32>
    %6 = arith.addf %3, %5 : vector<48x50xf32>
    %7 = vector.shape_cast %6 : vector<48x50xf32> to vector<2x3x8x50xf32>
    %8 = vector.extract_strided_slice %7 {offsets = [0, 0, 0, 0], sizes = [2, 1, 8, 50], strides = [1, 1, 1, 1]} : vector<2x3x8x50xf32> to vector<2x1x8x50xf32>
    %9 = vector.shape_cast %8 : vector<2x1x8x50xf32> to vector<2x8x50xf32>
    %10 = vector.extract_strided_slice %7 {offsets = [0, 1, 0, 0], sizes = [2, 1, 8, 50], strides = [1, 1, 1, 1]} : vector<2x3x8x50xf32> to vector<2x1x8x50xf32>
    %11 = vector.shape_cast %10 : vector<2x1x8x50xf32> to vector<2x8x50xf32>
    %12 = arith.addf %9, %11 : vector<2x8x50xf32>
    %13 = vector.extract_strided_slice %7 {offsets = [0, 2, 0, 0], sizes = [2, 1, 8, 50], strides = [1, 1, 1, 1]} : vector<2x3x8x50xf32> to vector<2x1x8x50xf32>
    %14 = vector.shape_cast %13 : vector<2x1x8x50xf32> to vector<2x8x50xf32>
    %15 = arith.addf %12, %14 : vector<2x8x50xf32>
    %c0_7 = arith.constant 0 : index
    %c0_8 = arith.constant 0 : index
    %16 = vector.load %arg4[%c0_7, %c0_8] : memref<1x50xf32, #tpu.memory_space<vmem>>, vector<1x50xf32>
    %17 = vector.shape_cast %16 : vector<1x50xf32> to vector<1x1x50xf32>
    %18 = vector.broadcast %17 : vector<1x1x50xf32> to vector<2x8x50xf32>
    %19 = arith.mulf %15, %18 : vector<2x8x50xf32>
    %cst_9 = arith.constant dense<0.000000e+00> : vector<2x8xf32>
    %20 = vector.multi_reduction <add>, %19, %cst_9 [2] : vector<2x8x50xf32> to vector<2x8xf32>
    %c0_10 = arith.constant 0 : index
    %c0_11 = arith.constant 0 : index
    %21 = vector.load %arg5[%c0_10, %c0_11] : memref<1x1xf32, #tpu.memory_space<vmem>>, vector<1x1xf32>
    %22 = vector.broadcast %21 : vector<1x1xf32> to vector<2x8xf32>
    %23 = arith.addf %20, %22 : vector<2x8xf32>
    %c0_12 = arith.constant 0 : index
    %c0_13 = arith.constant 0 : index
    %24 = vector.load %arg6[%c0_12, %c0_13] : memref<2x8xf32, #tpu.memory_space<vmem>>, vector<2x8xf32>
    tpu.vector_store %arg6[%c0_12, %c0_13], %23 {strides = array<i32>} : memref<2x8xf32, #tpu.memory_space<vmem>>, vector<2x8xf32>,
    return
  }
  func.func @transform_0(%arg0: i32) -> (i32, i32, i32, i32) {
    %c0_i32 = arith.constant 0 : i32
    %c0_i32_0 = arith.constant 0 : i32
    %c0_i32_1 = arith.constant 0 : i32
    %c0_i32_2 = arith.constant 0 : i32
    %c0_i32_3 = arith.constant 0 : i32
    return %c0_i32, %c0_i32_0, %c0_i32_1, %c0_i32_2 : i32, i32, i32, i32
  }
  func.func @transform_1(%arg0: i32) -> (i32, i32) {
    %c0_i32 = arith.constant 0 : i32
    %c0_i32_0 = arith.constant 0 : i32
    %c0_i32_1 = arith.constant 0 : i32
    return %c0_i32, %c0_i32_0 : i32, i32
  }
  func.func @transform_2(%arg0: i32) -> (i32, i32) {
    %c0_i32 = arith.constant 0 : i32
    %c0_i32_0 = arith.constant 0 : i32
    %c0_i32_1 = arith.constant 0 : i32
    return %c0_i32, %c0_i32_0 : i32, i32
  }
  func.func @transform_3(%arg0: i32) -> (i32, i32) {
    %c0_i32 = arith.constant 0 : i32
    %c0_i32_0 = arith.constant 0 : i32
    %c0_i32_1 = arith.constant 0 : i32
    return %c0_i32, %c0_i32_0 : i32, i32
  }
  func.func @transform_4(%arg0: i32) -> (i32, i32) {
    %c0_i32 = arith.constant 0 : i32
    %c0_i32_0 = arith.constant 0 : i32
    %c0_i32_1 = arith.constant 0 : i32
    return %c0_i32, %c0_i32_0 : i32, i32
  }
  func.func @transform_5(%arg0: i32) -> (i32, i32) {
    %c0_i32 = arith.constant 0 : i32
    %c0_i32_0 = arith.constant 0 : i32
    %c0_i32_1 = arith.constant 0 : i32
    return %c0_i32, %c0_i32_0 : i32, i32
  }
}

</mosaic_0001>

<llo_original>
// kernel: time_agent_transformer_forward.6
$region0: #{time_agent_transformer_forward.6}
  #allocation0 [shape = 'u32[]', space=smem, size = 0x4, offset = 0x4, fixed_abs, tag = 'smem constant byte address 0x4 - core index']
  #allocation1 [shape = 'u32[144,128]{1,0:T(1,128)}', space=vmem, size = 0x12000, scoped, tag = 'internal scratch']
  %s0 = inlined_call_operand.vmem [shape: f32[2,3,8,32], index: 0, kind: input, shape index: {}]
  %s1 = inlined_call_operand.vmem [shape: bf16[32,32], index: 1, kind: input, shape index: {}]
  %s2 = inlined_call_operand.vmem [shape: f32[1,32], index: 2, kind: input, shape index: {}]
  %s3 = inlined_call_operand.vmem [shape: f32[8,32], index: 3, kind: input, shape index: {}]
  %s4 = inlined_call_operand.vmem [shape: f32[2,3,8,32], index: 4, kind: output, shape index: {}]
  %s5 = sld [smem:[#allocation0]]
  $region49: #{time_agent_transformer_forward.6} parent=0
    _
  %s7 = ssub.s32 1, %s5
  %s8 = scalar_select 0, %s7, %s5
  loop: start=0, step=1, limit=4
  $region2: #{time_agent_transformer_forward.6} parent=0 // loop_pre_header
    _
  $region3: #{time_agent_transformer_forward.6} parent=0 // loop_header
    %s10 = sphi 0, %s14
    %p11 = scmp.ge.s32.totalorder %s10, 4
    %s20 = sphi 0, %s22
    %s23 = sphi 0, %s20
    %s24 = sphi 0, %s23
    %s40 = sphi 0, %s24
    %s44 = sphi 0, %s44
    %s46 = sphi 0, %s44
    %s47 = sphi 0, %s46
    %s61 = sphi 0, %s47
    %s65 = sphi 0, %s65
    %s67 = sphi 0, %s65
    %s68 = sphi 0, %s67
    %s82 = sphi 0, %s68
    %s86 = sphi 0, %s86
    %s88 = sphi 0, %s86
    %s89 = sphi 0, %s88
    %s103 = sphi 0, %s89
    %s109 = sphi 0, %s111
    %s112 = sphi 0, %s109
    %s113 = sphi 0, %s112
    %s129 = sphi 0, %s113
  $region4: #{time_agent_transformer_forward.6} parent=0 // loop_header_branch
    %13 = sbr.rel (%p11) target = $region8
  $region5: #{time_agent_transformer_forward.6} parent=0 // loop_body
    %s15 = ssub.s32 %s10, 1
    %s16 = ssub.s32 %s10, 2
    %s17 = sadd.s32 %s10, 1
    %s18 = ssub.s32 %s10, %s17
    %p19 = scmp.eq.s32.totalorder %s18, 0
    %s21 = sadd.s32 %s20, 1
    %s22 = scalar_select %p19, %s20, %s21
    %p25 = pneg %p19
    %p26 = scmp.eq.s32.totalorder %s10, 1
    %p27 = por %p25, %p26
    %p28 = scmp.ne.s32.totalorder %s20, %s23
    %p29 = scmp.eq.s32.totalorder %s10, 0
    %p30 = por %p28, %p29
    %p31 = scmp.ne.s32.totalorder %s20, %s23
    %p32 = scmp.eq.s32.totalorder %s15, 1
    %p33 = por %p31, %p32
    %p34 = scmp.ne.s32.totalorder %s23, %s24
    %p35 = scmp.eq.s32.totalorder %s15, 0
    %p36 = por %p34, %p35
    %p37 = scmp.ne.s32.totalorder %s23, %s24
    %p38 = scmp.eq.s32.totalorder %s16, 1
    %p39 = por %p37, %p38
    %p41 = scmp.ne.s32.totalorder %s24, %s40
    %p42 = scmp.eq.s32.totalorder %s16, 0
    %p43 = por %p41, %p42
    %s45 = sadd.s32 %s44, 1
    %p48 = scmp.eq.s32.totalorder %s10, 1
    %p49 = scmp.ne.s32.totalorder %s44, %s46
    %p50 = scmp.eq.s32.totalorder %s10, 0
    %p51 = por %p49, %p50
    %p52 = scmp.ne.s32.totalorder %s44, %s46
    %p53 = scmp.eq.s32.totalorder %s15, 1
    %p54 = por %p52, %p53
    %p55 = scmp.ne.s32.totalorder %s46, %s47
    %p56 = scmp.eq.s32.totalorder %s15, 0
    %p57 = por %p55, %p56
    %p58 = scmp.ne.s32.totalorder %s46, %s47
    %p59 = scmp.eq.s32.totalorder %s16, 1
    %p60 = por %p58, %p59
    %p62 = scmp.ne.s32.totalorder %s47, %s61
    %p63 = scmp.eq.s32.totalorder %s16, 0
    %p64 = por %p62, %p63
    %s66 = sadd.s32 %s65, 1
    %p69 = scmp.eq.s32.totalorder %s10, 1
    %p70 = scmp.ne.s32.totalorder %s65, %s67
    %p71 = scmp.eq.s32.totalorder %s10, 0
    %p72 = por %p70, %p71
    %p73 = scmp.ne.s32.totalorder %s65, %s67
    %p74 = scmp.eq.s32.totalorder %s15, 1
    %p75 = por %p73, %p74
    %p76 = scmp.ne.s32.totalorder %s67, %s68
    %p77 = scmp.eq.s32.totalorder %s15, 0
    %p78 = por %p76, %p77
    %p79 = scmp.ne.s32.totalorder %s67, %s68
    %p80 = scmp.eq.s32.totalorder %s16, 1
    %p81 = por %p79, %p80
    %p83 = scmp.ne.s32.totalorder %s68, %s82
    %p84 = scmp.eq.s32.totalorder %s16, 0
    %p85 = por %p83, %p84
    %s87 = sadd.s32 %s86, 1
    %p90 = scmp.eq.s32.totalorder %s10, 1
    %p91 = scmp.ne.s32.totalorder %s86, %s88
    %p92 = scmp.eq.s32.totalorder %s10, 0
    %p93 = por %p91, %p92
    %p94 = scmp.ne.s32.totalorder %s86, %s88
    %p95 = scmp.eq.s32.totalorder %s15, 1
    %p96 = por %p94, %p95
    %p97 = scmp.ne.s32.totalorder %s88, %s89
    %p98 = scmp.eq.s32.totalorder %s15, 0
    %p99 = por %p97, %p98
    %p100 = scmp.ne.s32.totalorder %s88, %s89
    %p101 = scmp.eq.s32.totalorder %s16, 1
    %p102 = por %p100, %p101
    %p104 = scmp.ne.s32.totalorder %s89, %s103
    %p105 = scmp.eq.s32.totalorder %s16, 0
    %p106 = por %p104, %p105
    %s107 = ssub.s32 %s10, %s17
    %p108 = scmp.eq.s32.totalorder %s107, 0
    %s110 = sadd.s32 %s109, 1
    %s111 = scalar_select %p108, %s109, %s110
    %p114 = pneg %p108
    %p115 = scmp.eq.s32.totalorder %s10, 1
    %p116 = por %p114, %p115
    %p117 = scmp.ne.s32.totalorder %s109, %s112
    %p118 = scmp.eq.s32.totalorder %s10, 0
    %p119 = por %p117, %p118
    %p120 = scmp.ne.s32.totalorder %s109, %s112
    %p121 = scmp.eq.s32.totalorder %s15, 1
    %p122 = por %p120, %p121
    %p123 = scmp.ne.s32.totalorder %s112, %s113
    %p124 = scmp.eq.s32.totalorder %s15, 0
    %p125 = por %p123, %p124
    %p126 = scmp.ne.s32.totalorder %s112, %s113
    %p127 = scmp.eq.s32.totalorder %s16, 1
    %p128 = por %p126, %p127
    %p130 = scmp.ne.s32.totalorder %s113, %s129
    %p131 = scmp.eq.s32.totalorder %s16, 0
    %p132 = por %p130, %p131
    %p133 = scmp.le.s32.totalorder 1, %s10
    %p134 = scmp.lt.s32.totalorder %s10, 3
    %p135 = pnand %p133, %p134
    %p136 = pneg %p135
    // Predicated region
    $region9: #{time_agent_transformer_forward.6} parent=5 // pred_check
      _
    $region10: #{time_agent_transformer_forward.6} parent=5 // pred_check_branch
      %138 = sbr.rel (%p135) target = $region12
    $region11: #{time_agent_transformer_forward.6} parent=5 // pred_region
      %s139 = ssub.s32 %s10, 1
      // Predicated region
      $region13: #{time_agent_transformer_forward.6} parent=11 // pred_check
        %p140 = pneg %p57
      $region14: #{time_agent_transformer_forward.6} parent=11 // pred_check_branch
        %142 = sbr.rel (%p140) target = $region16
      $region15: #{time_agent_transformer_forward.6} parent=11 // pred_region
        _
      $region16: #{time_agent_transformer_forward.6} parent=11 // pred_fallthru
        _
      // Predicated region
      $region17: #{time_agent_transformer_forward.6} parent=11 // pred_check
        %p143 = pneg %p78
      $region18: #{time_agent_transformer_forward.6} parent=11 // pred_check_branch
        %145 = sbr.rel (%p143) target = $region20
      $region19: #{time_agent_transformer_forward.6} parent=11 // pred_region
        _
      $region20: #{time_agent_transformer_forward.6} parent=11 // pred_fallthru
        _
      // Predicated region
      $region21: #{time_agent_transformer_forward.6} parent=11 // pred_check
        %p146 = pneg %p99
      $region22: #{time_agent_transformer_forward.6} parent=11 // pred_check_branch
        %148 = sbr.rel (%p146) target = $region24
      $region23: #{time_agent_transformer_forward.6} parent=11 // pred_region
        _
      $region24: #{time_agent_transformer_forward.6} parent=11 // pred_fallthru
        _
    $region12: #{time_agent_transformer_forward.6} parent=5 // pred_fallthru
      _
    %p149 = scmp.lt.s32.totalorder %s10, 2
    // Predicated region
    $region25: #{time_agent_transformer_forward.6} parent=5 // pred_check
      %p150 = pneg %p149
    $region26: #{time_agent_transformer_forward.6} parent=5 // pred_check_branch
      %152 = sbr.rel (%p150) target = $region28
    $region27: #{time_agent_transformer_forward.6} parent=5 // pred_region
      // Predicated region
      $region29: #{time_agent_transformer_forward.6} parent=27 // pred_check
        %p153 = pneg %p30
      $region30: #{time_agent_transformer_forward.6} parent=27 // pred_check_branch
        %155 = sbr.rel (%p153) target = $region32
      $region31: #{time_agent_transformer_forward.6} parent=27 // pred_region
        %p156 = scmp.lt.s32.totalorder %s10, 1
        %s157 = scalar_select %p156, %s10, 1
        %s158 = smul.addr %s157, 3
        %s159 = smul.addr %s158, 8
        %s160 = scalar_lea.vmem %s0, %s159
      $region32: #{time_agent_transformer_forward.6} parent=27 // pred_fallthru
        _
    $region28: #{time_agent_transformer_forward.6} parent=5 // pred_fallthru
      _
    %p161 = scmp.le.s32.totalorder 1, %s10
    %p162 = scmp.lt.s32.totalorder %s10, 3
    %p163 = pnand %p161, %p162
    %p164 = pneg %p163
    // Predicated region
    $region33: #{time_agent_transformer_forward.6} parent=5 // pred_check
      _
    $region34: #{time_agent_transformer_forward.6} parent=5 // pred_check_branch
      %166 = sbr.rel (%p163) target = $region36
    $region35: #{time_agent_transformer_forward.6} parent=5 // pred_region
      %s167 = ssub.s32 %s10, 1
      %p168 = scmp.lt.s32.totalorder %s15, 1
      %s169 = scalar_select %p168, %s15, 1
      %s170 = smul.addr %s169, 3
      %s171 = smul.addr %s170, 8
      %s172 = scalar_lea.vmem %s0, %s171
      %p173 = pneg %p36
      %p174 = pneg %p33
      %p175 = pneg %p57
      %p176 = pneg %p54
      %p177 = pneg %p78
      %p178 = pneg %p75
      %p179 = pneg %p99
      %p180 = pneg %p96
      %p181 = pneg %p125
      %p182 = pneg %p122
      %p183 = scmp.lt.s32.totalorder %s15, 1
      %s184 = scalar_select %p183, %s15, 1
      %s185 = smul.addr %s184, 3
      %s186 = smul.addr %s185, 8
      %s187 = scalar_lea.vmem %s4, %s186
      %p188 = scmp.lt.s32.totalorder %s15, 1
      %s189 = scalar_select %p188, %s15, 1
      %s190 = smul.addr %s189, 3
      %s191 = smul.addr %s190, 8
      %s192 = scalar_lea.vmem %s0, %s191
      %p193 = scmp.lt.s32.totalorder %s15, 1
      %s194 = scalar_select %p193, %s15, 1
      %s195 = smul.addr %s194, 3
      %s196 = smul.addr %s195, 8
      %s197 = scalar_lea.vmem %s4, %s196
      %v199 = vld [vmem:[%s192] sm:$0xff]
      %v200 = vld [vmem:[%s192 + $0x8] sm:$0xff]
      %v201 = vld [vmem:[%s192 + $0x10] sm:$0xff]
      %v202 = vpack.c.bf16 %v200, %v199
      %v203 = vpack.c.bf16 %v201, %v201
      %v204 = vld [vmem:[%s1] sm:$0xf]
      %v205 = vld [vmem:[%s1 + $0x4] sm:$0xf]
      %v206 = vld [vmem:[%s1 + $0x8] sm:$0xf]
      %v207 = vld [vmem:[%s1 + $0xc] sm:$0xf]
      %v208 = vld [vmem:[%s2] sm:$0x1]
      %v210 = vlaneseq
      %v211 = vshrl.u32 %v210, 7
      %v212 = vsub.s32 0, %v211
      %v213 = vrot.slane %v208, %v212
      %v219 = vunpack.c.l.b16 %v204
      %v220 = vunpack.c.l.b16 %v205
      %v221 = vunpack.c.l.b16 %v206
      %v222 = vunpack.c.l.b16 %v207
      %v223 = vpack.c.b16 %v220, %v219
      %v224 = vpack.c.b16 %v222, %v221
      %vm227 = vcmask 261120
      %v229 = vsel %vm227, %v202, 0
      %v232 = vsel %vm227, %v203, 0
      %234 = vmatprep.subr.bf16.mxu0 0
      %235 = vmatpush1.bf16.msra.mxu0 0
      %236 = vmatprep.subr.bf16.mxu0 0
      %237 = vmatpush1.bf16.msra.mxu0 0
      %238 = vmatprep.subr.bf16.mxu0 0
      %239 = vmatpush1.bf16.msra.mxu0 0
      %240 = vmatprep.subr.bf16.mxu0 0
      %241 = vmatpush1.bf16.msra.mxu0 0
      %242 = vmatprep.subr.bf16.mxu0 0
      %243 = vmatpush1.bf16.msra.mxu0 0
      %244 = vmatprep.subr.bf16.mxu0 0
      %245 = vmatpush1.bf16.msra.mxu0 0
      %246 = vmatprep.subr.bf16.mxu0 0
      %247 = vmatpush1.bf16.msra.mxu0 %v224
      %248 = vmatprep.subr.bf16.mxu0 0
      %249 = vmatpush1.bf16.msra.mxu0 %v223
      %250 = vmatprep.subr.bf16.mxu0 0
      %251 = vmatpush2.bf16.msra.mxu0 0
      %252 = vmatprep.subr.bf16.mxu0 0
      %253 = vmatpush2.bf16.msra.mxu0 0
      %254 = vmatprep.subr.bf16.mxu0 0
      %255 = vmatpush2.bf16.msra.mxu0 0
      %256 = vmatprep.subr.bf16.mxu0 0
      %257 = vmatpush2.bf16.msra.mxu0 0
      %258 = vmatprep.subr.bf16.mxu0 0
      %259 = vmatpush2.bf16.msra.mxu0 0
      %260 = vmatprep.subr.bf16.mxu0 0
      %261 = vmatpush2.bf16.msra.mxu0 0
      %262 = vmatprep.subr.bf16.mxu0 0
      %263 = vmatpush2.bf16.msra.mxu0 0
      %264 = vmatprep.subr.bf16.mxu0 0
      %265 = vmatpush2.bf16.msra.mxu0 0
      %266 = vmatprep.mubr.bf16.mxu0 0
      %267 = vmatmul.mubr.bf16.gmra.mxu0 %v229
      %v268 = vpop.f32.mrf.mxu0
      %v269 = vadd.f32 %v213, %v268
      %v270 = vpop.f32.mrf.mxu0
      %v271 = vpop.f32.mrf.mxu0
      %v272 = vadd.f32 %v213, %v271
      %v273 = vpop.f32.mrf.mxu0
      %274 = vmatprep.mubr.bf16.mxu0 0
      %275 = vmatmul.mubr.bf16.gmra.mxu0 %v232
      %v276 = vpop.f32.mrf.mxu0
      %v277 = vadd.f32 %v213, %v276
      %v278 = vpop.f32.mrf.mxu0
      %v279 = vpop.f32.mrf.mxu0
      %v280 = vpop.f32.mrf.mxu0
      %281 = vdwg.mxu0
      %v282 = vld [vmem:[%s3] sm:$0xff]
      %v283 = vadd.f32 %v269, %v282
      %v284 = vadd.f32 %v272, %v282
      %v285 = vadd.f32 %v277, %v282
      %286 = vst.msk [vmem:[%s197] sm:$0xff] %vm227, %v283
      %287 = vst.msk [vmem:[%s197 + $0x8] sm:$0xff] %vm227, %v284
      %288 = vst.msk [vmem:[%s197 + $0x10] sm:$0xff] %vm227, %v285
      %p289 = scmp.lt.s32.totalorder %s15, 1
      %s290 = scalar_select %p289, %s15, 1
      %s291 = smul.addr %s290, 3
      %s292 = smul.addr %s291, 8
      %s293 = scalar_lea.vmem %s4, %s292
      // Predicated region
      $region37: #{time_agent_transformer_forward.6} parent=35 // pred_check
        %p294 = pneg %p122
      $region38: #{time_agent_transformer_forward.6} parent=35 // pred_check_branch
        %296 = sbr.rel (%p294) target = $region40
      $region39: #{time_agent_transformer_forward.6} parent=35 // pred_region
        _
      $region40: #{time_agent_transformer_forward.6} parent=35 // pred_fallthru
        _
    $region36: #{time_agent_transformer_forward.6} parent=5 // pred_fallthru
      _
    %p297 = scmp.le.s32.totalorder 2, %s10
    // Predicated region
    $region41: #{time_agent_transformer_forward.6} parent=5 // pred_check
      %p298 = pneg %p297
    $region42: #{time_agent_transformer_forward.6} parent=5 // pred_check_branch
      %300 = sbr.rel (%p298) target = $region44
    $region43: #{time_agent_transformer_forward.6} parent=5 // pred_region
      %s301 = ssub.s32 %s10, 2
      // Predicated region
      $region45: #{time_agent_transformer_forward.6} parent=43 // pred_check
        %p302 = pneg %p128
      $region46: #{time_agent_transformer_forward.6} parent=43 // pred_check_branch
        %304 = sbr.rel (%p302) target = $region48
      $region47: #{time_agent_transformer_forward.6} parent=43 // pred_region
        %p305 = scmp.lt.s32.totalorder %s16, 1
        %s306 = scalar_select %p305, %s16, 1
        %s307 = smul.addr %s306, 3
        %s308 = smul.addr %s307, 8
        %s309 = scalar_lea.vmem %s4, %s308
      $region48: #{time_agent_transformer_forward.6} parent=43 // pred_fallthru
        _
    $region44: #{time_agent_transformer_forward.6} parent=5 // pred_fallthru
      _
  $region6: #{time_agent_transformer_forward.6} parent=0 // loop_footer
    %s14 = sadd.s32 1, %s10
  $region7: #{time_agent_transformer_forward.6} parent=0 // loop_footer_branch
    %9 = sbr.rel target = $region3
  $region8: #{time_agent_transformer_forward.6} parent=0 // loop_exit
    _

// kernel: time_agent_transformer_forward.11
$region0: #{time_agent_transformer_forward.11}
  #allocation0 [shape = 'u32[]', space=smem, size = 0x4, offset = 0x4, fixed_abs, tag = 'smem constant byte address 0x4 - core index']
  #allocation1 [shape = 'u32[144,128]{1,0:T(1,128)}', space=vmem, size = 0x12000, scoped, tag = 'internal scratch']
  #allocation2 [shape = 'f32[1,1]{1,0:T(1,128)S(1)}', space=vmem, size = 0x200, scoped, tag = 'scoped memory for time_agent_transformer_forward.11']
  %s0 = inlined_call_operand.vmem [shape: f32[2,3,8,32], index: 0, kind: input, shape index: {}]
  %s1 = inlined_call_operand.vmem [shape: f32[32,50], index: 1, kind: input, shape index: {}]
  %s2 = inlined_call_operand.vmem [shape: f32[1,50], index: 2, kind: input, shape index: {}]
  %s3 = inlined_call_operand.vmem [shape: f32[1,50], index: 3, kind: input, shape index: {}]
  %s4 = inlined_call_operand.<no memory space> [shape: f32[1,1], index: 4, kind: input, shape index: {}]
  %s5 = inlined_call_operand.vmem [shape: f32[2,8], index: 5, kind: output, shape index: {}]
  %s6 = sld [smem:[#allocation0]]
  $region30: #{time_agent_transformer_forward.11} parent=0
    _
  %s8 = ssub.s32 1, %s6
  %s9 = scalar_select 0, %s8, %s6
  %v10 = vstv %s4
  %11 = vst [vmem:[#allocation2] sm:$0x1] %v10
  // Predicated region
  $region2: #{time_agent_transformer_forward.11} parent=0 // pred_check
    _
  $region3: #{time_agent_transformer_forward.11} parent=0 // pred_check_branch
    %13 = sbr.rel (0) target = $region5
  $region4: #{time_agent_transformer_forward.11} parent=0 // pred_region
    _
  $region5: #{time_agent_transformer_forward.11} parent=0 // pred_fallthru
    _
  // Predicated region
  $region6: #{time_agent_transformer_forward.11} parent=0 // pred_check
    _
  $region7: #{time_agent_transformer_forward.11} parent=0 // pred_check_branch
    %15 = sbr.rel (0) target = $region9
  $region8: #{time_agent_transformer_forward.11} parent=0 // pred_region
    _
  $region9: #{time_agent_transformer_forward.11} parent=0 // pred_fallthru
    _
  // Predicated region
  $region10: #{time_agent_transformer_forward.11} parent=0 // pred_check
    _
  $region11: #{time_agent_transformer_forward.11} parent=0 // pred_check_branch
    %17 = sbr.rel (0) target = $region13
  $region12: #{time_agent_transformer_forward.11} parent=0 // pred_region
    _
  $region13: #{time_agent_transformer_forward.11} parent=0 // pred_fallthru
    _
  // Predicated region
  $region14: #{time_agent_transformer_forward.11} parent=0 // pred_check
    _
  $region15: #{time_agent_transformer_forward.11} parent=0 // pred_check_branch
    %19 = sbr.rel (0) target = $region17
  $region16: #{time_agent_transformer_forward.11} parent=0 // pred_region
    _
  $region17: #{time_agent_transformer_forward.11} parent=0 // pred_fallthru
    _
  // Predicated region
  $region18: #{time_agent_transformer_forward.11} parent=0 // pred_check
    _
  $region19: #{time_agent_transformer_forward.11} parent=0 // pred_check_branch
    %21 = sbr.rel (0) target = $region21
  $region20: #{time_agent_transformer_forward.11} parent=0 // pred_region
    _
  $region21: #{time_agent_transformer_forward.11} parent=0 // pred_fallthru
    _
  %v22 = vld [vmem:[%s0] sm:$0xff]
  %v23 = vld [vmem:[%s0 + $0x8] sm:$0xff]
  %v24 = vld [vmem:[%s0 + $0x10] sm:$0xff]
  %v25 = vld [vmem:[%s0 + $0x18] sm:$0xff]
  %v26 = vld [vmem:[%s0 + $0x20] sm:$0xff]
  %v27 = vld [vmem:[%s0 + $0x28] sm:$0xff]
  %v28 = vld [vmem:[%s1] sm:$0xff]
  %v29 = vld [vmem:[%s1 + $0x8] sm:$0xff]
  %v30 = vld [vmem:[%s1 + $0x10] sm:$0xff]
  %v31 = vld [vmem:[%s1 + $0x18] sm:$0xff]
  %v32 = vld [vmem:[%s2] sm:$0x1]
  %v34 = vlaneseq
  %v35 = vshrl.u32 %v34, 7
  %v36 = vsub.s32 0, %v35
  %v37 = vrot.slane %v32, %v36
  %vm39 = vcmask 261120
  %v41 = vsel %vm39, %v22, 0
  %v44 = vsel %vm39, %v23, 0
  %v47 = vsel %vm39, %v24, 0
  %v50 = vsel %vm39, %v25, 0
  %v53 = vsel %vm39, %v26, 0
  %v56 = vsel %vm39, %v27, 0
  %58 = vmatprep.subr.mxu0 0.0
  %59 = vmatpush1.msra.mxu0 0.0
  %60 = vmatprep.subr.mxu0 0.0
  %61 = vmatpush1.msra.mxu0 0.0
  %62 = vmatprep.subr.mxu0 0.0
  %63 = vmatpush1.msra.mxu0 0.0
  %64 = vmatprep.subr.mxu0 0.0
  %65 = vmatpush1.msra.mxu0 0.0
  %66 = vmatprep.subr.mxu0 0.0
  %67 = vmatpush1.msra.mxu0 0.0
  %68 = vmatprep.subr.mxu0 0.0
  %69 = vmatpush1.msra.mxu0 0.0
  %70 = vmatprep.subr.mxu0 0.0
  %71 = vmatpush1.msra.mxu0 0.0
  %72 = vmatprep.subr.mxu0 0.0
  %73 = vmatpush1.msra.mxu0 0.0
  %74 = vmatprep.subr.mxu0 0.0
  %75 = vmatpush1.msra.mxu0 0.0
  %76 = vmatprep.subr.mxu0 0.0
  %77 = vmatpush1.msra.mxu0 0.0
  %78 = vmatprep.subr.mxu0 0.0
  %79 = vmatpush1.msra.mxu0 0.0
  %80 = vmatprep.subr.mxu0 0.0
  %81 = vmatpush1.msra.mxu0 0.0
  %82 = vmatprep.subr.mxu0 0.0
  %83 = vmatpush1.msra.mxu0 %v31
  %84 = vmatprep.subr.mxu0 0.0
  %85 = vmatpush1.msra.mxu0 %v30
  %86 = vmatprep.subr.mxu0 0.0
  %87 = vmatpush1.msra.mxu0 %v29
  %88 = vmatprep.subr.mxu0 0.0
  %89 = vmatpush1.msra.mxu0 %v28
  %90 = vmatprep.subr.mxu0 0.0
  %91 = vmatpush2.msra.mxu0 0.0
  %92 = vmatprep.subr.mxu0 0.0
  %93 = vmatpush2.msra.mxu0 0.0
  %94 = vmatprep.subr.mxu0 0.0
  %95 = vmatpush2.msra.mxu0 0.0
  %96 = vmatprep.subr.mxu0 0.0
  %97 = vmatpush2.msra.mxu0 0.0
  %98 = vmatprep.subr.mxu0 0.0
  %99 = vmatpush2.msra.mxu0 0.0
  %100 = vmatprep.subr.mxu0 0.0
  %101 = vmatpush2.msra.mxu0 0.0
  %102 = vmatprep.subr.mxu0 0.0
  %103 = vmatpush2.msra.mxu0 0.0
  %104 = vmatprep.subr.mxu0 0.0
  %105 = vmatpush2.msra.mxu0 0.0
  %106 = vmatprep.subr.mxu0 0.0
  %107 = vmatpush2.msra.mxu0 0.0
  %108 = vmatprep.subr.mxu0 0.0
  %109 = vmatpush2.msra.mxu0 0.0
  %110 = vmatprep.subr.mxu0 0.0
  %111 = vmatpush2.msra.mxu0 0.0
  %112 = vmatprep.subr.mxu0 0.0
  %113 = vmatpush2.msra.mxu0 0.0
  %114 = vmatprep.subr.mxu0 0.0
  %115 = vmatpush2.msra.mxu0 0.0
  %116 = vmatprep.subr.mxu0 0.0
  %117 = vmatpush2.msra.mxu0 0.0
  %118 = vmatprep.subr.mxu0 0.0
  %119 = vmatpush2.msra.mxu0 0.0
  %120 = vmatprep.subr.mxu0 0.0
  %121 = vmatpush2.msra.mxu0 0.0
  %122 = vmatprep.mubr.f32.mxu0 0.0
  %123 = vmatmul.mubr.f32.gmra.mxu0 %v41
  %v124 = vpop.f32.mrf.mxu0
  %v125 = vadd.f32 %v37, %v124
  %v126 = vpop.f32.mrf.mxu0
  %127 = vmatprep.mubr.f32.mxu0 0.0
  %128 = vmatmul.mubr.f32.gmra.mxu0 %v44
  %v129 = vpop.f32.mrf.mxu0
  %v130 = vadd.f32 %v37, %v129
  %v131 = vpop.f32.mrf.mxu0
  %132 = vmatprep.mubr.f32.mxu0 0.0
  %133 = vmatmul.mubr.f32.gmra.mxu0 %v47
  %v134 = vpop.f32.mrf.mxu0
  %v135 = vadd.f32 %v37, %v134
  %v136 = vpop.f32.mrf.mxu0
  %137 = vmatprep.mubr.f32.mxu0 0.0
  %138 = vmatmul.mubr.f32.gmra.mxu0 %v50
  %v139 = vpop.f32.mrf.mxu0
  %v140 = vadd.f32 %v37, %v139
  %v141 = vpop.f32.mrf.mxu0
  %142 = vmatprep.mubr.f32.mxu0 0.0
  %143 = vmatmul.mubr.f32.gmra.mxu0 %v53
  %v144 = vpop.f32.mrf.mxu0
  %v145 = vadd.f32 %v37, %v144
  %v146 = vpop.f32.mrf.mxu0
  %147 = vmatprep.mubr.f32.mxu0 0.0
  %148 = vmatmul.mubr.f32.gmra.mxu0 %v56
  %v149 = vpop.f32.mrf.mxu0
  %v150 = vadd.f32 %v37, %v149
  %v151 = vpop.f32.mrf.mxu0
  %152 = vdwg.mxu0
  %v153 = vadd.f32 %v125, %v130
  %v154 = vadd.f32 %v140, %v145
  %v155 = vadd.f32 %v153, %v135
  %v156 = vadd.f32 %v154, %v150
  %v157 = vld [vmem:[%s3] sm:$0x1]
  %v159 = vlaneseq
  %v160 = vshrl.u32 %v159, 7
  %v161 = vsub.s32 0, %v160
  %v162 = vrot.slane %v157, %v161
  %v164 = vmul.f32 %v155, %v162
  %v165 = vmul.f32 %v156, %v162
  %vm166 = vcmask 408576
  %v167 = vsel %vm166, %v164, 0.0
  %168 = vadd.xlane.f32.xlu0 %v167
  %v169 = vpop.xlane.xlu0 %168
  %v170 = vsel %vm166, %v165, 0.0
  %171 = vadd.xlane.f32.xlu0 %v170
  %v172 = vpop.xlane.xlu0 %171
  %v173 = vld [vmem:[#allocation2] sm:$0x1]
  %v175 = vlaneseq
  %v176 = vshrl.u32 %v175, 7
  %v177 = vsub.s32 0, %v176
  %v178 = vrot.slane %v173, %v177
  %179 = vset.pattern.permute.xlu0 0
  %180 = vperm.xlu0 %179, %v178
  %v181 = vpop.permute.xlu0 %180
  %v183 = vadd.f32 %v169, %v181
  %v184 = vadd.f32 %v172, %v181
  %v187 = vlaneseq
  %v188 = vand.u32 %v187, 127
  %v189 = vlaneseq
  %v190 = vshrl.u32 %v189, 7
  %v191 = vsub.s32 %v188, %v190
  %v192 = vrot.slane %v183, %v191
  %v193 = vlaneseq
  %v194 = vshrl.u32 %v193, 7
  %v195 = vsub.s32 %v188, %v194
  %v196 = vrot.slane %v184, %v195
  %vm197 = vcmask 1041409
  %v198 = vsel %vm197, %v196, %v192
  %vm200 = vcmask 58368
  %201 = vst.msk [vmem:[%s5] sm:$0x3] %vm200, %v198
  // Predicated region
  $region22: #{time_agent_transformer_forward.11} parent=0 // pred_check
    _
  $region23: #{time_agent_transformer_forward.11} parent=0 // pred_check_branch
    %203 = sbr.rel (0) target = $region25
  $region24: #{time_agent_transformer_forward.11} parent=0 // pred_region
    _
  $region25: #{time_agent_transformer_forward.11} parent=0 // pred_fallthru
    _
  // Predicated region
  $region26: #{time_agent_transformer_forward.11} parent=0 // pred_check
    _
  $region27: #{time_agent_transformer_forward.11} parent=0 // pred_check_branch
    %205 = sbr.rel (0) target = $region29
  $region28: #{time_agent_transformer_forward.11} parent=0 // pred_region
    _
  $region29: #{time_agent_transformer_forward.11} parent=0 // pred_fallthru
    _

// kernel: time_agent_transformer_forward.7
$region0: #{time_agent_transformer_forward.7}
  #allocation0 [shape = 'u32[]', space=smem, size = 0x4, offset = 0x4, fixed_abs, tag = 'smem constant byte address 0x4 - core index']
  #allocation1 [shape = 'u32[144,128]{1,0:T(1,128)}', space=vmem, size = 0x12000, scoped, tag = 'internal scratch']
  %s0 = inlined_call_operand.vmem [shape: f32[2,3,8,32], index: 0, kind: input, shape index: {}]
  %s1 = inlined_call_operand.vmem [shape: bf16[32,192], index: 1, kind: input, shape index: {}]
  %s2 = inlined_call_operand.vmem [shape: bf16[64,32], index: 2, kind: input, shape index: {}]
  %s3 = inlined_call_operand.vmem [shape: f32[1,32], index: 3, kind: input, shape index: {}]
  %s4 = inlined_call_operand.vmem [shape: f32[1,32], index: 4, kind: input, shape index: {}]
  %s5 = inlined_call_operand.vmem [shape: f32[1,32], index: 5, kind: input, shape index: {}]
  %s6 = inlined_call_operand.vmem [shape: bf16[32,128], index: 6, kind: input, shape index: {}]
  %s7 = inlined_call_operand.vmem [shape: f32[1,128], index: 7, kind: input, shape index: {}]
  %s8 = inlined_call_operand.vmem [shape: bf16[128,32], index: 8, kind: input, shape index: {}]
  %s9 = inlined_call_operand.vmem [shape: f32[1,32], index: 9, kind: input, shape index: {}]
  %s10 = inlined_call_operand.vmem [shape: f32[1,32], index: 10, kind: input, shape index: {}]
  %s11 = inlined_call_operand.vmem [shape: f32[1,32], index: 11, kind: input, shape index: {}]
  %s12 = inlined_call_operand.vmem [shape: f32[2,3,8,32], index: 12, kind: output, shape index: {}]
  %s13 = sld [smem:[#allocation0]]
  $region81: #{time_agent_transformer_forward.7} parent=0
    _
  %s15 = ssub.s32 1, %s13
  %s16 = scalar_select 0, %s15, %s13
  loop: start=0, step=1, limit=4
  $region2: #{time_agent_transformer_forward.7} parent=0 // loop_pre_header
    _
  $region3: #{time_agent_transformer_forward.7} parent=0 // loop_header
    %s18 = sphi 0, %s22
    %p19 = scmp.ge.s32.totalorder %s18, 4
    %s28 = sphi 0, %s30
    %s31 = sphi 0, %s28
    %s32 = sphi 0, %s31
    %s48 = sphi 0, %s32
    %s52 = sphi 0, %s52
    %s54 = sphi 0, %s52
    %s55 = sphi 0, %s54
    %s69 = sphi 0, %s55
    %s73 = sphi 0, %s73
    %s75 = sphi 0, %s73
    %s76 = sphi 0, %s75
    %s90 = sphi 0, %s76
    %s94 = sphi 0, %s94
    %s96 = sphi 0, %s94
    %s97 = sphi 0, %s96
    %s111 = sphi 0, %s97
    %s115 = sphi 0, %s115
    %s117 = sphi 0, %s115
    %s118 = sphi 0, %s117
    %s132 = sphi 0, %s118
    %s136 = sphi 0, %s136
    %s138 = sphi 0, %s136
    %s139 = sphi 0, %s138
    %s153 = sphi 0, %s139
    %s157 = sphi 0, %s157
    %s159 = sphi 0, %s157
    %s160 = sphi 0, %s159
    %s174 = sphi 0, %s160
    %s178 = sphi 0, %s178
    %s180 = sphi 0, %s178
    %s181 = sphi 0, %s180
    %s195 = sphi 0, %s181
    %s199 = sphi 0, %s199
    %s201 = sphi 0, %s199
    %s202 = sphi 0, %s201
    %s216 = sphi 0, %s202
    %s220 = sphi 0, %s220
    %s222 = sphi 0, %s220
    %s223 = sphi 0, %s222
    %s237 = sphi 0, %s223
    %s241 = sphi 0, %s241
    %s243 = sphi 0, %s241
    %s244 = sphi 0, %s243
    %s258 = sphi 0, %s244
    %s262 = sphi 0, %s262
    %s264 = sphi 0, %s262
    %s265 = sphi 0, %s264
    %s279 = sphi 0, %s265
    %s285 = sphi 0, %s287
    %s288 = sphi 0, %s285
    %s289 = sphi 0, %s288
    %s305 = sphi 0, %s289
  $region4: #{time_agent_transformer_forward.7} parent=0 // loop_header_branch
    %21 = sbr.rel (%p19) target = $region8
  $region5: #{time_agent_transformer_forward.7} parent=0 // loop_body
    %s23 = ssub.s32 %s18, 1
    %s24 = ssub.s32 %s18, 2
    %s25 = sadd.s32 %s18, 1
    %s26 = ssub.s32 %s18, %s25
    %p27 = scmp.eq.s32.totalorder %s26, 0
    %s29 = sadd.s32 %s28, 1
    %s30 = scalar_select %p27, %s28, %s29
    %p33 = pneg %p27
    %p34 = scmp.eq.s32.totalorder %s18, 1
    %p35 = por %p33, %p34
    %p36 = scmp.ne.s32.totalorder %s28, %s31
    %p37 = scmp.eq.s32.totalorder %s18, 0
    %p38 = por %p36, %p37
    %p39 = scmp.ne.s32.totalorder %s28, %s31
    %p40 = scmp.eq.s32.totalorder %s23, 1
    %p41 = por %p39, %p40
    %p42 = scmp.ne.s32.totalorder %s31, %s32
    %p43 = scmp.eq.s32.totalorder %s23, 0
    %p44 = por %p42, %p43
    %p45 = scmp.ne.s32.totalorder %s31, %s32
    %p46 = scmp.eq.s32.totalorder %s24, 1
    %p47 = por %p45, %p46
    %p49 = scmp.ne.s32.totalorder %s32, %s48
    %p50 = scmp.eq.s32.totalorder %s24, 0
    %p51 = por %p49, %p50
    %s53 = sadd.s32 %s52, 1
    %p56 = scmp.eq.s32.totalorder %s18, 1
    %p57 = scmp.ne.s32.totalorder %s52, %s54
    %p58 = scmp.eq.s32.totalorder %s18, 0
    %p59 = por %p57, %p58
    %p60 = scmp.ne.s32.totalorder %s52, %s54
    %p61 = scmp.eq.s32.totalorder %s23, 1
    %p62 = por %p60, %p61
    %p63 = scmp.ne.s32.totalorder %s54, %s55
    %p64 = scmp.eq.s32.totalorder %s23, 0
    %p65 = por %p63, %p64
    %p66 = scmp.ne.s32.totalorder %s54, %s55
    %p67 = scmp.eq.s32.totalorder %s24, 1
    %p68 = por %p66, %p67
    %p70 = scmp.ne.s32.totalorder %s55, %s69
    %p71 = scmp.eq.s32.totalorder %s24, 0
    %p72 = por %p70, %p71
    %s74 = sadd.s32 %s73, 1
    %p77 = scmp.eq.s32.totalorder %s18, 1
    %p78 = scmp.ne.s32.totalorder %s73, %s75
    %p79 = scmp.eq.s32.totalorder %s18, 0
    %p80 = por %p78, %p79
    %p81 = scmp.ne.s32.totalorder %s73, %s75
    %p82 = scmp.eq.s32.totalorder %s23, 1
    %p83 = por %p81, %p82
    %p84 = scmp.ne.s32.totalorder %s75, %s76
    %p85 = scmp.eq.s32.totalorder %s23, 0
    %p86 = por %p84, %p85
    %p87 = scmp.ne.s32.totalorder %s75, %s76
    %p88 = scmp.eq.s32.totalorder %s24, 1
    %p89 = por %p87, %p88
    %p91 = scmp.ne.s32.totalorder %s76, %s90
    %p92 = scmp.eq.s32.totalorder %s24, 0
    %p93 = por %p91, %p92
    %s95 = sadd.s32 %s94, 1
    %p98 = scmp.eq.s32.totalorder %s18, 1
    %p99 = scmp.ne.s32.totalorder %s94, %s96
    %p100 = scmp.eq.s32.totalorder %s18, 0
    %p101 = por %p99, %p100
    %p102 = scmp.ne.s32.totalorder %s94, %s96
    %p103 = scmp.eq.s32.totalorder %s23, 1
    %p104 = por %p102, %p103
    %p105 = scmp.ne.s32.totalorder %s96, %s97
    %p106 = scmp.eq.s32.totalorder %s23, 0
    %p107 = por %p105, %p106
    %p108 = scmp.ne.s32.totalorder %s96, %s97
    %p109 = scmp.eq.s32.totalorder %s24, 1
    %p110 = por %p108, %p109
    %p112 = scmp.ne.s32.totalorder %s97, %s111
    %p113 = scmp.eq.s32.totalorder %s24, 0
    %p114 = por %p112, %p113
    %s116 = sadd.s32 %s115, 1
    %p119 = scmp.eq.s32.totalorder %s18, 1
    %p120 = scmp.ne.s32.totalorder %s115, %s117
    %p121 = scmp.eq.s32.totalorder %s18, 0
    %p122 = por %p120, %p121
    %p123 = scmp.ne.s32.totalorder %s115, %s117
    %p124 = scmp.eq.s32.totalorder %s23, 1
    %p125 = por %p123, %p124
    %p126 = scmp.ne.s32.totalorder %s117, %s118
    %p127 = scmp.eq.s32.totalorder %s23, 0
    %p128 = por %p126, %p127
    %p129 = scmp.ne.s32.totalorder %s117, %s118
    %p130 = scmp.eq.s32.totalorder %s24, 1
    %p131 = por %p129, %p130
    %p133 = scmp.ne.s32.totalorder %s118, %s132
    %p134 = scmp.eq.s32.totalorder %s24, 0
    %p135 = por %p133, %p134
    %s137 = sadd.s32 %s136, 1
    %p140 = scmp.eq.s32.totalorder %s18, 1
    %p141 = scmp.ne.s32.totalorder %s136, %s138
    %p142 = scmp.eq.s32.totalorder %s18, 0
    %p143 = por %p141, %p142
    %p144 = scmp.ne.s32.totalorder %s136, %s138
    %p145 = scmp.eq.s32.totalorder %s23, 1
    %p146 = por %p144, %p145
    %p147 = scmp.ne.s32.totalorder %s138, %s139
    %p148 = scmp.eq.s32.totalorder %s23, 0
    %p149 = por %p147, %p148
    %p150 = scmp.ne.s32.totalorder %s138, %s139
    %p151 = scmp.eq.s32.totalorder %s24, 1
    %p152 = por %p150, %p151
    %p154 = scmp.ne.s32.totalorder %s139, %s153
    %p155 = scmp.eq.s32.totalorder %s24, 0
    %p156 = por %p154, %p155
    %s158 = sadd.s32 %s157, 1
    %p161 = scmp.eq.s32.totalorder %s18, 1
    %p162 = scmp.ne.s32.totalorder %s157, %s159
    %p163 = scmp.eq.s32.totalorder %s18, 0
    %p164 = por %p162, %p163
    %p165 = scmp.ne.s32.totalorder %s157, %s159
    %p166 = scmp.eq.s32.totalorder %s23, 1
    %p167 = por %p165, %p166
    %p168 = scmp.ne.s32.totalorder %s159, %s160
    %p169 = scmp.eq.s32.totalorder %s23, 0
    %p170 = por %p168, %p169
    %p171 = scmp.ne.s32.totalorder %s159, %s160
    %p172 = scmp.eq.s32.totalorder %s24, 1
    %p173 = por %p171, %p172
    %p175 = scmp.ne.s32.totalorder %s160, %s174
    %p176 = scmp.eq.s32.totalorder %s24, 0
    %p177 = por %p175, %p176
    %s179 = sadd.s32 %s178, 1
    %p182 = scmp.eq.s32.totalorder %s18, 1
    %p183 = scmp.ne.s32.totalorder %s178, %s180
    %p184 = scmp.eq.s32.totalorder %s18, 0
    %p185 = por %p183, %p184
    %p186 = scmp.ne.s32.totalorder %s178, %s180
    %p187 = scmp.eq.s32.totalorder %s23, 1
    %p188 = por %p186, %p187
    %p189 = scmp.ne.s32.totalorder %s180, %s181
    %p190 = scmp.eq.s32.totalorder %s23, 0
    %p191 = por %p189, %p190
    %p192 = scmp.ne.s32.totalorder %s180, %s181
    %p193 = scmp.eq.s32.totalorder %s24, 1
    %p194 = por %p192, %p193
    %p196 = scmp.ne.s32.totalorder %s181, %s195
    %p197 = scmp.eq.s32.totalorder %s24, 0
    %p198 = por %p196, %p197
    %s200 = sadd.s32 %s199, 1
    %p203 = scmp.eq.s32.totalorder %s18, 1
    %p204 = scmp.ne.s32.totalorder %s199, %s201
    %p205 = scmp.eq.s32.totalorder %s18, 0
    %p206 = por %p204, %p205
    %p207 = scmp.ne.s32.totalorder %s199, %s201
    %p208 = scmp.eq.s32.totalorder %s23, 1
    %p209 = por %p207, %p208
    %p210 = scmp.ne.s32.totalorder %s201, %s202
    %p211 = scmp.eq.s32.totalorder %s23, 0
    %p212 = por %p210, %p211
    %p213 = scmp.ne.s32.totalorder %s201, %s202
    %p214 = scmp.eq.s32.totalorder %s24, 1
    %p215 = por %p213, %p214
    %p217 = scmp.ne.s32.totalorder %s202, %s216
    %p218 = scmp.eq.s32.totalorder %s24, 0
    %p219 = por %p217, %p218
    %s221 = sadd.s32 %s220, 1
    %p224 = scmp.eq.s32.totalorder %s18, 1
    %p225 = scmp.ne.s32.totalorder %s220, %s222
    %p226 = scmp.eq.s32.totalorder %s18, 0
    %p227 = por %p225, %p226
    %p228 = scmp.ne.s32.totalorder %s220, %s222
    %p229 = scmp.eq.s32.totalorder %s23, 1
    %p230 = por %p228, %p229
    %p231 = scmp.ne.s32.totalorder %s222, %s223
    %p232 = scmp.eq.s32.totalorder %s23, 0
    %p233 = por %p231, %p232
    %p234 = scmp.ne.s32.totalorder %s222, %s223
    %p235 = scmp.eq.s32.totalorder %s24, 1
    %p236 = por %p234, %p235
    %p238 = scmp.ne.s32.totalorder %s223, %s237
    %p239 = scmp.eq.s32.totalorder %s24, 0
    %p240 = por %p238, %p239
    %s242 = sadd.s32 %s241, 1
    %p245 = scmp.eq.s32.totalorder %s18, 1
    %p246 = scmp.ne.s32.totalorder %s241, %s243
    %p247 = scmp.eq.s32.totalorder %s18, 0
    %p248 = por %p246, %p247
    %p249 = scmp.ne.s32.totalorder %s241, %s243
    %p250 = scmp.eq.s32.totalorder %s23, 1
    %p251 = por %p249, %p250
    %p252 = scmp.ne.s32.totalorder %s243, %s244
    %p253 = scmp.eq.s32.totalorder %s23, 0
    %p254 = por %p252, %p253
    %p255 = scmp.ne.s32.totalorder %s243, %s244
    %p256 = scmp.eq.s32.totalorder %s24, 1
    %p257 = por %p255, %p256
    %p259 = scmp.ne.s32.totalorder %s244, %s258
    %p260 = scmp.eq.s32.totalorder %s24, 0
    %p261 = por %p259, %p260
    %s263 = sadd.s32 %s262, 1
    %p266 = scmp.eq.s32.totalorder %s18, 1
    %p267 = scmp.ne.s32.totalorder %s262, %s264
    %p268 = scmp.eq.s32.totalorder %s18, 0
    %p269 = por %p267, %p268
    %p270 = scmp.ne.s32.totalorder %s262, %s264
    %p271 = scmp.eq.s32.totalorder %s23, 1
    %p272 = por %p270, %p271
    %p273 = scmp.ne.s32.totalorder %s264, %s265
    %p274 = scmp.eq.s32.totalorder %s23, 0
    %p275 = por %p273, %p274
    %p276 = scmp.ne.s32.totalorder %s264, %s265
    %p277 = scmp.eq.s32.totalorder %s24, 1
    %p278 = por %p276, %p277
    %p280 = scmp.ne.s32.totalorder %s265, %s279
    %p281 = scmp.eq.s32.totalorder %s24, 0
    %p282 = por %p280, %p281
    %s283 = ssub.s32 %s18, %s25
    %p284 = scmp.eq.s32.totalorder %s283, 0
    %s286 = sadd.s32 %s285, 1
    %s287 = scalar_select %p284, %s285, %s286
    %p290 = pneg %p284
    %p291 = scmp.eq.s32.totalorder %s18, 1
    %p292 = por %p290, %p291
    %p293 = scmp.ne.s32.totalorder %s285, %s288
    %p294 = scmp.eq.s32.totalorder %s18, 0
    %p295 = por %p293, %p294
    %p296 = scmp.ne.s32.totalorder %s285, %s288
    %p297 = scmp.eq.s32.totalorder %s23, 1
    %p298 = por %p296, %p297
    %p299 = scmp.ne.s32.totalorder %s288, %s289
    %p300 = scmp.eq.s32.totalorder %s23, 0
    %p301 = por %p299, %p300
    %p302 = scmp.ne.s32.totalorder %s288, %s289
    %p303 = scmp.eq.s32.totalorder %s24, 1
    %p304 = por %p302, %p303
    %p306 = scmp.ne.s32.totalorder %s289, %s305
    %p307 = scmp.eq.s32.totalorder %s24, 0
    %p308 = por %p306, %p307
    %p309 = scmp.le.s32.totalorder 1, %s18
    %p310 = scmp.lt.s32.totalorder %s18, 3
    %p311 = pnand %p309, %p310
    %p312 = pneg %p311
    // Predicated region
    $region9: #{time_agent_transformer_forward.7} parent=5 // pred_check
      _
    $region10: #{time_agent_transformer_forward.7} parent=5 // pred_check_branch
      %314 = sbr.rel (%p311) target = $region12
    $region11: #{time_agent_transformer_forward.7} parent=5 // pred_region
      %s315 = ssub.s32 %s18, 1
      // Predicated region
      $region13: #{time_agent_transformer_forward.7} parent=11 // pred_check
        %p316 = pneg %p65
      $region14: #{time_agent_transformer_forward.7} parent=11 // pred_check_branch
        %318 = sbr.rel (%p316) target = $region16
      $region15: #{time_agent_transformer_forward.7} parent=11 // pred_region
        _
      $region16: #{time_agent_transformer_forward.7} parent=11 // pred_fallthru
        _
      // Predicated region
      $region17: #{time_agent_transformer_forward.7} parent=11 // pred_check
        %p319 = pneg %p86
      $region18: #{time_agent_transformer_forward.7} parent=11 // pred_check_branch
        %321 = sbr.rel (%p319) target = $region20
      $region19: #{time_agent_transformer_forward.7} parent=11 // pred_region
        _
      $region20: #{time_agent_transformer_forward.7} parent=11 // pred_fallthru
        _
      // Predicated region
      $region21: #{time_agent_transformer_forward.7} parent=11 // pred_check
        %p322 = pneg %p107
      $region22: #{time_agent_transformer_forward.7} parent=11 // pred_check_branch
        %324 = sbr.rel (%p322) target = $region24
      $region23: #{time_agent_transformer_forward.7} parent=11 // pred_region
        _
      $region24: #{time_agent_transformer_forward.7} parent=11 // pred_fallthru
        _
      // Predicated region
      $region25: #{time_agent_transformer_forward.7} parent=11 // pred_check
        %p325 = pneg %p128
      $region26: #{time_agent_transformer_forward.7} parent=11 // pred_check_branch
        %327 = sbr.rel (%p325) target = $region28
      $region27: #{time_agent_transformer_forward.7} parent=11 // pred_region
        _
      $region28: #{time_agent_transformer_forward.7} parent=11 // pred_fallthru
        _
      // Predicated region
      $region29: #{time_agent_transformer_forward.7} parent=11 // pred_check
        %p328 = pneg %p149
      $region30: #{time_agent_transformer_forward.7} parent=11 // pred_check_branch
        %330 = sbr.rel (%p328) target = $region32
      $region31: #{time_agent_transformer_forward.7} parent=11 // pred_region
        _
      $region32: #{time_agent_transformer_forward.7} parent=11 // pred_fallthru
        _
      // Predicated region
      $region33: #{time_agent_transformer_forward.7} parent=11 // pred_check
        %p331 = pneg %p170
      $region34: #{time_agent_transformer_forward.7} parent=11 // pred_check_branch
        %333 = sbr.rel (%p331) target = $region36
      $region35: #{time_agent_transformer_forward.7} parent=11 // pred_region
        _
      $region36: #{time_agent_transformer_forward.7} parent=11 // pred_fallthru
        _
      // Predicated region
      $region37: #{time_agent_transformer_forward.7} parent=11 // pred_check
        %p334 = pneg %p191
      $region38: #{time_agent_transformer_forward.7} parent=11 // pred_check_branch
        %336 = sbr.rel (%p334) target = $region40
      $region39: #{time_agent_transformer_forward.7} parent=11 // pred_region
        _
      $region40: #{time_agent_transformer_forward.7} parent=11 // pred_fallthru
        _
      // Predicated region
      $region41: #{time_agent_transformer_forward.7} parent=11 // pred_check
        %p337 = pneg %p212
      $region42: #{time_agent_transformer_forward.7} parent=11 // pred_check_branch
        %339 = sbr.rel (%p337) target = $region44
      $region43: #{time_agent_transformer_forward.7} parent=11 // pred_region
        _
      $region44: #{time_agent_transformer_forward.7} parent=11 // pred_fallthru
        _
      // Predicated region
      $region45: #{time_agent_transformer_forward.7} parent=11 // pred_check
        %p340 = pneg %p233
      $region46: #{time_agent_transformer_forward.7} parent=11 // pred_check_branch
        %342 = sbr.rel (%p340) target = $region48
      $region47: #{time_agent_transformer_forward.7} parent=11 // pred_region
        _
      $region48: #{time_agent_transformer_forward.7} parent=11 // pred_fallthru
        _
      // Predicated region
      $region49: #{time_agent_transformer_forward.7} parent=11 // pred_check
        %p343 = pneg %p254
      $region50: #{time_agent_transformer_forward.7} parent=11 // pred_check_branch
        %345 = sbr.rel (%p343) target = $region52
      $region51: #{time_agent_transformer_forward.7} parent=11 // pred_region
        _
      $region52: #{time_agent_transformer_forward.7} parent=11 // pred_fallthru
        _
      // Predicated region
      $region53: #{time_agent_transformer_forward.7} parent=11 // pred_check
        %p346 = pneg %p275
      $region54: #{time_agent_transformer_forward.7} parent=11 // pred_check_branch
        %348 = sbr.rel (%p346) target = $region56
      $region55: #{time_agent_transformer_forward.7} parent=11 // pred_region
        _
      $region56: #{time_agent_transformer_forward.7} parent=11 // pred_fallthru
        _
    $region12: #{time_agent_transformer_forward.7} parent=5 // pred_fallthru
      _
    %p349 = scmp.lt.s32.totalorder %s18, 2
    // Predicated region
    $region57: #{time_agent_transformer_forward.7} parent=5 // pred_check
      %p350 = pneg %p349
    $region58: #{time_agent_transformer_forward.7} parent=5 // pred_check_branch
      %352 = sbr.rel (%p350) target = $region60
    $region59: #{time_agent_transformer_forward.7} parent=5 // pred_region
      // Predicated region
      $region61: #{time_agent_transformer_forward.7} parent=59 // pred_check
        %p353 = pneg %p38
      $region62: #{time_agent_transformer_forward.7} parent=59 // pred_check_branch
        %355 = sbr.rel (%p353) target = $region64
      $region63: #{time_agent_transformer_forward.7} parent=59 // pred_region
        %p356 = scmp.lt.s32.totalorder %s18, 1
        %s357 = scalar_select %p356, %s18, 1
        %s358 = smul.addr %s357, 3
        %s359 = smul.addr %s358, 8
        %s360 = scalar_lea.vmem %s0, %s359
      $region64: #{time_agent_transformer_forward.7} parent=59 // pred_fallthru
        _
    $region60: #{time_agent_transformer_forward.7} parent=5 // pred_fallthru
      _
    %p361 = scmp.le.s32.totalorder 1, %s18
    %p362 = scmp.lt.s32.totalorder %s18, 3
    %p363 = pnand %p361, %p362
    %p364 = pneg %p363
    // Predicated region
    $region65: #{time_agent_transformer_forward.7} parent=5 // pred_check
      _
    $region66: #{time_agent_transformer_forward.7} parent=5 // pred_check_branch
      %366 = sbr.rel (%p363) target = $region68
    $region67: #{time_agent_transformer_forward.7} parent=5 // pred_region
      %s367 = ssub.s32 %s18, 1
      %p368 = scmp.lt.s32.totalorder %s23, 1
      %s369 = scalar_select %p368, %s23, 1
      %s370 = smul.addr %s369, 3
      %s371 = smul.addr %s370, 8
      %s372 = scalar_lea.vmem %s0, %s371
      %p373 = pneg %p44
      %p374 = pneg %p41
      %p375 = pneg %p65
      %p376 = pneg %p62
      %p377 = pneg %p86
      %p378 = pneg %p83
      %p379 = pneg %p107
      %p380 = pneg %p104
      %p381 = pneg %p128
      %p382 = pneg %p125
      %p383 = pneg %p149
      %p384 = pneg %p146
      %p385 = pneg %p170
      %p386 = pneg %p167
      %p387 = pneg %p191
      %p388 = pneg %p188
      %p389 = pneg %p212
      %p390 = pneg %p209
      %p391 = pneg %p233
      %p392 = pneg %p230
      %p393 = pneg %p254
      %p394 = pneg %p251
      %p395 = pneg %p275
      %p396 = pneg %p272
      %p397 = pneg %p301
      %p398 = pneg %p298
      %p399 = scmp.lt.s32.totalorder %s23, 1
      %s400 = scalar_select %p399, %s23, 1
      %s401 = smul.addr %s400, 3
      %s402 = smul.addr %s401, 8
      %s403 = scalar_lea.vmem %s12, %s402
      %p404 = scmp.lt.s32.totalorder %s23, 1
      %s405 = scalar_select %p404, %s23, 1
      %s406 = smul.addr %s405, 3
      %s407 = smul.addr %s406, 8
      %s408 = scalar_lea.vmem %s0, %s407
      %p409 = scmp.lt.s32.totalorder %s23, 1
      %s410 = scalar_select %p409, %s23, 1
      %s411 = smul.addr %s410, 3
      %s412 = smul.addr %s411, 8
      %s413 = scalar_lea.vmem %s12, %s412
      %v415 = vld [vmem:[%s408] sm:$0xff]
      %v416 = vld [vmem:[%s408 + $0x8] sm:$0xff]
      %v417 = vld [vmem:[%s408 + $0x10] sm:$0xff]
      %v418 = vpack.c.bf16 %v416, %v415
      %v419 = vpack.c.bf16 %v417, %v417
      %v420 = vld [vmem:[%s1] sm:$0xff]
      %v421 = vld [vmem:[%s1 + $0x8] sm:$0xff]
      %v422 = vld [vmem:[%s1 + $0x10] sm:$0xff]
      %v423 = vld [vmem:[%s1 + $0x18] sm:$0xff]
      %v428 = vunpack.c.l.b16 %v420
      %v429 = vunpack.c.h.b16 %v420
      %v430 = vunpack.c.l.b16 %v421
      %v431 = vunpack.c.h.b16 %v421
      %v432 = vunpack.c.l.b16 %v422
      %v433 = vunpack.c.h.b16 %v422
      %v434 = vunpack.c.l.b16 %v423
      %v435 = vunpack.c.h.b16 %v423
      %v436 = vpack.c.b16 %v430, %v428
      %v437 = vpack.c.b16 %v431, %v429
      %v438 = vpack.c.b16 %v434, %v432
      %v439 = vpack.c.b16 %v435, %v433
      %vm444 = vcmask 261120
      %v446 = vsel %vm444, %v418, 0
      %v449 = vsel %vm444, %v419, 0
      %451 = vmatprep.subr.bf16.mxu0 0
      %452 = vmatpush1.bf16.msra.mxu0 0
      %453 = vmatprep.subr.bf16.mxu0 0
      %454 = vmatpush1.bf16.msra.mxu0 0
      %455 = vmatprep.subr.bf16.mxu0 0
      %456 = vmatpush1.bf16.msra.mxu0 0
      %457 = vmatprep.subr.bf16.mxu0 0
      %458 = vmatpush1.bf16.msra.mxu0 0
      %459 = vmatprep.subr.bf16.mxu0 0
      %460 = vmatpush1.bf16.msra.mxu0 0
      %461 = vmatprep.subr.bf16.mxu0 0
      %462 = vmatpush1.bf16.msra.mxu0 0
      %463 = vmatprep.subr.bf16.mxu0 %v439
      %464 = vmatpush1.bf16.msra.mxu0 %v438
      %465 = vmatprep.subr.bf16.mxu0 %v437
      %466 = vmatpush1.bf16.msra.mxu0 %v436
      %467 = vmatprep.subr.bf16.mxu0 0
      %468 = vmatpush2.bf16.msra.mxu0 0
      %469 = vmatprep.subr.bf16.mxu0 0
      %470 = vmatpush2.bf16.msra.mxu0 0
      %471 = vmatprep.subr.bf16.mxu0 0
      %472 = vmatpush2.bf16.msra.mxu0 0
      %473 = vmatprep.subr.bf16.mxu0 0
      %474 = vmatpush2.bf16.msra.mxu0 0
      %475 = vmatprep.subr.bf16.mxu0 0
      %476 = vmatpush2.bf16.msra.mxu0 0
      %477 = vmatprep.subr.bf16.mxu0 0
      %478 = vmatpush2.bf16.msra.mxu0 0
      %479 = vmatprep.subr.bf16.mxu0 0
      %480 = vmatpush2.bf16.msra.mxu0 0
      %481 = vmatprep.subr.bf16.mxu0 0
      %482 = vmatpush2.bf16.msra.mxu0 0
      %483 = vmatprep.mubr.bf16.mxu0 0
      %484 = vmatmul.mubr.bf16.gmra.mxu0 %v446
      %v485 = vpop.f32.mrf.mxu0
      %v486 = vadd.f32 0.0, %v485
      %v487 = vpop.f32.mrf.mxu0
      %v488 = vadd.f32 0.0, %v487
      %v489 = vpop.f32.mrf.mxu0
      %v490 = vadd.f32 0.0, %v489
      %v491 = vpop.f32.mrf.mxu0
      %v492 = vadd.f32 0.0, %v491
      %493 = vmatprep.mubr.bf16.mxu0 0
      %494 = vmatmul.mubr.bf16.gmra.mxu0 %v449
      %v495 = vpop.f32.mrf.mxu0
      %v496 = vadd.f32 0.0, %v495
      %v497 = vpop.f32.mrf.mxu0
      %v498 = vadd.f32 0.0, %v497
      %v499 = vpop.f32.mrf.mxu0
      %v500 = vpop.f32.mrf.mxu0
      %501 = vdwg.mxu0
      %v502 = vpack.c.bf16 %v486, %v486
      %v503 = vpack.c.bf16 %v490, %v490
      %v504 = vpack.c.bf16 %v496, %v496
      %506 = vrot.lane.b32.xlu0 %v502, 64
      %v507 = vpop.permute.xlu0 %506
      %v509 = vsel %vm444, %v502, 0
      %v512 = vsel %vm444, %v507, 0
      %514 = vmatprep.subr.bf16.mxu0 0
      %515 = vmatpush1.bf16.xpose.msra.mxu0 0
      %516 = vmatprep.subr.bf16.mxu0 0
      %517 = vmatpush1.bf16.xpose.msra.mxu0 0
      %518 = vmatprep.subr.bf16.mxu0 0
      %519 = vmatpush1.bf16.xpose.msra.mxu0 0
      %520 = vmatprep.subr.bf16.mxu0 0
      %521 = vmatpush1.bf16.xpose.msra.mxu0 0
      %522 = vmatprep.subr.bf16.mxu0 0
      %523 = vmatpush1.bf16.xpose.msra.mxu0 0
      %524 = vmatprep.subr.bf16.mxu0 0
      %525 = vmatpush1.bf16.xpose.msra.mxu0 0
      %526 = vmatprep.subr.bf16.mxu0 0
      %527 = vmatpush1.bf16.xpose.msra.mxu0 0
      %528 = vmatprep.subr.bf16.mxu0 0
      %529 = vmatpush1.bf16.xpose.msra.mxu0 %v512
      %530 = vmatprep.subr.bf16.mxu0 0
      %531 = vmatpush2.bf16.xpose.msra.mxu0 0
      %532 = vmatprep.subr.bf16.mxu0 0
      %533 = vmatpush2.bf16.xpose.msra.mxu0 0
      %534 = vmatprep.subr.bf16.mxu0 0
      %535 = vmatpush2.bf16.xpose.msra.mxu0 0
      %536 = vmatprep.subr.bf16.mxu0 0
      %537 = vmatpush2.bf16.xpose.msra.mxu0 0
      %538 = vmatprep.subr.bf16.mxu0 0
      %539 = vmatpush2.bf16.xpose.msra.mxu0 0
      %540 = vmatprep.subr.bf16.mxu0 0
      %541 = vmatpush2.bf16.xpose.msra.mxu0 0
      %542 = vmatprep.subr.bf16.mxu0 0
      %543 = vmatpush2.bf16.xpose.msra.mxu0 0
      %544 = vmatprep.subr.bf16.mxu0 0
      %545 = vmatpush2.bf16.xpose.msra.mxu0 0
      %546 = vmatprep.mubr.bf16.mxu0 0
      %547 = vmatmul.mubr.bf16.gmra.mxu0 %v509
      %v548 = vpop.f32.mrf.mxu0
      %v549 = vadd.f32 0.0, %v548
      %v550 = vpop.f32.mrf.mxu0
      %v551 = vpop.f32.mrf.mxu0
      %v552 = vpop.f32.mrf.mxu0
      %553 = vdwg.mxu0
      %555 = vrot.lane.b32.xlu0 %v503, 64
      %v556 = vpop.permute.xlu0 %555
      %v558 = vsel %vm444, %v503, 0
      %v561 = vsel %vm444, %v556, 0
      %563 = vmatprep.subr.bf16.mxu0 0
      %564 = vmatpush1.bf16.xpose.msra.mxu0 0
      %565 = vmatprep.subr.bf16.mxu0 0
      %566 = vmatpush1.bf16.xpose.msra.mxu0 0
      %567 = vmatprep.subr.bf16.mxu0 0
      %568 = vmatpush1.bf16.xpose.msra.mxu0 0
      %569 = vmatprep.subr.bf16.mxu0 0
      %570 = vmatpush1.bf16.xpose.msra.mxu0 0
      %571 = vmatprep.subr.bf16.mxu0 0
      %572 = vmatpush1.bf16.xpose.msra.mxu0 0
      %573 = vmatprep.subr.bf16.mxu0 0
      %574 = vmatpush1.bf16.xpose.msra.mxu0 0
      %575 = vmatprep.subr.bf16.mxu0 0
      %576 = vmatpush1.bf16.xpose.msra.mxu0 0
      %577 = vmatprep.subr.bf16.mxu0 0
      %578 = vmatpush1.bf16.xpose.msra.mxu0 %v561
      %579 = vmatprep.subr.bf16.mxu0 0
      %580 = vmatpush2.bf16.xpose.msra.mxu0 0
      %581 = vmatprep.subr.bf16.mxu0 0
      %582 = vmatpush2.bf16.xpose.msra.mxu0 0
      %583 = vmatprep.subr.bf16.mxu0 0
      %584 = vmatpush2.bf16.xpose.msra.mxu0 0
      %585 = vmatprep.subr.bf16.mxu0 0
      %586 = vmatpush2.bf16.xpose.msra.mxu0 0
      %587 = vmatprep.subr.bf16.mxu0 0
      %588 = vmatpush2.bf16.xpose.msra.mxu0 0
      %589 = vmatprep.subr.bf16.mxu0 0
      %590 = vmatpush2.bf16.xpose.msra.mxu0 0
      %591 = vmatprep.subr.bf16.mxu0 0
      %592 = vmatpush2.bf16.xpose.msra.mxu0 0
      %593 = vmatprep.subr.bf16.mxu0 0
      %594 = vmatpush2.bf16.xpose.msra.mxu0 0
      %595 = vmatprep.mubr.bf16.mxu0 0
      %596 = vmatmul.mubr.bf16.gmra.mxu0 %v558
      %v597 = vpop.f32.mrf.mxu0
      %v598 = vadd.f32 0.0, %v597
      %v599 = vpop.f32.mrf.mxu0
      %v600 = vpop.f32.mrf.mxu0
      %v601 = vpop.f32.mrf.mxu0
      %602 = vdwg.mxu0
      %604 = vrot.lane.b32.xlu0 %v504, 64
      %v605 = vpop.permute.xlu0 %604
      %v607 = vsel %vm444, %v504, 0
      %v610 = vsel %vm444, %v605, 0
      %612 = vmatprep.subr.bf16.mxu0 0
      %613 = vmatpush1.bf16.xpose.msra.mxu0 0
      %614 = vmatprep.subr.bf16.mxu0 0
      %615 = vmatpush1.bf16.xpose.msra.mxu0 0
      %616 = vmatprep.subr.bf16.mxu0 0
      %617 = vmatpush1.bf16.xpose.msra.mxu0 0
      %618 = vmatprep.subr.bf16.mxu0 0
      %619 = vmatpush1.bf16.xpose.msra.mxu0 0
      %620 = vmatprep.subr.bf16.mxu0 0
      %621 = vmatpush1.bf16.xpose.msra.mxu0 0
      %622 = vmatprep.subr.bf16.mxu0 0
      %623 = vmatpush1.bf16.xpose.msra.mxu0 0
      %624 = vmatprep.subr.bf16.mxu0 0
      %625 = vmatpush1.bf16.xpose.msra.mxu0 0
      %626 = vmatprep.subr.bf16.mxu0 0
      %627 = vmatpush1.bf16.xpose.msra.mxu0 %v610
      %628 = vmatprep.subr.bf16.mxu0 0
      %629 = vmatpush2.bf16.xpose.msra.mxu0 0
      %630 = vmatprep.subr.bf16.mxu0 0
      %631 = vmatpush2.bf16.xpose.msra.mxu0 0
      %632 = vmatprep.subr.bf16.mxu0 0
      %633 = vmatpush2.bf16.xpose.msra.mxu0 0
      %634 = vmatprep.subr.bf16.mxu0 0
      %635 = vmatpush2.bf16.xpose.msra.mxu0 0
      %636 = vmatprep.subr.bf16.mxu0 0
      %637 = vmatpush2.bf16.xpose.msra.mxu0 0
      %638 = vmatprep.subr.bf16.mxu0 0
      %639 = vmatpush2.bf16.xpose.msra.mxu0 0
      %640 = vmatprep.subr.bf16.mxu0 0
      %641 = vmatpush2.bf16.xpose.msra.mxu0 0
      %642 = vmatprep.subr.bf16.mxu0 0
      %643 = vmatpush2.bf16.xpose.msra.mxu0 0
      %644 = vmatprep.mubr.bf16.mxu0 0
      %645 = vmatmul.mubr.bf16.gmra.mxu0 %v607
      %v646 = vpop.f32.mrf.mxu0
      %v647 = vadd.f32 0.0, %v646
      %v648 = vpop.f32.mrf.mxu0
      %v649 = vpop.f32.mrf.mxu0
      %v650 = vpop.f32.mrf.mxu0
      %651 = vdwg.mxu0
      %v652 = vmul.f32 %v549, 0.17677669
      %v653 = vmul.f32 %v598, 0.17677669
      %v654 = vmul.f32 %v647, 0.17677669
      %v655 = vlaneseq
      %v656 = vshrl.u32 %v655, 7
      %v657 = vlaneseq
      %v658 = vand.u32 %v657, 127
      %vm659 = vcmp.le.s32.totalorder %v658, %v656
      %v660 = vsel %vm659, %v652, -inf
      %v661 = vsel %vm659, %v653, -inf
      %v662 = vsel %vm659, %v654, -inf
      %vm663 = vcmask 64512
      %v664 = vsel %vm663, %v660, -inf
      %665 = vmax.xlane.f32.xlu0 %v664
      %v666 = vpop.xlane.xlu0 %665
      %v667 = vsel %vm663, %v661, -inf
      %668 = vmax.xlane.f32.xlu0 %v667
      %v669 = vpop.xlane.xlu0 %668
      %v670 = vsel %vm663, %v662, -inf
      %671 = vmax.xlane.f32.xlu0 %v670
      %v672 = vpop.xlane.xlu0 %671
      %v673 = vsub.f32 %v660, %v666
      %v674 = vsub.f32 %v661, %v669
      %v675 = vsub.f32 %v662, %v672
      %v676 = vmul.f32 %v673, 1.442695
      %v677 = vpow.pop %v676
      %v678 = vmul.f32 %v674, 1.442695
      %v679 = vpow.pop %v678
      %v680 = vmul.f32 %v675, 1.442695
      %v681 = vpow.pop %v680
      %v682 = vsel %vm663, %v677, 0.0
      %683 = vadd.xlane.f32.xlu0 %v682
      %v684 = vpop.xlane.xlu0 %683
      %v685 = vsel %vm663, %v679, 0.0
      %686 = vadd.xlane.f32.xlu0 %v685
      %v687 = vpop.xlane.xlu0 %686
      %v688 = vsel %vm663, %v681, 0.0
      %689 = vadd.xlane.f32.xlu0 %v688
      %v690 = vpop.xlane.xlu0 %689
      %v691 = vrcp.pop %v684
      %v692 = vrcp.pop %v687
      %v693 = vrcp.pop %v690
      %v694 = vmul.f32 %v677, %v691
      %v695 = vmul.f32 %v679, %v692
      %v696 = vmul.f32 %v681, %v693
      %v697 = vpack.c.bf16 %v694, %v694
      %v698 = vpack.c.bf16 %v695, %v695
      %v699 = vpack.c.bf16 %v696, %v696
      %v700 = vpack.c.bf16 %v488, %v488
      %v701 = vpack.c.bf16 %v492, %v492
      %v702 = vpack.c.bf16 %v498, %v498
      %v704 = vsel %vm663, %v697, 0
      %vm706 = vcmask 1043456
      %v708 = vsel %vm706, %v700, 0
      %710 = vmatprep.subr.bf16.mxu0 0
      %711 = vmatpush1.bf16.msra.mxu0 0
      %712 = vmatprep.subr.bf16.mxu0 0
      %713 = vmatpush1.bf16.msra.mxu0 0
      %714 = vmatprep.subr.bf16.mxu0 0
      %715 = vmatpush1.bf16.msra.mxu0 0
      %716 = vmatprep.subr.bf16.mxu0 0
      %717 = vmatpush1.bf16.msra.mxu0 0
      %718 = vmatprep.subr.bf16.mxu0 0
      %719 = vmatpush1.bf16.msra.mxu0 0
      %720 = vmatprep.subr.bf16.mxu0 0
      %721 = vmatpush1.bf16.msra.mxu0 0
      %722 = vmatprep.subr.bf16.mxu0 0
      %723 = vmatpush1.bf16.msra.mxu0 0
      %724 = vmatprep.subr.bf16.mxu0 0
      %725 = vmatpush1.bf16.msra.mxu0 %v708
      %726 = vmatprep.subr.bf16.mxu0 0
      %727 = vmatpush2.bf16.msra.mxu0 0
      %728 = vmatprep.subr.bf16.mxu0 0
      %729 = vmatpush2.bf16.msra.mxu0 0
      %730 = vmatprep.subr.bf16.mxu0 0
      %731 = vmatpush2.bf16.msra.mxu0 0
      %732 = vmatprep.subr.bf16.mxu0 0
      %733 = vmatpush2.bf16.msra.mxu0 0
      %734 = vmatprep.subr.bf16.mxu0 0
      %735 = vmatpush2.bf16.msra.mxu0 0
      %736 = vmatprep.subr.bf16.mxu0 0
      %737 = vmatpush2.bf16.msra.mxu0 0
      %738 = vmatprep.subr.bf16.mxu0 0
      %739 = vmatpush2.bf16.msra.mxu0 0
      %740 = vmatprep.subr.bf16.mxu0 0
      %741 = vmatpush2.bf16.msra.mxu0 0
      %742 = vmatprep.mubr.bf16.mxu0 0
      %743 = vmatmul.mubr.bf16.gmra.mxu0 %v704
      %v744 = vpop.f32.mrf.mxu0
      %v745 = vadd.f32 0.0, %v744
      %v746 = vpop.f32.mrf.mxu0
      %v747 = vpop.f32.mrf.mxu0
      %v748 = vpop.f32.mrf.mxu0
      %749 = vdwg.mxu0
      %v751 = vsel %vm663, %v698, 0
      %v754 = vsel %vm706, %v701, 0
      %756 = vmatprep.subr.bf16.mxu0 0
      %757 = vmatpush1.bf16.msra.mxu0 0
      %758 = vmatprep.subr.bf16.mxu0 0
      %759 = vmatpush1.bf16.msra.mxu0 0
      %760 = vmatprep.subr.bf16.mxu0 0
      %761 = vmatpush1.bf16.msra.mxu0 0
      %762 = vmatprep.subr.bf16.mxu0 0
      %763 = vmatpush1.bf16.msra.mxu0 0
      %764 = vmatprep.subr.bf16.mxu0 0
      %765 = vmatpush1.bf16.msra.mxu0 0
      %766 = vmatprep.subr.bf16.mxu0 0
      %767 = vmatpush1.bf16.msra.mxu0 0
      %768 = vmatprep.subr.bf16.mxu0 0
      %769 = vmatpush1.bf16.msra.mxu0 0
      %770 = vmatprep.subr.bf16.mxu0 0
      %771 = vmatpush1.bf16.msra.mxu0 %v754
      %772 = vmatprep.subr.bf16.mxu0 0
      %773 = vmatpush2.bf16.msra.mxu0 0
      %774 = vmatprep.subr.bf16.mxu0 0
      %775 = vmatpush2.bf16.msra.mxu0 0
      %776 = vmatprep.subr.bf16.mxu0 0
      %777 = vmatpush2.bf16.msra.mxu0 0
      %778 = vmatprep.subr.bf16.mxu0 0
      %779 = vmatpush2.bf16.msra.mxu0 0
      %780 = vmatprep.subr.bf16.mxu0 0
      %781 = vmatpush2.bf16.msra.mxu0 0
      %782 = vmatprep.subr.bf16.mxu0 0
      %783 = vmatpush2.bf16.msra.mxu0 0
      %784 = vmatprep.subr.bf16.mxu0 0
      %785 = vmatpush2.bf16.msra.mxu0 0
      %786 = vmatprep.subr.bf16.mxu0 0
      %787 = vmatpush2.bf16.msra.mxu0 0
      %788 = vmatprep.mubr.bf16.mxu0 0
      %789 = vmatmul.mubr.bf16.gmra.mxu0 %v751
      %v790 = vpop.f32.mrf.mxu0
      %v791 = vadd.f32 0.0, %v790
      %v792 = vpop.f32.mrf.mxu0
      %v793 = vpop.f32.mrf.mxu0
      %v794 = vpop.f32.mrf.mxu0
      %795 = vdwg.mxu0
      %v797 = vsel %vm663, %v699, 0
      %v800 = vsel %vm706, %v702, 0
      %802 = vmatprep.subr.bf16.mxu0 0
      %803 = vmatpush1.bf16.msra.mxu0 0
      %804 = vmatprep.subr.bf16.mxu0 0
      %805 = vmatpush1.bf16.msra.mxu0 0
      %806 = vmatprep.subr.bf16.mxu0 0
      %807 = vmatpush1.bf16.msra.mxu0 0
      %808 = vmatprep.subr.bf16.mxu0 0
      %809 = vmatpush1.bf16.msra.mxu0 0
      %810 = vmatprep.subr.bf16.mxu0 0
      %811 = vmatpush1.bf16.msra.mxu0 0
      %812 = vmatprep.subr.bf16.mxu0 0
      %813 = vmatpush1.bf16.msra.mxu0 0
      %814 = vmatprep.subr.bf16.mxu0 0
      %815 = vmatpush1.bf16.msra.mxu0 0
      %816 = vmatprep.subr.bf16.mxu0 0
      %817 = vmatpush1.bf16.msra.mxu0 %v800
      %818 = vmatprep.subr.bf16.mxu0 0
      %819 = vmatpush2.bf16.msra.mxu0 0
      %820 = vmatprep.subr.bf16.mxu0 0
      %821 = vmatpush2.bf16.msra.mxu0 0
      %822 = vmatprep.subr.bf16.mxu0 0
      %823 = vmatpush2.bf16.msra.mxu0 0
      %824 = vmatprep.subr.bf16.mxu0 0
      %825 = vmatpush2.bf16.msra.mxu0 0
      %826 = vmatprep.subr.bf16.mxu0 0
      %827 = vmatpush2.bf16.msra.mxu0 0
      %828 = vmatprep.subr.bf16.mxu0 0
      %829 = vmatpush2.bf16.msra.mxu0 0
      %830 = vmatprep.subr.bf16.mxu0 0
      %831 = vmatpush2.bf16.msra.mxu0 0
      %832 = vmatprep.subr.bf16.mxu0 0
      %833 = vmatpush2.bf16.msra.mxu0 0
      %834 = vmatprep.mubr.bf16.mxu0 0
      %835 = vmatmul.mubr.bf16.gmra.mxu0 %v797
      %v836 = vpop.f32.mrf.mxu0
      %v837 = vadd.f32 0.0, %v836
      %v838 = vpop.f32.mrf.mxu0
      %v839 = vpop.f32.mrf.mxu0
      %v840 = vpop.f32.mrf.mxu0
      %841 = vdwg.mxu0
      %842 = vrot.lane.b32.xlu0 %v502, 96
      %v843 = vpop.permute.xlu0 %842
      %844 = vrot.lane.b32.xlu0 %v502, 32
      %v845 = vpop.permute.xlu0 %844
      %v847 = vsel %vm444, %v843, 0
      %v850 = vsel %vm444, %v845, 0
      %852 = vmatprep.subr.bf16.mxu0 0
      %853 = vmatpush1.bf16.xpose.msra.mxu0 0
      %854 = vmatprep.subr.bf16.mxu0 0
      %855 = vmatpush1.bf16.xpose.msra.mxu0 0
      %856 = vmatprep.subr.bf16.mxu0 0
      %857 = vmatpush1.bf16.xpose.msra.mxu0 0
      %858 = vmatprep.subr.bf16.mxu0 0
      %859 = vmatpush1.bf16.xpose.msra.mxu0 0
      %860 = vmatprep.subr.bf16.mxu0 0
      %861 = vmatpush1.bf16.xpose.msra.mxu0 0
      %862 = vmatprep.subr.bf16.mxu0 0
      %863 = vmatpush1.bf16.xpose.msra.mxu0 0
      %864 = vmatprep.subr.bf16.mxu0 0
      %865 = vmatpush1.bf16.xpose.msra.mxu0 0
      %866 = vmatprep.subr.bf16.mxu0 0
      %867 = vmatpush1.bf16.xpose.msra.mxu0 %v850
      %868 = vmatprep.subr.bf16.mxu0 0
      %869 = vmatpush2.bf16.xpose.msra.mxu0 0
      %870 = vmatprep.subr.bf16.mxu0 0
      %871 = vmatpush2.bf16.xpose.msra.mxu0 0
      %872 = vmatprep.subr.bf16.mxu0 0
      %873 = vmatpush2.bf16.xpose.msra.mxu0 0
      %874 = vmatprep.subr.bf16.mxu0 0
      %875 = vmatpush2.bf16.xpose.msra.mxu0 0
      %876 = vmatprep.subr.bf16.mxu0 0
      %877 = vmatpush2.bf16.xpose.msra.mxu0 0
      %878 = vmatprep.subr.bf16.mxu0 0
      %879 = vmatpush2.bf16.xpose.msra.mxu0 0
      %880 = vmatprep.subr.bf16.mxu0 0
      %881 = vmatpush2.bf16.xpose.msra.mxu0 0
      %882 = vmatprep.subr.bf16.mxu0 0
      %883 = vmatpush2.bf16.xpose.msra.mxu0 0
      %884 = vmatprep.mubr.bf16.mxu0 0
      %885 = vmatmul.mubr.bf16.gmra.mxu0 %v847
      %v886 = vpop.f32.mrf.mxu0
      %v887 = vadd.f32 0.0, %v886
      %v888 = vpop.f32.mrf.mxu0
      %v889 = vpop.f32.mrf.mxu0
      %v890 = vpop.f32.mrf.mxu0
      %891 = vdwg.mxu0
      %892 = vrot.lane.b32.xlu0 %v503, 96
      %v893 = vpop.permute.xlu0 %892
      %894 = vrot.lane.b32.xlu0 %v503, 32
      %v895 = vpop.permute.xlu0 %894
      %v897 = vsel %vm444, %v893, 0
      %v900 = vsel %vm444, %v895, 0
      %902 = vmatprep.subr.bf16.mxu0 0
      %903 = vmatpush1.bf16.xpose.msra.mxu0 0
      %904 = vmatprep.subr.bf16.mxu0 0
      %905 = vmatpush1.bf16.xpose.msra.mxu0 0
      %906 = vmatprep.subr.bf16.mxu0 0
      %907 = vmatpush1.bf16.xpose.msra.mxu0 0
      %908 = vmatprep.subr.bf16.mxu0 0
      %909 = vmatpush1.bf16.xpose.msra.mxu0 0
      %910 = vmatprep.subr.bf16.mxu0 0
      %911 = vmatpush1.bf16.xpose.msra.mxu0 0
      %912 = vmatprep.subr.bf16.mxu0 0
      %913 = vmatpush1.bf16.xpose.msra.mxu0 0
      %914 = vmatprep.subr.bf16.mxu0 0
      %915 = vmatpush1.bf16.xpose.msra.mxu0 0
      %916 = vmatprep.subr.bf16.mxu0 0
      %917 = vmatpush1.bf16.xpose.msra.mxu0 %v900
      %918 = vmatprep.subr.bf16.mxu0 0
      %919 = vmatpush2.bf16.xpose.msra.mxu0 0
      %920 = vmatprep.subr.bf16.mxu0 0
      %921 = vmatpush2.bf16.xpose.msra.mxu0 0
      %922 = vmatprep.subr.bf16.mxu0 0
      %923 = vmatpush2.bf16.xpose.msra.mxu0 0
      %924 = vmatprep.subr.bf16.mxu0 0
      %925 = vmatpush2.bf16.xpose.msra.mxu0 0
      %926 = vmatprep.subr.bf16.mxu0 0
      %927 = vmatpush2.bf16.xpose.msra.mxu0 0
      %928 = vmatprep.subr.bf16.mxu0 0
      %929 = vmatpush2.bf16.xpose.msra.mxu0 0
      %930 = vmatprep.subr.bf16.mxu0 0
      %931 = vmatpush2.bf16.xpose.msra.mxu0 0
      %932 = vmatprep.subr.bf16.mxu0 0
      %933 = vmatpush2.bf16.xpose.msra.mxu0 0
      %934 = vmatprep.mubr.bf16.mxu0 0
      %935 = vmatmul.mubr.bf16.gmra.mxu0 %v897
      %v936 = vpop.f32.mrf.mxu0
      %v937 = vadd.f32 0.0, %v936
      %v938 = vpop.f32.mrf.mxu0
      %v939 = vpop.f32.mrf.mxu0
      %v940 = vpop.f32.mrf.mxu0
      %941 = vdwg.mxu0
      %942 = vrot.lane.b32.xlu0 %v504, 96
      %v943 = vpop.permute.xlu0 %942
      %944 = vrot.lane.b32.xlu0 %v504, 32
      %v945 = vpop.permute.xlu0 %944
      %v947 = vsel %vm444, %v943, 0
      %v950 = vsel %vm444, %v945, 0
      %952 = vmatprep.subr.bf16.mxu0 0
      %953 = vmatpush1.bf16.xpose.msra.mxu0 0
      %954 = vmatprep.subr.bf16.mxu0 0
      %955 = vmatpush1.bf16.xpose.msra.mxu0 0
      %956 = vmatprep.subr.bf16.mxu0 0
      %957 = vmatpush1.bf16.xpose.msra.mxu0 0
      %958 = vmatprep.subr.bf16.mxu0 0
      %959 = vmatpush1.bf16.xpose.msra.mxu0 0
      %960 = vmatprep.subr.bf16.mxu0 0
      %961 = vmatpush1.bf16.xpose.msra.mxu0 0
      %962 = vmatprep.subr.bf16.mxu0 0
      %963 = vmatpush1.bf16.xpose.msra.mxu0 0
      %964 = vmatprep.subr.bf16.mxu0 0
      %965 = vmatpush1.bf16.xpose.msra.mxu0 0
      %966 = vmatprep.subr.bf16.mxu0 0
      %967 = vmatpush1.bf16.xpose.msra.mxu0 %v950
      %968 = vmatprep.subr.bf16.mxu0 0
      %969 = vmatpush2.bf16.xpose.msra.mxu0 0
      %970 = vmatprep.subr.bf16.mxu0 0
      %971 = vmatpush2.bf16.xpose.msra.mxu0 0
      %972 = vmatprep.subr.bf16.mxu0 0
      %973 = vmatpush2.bf16.xpose.msra.mxu0 0
      %974 = vmatprep.subr.bf16.mxu0 0
      %975 = vmatpush2.bf16.xpose.msra.mxu0 0
      %976 = vmatprep.subr.bf16.mxu0 0
      %977 = vmatpush2.bf16.xpose.msra.mxu0 0
      %978 = vmatprep.subr.bf16.mxu0 0
      %979 = vmatpush2.bf16.xpose.msra.mxu0 0
      %980 = vmatprep.subr.bf16.mxu0 0
      %981 = vmatpush2.bf16.xpose.msra.mxu0 0
      %982 = vmatprep.subr.bf16.mxu0 0
      %983 = vmatpush2.bf16.xpose.msra.mxu0 0
      %984 = vmatprep.mubr.bf16.mxu0 0
      %985 = vmatmul.mubr.bf16.gmra.mxu0 %v947
      %v986 = vpop.f32.mrf.mxu0
      %v987 = vadd.f32 0.0, %v986
      %v988 = vpop.f32.mrf.mxu0
      %v989 = vpop.f32.mrf.mxu0
      %v990 = vpop.f32.mrf.mxu0
      %991 = vdwg.mxu0
      %v992 = vmul.f32 %v887, 0.17677669
      %v993 = vmul.f32 %v937, 0.17677669
      %v994 = vmul.f32 %v987, 0.17677669
      %v995 = vsel %vm659, %v992, -inf
      %v996 = vsel %vm659, %v993, -inf
      %v997 = vsel %vm659, %v994, -inf
      %v998 = vsel %vm663, %v995, -inf
      %999 = vmax.xlane.f32.xlu0 %v998
      %v1000 = vpop.xlane.xlu0 %999
      %v1001 = vsel %vm663, %v996, -inf
      %1002 = vmax.xlane.f32.xlu0 %v1001
      %v1003 = vpop.xlane.xlu0 %1002
      %v1004 = vsel %vm663, %v997, -inf
      %1005 = vmax.xlane.f32.xlu0 %v1004
      %v1006 = vpop.xlane.xlu0 %1005
      %v1007 = vsub.f32 %v995, %v1000
      %v1008 = vsub.f32 %v996, %v1003
      %v1009 = vsub.f32 %v997, %v1006
      %v1010 = vmul.f32 %v1007, 1.442695
      %v1011 = vpow.pop %v1010
      %v1012 = vmul.f32 %v1008, 1.442695
      %v1013 = vpow.pop %v1012
      %v1014 = vmul.f32 %v1009, 1.442695
      %v1015 = vpow.pop %v1014
      %v1016 = vsel %vm663, %v1011, 0.0
      %1017 = vadd.xlane.f32.xlu0 %v1016
      %v1018 = vpop.xlane.xlu0 %1017
      %v1019 = vsel %vm663, %v1013, 0.0
      %1020 = vadd.xlane.f32.xlu0 %v1019
      %v1021 = vpop.xlane.xlu0 %1020
      %v1022 = vsel %vm663, %v1015, 0.0
      %1023 = vadd.xlane.f32.xlu0 %v1022
      %v1024 = vpop.xlane.xlu0 %1023
      %v1025 = vrcp.pop %v1018
      %v1026 = vrcp.pop %v1021
      %v1027 = vrcp.pop %v1024
      %v1028 = vmul.f32 %v1011, %v1025
      %v1029 = vmul.f32 %v1013, %v1026
      %v1030 = vmul.f32 %v1015, %v1027
      %v1031 = vpack.c.bf16 %v1028, %v1028
      %v1032 = vpack.c.bf16 %v1029, %v1029
      %v1033 = vpack.c.bf16 %v1030, %v1030
      %1035 = vrot.lane.b32.xlu0 %v700, 96
      %v1036 = vpop.permute.xlu0 %1035
      %v1038 = vsel %vm663, %v1031, 0
      %v1041 = vsel %vm706, %v1036, 0
      %1043 = vmatprep.subr.bf16.mxu0 0
      %1044 = vmatpush1.bf16.msra.mxu0 0
      %1045 = vmatprep.subr.bf16.mxu0 0
      %1046 = vmatpush1.bf16.msra.mxu0 0
      %1047 = vmatprep.subr.bf16.mxu0 0
      %1048 = vmatpush1.bf16.msra.mxu0 0
      %1049 = vmatprep.subr.bf16.mxu0 0
      %1050 = vmatpush1.bf16.msra.mxu0 0
      %1051 = vmatprep.subr.bf16.mxu0 0
      %1052 = vmatpush1.bf16.msra.mxu0 0
      %1053 = vmatprep.subr.bf16.mxu0 0
      %1054 = vmatpush1.bf16.msra.mxu0 0
      %1055 = vmatprep.subr.bf16.mxu0 0
      %1056 = vmatpush1.bf16.msra.mxu0 0
      %1057 = vmatprep.subr.bf16.mxu0 0
      %1058 = vmatpush1.bf16.msra.mxu0 %v1041
      %1059 = vmatprep.subr.bf16.mxu0 0
      %1060 = vmatpush2.bf16.msra.mxu0 0
      %1061 = vmatprep.subr.bf16.mxu0 0
      %1062 = vmatpush2.bf16.msra.mxu0 0
      %1063 = vmatprep.subr.bf16.mxu0 0
      %1064 = vmatpush2.bf16.msra.mxu0 0
      %1065 = vmatprep.subr.bf16.mxu0 0
      %1066 = vmatpush2.bf16.msra.mxu0 0
      %1067 = vmatprep.subr.bf16.mxu0 0
      %1068 = vmatpush2.bf16.msra.mxu0 0
      %1069 = vmatprep.subr.bf16.mxu0 0
      %1070 = vmatpush2.bf16.msra.mxu0 0
      %1071 = vmatprep.subr.bf16.mxu0 0
      %1072 = vmatpush2.bf16.msra.mxu0 0
      %1073 = vmatprep.subr.bf16.mxu0 0
      %1074 = vmatpush2.bf16.msra.mxu0 0
      %1075 = vmatprep.mubr.bf16.mxu0 0
      %1076 = vmatmul.mubr.bf16.gmra.mxu0 %v1038
      %v1077 = vpop.f32.mrf.mxu0
      %v1078 = vadd.f32 0.0, %v1077
      %v1079 = vpop.f32.mrf.mxu0
      %v1080 = vpop.f32.mrf.mxu0
      %v1081 = vpop.f32.mrf.mxu0
      %1082 = vdwg.mxu0
      %1084 = vrot.lane.b32.xlu0 %v701, 96
      %v1085 = vpop.permute.xlu0 %1084
      %v1087 = vsel %vm663, %v1032, 0
      %v1090 = vsel %vm706, %v1085, 0
      %1092 = vmatprep.subr.bf16.mxu0 0
      %1093 = vmatpush1.bf16.msra.mxu0 0
      %1094 = vmatprep.subr.bf16.mxu0 0
      %1095 = vmatpush1.bf16.msra.mxu0 0
      %1096 = vmatprep.subr.bf16.mxu0 0
      %1097 = vmatpush1.bf16.msra.mxu0 0
      %1098 = vmatprep.subr.bf16.mxu0 0
      %1099 = vmatpush1.bf16.msra.mxu0 0
      %1100 = vmatprep.subr.bf16.mxu0 0
      %1101 = vmatpush1.bf16.msra.mxu0 0
      %1102 = vmatprep.subr.bf16.mxu0 0
      %1103 = vmatpush1.bf16.msra.mxu0 0
      %1104 = vmatprep.subr.bf16.mxu0 0
      %1105 = vmatpush1.bf16.msra.mxu0 0
      %1106 = vmatprep.subr.bf16.mxu0 0
      %1107 = vmatpush1.bf16.msra.mxu0 %v1090
      %1108 = vmatprep.subr.bf16.mxu0 0
      %1109 = vmatpush2.bf16.msra.mxu0 0
      %1110 = vmatprep.subr.bf16.mxu0 0
      %1111 = vmatpush2.bf16.msra.mxu0 0
      %1112 = vmatprep.subr.bf16.mxu0 0
      %1113 = vmatpush2.bf16.msra.mxu0 0
      %1114 = vmatprep.subr.bf16.mxu0 0
      %1115 = vmatpush2.bf16.msra.mxu0 0
      %1116 = vmatprep.subr.bf16.mxu0 0
      %1117 = vmatpush2.bf16.msra.mxu0 0
      %1118 = vmatprep.subr.bf16.mxu0 0
      %1119 = vmatpush2.bf16.msra.mxu0 0
      %1120 = vmatprep.subr.bf16.mxu0 0
      %1121 = vmatpush2.bf16.msra.mxu0 0
      %1122 = vmatprep.subr.bf16.mxu0 0
      %1123 = vmatpush2.bf16.msra.mxu0 0
      %1124 = vmatprep.mubr.bf16.mxu0 0
      %1125 = vmatmul.mubr.bf16.gmra.mxu0 %v1087
      %v1126 = vpop.f32.mrf.mxu0
      %v1127 = vadd.f32 0.0, %v1126
      %v1128 = vpop.f32.mrf.mxu0
      %v1129 = vpop.f32.mrf.mxu0
      %v1130 = vpop.f32.mrf.mxu0
      %1131 = vdwg.mxu0
      %1133 = vrot.lane.b32.xlu0 %v702, 96
      %v1134 = vpop.permute.xlu0 %1133
      %v1136 = vsel %vm663, %v1033, 0
      %v1139 = vsel %vm706, %v1134, 0
      %1141 = vmatprep.subr.bf16.mxu0 0
      %1142 = vmatpush1.bf16.msra.mxu0 0
      %1143 = vmatprep.subr.bf16.mxu0 0
      %1144 = vmatpush1.bf16.msra.mxu0 0
      %1145 = vmatprep.subr.bf16.mxu0 0
      %1146 = vmatpush1.bf16.msra.mxu0 0
      %1147 = vmatprep.subr.bf16.mxu0 0
      %1148 = vmatpush1.bf16.msra.mxu0 0
      %1149 = vmatprep.subr.bf16.mxu0 0
      %1150 = vmatpush1.bf16.msra.mxu0 0
      %1151 = vmatprep.subr.bf16.mxu0 0
      %1152 = vmatpush1.bf16.msra.mxu0 0
      %1153 = vmatprep.subr.bf16.mxu0 0
      %1154 = vmatpush1.bf16.msra.mxu0 0
      %1155 = vmatprep.subr.bf16.mxu0 0
      %1156 = vmatpush1.bf16.msra.mxu0 %v1139
      %1157 = vmatprep.subr.bf16.mxu0 0
      %1158 = vmatpush2.bf16.msra.mxu0 0
      %1159 = vmatprep.subr.bf16.mxu0 0
      %1160 = vmatpush2.bf16.msra.mxu0 0
      %1161 = vmatprep.subr.bf16.mxu0 0
      %1162 = vmatpush2.bf16.msra.mxu0 0
      %1163 = vmatprep.subr.bf16.mxu0 0
      %1164 = vmatpush2.bf16.msra.mxu0 0
      %1165 = vmatprep.subr.bf16.mxu0 0
      %1166 = vmatpush2.bf16.msra.mxu0 0
      %1167 = vmatprep.subr.bf16.mxu0 0
      %1168 = vmatpush2.bf16.msra.mxu0 0
      %1169 = vmatprep.subr.bf16.mxu0 0
      %1170 = vmatpush2.bf16.msra.mxu0 0
      %1171 = vmatprep.subr.bf16.mxu0 0
      %1172 = vmatpush2.bf16.msra.mxu0 0
      %1173 = vmatprep.mubr.bf16.mxu0 0
      %1174 = vmatmul.mubr.bf16.gmra.mxu0 %v1136
      %v1175 = vpop.f32.mrf.mxu0
      %v1176 = vadd.f32 0.0, %v1175
      %v1177 = vpop.f32.mrf.mxu0
      %v1178 = vpop.f32.mrf.mxu0
      %v1179 = vpop.f32.mrf.mxu0
      %1180 = vdwg.mxu0
      %1184 = vrot.lane.b32.xlu0 %v1078, 32
      %v1185 = vpop.permute.xlu0 %1184
      %1186 = vrot.lane.b32.xlu0 %v1127, 32
      %v1187 = vpop.permute.xlu0 %1186
      %1188 = vrot.lane.b32.xlu0 %v1176, 32
      %v1189 = vpop.permute.xlu0 %1188
      %v1193 = vsel %vm444, %v745, %v1185
      %v1194 = vsel %vm444, %v791, %v1187
      %v1195 = vsel %vm444, %v837, %v1189
      %v1196 = vpack.c.bf16 %v1194, %v1193
      %v1197 = vpack.c.bf16 %v1195, %v1195
      %v1198 = vld [vmem:[%s2] sm:$0xf]
      %v1199 = vld [vmem:[%s2 + $0x4] sm:$0xf]
      %v1200 = vld [vmem:[%s2 + $0x8] sm:$0xf]
      %v1201 = vld [vmem:[%s2 + $0xc] sm:$0xf]
      %v1202 = vld [vmem:[%s2 + $0x10] sm:$0xf]
      %v1203 = vld [vmem:[%s2 + $0x14] sm:$0xf]
      %v1204 = vld [vmem:[%s2 + $0x18] sm:$0xf]
      %v1205 = vld [vmem:[%s2 + $0x1c] sm:$0xf]
      %v1206 = vld [vmem:[%s3] sm:$0x1]
      %v1208 = vlaneseq
      %v1209 = vshrl.u32 %v1208, 7
      %v1210 = vsub.s32 0, %v1209
      %v1211 = vrot.slane %v1206, %v1210
      %v1221 = vunpack.c.l.b16 %v1198
      %v1222 = vunpack.c.l.b16 %v1199
      %v1223 = vunpack.c.l.b16 %v1200
      %v1224 = vunpack.c.l.b16 %v1201
      %v1225 = vunpack.c.l.b16 %v1202
      %v1226 = vunpack.c.l.b16 %v1203
      %v1227 = vunpack.c.l.b16 %v1204
      %v1228 = vunpack.c.l.b16 %v1205
      %v1229 = vpack.c.b16 %v1222, %v1221
      %v1230 = vpack.c.b16 %v1224, %v1223
      %v1231 = vpack.c.b16 %v1226, %v1225
      %v1232 = vpack.c.b16 %v1228, %v1227
      %vm1237 = vcmask 523264
      %v1239 = vsel %vm1237, %v1196, 0
      %v1242 = vsel %vm1237, %v1197, 0
      %1244 = vmatprep.subr.bf16.mxu0 0
      %1245 = vmatpush1.bf16.msra.mxu0 0
      %1246 = vmatprep.subr.bf16.mxu0 0
      %1247 = vmatpush1.bf16.msra.mxu0 0
      %1248 = vmatprep.subr.bf16.mxu0 0
      %1249 = vmatpush1.bf16.msra.mxu0 0
      %1250 = vmatprep.subr.bf16.mxu0 0
      %1251 = vmatpush1.bf16.msra.mxu0 0
      %1252 = vmatprep.subr.bf16.mxu0 0
      %1253 = vmatpush1.bf16.msra.mxu0 %v1232
      %1254 = vmatprep.subr.bf16.mxu0 0
      %1255 = vmatpush1.bf16.msra.mxu0 %v1231
      %1256 = vmatprep.subr.bf16.mxu0 0
      %1257 = vmatpush1.bf16.msra.mxu0 %v1230
      %1258 = vmatprep.subr.bf16.mxu0 0
      %1259 = vmatpush1.bf16.msra.mxu0 %v1229
      %1260 = vmatprep.subr.bf16.mxu0 0
      %1261 = vmatpush2.bf16.msra.mxu0 0
      %1262 = vmatprep.subr.bf16.mxu0 0
      %1263 = vmatpush2.bf16.msra.mxu0 0
      %1264 = vmatprep.subr.bf16.mxu0 0
      %1265 = vmatpush2.bf16.msra.mxu0 0
      %1266 = vmatprep.subr.bf16.mxu0 0
      %1267 = vmatpush2.bf16.msra.mxu0 0
      %1268 = vmatprep.subr.bf16.mxu0 0
      %1269 = vmatpush2.bf16.msra.mxu0 0
      %1270 = vmatprep.subr.bf16.mxu0 0
      %1271 = vmatpush2.bf16.msra.mxu0 0
      %1272 = vmatprep.subr.bf16.mxu0 0
      %1273 = vmatpush2.bf16.msra.mxu0 0
      %1274 = vmatprep.subr.bf16.mxu0 0
      %1275 = vmatpush2.bf16.msra.mxu0 0
      %1276 = vmatprep.mubr.bf16.mxu0 0
      %1277 = vmatmul.mubr.bf16.gmra.mxu0 %v1239
      %v1278 = vpop.f32.mrf.mxu0
      %v1279 = vadd.f32 %v1211, %v1278
      %v1280 = vpop.f32.mrf.mxu0
      %v1281 = vpop.f32.mrf.mxu0
      %v1282 = vadd.f32 %v1211, %v1281
      %v1283 = vpop.f32.mrf.mxu0
      %1284 = vmatprep.mubr.bf16.mxu0 0
      %1285 = vmatmul.mubr.bf16.gmra.mxu0 %v1242
      %v1286 = vpop.f32.mrf.mxu0
      %v1287 = vadd.f32 %v1211, %v1286
      %v1288 = vpop.f32.mrf.mxu0
      %v1289 = vpop.f32.mrf.mxu0
      %v1290 = vpop.f32.mrf.mxu0
      %1291 = vdwg.mxu0
      %v1292 = vadd.f32 %v1279, %v415
      %v1293 = vadd.f32 %v1282, %v416
      %v1294 = vadd.f32 %v1287, %v417
      %v1295 = vld [vmem:[%s4] sm:$0x1]
      %v1296 = vld [vmem:[%s5] sm:$0x1]
      %v1297 = vsel %vm444, %v1292, 0.0
      %1298 = vadd.xlane.f32.xlu0 %v1297
      %v1299 = vpop.xlane.xlu0 %1298
      %v1300 = vsel %vm444, %v1293, 0.0
      %1301 = vadd.xlane.f32.xlu0 %v1300
      %v1302 = vpop.xlane.xlu0 %1301
      %v1303 = vsel %vm444, %v1294, 0.0
      %1304 = vadd.xlane.f32.xlu0 %v1303
      %v1305 = vpop.xlane.xlu0 %1304
      %v1306 = vrcp.pop 32.0
      %v1307 = vmul.f32 %v1299, %v1306
      %v1308 = vmul.f32 %v1302, %v1306
      %v1309 = vmul.f32 %v1305, %v1306
      %v1310 = vsub.f32 %v1292, %v1307
      %v1311 = vsub.f32 %v1293, %v1308
      %v1312 = vsub.f32 %v1294, %v1309
      %v1313 = vmul.f32 %v1310, %v1310
      %v1314 = vmul.f32 %v1311, %v1311
      %v1315 = vmul.f32 %v1312, %v1312
      %v1316 = vsel %vm444, %v1313, 0.0
      %1317 = vadd.xlane.f32.xlu0 %v1316
      %v1318 = vpop.xlane.xlu0 %1317
      %v1319 = vsel %vm444, %v1314, 0.0
      %1320 = vadd.xlane.f32.xlu0 %v1319
      %v1321 = vpop.xlane.xlu0 %1320
      %v1322 = vsel %vm444, %v1315, 0.0
      %1323 = vadd.xlane.f32.xlu0 %v1322
      %v1324 = vpop.xlane.xlu0 %1323
      %v1325 = vmul.f32 %v1318, %v1306
      %v1326 = vmul.f32 %v1321, %v1306
      %v1327 = vmul.f32 %v1324, %v1306
      %v1328 = vadd.f32 %v1325, 1e-05
      %v1329 = vadd.f32 %v1326, 1e-05
      %v1330 = vadd.f32 %v1327, 1e-05
      %v1331 = vrsqrt.pop %v1328
      %v1332 = vrsqrt.pop %v1329
      %v1333 = vrsqrt.pop %v1330
      %v1334 = vmul.f32 %v1310, %v1331
      %v1335 = vmul.f32 %v1311, %v1332
      %v1336 = vmul.f32 %v1312, %v1333
      %v1338 = vlaneseq
      %v1339 = vshrl.u32 %v1338, 7
      %v1340 = vsub.s32 0, %v1339
      %v1341 = vrot.slane %v1295, %v1340
      %v1343 = vmul.f32 %v1334, %v1341
      %v1344 = vmul.f32 %v1335, %v1341
      %v1345 = vmul.f32 %v1336, %v1341
      %v1347 = vlaneseq
      %v1348 = vshrl.u32 %v1347, 7
      %v1349 = vsub.s32 0, %v1348
      %v1350 = vrot.slane %v1296, %v1349
      %v1352 = vadd.f32 %v1343, %v1350
      %v1353 = vadd.f32 %v1344, %v1350
      %v1354 = vadd.f32 %v1345, %v1350
      %v1355 = vpack.c.bf16 %v1353, %v1352
      %v1356 = vpack.c.bf16 %v1354, %v1354
      %v1357 = vld [vmem:[%s6] sm:$0xf]
      %v1358 = vld [vmem:[%s6 + $0x4] sm:$0xf]
      %v1359 = vld [vmem:[%s6 + $0x8] sm:$0xf]
      %v1360 = vld [vmem:[%s6 + $0xc] sm:$0xf]
      %v1361 = vld [vmem:[%s7] sm:$0x1]
      %v1363 = vlaneseq
      %v1364 = vshrl.u32 %v1363, 7
      %v1365 = vsub.s32 0, %v1364
      %v1366 = vrot.slane %v1361, %v1365
      %v1372 = vunpack.c.l.b16 %v1357
      %v1373 = vunpack.c.l.b16 %v1358
      %v1374 = vunpack.c.l.b16 %v1359
      %v1375 = vunpack.c.l.b16 %v1360
      %v1376 = vpack.c.b16 %v1373, %v1372
      %v1377 = vpack.c.b16 %v1375, %v1374
      %v1381 = vsel %vm444, %v1355, 0
      %v1384 = vsel %vm444, %v1356, 0
      %1386 = vmatprep.subr.bf16.mxu0 0
      %1387 = vmatpush1.bf16.msra.mxu0 0
      %1388 = vmatprep.subr.bf16.mxu0 0
      %1389 = vmatpush1.bf16.msra.mxu0 0
      %1390 = vmatprep.subr.bf16.mxu0 0
      %1391 = vmatpush1.bf16.msra.mxu0 0
      %1392 = vmatprep.subr.bf16.mxu0 0
      %1393 = vmatpush1.bf16.msra.mxu0 0
      %1394 = vmatprep.subr.bf16.mxu0 0
      %1395 = vmatpush1.bf16.msra.mxu0 0
      %1396 = vmatprep.subr.bf16.mxu0 0
      %1397 = vmatpush1.bf16.msra.mxu0 0
      %1398 = vmatprep.subr.bf16.mxu0 0
      %1399 = vmatpush1.bf16.msra.mxu0 %v1377
      %1400 = vmatprep.subr.bf16.mxu0 0
      %1401 = vmatpush1.bf16.msra.mxu0 %v1376
      %1402 = vmatprep.subr.bf16.mxu0 0
      %1403 = vmatpush2.bf16.msra.mxu0 0
      %1404 = vmatprep.subr.bf16.mxu0 0
      %1405 = vmatpush2.bf16.msra.mxu0 0
      %1406 = vmatprep.subr.bf16.mxu0 0
      %1407 = vmatpush2.bf16.msra.mxu0 0
      %1408 = vmatprep.subr.bf16.mxu0 0
      %1409 = vmatpush2.bf16.msra.mxu0 0
      %1410 = vmatprep.subr.bf16.mxu0 0
      %1411 = vmatpush2.bf16.msra.mxu0 0
      %1412 = vmatprep.subr.bf16.mxu0 0
      %1413 = vmatpush2.bf16.msra.mxu0 0
      %1414 = vmatprep.subr.bf16.mxu0 0
      %1415 = vmatpush2.bf16.msra.mxu0 0
      %1416 = vmatprep.subr.bf16.mxu0 0
      %1417 = vmatpush2.bf16.msra.mxu0 0
      %1418 = vmatprep.mubr.bf16.mxu0 0
      %1419 = vmatmul.mubr.bf16.gmra.mxu0 %v1381
      %v1420 = vpop.f32.mrf.mxu0
      %v1421 = vadd.f32 %v1366, %v1420
      %v1422 = vpop.f32.mrf.mxu0
      %v1423 = vpop.f32.mrf.mxu0
      %v1424 = vadd.f32 %v1366, %v1423
      %v1425 = vpop.f32.mrf.mxu0
      %1426 = vmatprep.mubr.bf16.mxu0 0
      %1427 = vmatmul.mubr.bf16.gmra.mxu0 %v1384
      %v1428 = vpop.f32.mrf.mxu0
      %v1429 = vadd.f32 %v1366, %v1428
      %v1430 = vpop.f32.mrf.mxu0
      %v1431 = vpop.f32.mrf.mxu0
      %v1432 = vpop.f32.mrf.mxu0
      %1433 = vdwg.mxu0
      %v1434 = vmax.f32 %v1421, 0.0
      %v1435 = vmax.f32 %v1424, 0.0
      %v1436 = vmax.f32 %v1429, 0.0
      %v1437 = vpack.c.bf16 %v1435, %v1434
      %v1438 = vpack.c.bf16 %v1436, %v1436
      %v1439 = vld [vmem:[%s8] sm:$0xf]
      %v1440 = vld [vmem:[%s8 + $0x4] sm:$0xf]
      %v1441 = vld [vmem:[%s8 + $0x8] sm:$0xf]
      %v1442 = vld [vmem:[%s8 + $0xc] sm:$0xf]
      %v1443 = vld [vmem:[%s8 + $0x10] sm:$0xf]
      %v1444 = vld [vmem:[%s8 + $0x14] sm:$0xf]
      %v1445 = vld [vmem:[%s8 + $0x18] sm:$0xf]
      %v1446 = vld [vmem:[%s8 + $0x1c] sm:$0xf]
      %v1447 = vld [vmem:[%s8 + $0x20] sm:$0xf]
      %v1448 = vld [vmem:[%s8 + $0x24] sm:$0xf]
      %v1449 = vld [vmem:[%s8 + $0x28] sm:$0xf]
      %v1450 = vld [vmem:[%s8 + $0x2c] sm:$0xf]
      %v1451 = vld [vmem:[%s8 + $0x30] sm:$0xf]
      %v1452 = vld [vmem:[%s8 + $0x34] sm:$0xf]
      %v1453 = vld [vmem:[%s8 + $0x38] sm:$0xf]
      %v1454 = vld [vmem:[%s8 + $0x3c] sm:$0xf]
      %v1455 = vld [vmem:[%s9] sm:$0x1]
      %v1457 = vlaneseq
      %v1458 = vshrl.u32 %v1457, 7
      %v1459 = vsub.s32 0, %v1458
      %v1460 = vrot.slane %v1455, %v1459
      %v1478 = vunpack.c.l.b16 %v1439
      %v1479 = vunpack.c.l.b16 %v1440
      %v1480 = vunpack.c.l.b16 %v1441
      %v1481 = vunpack.c.l.b16 %v1442
      %v1482 = vunpack.c.l.b16 %v1443
      %v1483 = vunpack.c.l.b16 %v1444
      %v1484 = vunpack.c.l.b16 %v1445
      %v1485 = vunpack.c.l.b16 %v1446
      %v1486 = vunpack.c.l.b16 %v1447
      %v1487 = vunpack.c.l.b16 %v1448
      %v1488 = vunpack.c.l.b16 %v1449
      %v1489 = vunpack.c.l.b16 %v1450
      %v1490 = vunpack.c.l.b16 %v1451
      %v1491 = vunpack.c.l.b16 %v1452
      %v1492 = vunpack.c.l.b16 %v1453
      %v1493 = vunpack.c.l.b16 %v1454
      %v1494 = vpack.c.b16 %v1479, %v1478
      %v1495 = vpack.c.b16 %v1481, %v1480
      %v1496 = vpack.c.b16 %v1483, %v1482
      %v1497 = vpack.c.b16 %v1485, %v1484
      %v1498 = vpack.c.b16 %v1487, %v1486
      %v1499 = vpack.c.b16 %v1489, %v1488
      %v1500 = vpack.c.b16 %v1491, %v1490
      %v1501 = vpack.c.b16 %v1493, %v1492
      %1510 = vmatprep.subr.bf16.mxu0 0
      %1511 = vmatpush1.bf16.msra.mxu0 %v1501
      %1512 = vmatprep.subr.bf16.mxu0 0
      %1513 = vmatpush1.bf16.msra.mxu0 %v1500
      %1514 = vmatprep.subr.bf16.mxu0 0
      %1515 = vmatpush1.bf16.msra.mxu0 %v1499
      %1516 = vmatprep.subr.bf16.mxu0 0
      %1517 = vmatpush1.bf16.msra.mxu0 %v1498
      %1518 = vmatprep.subr.bf16.mxu0 0
      %1519 = vmatpush1.bf16.msra.mxu0 %v1497
      %1520 = vmatprep.subr.bf16.mxu0 0
      %1521 = vmatpush1.bf16.msra.mxu0 %v1496
      %1522 = vmatprep.subr.bf16.mxu0 0
      %1523 = vmatpush1.bf16.msra.mxu0 %v1495
      %1524 = vmatprep.subr.bf16.mxu0 0
      %1525 = vmatpush1.bf16.msra.mxu0 %v1494
      %1526 = vmatprep.subr.bf16.mxu0 0
      %1527 = vmatpush2.bf16.msra.mxu0 0
      %1528 = vmatprep.subr.bf16.mxu0 0
      %1529 = vmatpush2.bf16.msra.mxu0 0
      %1530 = vmatprep.subr.bf16.mxu0 0
      %1531 = vmatpush2.bf16.msra.mxu0 0
      %1532 = vmatprep.subr.bf16.mxu0 0
      %1533 = vmatpush2.bf16.msra.mxu0 0
      %1534 = vmatprep.subr.bf16.mxu0 0
      %1535 = vmatpush2.bf16.msra.mxu0 0
      %1536 = vmatprep.subr.bf16.mxu0 0
      %1537 = vmatpush2.bf16.msra.mxu0 0
      %1538 = vmatprep.subr.bf16.mxu0 0
      %1539 = vmatpush2.bf16.msra.mxu0 0
      %1540 = vmatprep.subr.bf16.mxu0 0
      %1541 = vmatpush2.bf16.msra.mxu0 0
      %1542 = vmatprep.mubr.bf16.mxu0 0
      %1543 = vmatmul.mubr.bf16.gmra.mxu0 %v1437
      %v1544 = vpop.f32.mrf.mxu0
      %v1545 = vadd.f32 %v1460, %v1544
      %v1546 = vpop.f32.mrf.mxu0
      %v1547 = vpop.f32.mrf.mxu0
      %v1548 = vadd.f32 %v1460, %v1547
      %v1549 = vpop.f32.mrf.mxu0
      %1550 = vmatprep.mubr.bf16.mxu0 0
      %1551 = vmatmul.mubr.bf16.gmra.mxu0 %v1438
      %v1552 = vpop.f32.mrf.mxu0
      %v1553 = vadd.f32 %v1460, %v1552
      %v1554 = vpop.f32.mrf.mxu0
      %v1555 = vpop.f32.mrf.mxu0
      %v1556 = vpop.f32.mrf.mxu0
      %1557 = vdwg.mxu0
      %v1558 = vadd.f32 %v1545, %v1352
      %v1559 = vadd.f32 %v1548, %v1353
      %v1560 = vadd.f32 %v1553, %v1354
      %v1561 = vld [vmem:[%s10] sm:$0x1]
      %v1562 = vld [vmem:[%s11] sm:$0x1]
      %v1563 = vsel %vm444, %v1558, 0.0
      %1564 = vadd.xlane.f32.xlu0 %v1563
      %v1565 = vpop.xlane.xlu0 %1564
      %v1566 = vsel %vm444, %v1559, 0.0
      %1567 = vadd.xlane.f32.xlu0 %v1566
      %v1568 = vpop.xlane.xlu0 %1567
      %v1569 = vsel %vm444, %v1560, 0.0
      %1570 = vadd.xlane.f32.xlu0 %v1569
      %v1571 = vpop.xlane.xlu0 %1570
      %v1572 = vmul.f32 %v1565, %v1306
      %v1573 = vmul.f32 %v1568, %v1306
      %v1574 = vmul.f32 %v1571, %v1306
      %v1575 = vsub.f32 %v1558, %v1572
      %v1576 = vsub.f32 %v1559, %v1573
      %v1577 = vsub.f32 %v1560, %v1574
      %v1578 = vmul.f32 %v1575, %v1575
      %v1579 = vmul.f32 %v1576, %v1576
      %v1580 = vmul.f32 %v1577, %v1577
      %v1581 = vsel %vm444, %v1578, 0.0
      %1582 = vadd.xlane.f32.xlu0 %v1581
      %v1583 = vpop.xlane.xlu0 %1582
      %v1584 = vsel %vm444, %v1579, 0.0
      %1585 = vadd.xlane.f32.xlu0 %v1584
      %v1586 = vpop.xlane.xlu0 %1585
      %v1587 = vsel %vm444, %v1580, 0.0
      %1588 = vadd.xlane.f32.xlu0 %v1587
      %v1589 = vpop.xlane.xlu0 %1588
      %v1590 = vmul.f32 %v1583, %v1306
      %v1591 = vmul.f32 %v1586, %v1306
      %v1592 = vmul.f32 %v1589, %v1306
      %v1593 = vadd.f32 %v1590, 1e-05
      %v1594 = vadd.f32 %v1591, 1e-05
      %v1595 = vadd.f32 %v1592, 1e-05
      %v1596 = vrsqrt.pop %v1593
      %v1597 = vrsqrt.pop %v1594
      %v1598 = vrsqrt.pop %v1595
      %v1599 = vmul.f32 %v1575, %v1596
      %v1600 = vmul.f32 %v1576, %v1597
      %v1601 = vmul.f32 %v1577, %v1598
      %v1603 = vlaneseq
      %v1604 = vshrl.u32 %v1603, 7
      %v1605 = vsub.s32 0, %v1604
      %v1606 = vrot.slane %v1561, %v1605
      %v1608 = vmul.f32 %v1599, %v1606
      %v1609 = vmul.f32 %v1600, %v1606
      %v1610 = vmul.f32 %v1601, %v1606
      %v1612 = vlaneseq
      %v1613 = vshrl.u32 %v1612, 7
      %v1614 = vsub.s32 0, %v1613
      %v1615 = vrot.slane %v1562, %v1614
      %v1617 = vadd.f32 %v1608, %v1615
      %v1618 = vadd.f32 %v1609, %v1615
      %v1619 = vadd.f32 %v1610, %v1615
      %1620 = vst.msk [vmem:[%s413] sm:$0xff] %vm444, %v1617
      %1621 = vst.msk [vmem:[%s413 + $0x8] sm:$0xff] %vm444, %v1618
      %1622 = vst.msk [vmem:[%s413 + $0x10] sm:$0xff] %vm444, %v1619
      %p1623 = scmp.lt.s32.totalorder %s23, 1
      %s1624 = scalar_select %p1623, %s23, 1
      %s1625 = smul.addr %s1624, 3
      %s1626 = smul.addr %s1625, 8
      %s1627 = scalar_lea.vmem %s12, %s1626
      // Predicated region
      $region69: #{time_agent_transformer_forward.7} parent=67 // pred_check
        %p1628 = pneg %p298
      $region70: #{time_agent_transformer_forward.7} parent=67 // pred_check_branch
        %1630 = sbr.rel (%p1628) target = $region72
      $region71: #{time_agent_transformer_forward.7} parent=67 // pred_region
        _
      $region72: #{time_agent_transformer_forward.7} parent=67 // pred_fallthru
        _
    $region68: #{time_agent_transformer_forward.7} parent=5 // pred_fallthru
      _
    %p1631 = scmp.le.s32.totalorder 2, %s18
    // Predicated region
    $region73: #{time_agent_transformer_forward.7} parent=5 // pred_check
      %p1632 = pneg %p1631
    $region74: #{time_agent_transformer_forward.7} parent=5 // pred_check_branch
      %1634 = sbr.rel (%p1632) target = $region76
    $region75: #{time_agent_transformer_forward.7} parent=5 // pred_region
      %s1635 = ssub.s32 %s18, 2
      // Predicated region
      $region77: #{time_agent_transformer_forward.7} parent=75 // pred_check
        %p1636 = pneg %p304
      $region78: #{time_agent_transformer_forward.7} parent=75 // pred_check_branch
        %1638 = sbr.rel (%p1636) target = $region80
      $region79: #{time_agent_transformer_forward.7} parent=75 // pred_region
        %p1639 = scmp.lt.s32.totalorder %s24, 1
        %s1640 = scalar_select %p1639, %s24, 1
        %s1641 = smul.addr %s1640, 3
        %s1642 = smul.addr %s1641, 8
        %s1643 = scalar_lea.vmem %s12, %s1642
      $region80: #{time_agent_transformer_forward.7} parent=75 // pred_fallthru
        _
    $region76: #{time_agent_transformer_forward.7} parent=5 // pred_fallthru
      _
  $region6: #{time_agent_transformer_forward.7} parent=0 // loop_footer
    %s22 = sadd.s32 1, %s18
  $region7: #{time_agent_transformer_forward.7} parent=0 // loop_footer_branch
    %17 = sbr.rel target = $region3
  $region8: #{time_agent_transformer_forward.7} parent=0 // loop_exit
    _

// kernel: time_agent_transformer_forward.8
$region0: #{time_agent_transformer_forward.8}
  #allocation0 [shape = 'u32[]', space=smem, size = 0x4, offset = 0x4, fixed_abs, tag = 'smem constant byte address 0x4 - core index']
  #allocation1 [shape = 'u32[144,128]{1,0:T(1,128)}', space=vmem, size = 0x12000, scoped, tag = 'internal scratch']
  %s0 = inlined_call_operand.vmem [shape: f32[2,8,3,32], index: 0, kind: input, shape index: {}]
  %s1 = inlined_call_operand.vmem [shape: bf16[32,192], index: 1, kind: input, shape index: {}]
  %s2 = inlined_call_operand.vmem [shape: bf16[64,32], index: 2, kind: input, shape index: {}]
  %s3 = inlined_call_operand.vmem [shape: f32[1,32], index: 3, kind: input, shape index: {}]
  %s4 = inlined_call_operand.vmem [shape: f32[1,32], index: 4, kind: input, shape index: {}]
  %s5 = inlined_call_operand.vmem [shape: f32[1,32], index: 5, kind: input, shape index: {}]
  %s6 = inlined_call_operand.vmem [shape: bf16[32,128], index: 6, kind: input, shape index: {}]
  %s7 = inlined_call_operand.vmem [shape: f32[1,128], index: 7, kind: input, shape index: {}]
  %s8 = inlined_call_operand.vmem [shape: bf16[128,32], index: 8, kind: input, shape index: {}]
  %s9 = inlined_call_operand.vmem [shape: f32[1,32], index: 9, kind: input, shape index: {}]
  %s10 = inlined_call_operand.vmem [shape: f32[1,32], index: 10, kind: input, shape index: {}]
  %s11 = inlined_call_operand.vmem [shape: f32[1,32], index: 11, kind: input, shape index: {}]
  %s12 = inlined_call_operand.vmem [shape: f32[2,8,3,32], index: 12, kind: output, shape index: {}]
  %s13 = sld [smem:[#allocation0]]
  $region81: #{time_agent_transformer_forward.8} parent=0
    _
  %s15 = ssub.s32 1, %s13
  %s16 = scalar_select 0, %s15, %s13
  loop: start=0, step=1, limit=4
  $region2: #{time_agent_transformer_forward.8} parent=0 // loop_pre_header
    _
  $region3: #{time_agent_transformer_forward.8} parent=0 // loop_header
    %s18 = sphi 0, %s22
    %p19 = scmp.ge.s32.totalorder %s18, 4
    %s28 = sphi 0, %s30
    %s31 = sphi 0, %s28
    %s32 = sphi 0, %s31
    %s48 = sphi 0, %s32
    %s52 = sphi 0, %s52
    %s54 = sphi 0, %s52
    %s55 = sphi 0, %s54
    %s69 = sphi 0, %s55
    %s73 = sphi 0, %s73
    %s75 = sphi 0, %s73
    %s76 = sphi 0, %s75
    %s90 = sphi 0, %s76
    %s94 = sphi 0, %s94
    %s96 = sphi 0, %s94
    %s97 = sphi 0, %s96
    %s111 = sphi 0, %s97
    %s115 = sphi 0, %s115
    %s117 = sphi 0, %s115
    %s118 = sphi 0, %s117
    %s132 = sphi 0, %s118
    %s136 = sphi 0, %s136
    %s138 = sphi 0, %s136
    %s139 = sphi 0, %s138
    %s153 = sphi 0, %s139
    %s157 = sphi 0, %s157
    %s159 = sphi 0, %s157
    %s160 = sphi 0, %s159
    %s174 = sphi 0, %s160
    %s178 = sphi 0, %s178
    %s180 = sphi 0, %s178
    %s181 = sphi 0, %s180
    %s195 = sphi 0, %s181
    %s199 = sphi 0, %s199
    %s201 = sphi 0, %s199
    %s202 = sphi 0, %s201
    %s216 = sphi 0, %s202
    %s220 = sphi 0, %s220
    %s222 = sphi 0, %s220
    %s223 = sphi 0, %s222
    %s237 = sphi 0, %s223
    %s241 = sphi 0, %s241
    %s243 = sphi 0, %s241
    %s244 = sphi 0, %s243
    %s258 = sphi 0, %s244
    %s262 = sphi 0, %s262
    %s264 = sphi 0, %s262
    %s265 = sphi 0, %s264
    %s279 = sphi 0, %s265
    %s285 = sphi 0, %s287
    %s288 = sphi 0, %s285
    %s289 = sphi 0, %s288
    %s305 = sphi 0, %s289
  $region4: #{time_agent_transformer_forward.8} parent=0 // loop_header_branch
    %21 = sbr.rel (%p19) target = $region8
  $region5: #{time_agent_transformer_forward.8} parent=0 // loop_body
    %s23 = ssub.s32 %s18, 1
    %s24 = ssub.s32 %s18, 2
    %s25 = sadd.s32 %s18, 1
    %s26 = ssub.s32 %s18, %s25
    %p27 = scmp.eq.s32.totalorder %s26, 0
    %s29 = sadd.s32 %s28, 1
    %s30 = scalar_select %p27, %s28, %s29
    %p33 = pneg %p27
    %p34 = scmp.eq.s32.totalorder %s18, 1
    %p35 = por %p33, %p34
    %p36 = scmp.ne.s32.totalorder %s28, %s31
    %p37 = scmp.eq.s32.totalorder %s18, 0
    %p38 = por %p36, %p37
    %p39 = scmp.ne.s32.totalorder %s28, %s31
    %p40 = scmp.eq.s32.totalorder %s23, 1
    %p41 = por %p39, %p40
    %p42 = scmp.ne.s32.totalorder %s31, %s32
    %p43 = scmp.eq.s32.totalorder %s23, 0
    %p44 = por %p42, %p43
    %p45 = scmp.ne.s32.totalorder %s31, %s32
    %p46 = scmp.eq.s32.totalorder %s24, 1
    %p47 = por %p45, %p46
    %p49 = scmp.ne.s32.totalorder %s32, %s48
    %p50 = scmp.eq.s32.totalorder %s24, 0
    %p51 = por %p49, %p50
    %s53 = sadd.s32 %s52, 1
    %p56 = scmp.eq.s32.totalorder %s18, 1
    %p57 = scmp.ne.s32.totalorder %s52, %s54
    %p58 = scmp.eq.s32.totalorder %s18, 0
    %p59 = por %p57, %p58
    %p60 = scmp.ne.s32.totalorder %s52, %s54
    %p61 = scmp.eq.s32.totalorder %s23, 1
    %p62 = por %p60, %p61
    %p63 = scmp.ne.s32.totalorder %s54, %s55
    %p64 = scmp.eq.s32.totalorder %s23, 0
    %p65 = por %p63, %p64
    %p66 = scmp.ne.s32.totalorder %s54, %s55
    %p67 = scmp.eq.s32.totalorder %s24, 1
    %p68 = por %p66, %p67
    %p70 = scmp.ne.s32.totalorder %s55, %s69
    %p71 = scmp.eq.s32.totalorder %s24, 0
    %p72 = por %p70, %p71
    %s74 = sadd.s32 %s73, 1
    %p77 = scmp.eq.s32.totalorder %s18, 1
    %p78 = scmp.ne.s32.totalorder %s73, %s75
    %p79 = scmp.eq.s32.totalorder %s18, 0
    %p80 = por %p78, %p79
    %p81 = scmp.ne.s32.totalorder %s73, %s75
    %p82 = scmp.eq.s32.totalorder %s23, 1
    %p83 = por %p81, %p82
    %p84 = scmp.ne.s32.totalorder %s75, %s76
    %p85 = scmp.eq.s32.totalorder %s23, 0
    %p86 = por %p84, %p85
    %p87 = scmp.ne.s32.totalorder %s75, %s76
    %p88 = scmp.eq.s32.totalorder %s24, 1
    %p89 = por %p87, %p88
    %p91 = scmp.ne.s32.totalorder %s76, %s90
    %p92 = scmp.eq.s32.totalorder %s24, 0
    %p93 = por %p91, %p92
    %s95 = sadd.s32 %s94, 1
    %p98 = scmp.eq.s32.totalorder %s18, 1
    %p99 = scmp.ne.s32.totalorder %s94, %s96
    %p100 = scmp.eq.s32.totalorder %s18, 0
    %p101 = por %p99, %p100
    %p102 = scmp.ne.s32.totalorder %s94, %s96
    %p103 = scmp.eq.s32.totalorder %s23, 1
    %p104 = por %p102, %p103
    %p105 = scmp.ne.s32.totalorder %s96, %s97
    %p106 = scmp.eq.s32.totalorder %s23, 0
    %p107 = por %p105, %p106
    %p108 = scmp.ne.s32.totalorder %s96, %s97
    %p109 = scmp.eq.s32.totalorder %s24, 1
    %p110 = por %p108, %p109
    %p112 = scmp.ne.s32.totalorder %s97, %s111
    %p113 = scmp.eq.s32.totalorder %s24, 0
    %p114 = por %p112, %p113
    %s116 = sadd.s32 %s115, 1
    %p119 = scmp.eq.s32.totalorder %s18, 1
    %p120 = scmp.ne.s32.totalorder %s115, %s117
    %p121 = scmp.eq.s32.totalorder %s18, 0
    %p122 = por %p120, %p121
    %p123 = scmp.ne.s32.totalorder %s115, %s117
    %p124 = scmp.eq.s32.totalorder %s23, 1
    %p125 = por %p123, %p124
    %p126 = scmp.ne.s32.totalorder %s117, %s118
    %p127 = scmp.eq.s32.totalorder %s23, 0
    %p128 = por %p126, %p127
    %p129 = scmp.ne.s32.totalorder %s117, %s118
    %p130 = scmp.eq.s32.totalorder %s24, 1
    %p131 = por %p129, %p130
    %p133 = scmp.ne.s32.totalorder %s118, %s132
    %p134 = scmp.eq.s32.totalorder %s24, 0
    %p135 = por %p133, %p134
    %s137 = sadd.s32 %s136, 1
    %p140 = scmp.eq.s32.totalorder %s18, 1
    %p141 = scmp.ne.s32.totalorder %s136, %s138
    %p142 = scmp.eq.s32.totalorder %s18, 0
    %p143 = por %p141, %p142
    %p144 = scmp.ne.s32.totalorder %s136, %s138
    %p145 = scmp.eq.s32.totalorder %s23, 1
    %p146 = por %p144, %p145
    %p147 = scmp.ne.s32.totalorder %s138, %s139
    %p148 = scmp.eq.s32.totalorder %s23, 0
    %p149 = por %p147, %p148
    %p150 = scmp.ne.s32.totalorder %s138, %s139
    %p151 = scmp.eq.s32.totalorder %s24, 1
    %p152 = por %p150, %p151
    %p154 = scmp.ne.s32.totalorder %s139, %s153
    %p155 = scmp.eq.s32.totalorder %s24, 0
    %p156 = por %p154, %p155
    %s158 = sadd.s32 %s157, 1
    %p161 = scmp.eq.s32.totalorder %s18, 1
    %p162 = scmp.ne.s32.totalorder %s157, %s159
    %p163 = scmp.eq.s32.totalorder %s18, 0
    %p164 = por %p162, %p163
    %p165 = scmp.ne.s32.totalorder %s157, %s159
    %p166 = scmp.eq.s32.totalorder %s23, 1
    %p167 = por %p165, %p166
    %p168 = scmp.ne.s32.totalorder %s159, %s160
    %p169 = scmp.eq.s32.totalorder %s23, 0
    %p170 = por %p168, %p169
    %p171 = scmp.ne.s32.totalorder %s159, %s160
    %p172 = scmp.eq.s32.totalorder %s24, 1
    %p173 = por %p171, %p172
    %p175 = scmp.ne.s32.totalorder %s160, %s174
    %p176 = scmp.eq.s32.totalorder %s24, 0
    %p177 = por %p175, %p176
    %s179 = sadd.s32 %s178, 1
    %p182 = scmp.eq.s32.totalorder %s18, 1
    %p183 = scmp.ne.s32.totalorder %s178, %s180
    %p184 = scmp.eq.s32.totalorder %s18, 0
    %p185 = por %p183, %p184
    %p186 = scmp.ne.s32.totalorder %s178, %s180
    %p187 = scmp.eq.s32.totalorder %s23, 1
    %p188 = por %p186, %p187
    %p189 = scmp.ne.s32.totalorder %s180, %s181
    %p190 = scmp.eq.s32.totalorder %s23, 0
    %p191 = por %p189, %p190
    %p192 = scmp.ne.s32.totalorder %s180, %s181
    %p193 = scmp.eq.s32.totalorder %s24, 1
    %p194 = por %p192, %p193
    %p196 = scmp.ne.s32.totalorder %s181, %s195
    %p197 = scmp.eq.s32.totalorder %s24, 0
    %p198 = por %p196, %p197
    %s200 = sadd.s32 %s199, 1
    %p203 = scmp.eq.s32.totalorder %s18, 1
    %p204 = scmp.ne.s32.totalorder %s199, %s201
    %p205 = scmp.eq.s32.totalorder %s18, 0
    %p206 = por %p204, %p205
    %p207 = scmp.ne.s32.totalorder %s199, %s201
    %p208 = scmp.eq.s32.totalorder %s23, 1
    %p209 = por %p207, %p208
    %p210 = scmp.ne.s32.totalorder %s201, %s202
    %p211 = scmp.eq.s32.totalorder %s23, 0
    %p212 = por %p210, %p211
    %p213 = scmp.ne.s32.totalorder %s201, %s202
    %p214 = scmp.eq.s32.totalorder %s24, 1
    %p215 = por %p213, %p214
    %p217 = scmp.ne.s32.totalorder %s202, %s216
    %p218 = scmp.eq.s32.totalorder %s24, 0
    %p219 = por %p217, %p218
    %s221 = sadd.s32 %s220, 1
    %p224 = scmp.eq.s32.totalorder %s18, 1
    %p225 = scmp.ne.s32.totalorder %s220, %s222
    %p226 = scmp.eq.s32.totalorder %s18, 0
    %p227 = por %p225, %p226
    %p228 = scmp.ne.s32.totalorder %s220, %s222
    %p229 = scmp.eq.s32.totalorder %s23, 1
    %p230 = por %p228, %p229
    %p231 = scmp.ne.s32.totalorder %s222, %s223
    %p232 = scmp.eq.s32.totalorder %s23, 0
    %p233 = por %p231, %p232
    %p234 = scmp.ne.s32.totalorder %s222, %s223
    %p235 = scmp.eq.s32.totalorder %s24, 1
    %p236 = por %p234, %p235
    %p238 = scmp.ne.s32.totalorder %s223, %s237
    %p239 = scmp.eq.s32.totalorder %s24, 0
    %p240 = por %p238, %p239
    %s242 = sadd.s32 %s241, 1
    %p245 = scmp.eq.s32.totalorder %s18, 1
    %p246 = scmp.ne.s32.totalorder %s241, %s243
    %p247 = scmp.eq.s32.totalorder %s18, 0
    %p248 = por %p246, %p247
    %p249 = scmp.ne.s32.totalorder %s241, %s243
    %p250 = scmp.eq.s32.totalorder %s23, 1
    %p251 = por %p249, %p250
    %p252 = scmp.ne.s32.totalorder %s243, %s244
    %p253 = scmp.eq.s32.totalorder %s23, 0
    %p254 = por %p252, %p253
    %p255 = scmp.ne.s32.totalorder %s243, %s244
    %p256 = scmp.eq.s32.totalorder %s24, 1
    %p257 = por %p255, %p256
    %p259 = scmp.ne.s32.totalorder %s244, %s258
    %p260 = scmp.eq.s32.totalorder %s24, 0
    %p261 = por %p259, %p260
    %s263 = sadd.s32 %s262, 1
    %p266 = scmp.eq.s32.totalorder %s18, 1
    %p267 = scmp.ne.s32.totalorder %s262, %s264
    %p268 = scmp.eq.s32.totalorder %s18, 0
    %p269 = por %p267, %p268
    %p270 = scmp.ne.s32.totalorder %s262, %s264
    %p271 = scmp.eq.s32.totalorder %s23, 1
    %p272 = por %p270, %p271
    %p273 = scmp.ne.s32.totalorder %s264, %s265
    %p274 = scmp.eq.s32.totalorder %s23, 0
    %p275 = por %p273, %p274
    %p276 = scmp.ne.s32.totalorder %s264, %s265
    %p277 = scmp.eq.s32.totalorder %s24, 1
    %p278 = por %p276, %p277
    %p280 = scmp.ne.s32.totalorder %s265, %s279
    %p281 = scmp.eq.s32.totalorder %s24, 0
    %p282 = por %p280, %p281
    %s283 = ssub.s32 %s18, %s25
    %p284 = scmp.eq.s32.totalorder %s283, 0
    %s286 = sadd.s32 %s285, 1
    %s287 = scalar_select %p284, %s285, %s286
    %p290 = pneg %p284
    %p291 = scmp.eq.s32.totalorder %s18, 1
    %p292 = por %p290, %p291
    %p293 = scmp.ne.s32.totalorder %s285, %s288
    %p294 = scmp.eq.s32.totalorder %s18, 0
    %p295 = por %p293, %p294
    %p296 = scmp.ne.s32.totalorder %s285, %s288
    %p297 = scmp.eq.s32.totalorder %s23, 1
    %p298 = por %p296, %p297
    %p299 = scmp.ne.s32.totalorder %s288, %s289
    %p300 = scmp.eq.s32.totalorder %s23, 0
    %p301 = por %p299, %p300
    %p302 = scmp.ne.s32.totalorder %s288, %s289
    %p303 = scmp.eq.s32.totalorder %s24, 1
    %p304 = por %p302, %p303
    %p306 = scmp.ne.s32.totalorder %s289, %s305
    %p307 = scmp.eq.s32.totalorder %s24, 0
    %p308 = por %p306, %p307
    %p309 = scmp.le.s32.totalorder 1, %s18
    %p310 = scmp.lt.s32.totalorder %s18, 3
    %p311 = pnand %p309, %p310
    %p312 = pneg %p311
    // Predicated region
    $region9: #{time_agent_transformer_forward.8} parent=5 // pred_check
      _
    $region10: #{time_agent_transformer_forward.8} parent=5 // pred_check_branch
      %314 = sbr.rel (%p311) target = $region12
    $region11: #{time_agent_transformer_forward.8} parent=5 // pred_region
      %s315 = ssub.s32 %s18, 1
      // Predicated region
      $region13: #{time_agent_transformer_forward.8} parent=11 // pred_check
        %p316 = pneg %p65
      $region14: #{time_agent_transformer_forward.8} parent=11 // pred_check_branch
        %318 = sbr.rel (%p316) target = $region16
      $region15: #{time_agent_transformer_forward.8} parent=11 // pred_region
        _
      $region16: #{time_agent_transformer_forward.8} parent=11 // pred_fallthru
        _
      // Predicated region
      $region17: #{time_agent_transformer_forward.8} parent=11 // pred_check
        %p319 = pneg %p86
      $region18: #{time_agent_transformer_forward.8} parent=11 // pred_check_branch
        %321 = sbr.rel (%p319) target = $region20
      $region19: #{time_agent_transformer_forward.8} parent=11 // pred_region
        _
      $region20: #{time_agent_transformer_forward.8} parent=11 // pred_fallthru
        _
      // Predicated region
      $region21: #{time_agent_transformer_forward.8} parent=11 // pred_check
        %p322 = pneg %p107
      $region22: #{time_agent_transformer_forward.8} parent=11 // pred_check_branch
        %324 = sbr.rel (%p322) target = $region24
      $region23: #{time_agent_transformer_forward.8} parent=11 // pred_region
        _
      $region24: #{time_agent_transformer_forward.8} parent=11 // pred_fallthru
        _
      // Predicated region
      $region25: #{time_agent_transformer_forward.8} parent=11 // pred_check
        %p325 = pneg %p128
      $region26: #{time_agent_transformer_forward.8} parent=11 // pred_check_branch
        %327 = sbr.rel (%p325) target = $region28
      $region27: #{time_agent_transformer_forward.8} parent=11 // pred_region
        _
      $region28: #{time_agent_transformer_forward.8} parent=11 // pred_fallthru
        _
      // Predicated region
      $region29: #{time_agent_transformer_forward.8} parent=11 // pred_check
        %p328 = pneg %p149
      $region30: #{time_agent_transformer_forward.8} parent=11 // pred_check_branch
        %330 = sbr.rel (%p328) target = $region32
      $region31: #{time_agent_transformer_forward.8} parent=11 // pred_region
        _
      $region32: #{time_agent_transformer_forward.8} parent=11 // pred_fallthru
        _
      // Predicated region
      $region33: #{time_agent_transformer_forward.8} parent=11 // pred_check
        %p331 = pneg %p170
      $region34: #{time_agent_transformer_forward.8} parent=11 // pred_check_branch
        %333 = sbr.rel (%p331) target = $region36
      $region35: #{time_agent_transformer_forward.8} parent=11 // pred_region
        _
      $region36: #{time_agent_transformer_forward.8} parent=11 // pred_fallthru
        _
      // Predicated region
      $region37: #{time_agent_transformer_forward.8} parent=11 // pred_check
        %p334 = pneg %p191
      $region38: #{time_agent_transformer_forward.8} parent=11 // pred_check_branch
        %336 = sbr.rel (%p334) target = $region40
      $region39: #{time_agent_transformer_forward.8} parent=11 // pred_region
        _
      $region40: #{time_agent_transformer_forward.8} parent=11 // pred_fallthru
        _
      // Predicated region
      $region41: #{time_agent_transformer_forward.8} parent=11 // pred_check
        %p337 = pneg %p212
      $region42: #{time_agent_transformer_forward.8} parent=11 // pred_check_branch
        %339 = sbr.rel (%p337) target = $region44
      $region43: #{time_agent_transformer_forward.8} parent=11 // pred_region
        _
      $region44: #{time_agent_transformer_forward.8} parent=11 // pred_fallthru
        _
      // Predicated region
      $region45: #{time_agent_transformer_forward.8} parent=11 // pred_check
        %p340 = pneg %p233
      $region46: #{time_agent_transformer_forward.8} parent=11 // pred_check_branch
        %342 = sbr.rel (%p340) target = $region48
      $region47: #{time_agent_transformer_forward.8} parent=11 // pred_region
        _
      $region48: #{time_agent_transformer_forward.8} parent=11 // pred_fallthru
        _
      // Predicated region
      $region49: #{time_agent_transformer_forward.8} parent=11 // pred_check
        %p343 = pneg %p254
      $region50: #{time_agent_transformer_forward.8} parent=11 // pred_check_branch
        %345 = sbr.rel (%p343) target = $region52
      $region51: #{time_agent_transformer_forward.8} parent=11 // pred_region
        _
      $region52: #{time_agent_transformer_forward.8} parent=11 // pred_fallthru
        _
      // Predicated region
      $region53: #{time_agent_transformer_forward.8} parent=11 // pred_check
        %p346 = pneg %p275
      $region54: #{time_agent_transformer_forward.8} parent=11 // pred_check_branch
        %348 = sbr.rel (%p346) target = $region56
      $region55: #{time_agent_transformer_forward.8} parent=11 // pred_region
        _
      $region56: #{time_agent_transformer_forward.8} parent=11 // pred_fallthru
        _
    $region12: #{time_agent_transformer_forward.8} parent=5 // pred_fallthru
      _
    %p349 = scmp.lt.s32.totalorder %s18, 2
    // Predicated region
    $region57: #{time_agent_transformer_forward.8} parent=5 // pred_check
      %p350 = pneg %p349
    $region58: #{time_agent_transformer_forward.8} parent=5 // pred_check_branch
      %352 = sbr.rel (%p350) target = $region60
    $region59: #{time_agent_transformer_forward.8} parent=5 // pred_region
      // Predicated region
      $region61: #{time_agent_transformer_forward.8} parent=59 // pred_check
        %p353 = pneg %p38
      $region62: #{time_agent_transformer_forward.8} parent=59 // pred_check_branch
        %355 = sbr.rel (%p353) target = $region64
      $region63: #{time_agent_transformer_forward.8} parent=59 // pred_region
        %p356 = scmp.lt.s32.totalorder %s18, 1
        %s357 = scalar_select %p356, %s18, 1
        %s358 = smul.addr %s357, 8
        %s359 = smul.addr %s358, 4
        %s360 = scalar_lea.vmem %s0, %s359
      $region64: #{time_agent_transformer_forward.8} parent=59 // pred_fallthru
        _
    $region60: #{time_agent_transformer_forward.8} parent=5 // pred_fallthru
      _
    %p361 = scmp.le.s32.totalorder 1, %s18
    %p362 = scmp.lt.s32.totalorder %s18, 3
    %p363 = pnand %p361, %p362
    %p364 = pneg %p363
    // Predicated region
    $region65: #{time_agent_transformer_forward.8} parent=5 // pred_check
      _
    $region66: #{time_agent_transformer_forward.8} parent=5 // pred_check_branch
      %366 = sbr.rel (%p363) target = $region68
    $region67: #{time_agent_transformer_forward.8} parent=5 // pred_region
      %s367 = ssub.s32 %s18, 1
      %p368 = scmp.lt.s32.totalorder %s23, 1
      %s369 = scalar_select %p368, %s23, 1
      %s370 = smul.addr %s369, 8
      %s371 = smul.addr %s370, 4
      %s372 = scalar_lea.vmem %s0, %s371
      %p373 = pneg %p44
      %p374 = pneg %p41
      %p375 = pneg %p65
      %p376 = pneg %p62
      %p377 = pneg %p86
      %p378 = pneg %p83
      %p379 = pneg %p107
      %p380 = pneg %p104
      %p381 = pneg %p128
      %p382 = pneg %p125
      %p383 = pneg %p149
      %p384 = pneg %p146
      %p385 = pneg %p170
      %p386 = pneg %p167
      %p387 = pneg %p191
      %p388 = pneg %p188
      %p389 = pneg %p212
      %p390 = pneg %p209
      %p391 = pneg %p233
      %p392 = pneg %p230
      %p393 = pneg %p254
      %p394 = pneg %p251
      %p395 = pneg %p275
      %p396 = pneg %p272
      %p397 = pneg %p301
      %p398 = pneg %p298
      %p399 = scmp.lt.s32.totalorder %s23, 1
      %s400 = scalar_select %p399, %s23, 1
      %s401 = smul.addr %s400, 8
      %s402 = smul.addr %s401, 4
      %s403 = scalar_lea.vmem %s12, %s402
      %p404 = scmp.lt.s32.totalorder %s23, 1
      %s405 = scalar_select %p404, %s23, 1
      %s406 = smul.addr %s405, 8
      %s407 = smul.addr %s406, 4
      %s408 = scalar_lea.vmem %s0, %s407
      %p409 = scmp.lt.s32.totalorder %s23, 1
      %s410 = scalar_select %p409, %s23, 1
      %s411 = smul.addr %s410, 8
      %s412 = smul.addr %s411, 4
      %s413 = scalar_lea.vmem %s12, %s412
      %v415 = vld [vmem:[%s408] sm:$0x7]
      %v416 = vld [vmem:[%s408 + $0x4] sm:$0x7]
      %v417 = vld [vmem:[%s408 + $0x8] sm:$0x7]
      %v418 = vld [vmem:[%s408 + $0xc] sm:$0x7]
      %v419 = vld [vmem:[%s408 + $0x10] sm:$0x7]
      %v420 = vld [vmem:[%s408 + $0x14] sm:$0x7]
      %v421 = vld [vmem:[%s408 + $0x18] sm:$0x7]
      %v422 = vld [vmem:[%s408 + $0x1c] sm:$0x7]
      %v432 = vunpack.c.l.s4 1966171168
      %v433 = vunpack.c.0.s8 %v432
      %v434 = vlaneseq
      %v435 = vshrl.u32 %v434, 7
      %v436 = vsub.s32 %v433, %v435
      %v437 = vrot.slane %v415, %v436
      %v438 = vcombine.high %v437, %v437
      %v440 = vunpack.c.l.s4 1966171168
      %v441 = vunpack.c.0.s8 %v440
      %v442 = vlaneseq
      %v443 = vshrl.u32 %v442, 7
      %v444 = vsub.s32 %v441, %v443
      %v445 = vrot.slane %v437, %v444
      %v447 = vunpack.c.l.s4 1966171168
      %v448 = vunpack.c.0.s8 %v447
      %v449 = vlaneseq
      %v450 = vshrl.u32 %v449, 7
      %v451 = vsub.s32 %v448, %v450
      %v452 = vrot.slane %v438, %v451
      %v453 = vcombine.high %v445, %v445
      %v455 = vunpack.c.l.s4 1966171168
      %v456 = vunpack.c.0.s8 %v455
      %v457 = vlaneseq
      %v458 = vshrl.u32 %v457, 7
      %v459 = vsub.s32 %v456, %v458
      %v460 = vrot.slane %v416, %v459
      %v461 = vcombine.high %v460, %v460
      %v463 = vunpack.c.l.s4 1966171168
      %v464 = vunpack.c.0.s8 %v463
      %v465 = vlaneseq
      %v466 = vshrl.u32 %v465, 7
      %v467 = vsub.s32 %v464, %v466
      %v468 = vrot.slane %v460, %v467
      %v470 = vunpack.c.l.s4 1966171168
      %v471 = vunpack.c.0.s8 %v470
      %v472 = vlaneseq
      %v473 = vshrl.u32 %v472, 7
      %v474 = vsub.s32 %v471, %v473
      %v475 = vrot.slane %v461, %v474
      %v476 = vcombine.high %v468, %v468
      %v478 = vunpack.c.l.s4 1966171168
      %v479 = vunpack.c.0.s8 %v478
      %v480 = vlaneseq
      %v481 = vshrl.u32 %v480, 7
      %v482 = vsub.s32 %v479, %v481
      %v483 = vrot.slane %v417, %v482
      %v484 = vcombine.high %v483, %v483
      %v486 = vunpack.c.l.s4 1966171168
      %v487 = vunpack.c.0.s8 %v486
      %v488 = vlaneseq
      %v489 = vshrl.u32 %v488, 7
      %v490 = vsub.s32 %v487, %v489
      %v491 = vrot.slane %v483, %v490
      %v493 = vunpack.c.l.s4 1966171168
      %v494 = vunpack.c.0.s8 %v493
      %v495 = vlaneseq
      %v496 = vshrl.u32 %v495, 7
      %v497 = vsub.s32 %v494, %v496
      %v498 = vrot.slane %v484, %v497
      %v499 = vcombine.high %v491, %v491
      %v501 = vunpack.c.l.s4 1966171168
      %v502 = vunpack.c.0.s8 %v501
      %v503 = vlaneseq
      %v504 = vshrl.u32 %v503, 7
      %v505 = vsub.s32 %v502, %v504
      %v506 = vrot.slane %v418, %v505
      %v507 = vcombine.high %v506, %v506
      %v509 = vunpack.c.l.s4 1966171168
      %v510 = vunpack.c.0.s8 %v509
      %v511 = vlaneseq
      %v512 = vshrl.u32 %v511, 7
      %v513 = vsub.s32 %v510, %v512
      %v514 = vrot.slane %v506, %v513
      %v516 = vunpack.c.l.s4 1966171168
      %v517 = vunpack.c.0.s8 %v516
      %v518 = vlaneseq
      %v519 = vshrl.u32 %v518, 7
      %v520 = vsub.s32 %v517, %v519
      %v521 = vrot.slane %v507, %v520
      %v522 = vcombine.high %v514, %v514
      %v524 = vunpack.c.l.s4 1966171168
      %v525 = vunpack.c.0.s8 %v524
      %v526 = vlaneseq
      %v527 = vshrl.u32 %v526, 7
      %v528 = vsub.s32 %v525, %v527
      %v529 = vrot.slane %v419, %v528
      %v530 = vcombine.high %v529, %v529
      %v532 = vunpack.c.l.s4 1966171168
      %v533 = vunpack.c.0.s8 %v532
      %v534 = vlaneseq
      %v535 = vshrl.u32 %v534, 7
      %v536 = vsub.s32 %v533, %v535
      %v537 = vrot.slane %v529, %v536
      %v539 = vunpack.c.l.s4 1966171168
      %v540 = vunpack.c.0.s8 %v539
      %v541 = vlaneseq
      %v542 = vshrl.u32 %v541, 7
      %v543 = vsub.s32 %v540, %v542
      %v544 = vrot.slane %v530, %v543
      %v545 = vcombine.high %v537, %v537
      %v547 = vunpack.c.l.s4 1966171168
      %v548 = vunpack.c.0.s8 %v547
      %v549 = vlaneseq
      %v550 = vshrl.u32 %v549, 7
      %v551 = vsub.s32 %v548, %v550
      %v552 = vrot.slane %v420, %v551
      %v553 = vcombine.high %v552, %v552
      %v555 = vunpack.c.l.s4 1966171168
      %v556 = vunpack.c.0.s8 %v555
      %v557 = vlaneseq
      %v558 = vshrl.u32 %v557, 7
      %v559 = vsub.s32 %v556, %v558
      %v560 = vrot.slane %v552, %v559
      %v562 = vunpack.c.l.s4 1966171168
      %v563 = vunpack.c.0.s8 %v562
      %v564 = vlaneseq
      %v565 = vshrl.u32 %v564, 7
      %v566 = vsub.s32 %v563, %v565
      %v567 = vrot.slane %v553, %v566
      %v568 = vcombine.high %v560, %v560
      %v570 = vunpack.c.l.s4 1966171168
      %v571 = vunpack.c.0.s8 %v570
      %v572 = vlaneseq
      %v573 = vshrl.u32 %v572, 7
      %v574 = vsub.s32 %v571, %v573
      %v575 = vrot.slane %v421, %v574
      %v576 = vcombine.high %v575, %v575
      %v578 = vunpack.c.l.s4 1966171168
      %v579 = vunpack.c.0.s8 %v578
      %v580 = vlaneseq
      %v581 = vshrl.u32 %v580, 7
      %v582 = vsub.s32 %v579, %v581
      %v583 = vrot.slane %v575, %v582
      %v585 = vunpack.c.l.s4 1966171168
      %v586 = vunpack.c.0.s8 %v585
      %v587 = vlaneseq
      %v588 = vshrl.u32 %v587, 7
      %v589 = vsub.s32 %v586, %v588
      %v590 = vrot.slane %v576, %v589
      %v591 = vcombine.high %v583, %v583
      %v593 = vunpack.c.l.s4 1966171168
      %v594 = vunpack.c.0.s8 %v593
      %v595 = vlaneseq
      %v596 = vshrl.u32 %v595, 7
      %v597 = vsub.s32 %v594, %v596
      %v598 = vrot.slane %v422, %v597
      %v599 = vcombine.high %v598, %v598
      %v601 = vunpack.c.l.s4 1966171168
      %v602 = vunpack.c.0.s8 %v601
      %v603 = vlaneseq
      %v604 = vshrl.u32 %v603, 7
      %v605 = vsub.s32 %v602, %v604
      %v606 = vrot.slane %v598, %v605
      %v608 = vunpack.c.l.s4 1966171168
      %v609 = vunpack.c.0.s8 %v608
      %v610 = vlaneseq
      %v611 = vshrl.u32 %v610, 7
      %v612 = vsub.s32 %v609, %v611
      %v613 = vrot.slane %v599, %v612
      %v614 = vcombine.high %v606, %v606
      %v615 = vcombine.low %v445, %v452
      %v616 = vcombine.low %v453, %v468
      %v617 = vcombine.low %v475, %v476
      %v618 = vcombine.low %v491, %v498
      %v620 = vunpack.c.l.s4 1966171168
      %v621 = vunpack.c.0.s8 %v620
      %v622 = vlaneseq
      %v623 = vshrl.u32 %v622, 7
      %v624 = vsub.s32 %v621, %v623
      %v625 = vrot.slane %v615, %v624
      %v627 = vunpack.c.l.s4 1966171168
      %v628 = vunpack.c.0.s8 %v627
      %v629 = vlaneseq
      %v630 = vshrl.u32 %v629, 7
      %v631 = vsub.s32 %v628, %v630
      %v632 = vrot.slane %v616, %v631
      %v634 = vunpack.c.l.s4 1966171168
      %v635 = vunpack.c.0.s8 %v634
      %v636 = vlaneseq
      %v637 = vshrl.u32 %v636, 7
      %v638 = vsub.s32 %v635, %v637
      %v639 = vrot.slane %v617, %v638
      %v641 = vunpack.c.l.s4 1966171168
      %v642 = vunpack.c.0.s8 %v641
      %v643 = vlaneseq
      %v644 = vshrl.u32 %v643, 7
      %v645 = vsub.s32 %v642, %v644
      %v646 = vrot.slane %v618, %v645
      %v647 = vcombine.low %v625, %v632
      %v648 = vcombine.low %v639, %v646
      %v650 = vunpack.c.l.s4 1966171168
      %v651 = vunpack.c.0.s8 %v650
      %v652 = vlaneseq
      %v653 = vshrl.u32 %v652, 7
      %v654 = vsub.s32 %v651, %v653
      %v655 = vrot.slane %v647, %v654
      %v657 = vunpack.c.l.s4 1966171168
      %v658 = vunpack.c.0.s8 %v657
      %v659 = vlaneseq
      %v660 = vshrl.u32 %v659, 7
      %v661 = vsub.s32 %v658, %v660
      %v662 = vrot.slane %v648, %v661
      %v663 = vcombine.low %v655, %v662
      %v664 = vcombine.low %v499, %v514
      %v665 = vcombine.low %v521, %v522
      %v666 = vcombine.low %v537, %v544
      %v667 = vcombine.low %v545, %v560
      %v669 = vunpack.c.l.s4 1966171168
      %v670 = vunpack.c.0.s8 %v669
      %v671 = vlaneseq
      %v672 = vshrl.u32 %v671, 7
      %v673 = vsub.s32 %v670, %v672
      %v674 = vrot.slane %v664, %v673
      %v676 = vunpack.c.l.s4 1966171168
      %v677 = vunpack.c.0.s8 %v676
      %v678 = vlaneseq
      %v679 = vshrl.u32 %v678, 7
      %v680 = vsub.s32 %v677, %v679
      %v681 = vrot.slane %v665, %v680
      %v683 = vunpack.c.l.s4 1966171168
      %v684 = vunpack.c.0.s8 %v683
      %v685 = vlaneseq
      %v686 = vshrl.u32 %v685, 7
      %v687 = vsub.s32 %v684, %v686
      %v688 = vrot.slane %v666, %v687
      %v690 = vunpack.c.l.s4 1966171168
      %v691 = vunpack.c.0.s8 %v690
      %v692 = vlaneseq
      %v693 = vshrl.u32 %v692, 7
      %v694 = vsub.s32 %v691, %v693
      %v695 = vrot.slane %v667, %v694
      %v696 = vcombine.low %v674, %v681
      %v697 = vcombine.low %v688, %v695
      %v699 = vunpack.c.l.s4 1966171168
      %v700 = vunpack.c.0.s8 %v699
      %v701 = vlaneseq
      %v702 = vshrl.u32 %v701, 7
      %v703 = vsub.s32 %v700, %v702
      %v704 = vrot.slane %v696, %v703
      %v706 = vunpack.c.l.s4 1966171168
      %v707 = vunpack.c.0.s8 %v706
      %v708 = vlaneseq
      %v709 = vshrl.u32 %v708, 7
      %v710 = vsub.s32 %v707, %v709
      %v711 = vrot.slane %v697, %v710
      %v712 = vcombine.low %v704, %v711
      %v713 = vcombine.low %v567, %v568
      %v714 = vcombine.low %v583, %v590
      %v715 = vcombine.low %v591, %v606
      %v716 = vcombine.low %v613, %v614
      %v718 = vunpack.c.l.s4 1966171168
      %v719 = vunpack.c.0.s8 %v718
      %v720 = vlaneseq
      %v721 = vshrl.u32 %v720, 7
      %v722 = vsub.s32 %v719, %v721
      %v723 = vrot.slane %v713, %v722
      %v725 = vunpack.c.l.s4 1966171168
      %v726 = vunpack.c.0.s8 %v725
      %v727 = vlaneseq
      %v728 = vshrl.u32 %v727, 7
      %v729 = vsub.s32 %v726, %v728
      %v730 = vrot.slane %v714, %v729
      %v732 = vunpack.c.l.s4 1966171168
      %v733 = vunpack.c.0.s8 %v732
      %v734 = vlaneseq
      %v735 = vshrl.u32 %v734, 7
      %v736 = vsub.s32 %v733, %v735
      %v737 = vrot.slane %v715, %v736
      %v739 = vunpack.c.l.s4 1966171168
      %v740 = vunpack.c.0.s8 %v739
      %v741 = vlaneseq
      %v742 = vshrl.u32 %v741, 7
      %v743 = vsub.s32 %v740, %v742
      %v744 = vrot.slane %v716, %v743
      %v745 = vcombine.low %v723, %v730
      %v746 = vcombine.low %v737, %v744
      %v748 = vunpack.c.l.s4 1966171168
      %v749 = vunpack.c.0.s8 %v748
      %v750 = vlaneseq
      %v751 = vshrl.u32 %v750, 7
      %v752 = vsub.s32 %v749, %v751
      %v753 = vrot.slane %v745, %v752
      %v755 = vunpack.c.l.s4 1966171168
      %v756 = vunpack.c.0.s8 %v755
      %v757 = vlaneseq
      %v758 = vshrl.u32 %v757, 7
      %v759 = vsub.s32 %v756, %v758
      %v760 = vrot.slane %v746, %v759
      %v761 = vcombine.low %v753, %v760
      %v765 = vpack.c.bf16 %v712, %v663
      %v766 = vpack.c.bf16 %v761, %v761
      %v767 = vld [vmem:[%s1] sm:$0xff]
      %v768 = vld [vmem:[%s1 + $0x8] sm:$0xff]
      %v769 = vld [vmem:[%s1 + $0x10] sm:$0xff]
      %v770 = vld [vmem:[%s1 + $0x18] sm:$0xff]
      %v775 = vunpack.c.l.b16 %v767
      %v776 = vunpack.c.h.b16 %v767
      %v777 = vunpack.c.l.b16 %v768
      %v778 = vunpack.c.h.b16 %v768
      %v779 = vunpack.c.l.b16 %v769
      %v780 = vunpack.c.h.b16 %v769
      %v781 = vunpack.c.l.b16 %v770
      %v782 = vunpack.c.h.b16 %v770
      %v783 = vpack.c.b16 %v777, %v775
      %v784 = vpack.c.b16 %v778, %v776
      %v785 = vpack.c.b16 %v781, %v779
      %v786 = vpack.c.b16 %v782, %v780
      %vm791 = vcmask 261120
      %v793 = vsel %vm791, %v765, 0
      %v796 = vsel %vm791, %v766, 0
      %798 = vmatprep.subr.bf16.mxu0 0
      %799 = vmatpush1.bf16.msra.mxu0 0
      %800 = vmatprep.subr.bf16.mxu0 0
      %801 = vmatpush1.bf16.msra.mxu0 0
      %802 = vmatprep.subr.bf16.mxu0 0
      %803 = vmatpush1.bf16.msra.mxu0 0
      %804 = vmatprep.subr.bf16.mxu0 0
      %805 = vmatpush1.bf16.msra.mxu0 0
      %806 = vmatprep.subr.bf16.mxu0 0
      %807 = vmatpush1.bf16.msra.mxu0 0
      %808 = vmatprep.subr.bf16.mxu0 0
      %809 = vmatpush1.bf16.msra.mxu0 0
      %810 = vmatprep.subr.bf16.mxu0 %v786
      %811 = vmatpush1.bf16.msra.mxu0 %v785
      %812 = vmatprep.subr.bf16.mxu0 %v784
      %813 = vmatpush1.bf16.msra.mxu0 %v783
      %814 = vmatprep.subr.bf16.mxu0 0
      %815 = vmatpush2.bf16.msra.mxu0 0
      %816 = vmatprep.subr.bf16.mxu0 0
      %817 = vmatpush2.bf16.msra.mxu0 0
      %818 = vmatprep.subr.bf16.mxu0 0
      %819 = vmatpush2.bf16.msra.mxu0 0
      %820 = vmatprep.subr.bf16.mxu0 0
      %821 = vmatpush2.bf16.msra.mxu0 0
      %822 = vmatprep.subr.bf16.mxu0 0
      %823 = vmatpush2.bf16.msra.mxu0 0
      %824 = vmatprep.subr.bf16.mxu0 0
      %825 = vmatpush2.bf16.msra.mxu0 0
      %826 = vmatprep.subr.bf16.mxu0 0
      %827 = vmatpush2.bf16.msra.mxu0 0
      %828 = vmatprep.subr.bf16.mxu0 0
      %829 = vmatpush2.bf16.msra.mxu0 0
      %830 = vmatprep.mubr.bf16.mxu0 0
      %831 = vmatmul.mubr.bf16.gmra.mxu0 %v793
      %v832 = vpop.f32.mrf.mxu0
      %v833 = vadd.f32 0.0, %v832
      %v834 = vpop.f32.mrf.mxu0
      %v835 = vadd.f32 0.0, %v834
      %v836 = vpop.f32.mrf.mxu0
      %v837 = vadd.f32 0.0, %v836
      %v838 = vpop.f32.mrf.mxu0
      %v839 = vadd.f32 0.0, %v838
      %840 = vmatprep.mubr.bf16.mxu0 0
      %841 = vmatmul.mubr.bf16.gmra.mxu0 %v796
      %v842 = vpop.f32.mrf.mxu0
      %v843 = vadd.f32 0.0, %v842
      %v844 = vpop.f32.mrf.mxu0
      %v845 = vadd.f32 0.0, %v844
      %v846 = vpop.f32.mrf.mxu0
      %v847 = vpop.f32.mrf.mxu0
      %848 = vdwg.mxu0
      %v852 = vcombine.high %v833, %v833
      %v854 = vunpack.c.l.s4 1966171168
      %v855 = vunpack.c.0.s8 %v854
      %v856 = vlaneseq
      %v857 = vshrl.u32 %v856, 7
      %v858 = vsub.s32 %v855, %v857
      %v859 = vrot.slane %v833, %v858
      %v861 = vunpack.c.l.s4 1966171168
      %v862 = vunpack.c.0.s8 %v861
      %v863 = vlaneseq
      %v864 = vshrl.u32 %v863, 7
      %v865 = vsub.s32 %v862, %v864
      %v866 = vrot.slane %v852, %v865
      %v867 = vcombine.high %v859, %v859
      %v868 = vcombine.high %v866, %v866
      %v870 = vunpack.c.l.s4 1966171168
      %v871 = vunpack.c.0.s8 %v870
      %v872 = vlaneseq
      %v873 = vshrl.u32 %v872, 7
      %v874 = vsub.s32 %v871, %v873
      %v875 = vrot.slane %v859, %v874
      %v877 = vunpack.c.l.s4 1966171168
      %v878 = vunpack.c.0.s8 %v877
      %v879 = vlaneseq
      %v880 = vshrl.u32 %v879, 7
      %v881 = vsub.s32 %v878, %v880
      %v882 = vrot.slane %v866, %v881
      %v884 = vunpack.c.l.s4 1966171168
      %v885 = vunpack.c.0.s8 %v884
      %v886 = vlaneseq
      %v887 = vshrl.u32 %v886, 7
      %v888 = vsub.s32 %v885, %v887
      %v889 = vrot.slane %v867, %v888
      %v891 = vunpack.c.l.s4 1966171168
      %v892 = vunpack.c.0.s8 %v891
      %v893 = vlaneseq
      %v894 = vshrl.u32 %v893, 7
      %v895 = vsub.s32 %v892, %v894
      %v896 = vrot.slane %v868, %v895
      %v897 = vcombine.high %v875, %v875
      %v898 = vcombine.high %v882, %v882
      %v899 = vcombine.high %v889, %v889
      %v900 = vcombine.high %v896, %v896
      %v901 = vcombine.high %v837, %v837
      %v903 = vunpack.c.l.s4 1966171168
      %v904 = vunpack.c.0.s8 %v903
      %v905 = vlaneseq
      %v906 = vshrl.u32 %v905, 7
      %v907 = vsub.s32 %v904, %v906
      %v908 = vrot.slane %v837, %v907
      %v910 = vunpack.c.l.s4 1966171168
      %v911 = vunpack.c.0.s8 %v910
      %v912 = vlaneseq
      %v913 = vshrl.u32 %v912, 7
      %v914 = vsub.s32 %v911, %v913
      %v915 = vrot.slane %v901, %v914
      %v916 = vcombine.high %v908, %v908
      %v917 = vcombine.high %v915, %v915
      %v919 = vunpack.c.l.s4 1966171168
      %v920 = vunpack.c.0.s8 %v919
      %v921 = vlaneseq
      %v922 = vshrl.u32 %v921, 7
      %v923 = vsub.s32 %v920, %v922
      %v924 = vrot.slane %v908, %v923
      %v926 = vunpack.c.l.s4 1966171168
      %v927 = vunpack.c.0.s8 %v926
      %v928 = vlaneseq
      %v929 = vshrl.u32 %v928, 7
      %v930 = vsub.s32 %v927, %v929
      %v931 = vrot.slane %v915, %v930
      %v933 = vunpack.c.l.s4 1966171168
      %v934 = vunpack.c.0.s8 %v933
      %v935 = vlaneseq
      %v936 = vshrl.u32 %v935, 7
      %v937 = vsub.s32 %v934, %v936
      %v938 = vrot.slane %v916, %v937
      %v940 = vunpack.c.l.s4 1966171168
      %v941 = vunpack.c.0.s8 %v940
      %v942 = vlaneseq
      %v943 = vshrl.u32 %v942, 7
      %v944 = vsub.s32 %v941, %v943
      %v945 = vrot.slane %v917, %v944
      %v946 = vcombine.high %v924, %v924
      %v947 = vcombine.high %v931, %v931
      %v948 = vcombine.high %v938, %v938
      %v949 = vcombine.high %v945, %v945
      %v950 = vcombine.high %v843, %v843
      %v952 = vunpack.c.l.s4 1966171168
      %v953 = vunpack.c.0.s8 %v952
      %v954 = vlaneseq
      %v955 = vshrl.u32 %v954, 7
      %v956 = vsub.s32 %v953, %v955
      %v957 = vrot.slane %v843, %v956
      %v959 = vunpack.c.l.s4 1966171168
      %v960 = vunpack.c.0.s8 %v959
      %v961 = vlaneseq
      %v962 = vshrl.u32 %v961, 7
      %v963 = vsub.s32 %v960, %v962
      %v964 = vrot.slane %v950, %v963
      %v965 = vcombine.high %v957, %v957
      %v966 = vcombine.high %v964, %v964
      %v968 = vunpack.c.l.s4 1966171168
      %v969 = vunpack.c.0.s8 %v968
      %v970 = vlaneseq
      %v971 = vshrl.u32 %v970, 7
      %v972 = vsub.s32 %v969, %v971
      %v973 = vrot.slane %v957, %v972
      %v975 = vunpack.c.l.s4 1966171168
      %v976 = vunpack.c.0.s8 %v975
      %v977 = vlaneseq
      %v978 = vshrl.u32 %v977, 7
      %v979 = vsub.s32 %v976, %v978
      %v980 = vrot.slane %v964, %v979
      %v982 = vunpack.c.l.s4 1966171168
      %v983 = vunpack.c.0.s8 %v982
      %v984 = vlaneseq
      %v985 = vshrl.u32 %v984, 7
      %v986 = vsub.s32 %v983, %v985
      %v987 = vrot.slane %v965, %v986
      %v989 = vunpack.c.l.s4 1966171168
      %v990 = vunpack.c.0.s8 %v989
      %v991 = vlaneseq
      %v992 = vshrl.u32 %v991, 7
      %v993 = vsub.s32 %v990, %v992
      %v994 = vrot.slane %v966, %v993
      %v995 = vcombine.high %v973, %v973
      %v996 = vcombine.high %v980, %v980
      %v997 = vcombine.high %v987, %v987
      %v998 = vcombine.high %v994, %v994
      %v1002 = vcombine.high %v835, %v835
      %v1004 = vunpack.c.l.s4 1966171168
      %v1005 = vunpack.c.0.s8 %v1004
      %v1006 = vlaneseq
      %v1007 = vshrl.u32 %v1006, 7
      %v1008 = vsub.s32 %v1005, %v1007
      %v1009 = vrot.slane %v835, %v1008
      %v1011 = vunpack.c.l.s4 1966171168
      %v1012 = vunpack.c.0.s8 %v1011
      %v1013 = vlaneseq
      %v1014 = vshrl.u32 %v1013, 7
      %v1015 = vsub.s32 %v1012, %v1014
      %v1016 = vrot.slane %v1002, %v1015
      %v1017 = vcombine.high %v1009, %v1009
      %v1018 = vcombine.high %v1016, %v1016
      %v1020 = vunpack.c.l.s4 1966171168
      %v1021 = vunpack.c.0.s8 %v1020
      %v1022 = vlaneseq
      %v1023 = vshrl.u32 %v1022, 7
      %v1024 = vsub.s32 %v1021, %v1023
      %v1025 = vrot.slane %v1009, %v1024
      %v1027 = vunpack.c.l.s4 1966171168
      %v1028 = vunpack.c.0.s8 %v1027
      %v1029 = vlaneseq
      %v1030 = vshrl.u32 %v1029, 7
      %v1031 = vsub.s32 %v1028, %v1030
      %v1032 = vrot.slane %v1016, %v1031
      %v1034 = vunpack.c.l.s4 1966171168
      %v1035 = vunpack.c.0.s8 %v1034
      %v1036 = vlaneseq
      %v1037 = vshrl.u32 %v1036, 7
      %v1038 = vsub.s32 %v1035, %v1037
      %v1039 = vrot.slane %v1017, %v1038
      %v1041 = vunpack.c.l.s4 1966171168
      %v1042 = vunpack.c.0.s8 %v1041
      %v1043 = vlaneseq
      %v1044 = vshrl.u32 %v1043, 7
      %v1045 = vsub.s32 %v1042, %v1044
      %v1046 = vrot.slane %v1018, %v1045
      %v1047 = vcombine.high %v1025, %v1025
      %v1048 = vcombine.high %v1032, %v1032
      %v1049 = vcombine.high %v1039, %v1039
      %v1050 = vcombine.high %v1046, %v1046
      %v1051 = vcombine.high %v839, %v839
      %v1053 = vunpack.c.l.s4 1966171168
      %v1054 = vunpack.c.0.s8 %v1053
      %v1055 = vlaneseq
      %v1056 = vshrl.u32 %v1055, 7
      %v1057 = vsub.s32 %v1054, %v1056
      %v1058 = vrot.slane %v839, %v1057
      %v1060 = vunpack.c.l.s4 1966171168
      %v1061 = vunpack.c.0.s8 %v1060
      %v1062 = vlaneseq
      %v1063 = vshrl.u32 %v1062, 7
      %v1064 = vsub.s32 %v1061, %v1063
      %v1065 = vrot.slane %v1051, %v1064
      %v1066 = vcombine.high %v1058, %v1058
      %v1067 = vcombine.high %v1065, %v1065
      %v1069 = vunpack.c.l.s4 1966171168
      %v1070 = vunpack.c.0.s8 %v1069
      %v1071 = vlaneseq
      %v1072 = vshrl.u32 %v1071, 7
      %v1073 = vsub.s32 %v1070, %v1072
      %v1074 = vrot.slane %v1058, %v1073
      %v1076 = vunpack.c.l.s4 1966171168
      %v1077 = vunpack.c.0.s8 %v1076
      %v1078 = vlaneseq
      %v1079 = vshrl.u32 %v1078, 7
      %v1080 = vsub.s32 %v1077, %v1079
      %v1081 = vrot.slane %v1065, %v1080
      %v1083 = vunpack.c.l.s4 1966171168
      %v1084 = vunpack.c.0.s8 %v1083
      %v1085 = vlaneseq
      %v1086 = vshrl.u32 %v1085, 7
      %v1087 = vsub.s32 %v1084, %v1086
      %v1088 = vrot.slane %v1066, %v1087
      %v1090 = vunpack.c.l.s4 1966171168
      %v1091 = vunpack.c.0.s8 %v1090
      %v1092 = vlaneseq
      %v1093 = vshrl.u32 %v1092, 7
      %v1094 = vsub.s32 %v1091, %v1093
      %v1095 = vrot.slane %v1067, %v1094
      %v1096 = vcombine.high %v1074, %v1074
      %v1097 = vcombine.high %v1081, %v1081
      %v1098 = vcombine.high %v1088, %v1088
      %v1099 = vcombine.high %v1095, %v1095
      %v1100 = vcombine.high %v845, %v845
      %v1102 = vunpack.c.l.s4 1966171168
      %v1103 = vunpack.c.0.s8 %v1102
      %v1104 = vlaneseq
      %v1105 = vshrl.u32 %v1104, 7
      %v1106 = vsub.s32 %v1103, %v1105
      %v1107 = vrot.slane %v845, %v1106
      %v1109 = vunpack.c.l.s4 1966171168
      %v1110 = vunpack.c.0.s8 %v1109
      %v1111 = vlaneseq
      %v1112 = vshrl.u32 %v1111, 7
      %v1113 = vsub.s32 %v1110, %v1112
      %v1114 = vrot.slane %v1100, %v1113
      %v1115 = vcombine.high %v1107, %v1107
      %v1116 = vcombine.high %v1114, %v1114
      %v1118 = vunpack.c.l.s4 1966171168
      %v1119 = vunpack.c.0.s8 %v1118
      %v1120 = vlaneseq
      %v1121 = vshrl.u32 %v1120, 7
      %v1122 = vsub.s32 %v1119, %v1121
      %v1123 = vrot.slane %v1107, %v1122
      %v1125 = vunpack.c.l.s4 1966171168
      %v1126 = vunpack.c.0.s8 %v1125
      %v1127 = vlaneseq
      %v1128 = vshrl.u32 %v1127, 7
      %v1129 = vsub.s32 %v1126, %v1128
      %v1130 = vrot.slane %v1114, %v1129
      %v1132 = vunpack.c.l.s4 1966171168
      %v1133 = vunpack.c.0.s8 %v1132
      %v1134 = vlaneseq
      %v1135 = vshrl.u32 %v1134, 7
      %v1136 = vsub.s32 %v1133, %v1135
      %v1137 = vrot.slane %v1115, %v1136
      %v1139 = vunpack.c.l.s4 1966171168
      %v1140 = vunpack.c.0.s8 %v1139
      %v1141 = vlaneseq
      %v1142 = vshrl.u32 %v1141, 7
      %v1143 = vsub.s32 %v1140, %v1142
      %v1144 = vrot.slane %v1116, %v1143
      %v1145 = vcombine.high %v1123, %v1123
      %v1146 = vcombine.high %v1130, %v1130
      %v1147 = vcombine.high %v1137, %v1137
      %v1148 = vcombine.high %v1144, %v1144
      %v1149 = vcombine.low %v875, %v889
      %v1151 = vunpack.c.l.s4 1966171168
      %v1152 = vunpack.c.0.s8 %v1151
      %v1153 = vlaneseq
      %v1154 = vshrl.u32 %v1153, 7
      %v1155 = vsub.s32 %v1152, %v1154
      %v1156 = vrot.slane %v1149, %v1155
      %v1158 = vunpack.c.l.s4 1966171168
      %v1159 = vunpack.c.0.s8 %v1158
      %v1160 = vlaneseq
      %v1161 = vshrl.u32 %v1160, 7
      %v1162 = vsub.s32 %v1159, %v1161
      %v1163 = vrot.slane %v897, %v1162
      %v1164 = vcombine.low %v1156, %v1163
      %v1166 = vunpack.c.l.s4 1966171168
      %v1167 = vunpack.c.0.s8 %v1166
      %v1168 = vlaneseq
      %v1169 = vshrl.u32 %v1168, 7
      %v1170 = vsub.s32 %v1167, %v1169
      %v1171 = vrot.slane %v1164, %v1170
      %v1172 = vcombine.low %v899, %v882
      %v1174 = vunpack.c.l.s4 1966171168
      %v1175 = vunpack.c.0.s8 %v1174
      %v1176 = vlaneseq
      %v1177 = vshrl.u32 %v1176, 7
      %v1178 = vsub.s32 %v1175, %v1177
      %v1179 = vrot.slane %v1172, %v1178
      %v1181 = vunpack.c.l.s4 1966171168
      %v1182 = vunpack.c.0.s8 %v1181
      %v1183 = vlaneseq
      %v1184 = vshrl.u32 %v1183, 7
      %v1185 = vsub.s32 %v1182, %v1184
      %v1186 = vrot.slane %v896, %v1185
      %v1187 = vcombine.low %v1179, %v1186
      %v1189 = vunpack.c.l.s4 1966171168
      %v1190 = vunpack.c.0.s8 %v1189
      %v1191 = vlaneseq
      %v1192 = vshrl.u32 %v1191, 7
      %v1193 = vsub.s32 %v1190, %v1192
      %v1194 = vrot.slane %v1187, %v1193
      %v1195 = vcombine.low %v898, %v900
      %v1197 = vunpack.c.l.s4 1966171168
      %v1198 = vunpack.c.0.s8 %v1197
      %v1199 = vlaneseq
      %v1200 = vshrl.u32 %v1199, 7
      %v1201 = vsub.s32 %v1198, %v1200
      %v1202 = vrot.slane %v1195, %v1201
      %v1204 = vunpack.c.l.s4 1966171168
      %v1205 = vunpack.c.0.s8 %v1204
      %v1206 = vlaneseq
      %v1207 = vshrl.u32 %v1206, 7
      %v1208 = vsub.s32 %v1205, %v1207
      %v1209 = vrot.slane %v924, %v1208
      %v1210 = vcombine.low %v1202, %v1209
      %v1212 = vunpack.c.l.s4 1966171168
      %v1213 = vunpack.c.0.s8 %v1212
      %v1214 = vlaneseq
      %v1215 = vshrl.u32 %v1214, 7
      %v1216 = vsub.s32 %v1213, %v1215
      %v1217 = vrot.slane %v1210, %v1216
      %v1218 = vcombine.low %v938, %v946
      %v1220 = vunpack.c.l.s4 1966171168
      %v1221 = vunpack.c.0.s8 %v1220
      %v1222 = vlaneseq
      %v1223 = vshrl.u32 %v1222, 7
      %v1224 = vsub.s32 %v1221, %v1223
      %v1225 = vrot.slane %v1218, %v1224
      %v1227 = vunpack.c.l.s4 1966171168
      %v1228 = vunpack.c.0.s8 %v1227
      %v1229 = vlaneseq
      %v1230 = vshrl.u32 %v1229, 7
      %v1231 = vsub.s32 %v1228, %v1230
      %v1232 = vrot.slane %v948, %v1231
      %v1233 = vcombine.low %v1225, %v1232
      %v1235 = vunpack.c.l.s4 1966171168
      %v1236 = vunpack.c.0.s8 %v1235
      %v1237 = vlaneseq
      %v1238 = vshrl.u32 %v1237, 7
      %v1239 = vsub.s32 %v1236, %v1238
      %v1240 = vrot.slane %v1233, %v1239
      %v1241 = vcombine.low %v931, %v945
      %v1243 = vunpack.c.l.s4 1966171168
      %v1244 = vunpack.c.0.s8 %v1243
      %v1245 = vlaneseq
      %v1246 = vshrl.u32 %v1245, 7
      %v1247 = vsub.s32 %v1244, %v1246
      %v1248 = vrot.slane %v1241, %v1247
      %v1250 = vunpack.c.l.s4 1966171168
      %v1251 = vunpack.c.0.s8 %v1250
      %v1252 = vlaneseq
      %v1253 = vshrl.u32 %v1252, 7
      %v1254 = vsub.s32 %v1251, %v1253
      %v1255 = vrot.slane %v947, %v1254
      %v1256 = vcombine.low %v1248, %v1255
      %v1258 = vunpack.c.l.s4 1966171168
      %v1259 = vunpack.c.0.s8 %v1258
      %v1260 = vlaneseq
      %v1261 = vshrl.u32 %v1260, 7
      %v1262 = vsub.s32 %v1259, %v1261
      %v1263 = vrot.slane %v1256, %v1262
      %v1264 = vcombine.low %v949, %v973
      %v1266 = vunpack.c.l.s4 1966171168
      %v1267 = vunpack.c.0.s8 %v1266
      %v1268 = vlaneseq
      %v1269 = vshrl.u32 %v1268, 7
      %v1270 = vsub.s32 %v1267, %v1269
      %v1271 = vrot.slane %v1264, %v1270
      %v1273 = vunpack.c.l.s4 1966171168
      %v1274 = vunpack.c.0.s8 %v1273
      %v1275 = vlaneseq
      %v1276 = vshrl.u32 %v1275, 7
      %v1277 = vsub.s32 %v1274, %v1276
      %v1278 = vrot.slane %v987, %v1277
      %v1279 = vcombine.low %v1271, %v1278
      %v1281 = vunpack.c.l.s4 1966171168
      %v1282 = vunpack.c.0.s8 %v1281
      %v1283 = vlaneseq
      %v1284 = vshrl.u32 %v1283, 7
      %v1285 = vsub.s32 %v1282, %v1284
      %v1286 = vrot.slane %v1279, %v1285
      %v1287 = vcombine.low %v995, %v997
      %v1289 = vunpack.c.l.s4 1966171168
      %v1290 = vunpack.c.0.s8 %v1289
      %v1291 = vlaneseq
      %v1292 = vshrl.u32 %v1291, 7
      %v1293 = vsub.s32 %v1290, %v1292
      %v1294 = vrot.slane %v1287, %v1293
      %v1296 = vunpack.c.l.s4 1966171168
      %v1297 = vunpack.c.0.s8 %v1296
      %v1298 = vlaneseq
      %v1299 = vshrl.u32 %v1298, 7
      %v1300 = vsub.s32 %v1297, %v1299
      %v1301 = vrot.slane %v980, %v1300
      %v1302 = vcombine.low %v1294, %v1301
      %v1304 = vunpack.c.l.s4 1966171168
      %v1305 = vunpack.c.0.s8 %v1304
      %v1306 = vlaneseq
      %v1307 = vshrl.u32 %v1306, 7
      %v1308 = vsub.s32 %v1305, %v1307
      %v1309 = vrot.slane %v1302, %v1308
      %v1310 = vcombine.low %v994, %v996
      %v1312 = vunpack.c.l.s4 1966171168
      %v1313 = vunpack.c.0.s8 %v1312
      %v1314 = vlaneseq
      %v1315 = vshrl.u32 %v1314, 7
      %v1316 = vsub.s32 %v1313, %v1315
      %v1317 = vrot.slane %v1310, %v1316
      %v1319 = vunpack.c.l.s4 1966171168
      %v1320 = vunpack.c.0.s8 %v1319
      %v1321 = vlaneseq
      %v1322 = vshrl.u32 %v1321, 7
      %v1323 = vsub.s32 %v1320, %v1322
      %v1324 = vrot.slane %v998, %v1323
      %v1325 = vcombine.low %v1317, %v1324
      %v1327 = vunpack.c.l.s4 1966171168
      %v1328 = vunpack.c.0.s8 %v1327
      %v1329 = vlaneseq
      %v1330 = vshrl.u32 %v1329, 7
      %v1331 = vsub.s32 %v1328, %v1330
      %v1332 = vrot.slane %v1325, %v1331
      %v1341 = vpack.c.bf16 %v1171, %v1171
      %v1342 = vpack.c.bf16 %v1194, %v1194
      %v1343 = vpack.c.bf16 %v1217, %v1217
      %v1344 = vpack.c.bf16 %v1240, %v1240
      %v1345 = vpack.c.bf16 %v1263, %v1263
      %v1346 = vpack.c.bf16 %v1286, %v1286
      %v1347 = vpack.c.bf16 %v1309, %v1309
      %v1348 = vpack.c.bf16 %v1332, %v1332
      %1350 = vrot.lane.b32.xlu0 %v1341, 64
      %v1351 = vpop.permute.xlu0 %1350
      %v1353 = vsel %vm791, %v1341, 0
      %v1356 = vsel %vm791, %v1351, 0
      %1358 = vmatprep.subr.bf16.mxu0 0
      %1359 = vmatpush1.bf16.xpose.msra.mxu0 0
      %1360 = vmatprep.subr.bf16.mxu0 0
      %1361 = vmatpush1.bf16.xpose.msra.mxu0 0
      %1362 = vmatprep.subr.bf16.mxu0 0
      %1363 = vmatpush1.bf16.xpose.msra.mxu0 0
      %1364 = vmatprep.subr.bf16.mxu0 0
      %1365 = vmatpush1.bf16.xpose.msra.mxu0 0
      %1366 = vmatprep.subr.bf16.mxu0 0
      %1367 = vmatpush1.bf16.xpose.msra.mxu0 0
      %1368 = vmatprep.subr.bf16.mxu0 0
      %1369 = vmatpush1.bf16.xpose.msra.mxu0 0
      %1370 = vmatprep.subr.bf16.mxu0 0
      %1371 = vmatpush1.bf16.xpose.msra.mxu0 0
      %1372 = vmatprep.subr.bf16.mxu0 0
      %1373 = vmatpush1.bf16.xpose.msra.mxu0 %v1356
      %1374 = vmatprep.subr.bf16.mxu0 0
      %1375 = vmatpush2.bf16.xpose.msra.mxu0 0
      %1376 = vmatprep.subr.bf16.mxu0 0
      %1377 = vmatpush2.bf16.xpose.msra.mxu0 0
      %1378 = vmatprep.subr.bf16.mxu0 0
      %1379 = vmatpush2.bf16.xpose.msra.mxu0 0
      %1380 = vmatprep.subr.bf16.mxu0 0
      %1381 = vmatpush2.bf16.xpose.msra.mxu0 0
      %1382 = vmatprep.subr.bf16.mxu0 0
      %1383 = vmatpush2.bf16.xpose.msra.mxu0 0
      %1384 = vmatprep.subr.bf16.mxu0 0
      %1385 = vmatpush2.bf16.xpose.msra.mxu0 0
      %1386 = vmatprep.subr.bf16.mxu0 0
      %1387 = vmatpush2.bf16.xpose.msra.mxu0 0
      %1388 = vmatprep.subr.bf16.mxu0 0
      %1389 = vmatpush2.bf16.xpose.msra.mxu0 0
      %1390 = vmatprep.mubr.bf16.mxu0 0
      %1391 = vmatmul.mubr.bf16.gmra.mxu0 %v1353
      %v1392 = vpop.f32.mrf.mxu0
      %v1393 = vadd.f32 0.0, %v1392
      %v1394 = vpop.f32.mrf.mxu0
      %v1395 = vpop.f32.mrf.mxu0
      %v1396 = vpop.f32.mrf.mxu0
      %1397 = vdwg.mxu0
      %1399 = vrot.lane.b32.xlu0 %v1342, 64
      %v1400 = vpop.permute.xlu0 %1399
      %v1402 = vsel %vm791, %v1342, 0
      %v1405 = vsel %vm791, %v1400, 0
      %1407 = vmatprep.subr.bf16.mxu0 0
      %1408 = vmatpush1.bf16.xpose.msra.mxu0 0
      %1409 = vmatprep.subr.bf16.mxu0 0
      %1410 = vmatpush1.bf16.xpose.msra.mxu0 0
      %1411 = vmatprep.subr.bf16.mxu0 0
      %1412 = vmatpush1.bf16.xpose.msra.mxu0 0
      %1413 = vmatprep.subr.bf16.mxu0 0
      %1414 = vmatpush1.bf16.xpose.msra.mxu0 0
      %1415 = vmatprep.subr.bf16.mxu0 0
      %1416 = vmatpush1.bf16.xpose.msra.mxu0 0
      %1417 = vmatprep.subr.bf16.mxu0 0
      %1418 = vmatpush1.bf16.xpose.msra.mxu0 0
      %1419 = vmatprep.subr.bf16.mxu0 0
      %1420 = vmatpush1.bf16.xpose.msra.mxu0 0
      %1421 = vmatprep.subr.bf16.mxu0 0
      %1422 = vmatpush1.bf16.xpose.msra.mxu0 %v1405
      %1423 = vmatprep.subr.bf16.mxu0 0
      %1424 = vmatpush2.bf16.xpose.msra.mxu0 0
      %1425 = vmatprep.subr.bf16.mxu0 0
      %1426 = vmatpush2.bf16.xpose.msra.mxu0 0
      %1427 = vmatprep.subr.bf16.mxu0 0
      %1428 = vmatpush2.bf16.xpose.msra.mxu0 0
      %1429 = vmatprep.subr.bf16.mxu0 0
      %1430 = vmatpush2.bf16.xpose.msra.mxu0 0
      %1431 = vmatprep.subr.bf16.mxu0 0
      %1432 = vmatpush2.bf16.xpose.msra.mxu0 0
      %1433 = vmatprep.subr.bf16.mxu0 0
      %1434 = vmatpush2.bf16.xpose.msra.mxu0 0
      %1435 = vmatprep.subr.bf16.mxu0 0
      %1436 = vmatpush2.bf16.xpose.msra.mxu0 0
      %1437 = vmatprep.subr.bf16.mxu0 0
      %1438 = vmatpush2.bf16.xpose.msra.mxu0 0
      %1439 = vmatprep.mubr.bf16.mxu0 0
      %1440 = vmatmul.mubr.bf16.gmra.mxu0 %v1402
      %v1441 = vpop.f32.mrf.mxu0
      %v1442 = vadd.f32 0.0, %v1441
      %v1443 = vpop.f32.mrf.mxu0
      %v1444 = vpop.f32.mrf.mxu0
      %v1445 = vpop.f32.mrf.mxu0
      %1446 = vdwg.mxu0
      %1448 = vrot.lane.b32.xlu0 %v1343, 64
      %v1449 = vpop.permute.xlu0 %1448
      %v1451 = vsel %vm791, %v1343, 0
      %v1454 = vsel %vm791, %v1449, 0
      %1456 = vmatprep.subr.bf16.mxu0 0
      %1457 = vmatpush1.bf16.xpose.msra.mxu0 0
      %1458 = vmatprep.subr.bf16.mxu0 0
      %1459 = vmatpush1.bf16.xpose.msra.mxu0 0
      %1460 = vmatprep.subr.bf16.mxu0 0
      %1461 = vmatpush1.bf16.xpose.msra.mxu0 0
      %1462 = vmatprep.subr.bf16.mxu0 0
      %1463 = vmatpush1.bf16.xpose.msra.mxu0 0
      %1464 = vmatprep.subr.bf16.mxu0 0
      %1465 = vmatpush1.bf16.xpose.msra.mxu0 0
      %1466 = vmatprep.subr.bf16.mxu0 0
      %1467 = vmatpush1.bf16.xpose.msra.mxu0 0
      %1468 = vmatprep.subr.bf16.mxu0 0
      %1469 = vmatpush1.bf16.xpose.msra.mxu0 0
      %1470 = vmatprep.subr.bf16.mxu0 0
      %1471 = vmatpush1.bf16.xpose.msra.mxu0 %v1454
      %1472 = vmatprep.subr.bf16.mxu0 0
      %1473 = vmatpush2.bf16.xpose.msra.mxu0 0
      %1474 = vmatprep.subr.bf16.mxu0 0
      %1475 = vmatpush2.bf16.xpose.msra.mxu0 0
      %1476 = vmatprep.subr.bf16.mxu0 0
      %1477 = vmatpush2.bf16.xpose.msra.mxu0 0
      %1478 = vmatprep.subr.bf16.mxu0 0
      %1479 = vmatpush2.bf16.xpose.msra.mxu0 0
      %1480 = vmatprep.subr.bf16.mxu0 0
      %1481 = vmatpush2.bf16.xpose.msra.mxu0 0
      %1482 = vmatprep.subr.bf16.mxu0 0
      %1483 = vmatpush2.bf16.xpose.msra.mxu0 0
      %1484 = vmatprep.subr.bf16.mxu0 0
      %1485 = vmatpush2.bf16.xpose.msra.mxu0 0
      %1486 = vmatprep.subr.bf16.mxu0 0
      %1487 = vmatpush2.bf16.xpose.msra.mxu0 0
      %1488 = vmatprep.mubr.bf16.mxu0 0
      %1489 = vmatmul.mubr.bf16.gmra.mxu0 %v1451
      %v1490 = vpop.f32.mrf.mxu0
      %v1491 = vadd.f32 0.0, %v1490
      %v1492 = vpop.f32.mrf.mxu0
      %v1493 = vpop.f32.mrf.mxu0
      %v1494 = vpop.f32.mrf.mxu0
      %1495 = vdwg.mxu0
      %1497 = vrot.lane.b32.xlu0 %v1344, 64
      %v1498 = vpop.permute.xlu0 %1497
      %v1500 = vsel %vm791, %v1344, 0
      %v1503 = vsel %vm791, %v1498, 0
      %1505 = vmatprep.subr.bf16.mxu0 0
      %1506 = vmatpush1.bf16.xpose.msra.mxu0 0
      %1507 = vmatprep.subr.bf16.mxu0 0
      %1508 = vmatpush1.bf16.xpose.msra.mxu0 0
      %1509 = vmatprep.subr.bf16.mxu0 0
      %1510 = vmatpush1.bf16.xpose.msra.mxu0 0
      %1511 = vmatprep.subr.bf16.mxu0 0
      %1512 = vmatpush1.bf16.xpose.msra.mxu0 0
      %1513 = vmatprep.subr.bf16.mxu0 0
      %1514 = vmatpush1.bf16.xpose.msra.mxu0 0
      %1515 = vmatprep.subr.bf16.mxu0 0
      %1516 = vmatpush1.bf16.xpose.msra.mxu0 0
      %1517 = vmatprep.subr.bf16.mxu0 0
      %1518 = vmatpush1.bf16.xpose.msra.mxu0 0
      %1519 = vmatprep.subr.bf16.mxu0 0
      %1520 = vmatpush1.bf16.xpose.msra.mxu0 %v1503
      %1521 = vmatprep.subr.bf16.mxu0 0
      %1522 = vmatpush2.bf16.xpose.msra.mxu0 0
      %1523 = vmatprep.subr.bf16.mxu0 0
      %1524 = vmatpush2.bf16.xpose.msra.mxu0 0
      %1525 = vmatprep.subr.bf16.mxu0 0
      %1526 = vmatpush2.bf16.xpose.msra.mxu0 0
      %1527 = vmatprep.subr.bf16.mxu0 0
      %1528 = vmatpush2.bf16.xpose.msra.mxu0 0
      %1529 = vmatprep.subr.bf16.mxu0 0
      %1530 = vmatpush2.bf16.xpose.msra.mxu0 0
      %1531 = vmatprep.subr.bf16.mxu0 0
      %1532 = vmatpush2.bf16.xpose.msra.mxu0 0
      %1533 = vmatprep.subr.bf16.mxu0 0
      %1534 = vmatpush2.bf16.xpose.msra.mxu0 0
      %1535 = vmatprep.subr.bf16.mxu0 0
      %1536 = vmatpush2.bf16.xpose.msra.mxu0 0
      %1537 = vmatprep.mubr.bf16.mxu0 0
      %1538 = vmatmul.mubr.bf16.gmra.mxu0 %v1500
      %v1539 = vpop.f32.mrf.mxu0
      %v1540 = vadd.f32 0.0, %v1539
      %v1541 = vpop.f32.mrf.mxu0
      %v1542 = vpop.f32.mrf.mxu0
      %v1543 = vpop.f32.mrf.mxu0
      %1544 = vdwg.mxu0
      %1546 = vrot.lane.b32.xlu0 %v1345, 64
      %v1547 = vpop.permute.xlu0 %1546
      %v1549 = vsel %vm791, %v1345, 0
      %v1552 = vsel %vm791, %v1547, 0
      %1554 = vmatprep.subr.bf16.mxu0 0
      %1555 = vmatpush1.bf16.xpose.msra.mxu0 0
      %1556 = vmatprep.subr.bf16.mxu0 0
      %1557 = vmatpush1.bf16.xpose.msra.mxu0 0
      %1558 = vmatprep.subr.bf16.mxu0 0
      %1559 = vmatpush1.bf16.xpose.msra.mxu0 0
      %1560 = vmatprep.subr.bf16.mxu0 0
      %1561 = vmatpush1.bf16.xpose.msra.mxu0 0
      %1562 = vmatprep.subr.bf16.mxu0 0
      %1563 = vmatpush1.bf16.xpose.msra.mxu0 0
      %1564 = vmatprep.subr.bf16.mxu0 0
      %1565 = vmatpush1.bf16.xpose.msra.mxu0 0
      %1566 = vmatprep.subr.bf16.mxu0 0
      %1567 = vmatpush1.bf16.xpose.msra.mxu0 0
      %1568 = vmatprep.subr.bf16.mxu0 0
      %1569 = vmatpush1.bf16.xpose.msra.mxu0 %v1552
      %1570 = vmatprep.subr.bf16.mxu0 0
      %1571 = vmatpush2.bf16.xpose.msra.mxu0 0
      %1572 = vmatprep.subr.bf16.mxu0 0
      %1573 = vmatpush2.bf16.xpose.msra.mxu0 0
      %1574 = vmatprep.subr.bf16.mxu0 0
      %1575 = vmatpush2.bf16.xpose.msra.mxu0 0
      %1576 = vmatprep.subr.bf16.mxu0 0
      %1577 = vmatpush2.bf16.xpose.msra.mxu0 0
      %1578 = vmatprep.subr.bf16.mxu0 0
      %1579 = vmatpush2.bf16.xpose.msra.mxu0 0
      %1580 = vmatprep.subr.bf16.mxu0 0
      %1581 = vmatpush2.bf16.xpose.msra.mxu0 0
      %1582 = vmatprep.subr.bf16.mxu0 0
      %1583 = vmatpush2.bf16.xpose.msra.mxu0 0
      %1584 = vmatprep.subr.bf16.mxu0 0
      %1585 = vmatpush2.bf16.xpose.msra.mxu0 0
      %1586 = vmatprep.mubr.bf16.mxu0 0
      %1587 = vmatmul.mubr.bf16.gmra.mxu0 %v1549
      %v1588 = vpop.f32.mrf.mxu0
      %v1589 = vadd.f32 0.0, %v1588
      %v1590 = vpop.f32.mrf.mxu0
      %v1591 = vpop.f32.mrf.mxu0
      %v1592 = vpop.f32.mrf.mxu0
      %1593 = vdwg.mxu0
      %1595 = vrot.lane.b32.xlu0 %v1346, 64
      %v1596 = vpop.permute.xlu0 %1595
      %v1598 = vsel %vm791, %v1346, 0
      %v1601 = vsel %vm791, %v1596, 0
      %1603 = vmatprep.subr.bf16.mxu0 0
      %1604 = vmatpush1.bf16.xpose.msra.mxu0 0
      %1605 = vmatprep.subr.bf16.mxu0 0
      %1606 = vmatpush1.bf16.xpose.msra.mxu0 0
      %1607 = vmatprep.subr.bf16.mxu0 0
      %1608 = vmatpush1.bf16.xpose.msra.mxu0 0
      %1609 = vmatprep.subr.bf16.mxu0 0
      %1610 = vmatpush1.bf16.xpose.msra.mxu0 0
      %1611 = vmatprep.subr.bf16.mxu0 0
      %1612 = vmatpush1.bf16.xpose.msra.mxu0 0
      %1613 = vmatprep.subr.bf16.mxu0 0
      %1614 = vmatpush1.bf16.xpose.msra.mxu0 0
      %1615 = vmatprep.subr.bf16.mxu0 0
      %1616 = vmatpush1.bf16.xpose.msra.mxu0 0
      %1617 = vmatprep.subr.bf16.mxu0 0
      %1618 = vmatpush1.bf16.xpose.msra.mxu0 %v1601
      %1619 = vmatprep.subr.bf16.mxu0 0
      %1620 = vmatpush2.bf16.xpose.msra.mxu0 0
      %1621 = vmatprep.subr.bf16.mxu0 0
      %1622 = vmatpush2.bf16.xpose.msra.mxu0 0
      %1623 = vmatprep.subr.bf16.mxu0 0
      %1624 = vmatpush2.bf16.xpose.msra.mxu0 0
      %1625 = vmatprep.subr.bf16.mxu0 0
      %1626 = vmatpush2.bf16.xpose.msra.mxu0 0
      %1627 = vmatprep.subr.bf16.mxu0 0
      %1628 = vmatpush2.bf16.xpose.msra.mxu0 0
      %1629 = vmatprep.subr.bf16.mxu0 0
      %1630 = vmatpush2.bf16.xpose.msra.mxu0 0
      %1631 = vmatprep.subr.bf16.mxu0 0
      %1632 = vmatpush2.bf16.xpose.msra.mxu0 0
      %1633 = vmatprep.subr.bf16.mxu0 0
      %1634 = vmatpush2.bf16.xpose.msra.mxu0 0
      %1635 = vmatprep.mubr.bf16.mxu0 0
      %1636 = vmatmul.mubr.bf16.gmra.mxu0 %v1598
      %v1637 = vpop.f32.mrf.mxu0
      %v1638 = vadd.f32 0.0, %v1637
      %v1639 = vpop.f32.mrf.mxu0
      %v1640 = vpop.f32.mrf.mxu0
      %v1641 = vpop.f32.mrf.mxu0
      %1642 = vdwg.mxu0
      %1644 = vrot.lane.b32.xlu0 %v1347, 64
      %v1645 = vpop.permute.xlu0 %1644
      %v1647 = vsel %vm791, %v1347, 0
      %v1650 = vsel %vm791, %v1645, 0
      %1652 = vmatprep.subr.bf16.mxu0 0
      %1653 = vmatpush1.bf16.xpose.msra.mxu0 0
      %1654 = vmatprep.subr.bf16.mxu0 0
      %1655 = vmatpush1.bf16.xpose.msra.mxu0 0
      %1656 = vmatprep.subr.bf16.mxu0 0
      %1657 = vmatpush1.bf16.xpose.msra.mxu0 0
      %1658 = vmatprep.subr.bf16.mxu0 0
      %1659 = vmatpush1.bf16.xpose.msra.mxu0 0
      %1660 = vmatprep.subr.bf16.mxu0 0
      %1661 = vmatpush1.bf16.xpose.msra.mxu0 0
      %1662 = vmatprep.subr.bf16.mxu0 0
      %1663 = vmatpush1.bf16.xpose.msra.mxu0 0
      %1664 = vmatprep.subr.bf16.mxu0 0
      %1665 = vmatpush1.bf16.xpose.msra.mxu0 0
      %1666 = vmatprep.subr.bf16.mxu0 0
      %1667 = vmatpush1.bf16.xpose.msra.mxu0 %v1650
      %1668 = vmatprep.subr.bf16.mxu0 0
      %1669 = vmatpush2.bf16.xpose.msra.mxu0 0
      %1670 = vmatprep.subr.bf16.mxu0 0
      %1671 = vmatpush2.bf16.xpose.msra.mxu0 0
      %1672 = vmatprep.subr.bf16.mxu0 0
      %1673 = vmatpush2.bf16.xpose.msra.mxu0 0
      %1674 = vmatprep.subr.bf16.mxu0 0
      %1675 = vmatpush2.bf16.xpose.msra.mxu0 0
      %1676 = vmatprep.subr.bf16.mxu0 0
      %1677 = vmatpush2.bf16.xpose.msra.mxu0 0
      %1678 = vmatprep.subr.bf16.mxu0 0
      %1679 = vmatpush2.bf16.xpose.msra.mxu0 0
      %1680 = vmatprep.subr.bf16.mxu0 0
      %1681 = vmatpush2.bf16.xpose.msra.mxu0 0
      %1682 = vmatprep.subr.bf16.mxu0 0
      %1683 = vmatpush2.bf16.xpose.msra.mxu0 0
      %1684 = vmatprep.mubr.bf16.mxu0 0
      %1685 = vmatmul.mubr.bf16.gmra.mxu0 %v1647
      %v1686 = vpop.f32.mrf.mxu0
      %v1687 = vadd.f32 0.0, %v1686
      %v1688 = vpop.f32.mrf.mxu0
      %v1689 = vpop.f32.mrf.mxu0
      %v1690 = vpop.f32.mrf.mxu0
      %1691 = vdwg.mxu0
      %1693 = vrot.lane.b32.xlu0 %v1348, 64
      %v1694 = vpop.permute.xlu0 %1693
      %v1696 = vsel %vm791, %v1348, 0
      %v1699 = vsel %vm791, %v1694, 0
      %1701 = vmatprep.subr.bf16.mxu0 0
      %1702 = vmatpush1.bf16.xpose.msra.mxu0 0
      %1703 = vmatprep.subr.bf16.mxu0 0
      %1704 = vmatpush1.bf16.xpose.msra.mxu0 0
      %1705 = vmatprep.subr.bf16.mxu0 0
      %1706 = vmatpush1.bf16.xpose.msra.mxu0 0
      %1707 = vmatprep.subr.bf16.mxu0 0
      %1708 = vmatpush1.bf16.xpose.msra.mxu0 0
      %1709 = vmatprep.subr.bf16.mxu0 0
      %1710 = vmatpush1.bf16.xpose.msra.mxu0 0
      %1711 = vmatprep.subr.bf16.mxu0 0
      %1712 = vmatpush1.bf16.xpose.msra.mxu0 0
      %1713 = vmatprep.subr.bf16.mxu0 0
      %1714 = vmatpush1.bf16.xpose.msra.mxu0 0
      %1715 = vmatprep.subr.bf16.mxu0 0
      %1716 = vmatpush1.bf16.xpose.msra.mxu0 %v1699
      %1717 = vmatprep.subr.bf16.mxu0 0
      %1718 = vmatpush2.bf16.xpose.msra.mxu0 0
      %1719 = vmatprep.subr.bf16.mxu0 0
      %1720 = vmatpush2.bf16.xpose.msra.mxu0 0
      %1721 = vmatprep.subr.bf16.mxu0 0
      %1722 = vmatpush2.bf16.xpose.msra.mxu0 0
      %1723 = vmatprep.subr.bf16.mxu0 0
      %1724 = vmatpush2.bf16.xpose.msra.mxu0 0
      %1725 = vmatprep.subr.bf16.mxu0 0
      %1726 = vmatpush2.bf16.xpose.msra.mxu0 0
      %1727 = vmatprep.subr.bf16.mxu0 0
      %1728 = vmatpush2.bf16.xpose.msra.mxu0 0
      %1729 = vmatprep.subr.bf16.mxu0 0
      %1730 = vmatpush2.bf16.xpose.msra.mxu0 0
      %1731 = vmatprep.subr.bf16.mxu0 0
      %1732 = vmatpush2.bf16.xpose.msra.mxu0 0
      %1733 = vmatprep.mubr.bf16.mxu0 0
      %1734 = vmatmul.mubr.bf16.gmra.mxu0 %v1696
      %v1735 = vpop.f32.mrf.mxu0
      %v1736 = vadd.f32 0.0, %v1735
      %v1737 = vpop.f32.mrf.mxu0
      %v1738 = vpop.f32.mrf.mxu0
      %v1739 = vpop.f32.mrf.mxu0
      %1740 = vdwg.mxu0
      %v1741 = vmul.f32 %v1393, 0.17677669
      %v1742 = vmul.f32 %v1442, 0.17677669
      %v1743 = vmul.f32 %v1491, 0.17677669
      %v1744 = vmul.f32 %v1540, 0.17677669
      %v1745 = vmul.f32 %v1589, 0.17677669
      %v1746 = vmul.f32 %v1638, 0.17677669
      %v1747 = vmul.f32 %v1687, 0.17677669
      %v1748 = vmul.f32 %v1736, 0.17677669
      %vm1749 = vcmask 18432
      %v1750 = vsel %vm1749, %v1741, -inf
      %1751 = vmax.xlane.f32.xlu0 %v1750
      %v1752 = vpop.xlane.xlu0 %1751
      %v1753 = vsel %vm1749, %v1742, -inf
      %1754 = vmax.xlane.f32.xlu0 %v1753
      %v1755 = vpop.xlane.xlu0 %1754
      %v1756 = vsel %vm1749, %v1743, -inf
      %1757 = vmax.xlane.f32.xlu0 %v1756
      %v1758 = vpop.xlane.xlu0 %1757
      %v1759 = vsel %vm1749, %v1744, -inf
      %1760 = vmax.xlane.f32.xlu0 %v1759
      %v1761 = vpop.xlane.xlu0 %1760
      %v1762 = vsel %vm1749, %v1745, -inf
      %1763 = vmax.xlane.f32.xlu0 %v1762
      %v1764 = vpop.xlane.xlu0 %1763
      %v1765 = vsel %vm1749, %v1746, -inf
      %1766 = vmax.xlane.f32.xlu0 %v1765
      %v1767 = vpop.xlane.xlu0 %1766
      %v1768 = vsel %vm1749, %v1747, -inf
      %1769 = vmax.xlane.f32.xlu0 %v1768
      %v1770 = vpop.xlane.xlu0 %1769
      %v1771 = vsel %vm1749, %v1748, -inf
      %1772 = vmax.xlane.f32.xlu0 %v1771
      %v1773 = vpop.xlane.xlu0 %1772
      %v1774 = vsub.f32 %v1741, %v1752
      %v1775 = vsub.f32 %v1742, %v1755
      %v1776 = vsub.f32 %v1743, %v1758
      %v1777 = vsub.f32 %v1744, %v1761
      %v1778 = vsub.f32 %v1745, %v1764
      %v1779 = vsub.f32 %v1746, %v1767
      %v1780 = vsub.f32 %v1747, %v1770
      %v1781 = vsub.f32 %v1748, %v1773
      %v1782 = vmul.f32 %v1774, 1.442695
      %v1783 = vpow.pop %v1782
      %v1784 = vmul.f32 %v1775, 1.442695
      %v1785 = vpow.pop %v1784
      %v1786 = vmul.f32 %v1776, 1.442695
      %v1787 = vpow.pop %v1786
      %v1788 = vmul.f32 %v1777, 1.442695
      %v1789 = vpow.pop %v1788
      %v1790 = vmul.f32 %v1778, 1.442695
      %v1791 = vpow.pop %v1790
      %v1792 = vmul.f32 %v1779, 1.442695
      %v1793 = vpow.pop %v1792
      %v1794 = vmul.f32 %v1780, 1.442695
      %v1795 = vpow.pop %v1794
      %v1796 = vmul.f32 %v1781, 1.442695
      %v1797 = vpow.pop %v1796
      %v1798 = vsel %vm1749, %v1783, 0.0
      %1799 = vadd.xlane.f32.xlu0 %v1798
      %v1800 = vpop.xlane.xlu0 %1799
      %v1801 = vsel %vm1749, %v1785, 0.0
      %1802 = vadd.xlane.f32.xlu0 %v1801
      %v1803 = vpop.xlane.xlu0 %1802
      %v1804 = vsel %vm1749, %v1787, 0.0
      %1805 = vadd.xlane.f32.xlu0 %v1804
      %v1806 = vpop.xlane.xlu0 %1805
      %v1807 = vsel %vm1749, %v1789, 0.0
      %1808 = vadd.xlane.f32.xlu0 %v1807
      %v1809 = vpop.xlane.xlu0 %1808
      %v1810 = vsel %vm1749, %v1791, 0.0
      %1811 = vadd.xlane.f32.xlu0 %v1810
      %v1812 = vpop.xlane.xlu0 %1811
      %v1813 = vsel %vm1749, %v1793, 0.0
      %1814 = vadd.xlane.f32.xlu0 %v1813
      %v1815 = vpop.xlane.xlu0 %1814
      %v1816 = vsel %vm1749, %v1795, 0.0
      %1817 = vadd.xlane.f32.xlu0 %v1816
      %v1818 = vpop.xlane.xlu0 %1817
      %v1819 = vsel %vm1749, %v1797, 0.0
      %1820 = vadd.xlane.f32.xlu0 %v1819
      %v1821 = vpop.xlane.xlu0 %1820
      %v1822 = vrcp.pop %v1800
      %v1823 = vrcp.pop %v1803
      %v1824 = vrcp.pop %v1806
      %v1825 = vrcp.pop %v1809
      %v1826 = vrcp.pop %v1812
      %v1827 = vrcp.pop %v1815
      %v1828 = vrcp.pop %v1818
      %v1829 = vrcp.pop %v1821
      %v1830 = vmul.f32 %v1783, %v1822
      %v1831 = vmul.f32 %v1785, %v1823
      %v1832 = vmul.f32 %v1787, %v1824
      %v1833 = vmul.f32 %v1789, %v1825
      %v1834 = vmul.f32 %v1791, %v1826
      %v1835 = vmul.f32 %v1793, %v1827
      %v1836 = vmul.f32 %v1795, %v1828
      %v1837 = vmul.f32 %v1797, %v1829
      %v1838 = vpack.c.bf16 %v1830, %v1830
      %v1839 = vpack.c.bf16 %v1831, %v1831
      %v1840 = vpack.c.bf16 %v1832, %v1832
      %v1841 = vpack.c.bf16 %v1833, %v1833
      %v1842 = vpack.c.bf16 %v1834, %v1834
      %v1843 = vpack.c.bf16 %v1835, %v1835
      %v1844 = vpack.c.bf16 %v1836, %v1836
      %v1845 = vpack.c.bf16 %v1837, %v1837
      %v1846 = vcombine.low %v1025, %v1039
      %v1848 = vunpack.c.l.s4 1966171168
      %v1849 = vunpack.c.0.s8 %v1848
      %v1850 = vlaneseq
      %v1851 = vshrl.u32 %v1850, 7
      %v1852 = vsub.s32 %v1849, %v1851
      %v1853 = vrot.slane %v1846, %v1852
      %v1855 = vunpack.c.l.s4 1966171168
      %v1856 = vunpack.c.0.s8 %v1855
      %v1857 = vlaneseq
      %v1858 = vshrl.u32 %v1857, 7
      %v1859 = vsub.s32 %v1856, %v1858
      %v1860 = vrot.slane %v1047, %v1859
      %v1861 = vcombine.low %v1853, %v1860
      %v1863 = vunpack.c.l.s4 1966171168
      %v1864 = vunpack.c.0.s8 %v1863
      %v1865 = vlaneseq
      %v1866 = vshrl.u32 %v1865, 7
      %v1867 = vsub.s32 %v1864, %v1866
      %v1868 = vrot.slane %v1861, %v1867
      %v1869 = vcombine.low %v1049, %v1032
      %v1871 = vunpack.c.l.s4 1966171168
      %v1872 = vunpack.c.0.s8 %v1871
      %v1873 = vlaneseq
      %v1874 = vshrl.u32 %v1873, 7
      %v1875 = vsub.s32 %v1872, %v1874
      %v1876 = vrot.slane %v1869, %v1875
      %v1878 = vunpack.c.l.s4 1966171168
      %v1879 = vunpack.c.0.s8 %v1878
      %v1880 = vlaneseq
      %v1881 = vshrl.u32 %v1880, 7
      %v1882 = vsub.s32 %v1879, %v1881
      %v1883 = vrot.slane %v1046, %v1882
      %v1884 = vcombine.low %v1876, %v1883
      %v1886 = vunpack.c.l.s4 1966171168
      %v1887 = vunpack.c.0.s8 %v1886
      %v1888 = vlaneseq
      %v1889 = vshrl.u32 %v1888, 7
      %v1890 = vsub.s32 %v1887, %v1889
      %v1891 = vrot.slane %v1884, %v1890
      %v1892 = vcombine.low %v1048, %v1050
      %v1894 = vunpack.c.l.s4 1966171168
      %v1895 = vunpack.c.0.s8 %v1894
      %v1896 = vlaneseq
      %v1897 = vshrl.u32 %v1896, 7
      %v1898 = vsub.s32 %v1895, %v1897
      %v1899 = vrot.slane %v1892, %v1898
      %v1901 = vunpack.c.l.s4 1966171168
      %v1902 = vunpack.c.0.s8 %v1901
      %v1903 = vlaneseq
      %v1904 = vshrl.u32 %v1903, 7
      %v1905 = vsub.s32 %v1902, %v1904
      %v1906 = vrot.slane %v1074, %v1905
      %v1907 = vcombine.low %v1899, %v1906
      %v1909 = vunpack.c.l.s4 1966171168
      %v1910 = vunpack.c.0.s8 %v1909
      %v1911 = vlaneseq
      %v1912 = vshrl.u32 %v1911, 7
      %v1913 = vsub.s32 %v1910, %v1912
      %v1914 = vrot.slane %v1907, %v1913
      %v1915 = vcombine.low %v1088, %v1096
      %v1917 = vunpack.c.l.s4 1966171168
      %v1918 = vunpack.c.0.s8 %v1917
      %v1919 = vlaneseq
      %v1920 = vshrl.u32 %v1919, 7
      %v1921 = vsub.s32 %v1918, %v1920
      %v1922 = vrot.slane %v1915, %v1921
      %v1924 = vunpack.c.l.s4 1966171168
      %v1925 = vunpack.c.0.s8 %v1924
      %v1926 = vlaneseq
      %v1927 = vshrl.u32 %v1926, 7
      %v1928 = vsub.s32 %v1925, %v1927
      %v1929 = vrot.slane %v1098, %v1928
      %v1930 = vcombine.low %v1922, %v1929
      %v1932 = vunpack.c.l.s4 1966171168
      %v1933 = vunpack.c.0.s8 %v1932
      %v1934 = vlaneseq
      %v1935 = vshrl.u32 %v1934, 7
      %v1936 = vsub.s32 %v1933, %v1935
      %v1937 = vrot.slane %v1930, %v1936
      %v1938 = vcombine.low %v1081, %v1095
      %v1940 = vunpack.c.l.s4 1966171168
      %v1941 = vunpack.c.0.s8 %v1940
      %v1942 = vlaneseq
      %v1943 = vshrl.u32 %v1942, 7
      %v1944 = vsub.s32 %v1941, %v1943
      %v1945 = vrot.slane %v1938, %v1944
      %v1947 = vunpack.c.l.s4 1966171168
      %v1948 = vunpack.c.0.s8 %v1947
      %v1949 = vlaneseq
      %v1950 = vshrl.u32 %v1949, 7
      %v1951 = vsub.s32 %v1948, %v1950
      %v1952 = vrot.slane %v1097, %v1951
      %v1953 = vcombine.low %v1945, %v1952
      %v1955 = vunpack.c.l.s4 1966171168
      %v1956 = vunpack.c.0.s8 %v1955
      %v1957 = vlaneseq
      %v1958 = vshrl.u32 %v1957, 7
      %v1959 = vsub.s32 %v1956, %v1958
      %v1960 = vrot.slane %v1953, %v1959
      %v1961 = vcombine.low %v1099, %v1123
      %v1963 = vunpack.c.l.s4 1966171168
      %v1964 = vunpack.c.0.s8 %v1963
      %v1965 = vlaneseq
      %v1966 = vshrl.u32 %v1965, 7
      %v1967 = vsub.s32 %v1964, %v1966
      %v1968 = vrot.slane %v1961, %v1967
      %v1970 = vunpack.c.l.s4 1966171168
      %v1971 = vunpack.c.0.s8 %v1970
      %v1972 = vlaneseq
      %v1973 = vshrl.u32 %v1972, 7
      %v1974 = vsub.s32 %v1971, %v1973
      %v1975 = vrot.slane %v1137, %v1974
      %v1976 = vcombine.low %v1968, %v1975
      %v1978 = vunpack.c.l.s4 1966171168
      %v1979 = vunpack.c.0.s8 %v1978
      %v1980 = vlaneseq
      %v1981 = vshrl.u32 %v1980, 7
      %v1982 = vsub.s32 %v1979, %v1981
      %v1983 = vrot.slane %v1976, %v1982
      %v1984 = vcombine.low %v1145, %v1147
      %v1986 = vunpack.c.l.s4 1966171168
      %v1987 = vunpack.c.0.s8 %v1986
      %v1988 = vlaneseq
      %v1989 = vshrl.u32 %v1988, 7
      %v1990 = vsub.s32 %v1987, %v1989
      %v1991 = vrot.slane %v1984, %v1990
      %v1993 = vunpack.c.l.s4 1966171168
      %v1994 = vunpack.c.0.s8 %v1993
      %v1995 = vlaneseq
      %v1996 = vshrl.u32 %v1995, 7
      %v1997 = vsub.s32 %v1994, %v1996
      %v1998 = vrot.slane %v1130, %v1997
      %v1999 = vcombine.low %v1991, %v1998
      %v2001 = vunpack.c.l.s4 1966171168
      %v2002 = vunpack.c.0.s8 %v2001
      %v2003 = vlaneseq
      %v2004 = vshrl.u32 %v2003, 7
      %v2005 = vsub.s32 %v2002, %v2004
      %v2006 = vrot.slane %v1999, %v2005
      %v2007 = vcombine.low %v1144, %v1146
      %v2009 = vunpack.c.l.s4 1966171168
      %v2010 = vunpack.c.0.s8 %v2009
      %v2011 = vlaneseq
      %v2012 = vshrl.u32 %v2011, 7
      %v2013 = vsub.s32 %v2010, %v2012
      %v2014 = vrot.slane %v2007, %v2013
      %v2016 = vunpack.c.l.s4 1966171168
      %v2017 = vunpack.c.0.s8 %v2016
      %v2018 = vlaneseq
      %v2019 = vshrl.u32 %v2018, 7
      %v2020 = vsub.s32 %v2017, %v2019
      %v2021 = vrot.slane %v1148, %v2020
      %v2022 = vcombine.low %v2014, %v2021
      %v2024 = vunpack.c.l.s4 1966171168
      %v2025 = vunpack.c.0.s8 %v2024
      %v2026 = vlaneseq
      %v2027 = vshrl.u32 %v2026, 7
      %v2028 = vsub.s32 %v2025, %v2027
      %v2029 = vrot.slane %v2022, %v2028
      %v2038 = vpack.c.bf16 %v1868, %v1868
      %v2039 = vpack.c.bf16 %v1891, %v1891
      %v2040 = vpack.c.bf16 %v1914, %v1914
      %v2041 = vpack.c.bf16 %v1937, %v1937
      %v2042 = vpack.c.bf16 %v1960, %v1960
      %v2043 = vpack.c.bf16 %v1983, %v1983
      %v2044 = vpack.c.bf16 %v2006, %v2006
      %v2045 = vpack.c.bf16 %v2029, %v2029
      %vm2046 = vcmask 23552
      %v2048 = vsel %vm2046, %v1838, 0
      %vm2050 = vcmask 1040384
      %vm2051 = vcmask 1041408
      %v2052 = vsel %vm2050, 4294967295, 65535
      %v2053 = vsel %vm2051, %v2052, 0
      %v2055 = vand.u32 %v2038, %v2053
      %2057 = vmatprep.subr.bf16.mxu0 0
      %2058 = vmatpush1.bf16.msra.mxu0 0
      %2059 = vmatprep.subr.bf16.mxu0 0
      %2060 = vmatpush1.bf16.msra.mxu0 0
      %2061 = vmatprep.subr.bf16.mxu0 0
      %2062 = vmatpush1.bf16.msra.mxu0 0
      %2063 = vmatprep.subr.bf16.mxu0 0
      %2064 = vmatpush1.bf16.msra.mxu0 0
      %2065 = vmatprep.subr.bf16.mxu0 0
      %2066 = vmatpush1.bf16.msra.mxu0 0
      %2067 = vmatprep.subr.bf16.mxu0 0
      %2068 = vmatpush1.bf16.msra.mxu0 0
      %2069 = vmatprep.subr.bf16.mxu0 0
      %2070 = vmatpush1.bf16.msra.mxu0 0
      %2071 = vmatprep.subr.bf16.mxu0 0
      %2072 = vmatpush1.bf16.msra.mxu0 %v2055
      %2073 = vmatprep.subr.bf16.mxu0 0
      %2074 = vmatpush2.bf16.msra.mxu0 0
      %2075 = vmatprep.subr.bf16.mxu0 0
      %2076 = vmatpush2.bf16.msra.mxu0 0
      %2077 = vmatprep.subr.bf16.mxu0 0
      %2078 = vmatpush2.bf16.msra.mxu0 0
      %2079 = vmatprep.subr.bf16.mxu0 0
      %2080 = vmatpush2.bf16.msra.mxu0 0
      %2081 = vmatprep.subr.bf16.mxu0 0
      %2082 = vmatpush2.bf16.msra.mxu0 0
      %2083 = vmatprep.subr.bf16.mxu0 0
      %2084 = vmatpush2.bf16.msra.mxu0 0
      %2085 = vmatprep.subr.bf16.mxu0 0
      %2086 = vmatpush2.bf16.msra.mxu0 0
      %2087 = vmatprep.subr.bf16.mxu0 0
      %2088 = vmatpush2.bf16.msra.mxu0 0
      %2089 = vmatprep.mubr.bf16.mxu0 0
      %2090 = vmatmul.mubr.bf16.gmra.mxu0 %v2048
      %v2091 = vpop.f32.mrf.mxu0
      %v2092 = vadd.f32 0.0, %v2091
      %v2093 = vpop.f32.mrf.mxu0
      %v2094 = vpop.f32.mrf.mxu0
      %v2095 = vpop.f32.mrf.mxu0
      %2096 = vdwg.mxu0
      %v2098 = vsel %vm2046, %v1839, 0
      %v2101 = vand.u32 %v2039, %v2053
      %2103 = vmatprep.subr.bf16.mxu0 0
      %2104 = vmatpush1.bf16.msra.mxu0 0
      %2105 = vmatprep.subr.bf16.mxu0 0
      %2106 = vmatpush1.bf16.msra.mxu0 0
      %2107 = vmatprep.subr.bf16.mxu0 0
      %2108 = vmatpush1.bf16.msra.mxu0 0
      %2109 = vmatprep.subr.bf16.mxu0 0
      %2110 = vmatpush1.bf16.msra.mxu0 0
      %2111 = vmatprep.subr.bf16.mxu0 0
      %2112 = vmatpush1.bf16.msra.mxu0 0
      %2113 = vmatprep.subr.bf16.mxu0 0
      %2114 = vmatpush1.bf16.msra.mxu0 0
      %2115 = vmatprep.subr.bf16.mxu0 0
      %2116 = vmatpush1.bf16.msra.mxu0 0
      %2117 = vmatprep.subr.bf16.mxu0 0
      %2118 = vmatpush1.bf16.msra.mxu0 %v2101
      %2119 = vmatprep.subr.bf16.mxu0 0
      %2120 = vmatpush2.bf16.msra.mxu0 0
      %2121 = vmatprep.subr.bf16.mxu0 0
      %2122 = vmatpush2.bf16.msra.mxu0 0
      %2123 = vmatprep.subr.bf16.mxu0 0
      %2124 = vmatpush2.bf16.msra.mxu0 0
      %2125 = vmatprep.subr.bf16.mxu0 0
      %2126 = vmatpush2.bf16.msra.mxu0 0
      %2127 = vmatprep.subr.bf16.mxu0 0
      %2128 = vmatpush2.bf16.msra.mxu0 0
      %2129 = vmatprep.subr.bf16.mxu0 0
      %2130 = vmatpush2.bf16.msra.mxu0 0
      %2131 = vmatprep.subr.bf16.mxu0 0
      %2132 = vmatpush2.bf16.msra.mxu0 0
      %2133 = vmatprep.subr.bf16.mxu0 0
      %2134 = vmatpush2.bf16.msra.mxu0 0
      %2135 = vmatprep.mubr.bf16.mxu0 0
      %2136 = vmatmul.mubr.bf16.gmra.mxu0 %v2098
      %v2137 = vpop.f32.mrf.mxu0
      %v2138 = vadd.f32 0.0, %v2137
      %v2139 = vpop.f32.mrf.mxu0
      %v2140 = vpop.f32.mrf.mxu0
      %v2141 = vpop.f32.mrf.mxu0
      %2142 = vdwg.mxu0
      %v2144 = vsel %vm2046, %v1840, 0
      %v2147 = vand.u32 %v2040, %v2053
      %2149 = vmatprep.subr.bf16.mxu0 0
      %2150 = vmatpush1.bf16.msra.mxu0 0
      %2151 = vmatprep.subr.bf16.mxu0 0
      %2152 = vmatpush1.bf16.msra.mxu0 0
      %2153 = vmatprep.subr.bf16.mxu0 0
      %2154 = vmatpush1.bf16.msra.mxu0 0
      %2155 = vmatprep.subr.bf16.mxu0 0
      %2156 = vmatpush1.bf16.msra.mxu0 0
      %2157 = vmatprep.subr.bf16.mxu0 0
      %2158 = vmatpush1.bf16.msra.mxu0 0
      %2159 = vmatprep.subr.bf16.mxu0 0
      %2160 = vmatpush1.bf16.msra.mxu0 0
      %2161 = vmatprep.subr.bf16.mxu0 0
      %2162 = vmatpush1.bf16.msra.mxu0 0
      %2163 = vmatprep.subr.bf16.mxu0 0
      %2164 = vmatpush1.bf16.msra.mxu0 %v2147
      %2165 = vmatprep.subr.bf16.mxu0 0
      %2166 = vmatpush2.bf16.msra.mxu0 0
      %2167 = vmatprep.subr.bf16.mxu0 0
      %2168 = vmatpush2.bf16.msra.mxu0 0
      %2169 = vmatprep.subr.bf16.mxu0 0
      %2170 = vmatpush2.bf16.msra.mxu0 0
      %2171 = vmatprep.subr.bf16.mxu0 0
      %2172 = vmatpush2.bf16.msra.mxu0 0
      %2173 = vmatprep.subr.bf16.mxu0 0
      %2174 = vmatpush2.bf16.msra.mxu0 0
      %2175 = vmatprep.subr.bf16.mxu0 0
      %2176 = vmatpush2.bf16.msra.mxu0 0
      %2177 = vmatprep.subr.bf16.mxu0 0
      %2178 = vmatpush2.bf16.msra.mxu0 0
      %2179 = vmatprep.subr.bf16.mxu0 0
      %2180 = vmatpush2.bf16.msra.mxu0 0
      %2181 = vmatprep.mubr.bf16.mxu0 0
      %2182 = vmatmul.mubr.bf16.gmra.mxu0 %v2144
      %v2183 = vpop.f32.mrf.mxu0
      %v2184 = vadd.f32 0.0, %v2183
      %v2185 = vpop.f32.mrf.mxu0
      %v2186 = vpop.f32.mrf.mxu0
      %v2187 = vpop.f32.mrf.mxu0
      %2188 = vdwg.mxu0
      %v2190 = vsel %vm2046, %v1841, 0
      %v2193 = vand.u32 %v2041, %v2053
      %2195 = vmatprep.subr.bf16.mxu0 0
      %2196 = vmatpush1.bf16.msra.mxu0 0
      %2197 = vmatprep.subr.bf16.mxu0 0
      %2198 = vmatpush1.bf16.msra.mxu0 0
      %2199 = vmatprep.subr.bf16.mxu0 0
      %2200 = vmatpush1.bf16.msra.mxu0 0
      %2201 = vmatprep.subr.bf16.mxu0 0
      %2202 = vmatpush1.bf16.msra.mxu0 0
      %2203 = vmatprep.subr.bf16.mxu0 0
      %2204 = vmatpush1.bf16.msra.mxu0 0
      %2205 = vmatprep.subr.bf16.mxu0 0
      %2206 = vmatpush1.bf16.msra.mxu0 0
      %2207 = vmatprep.subr.bf16.mxu0 0
      %2208 = vmatpush1.bf16.msra.mxu0 0
      %2209 = vmatprep.subr.bf16.mxu0 0
      %2210 = vmatpush1.bf16.msra.mxu0 %v2193
      %2211 = vmatprep.subr.bf16.mxu0 0
      %2212 = vmatpush2.bf16.msra.mxu0 0
      %2213 = vmatprep.subr.bf16.mxu0 0
      %2214 = vmatpush2.bf16.msra.mxu0 0
      %2215 = vmatprep.subr.bf16.mxu0 0
      %2216 = vmatpush2.bf16.msra.mxu0 0
      %2217 = vmatprep.subr.bf16.mxu0 0
      %2218 = vmatpush2.bf16.msra.mxu0 0
      %2219 = vmatprep.subr.bf16.mxu0 0
      %2220 = vmatpush2.bf16.msra.mxu0 0
      %2221 = vmatprep.subr.bf16.mxu0 0
      %2222 = vmatpush2.bf16.msra.mxu0 0
      %2223 = vmatprep.subr.bf16.mxu0 0
      %2224 = vmatpush2.bf16.msra.mxu0 0
      %2225 = vmatprep.subr.bf16.mxu0 0
      %2226 = vmatpush2.bf16.msra.mxu0 0
      %2227 = vmatprep.mubr.bf16.mxu0 0
      %2228 = vmatmul.mubr.bf16.gmra.mxu0 %v2190
      %v2229 = vpop.f32.mrf.mxu0
      %v2230 = vadd.f32 0.0, %v2229
      %v2231 = vpop.f32.mrf.mxu0
      %v2232 = vpop.f32.mrf.mxu0
      %v2233 = vpop.f32.mrf.mxu0
      %2234 = vdwg.mxu0
      %v2236 = vsel %vm2046, %v1842, 0
      %v2239 = vand.u32 %v2042, %v2053
      %2241 = vmatprep.subr.bf16.mxu0 0
      %2242 = vmatpush1.bf16.msra.mxu0 0
      %2243 = vmatprep.subr.bf16.mxu0 0
      %2244 = vmatpush1.bf16.msra.mxu0 0
      %2245 = vmatprep.subr.bf16.mxu0 0
      %2246 = vmatpush1.bf16.msra.mxu0 0
      %2247 = vmatprep.subr.bf16.mxu0 0
      %2248 = vmatpush1.bf16.msra.mxu0 0
      %2249 = vmatprep.subr.bf16.mxu0 0
      %2250 = vmatpush1.bf16.msra.mxu0 0
      %2251 = vmatprep.subr.bf16.mxu0 0
      %2252 = vmatpush1.bf16.msra.mxu0 0
      %2253 = vmatprep.subr.bf16.mxu0 0
      %2254 = vmatpush1.bf16.msra.mxu0 0
      %2255 = vmatprep.subr.bf16.mxu0 0
      %2256 = vmatpush1.bf16.msra.mxu0 %v2239
      %2257 = vmatprep.subr.bf16.mxu0 0
      %2258 = vmatpush2.bf16.msra.mxu0 0
      %2259 = vmatprep.subr.bf16.mxu0 0
      %2260 = vmatpush2.bf16.msra.mxu0 0
      %2261 = vmatprep.subr.bf16.mxu0 0
      %2262 = vmatpush2.bf16.msra.mxu0 0
      %2263 = vmatprep.subr.bf16.mxu0 0
      %2264 = vmatpush2.bf16.msra.mxu0 0
      %2265 = vmatprep.subr.bf16.mxu0 0
      %2266 = vmatpush2.bf16.msra.mxu0 0
      %2267 = vmatprep.subr.bf16.mxu0 0
      %2268 = vmatpush2.bf16.msra.mxu0 0
      %2269 = vmatprep.subr.bf16.mxu0 0
      %2270 = vmatpush2.bf16.msra.mxu0 0
      %2271 = vmatprep.subr.bf16.mxu0 0
      %2272 = vmatpush2.bf16.msra.mxu0 0
      %2273 = vmatprep.mubr.bf16.mxu0 0
      %2274 = vmatmul.mubr.bf16.gmra.mxu0 %v2236
      %v2275 = vpop.f32.mrf.mxu0
      %v2276 = vadd.f32 0.0, %v2275
      %v2277 = vpop.f32.mrf.mxu0
      %v2278 = vpop.f32.mrf.mxu0
      %v2279 = vpop.f32.mrf.mxu0
      %2280 = vdwg.mxu0
      %v2282 = vsel %vm2046, %v1843, 0
      %v2285 = vand.u32 %v2043, %v2053
      %2287 = vmatprep.subr.bf16.mxu0 0
      %2288 = vmatpush1.bf16.msra.mxu0 0
      %2289 = vmatprep.subr.bf16.mxu0 0
      %2290 = vmatpush1.bf16.msra.mxu0 0
      %2291 = vmatprep.subr.bf16.mxu0 0
      %2292 = vmatpush1.bf16.msra.mxu0 0
      %2293 = vmatprep.subr.bf16.mxu0 0
      %2294 = vmatpush1.bf16.msra.mxu0 0
      %2295 = vmatprep.subr.bf16.mxu0 0
      %2296 = vmatpush1.bf16.msra.mxu0 0
      %2297 = vmatprep.subr.bf16.mxu0 0
      %2298 = vmatpush1.bf16.msra.mxu0 0
      %2299 = vmatprep.subr.bf16.mxu0 0
      %2300 = vmatpush1.bf16.msra.mxu0 0
      %2301 = vmatprep.subr.bf16.mxu0 0
      %2302 = vmatpush1.bf16.msra.mxu0 %v2285
      %2303 = vmatprep.subr.bf16.mxu0 0
      %2304 = vmatpush2.bf16.msra.mxu0 0
      %2305 = vmatprep.subr.bf16.mxu0 0
      %2306 = vmatpush2.bf16.msra.mxu0 0
      %2307 = vmatprep.subr.bf16.mxu0 0
      %2308 = vmatpush2.bf16.msra.mxu0 0
      %2309 = vmatprep.subr.bf16.mxu0 0
      %2310 = vmatpush2.bf16.msra.mxu0 0
      %2311 = vmatprep.subr.bf16.mxu0 0
      %2312 = vmatpush2.bf16.msra.mxu0 0
      %2313 = vmatprep.subr.bf16.mxu0 0
      %2314 = vmatpush2.bf16.msra.mxu0 0
      %2315 = vmatprep.subr.bf16.mxu0 0
      %2316 = vmatpush2.bf16.msra.mxu0 0
      %2317 = vmatprep.subr.bf16.mxu0 0
      %2318 = vmatpush2.bf16.msra.mxu0 0
      %2319 = vmatprep.mubr.bf16.mxu0 0
      %2320 = vmatmul.mubr.bf16.gmra.mxu0 %v2282
      %v2321 = vpop.f32.mrf.mxu0
      %v2322 = vadd.f32 0.0, %v2321
      %v2323 = vpop.f32.mrf.mxu0
      %v2324 = vpop.f32.mrf.mxu0
      %v2325 = vpop.f32.mrf.mxu0
      %2326 = vdwg.mxu0
      %v2328 = vsel %vm2046, %v1844, 0
      %v2331 = vand.u32 %v2044, %v2053
      %2333 = vmatprep.subr.bf16.mxu0 0
      %2334 = vmatpush1.bf16.msra.mxu0 0
      %2335 = vmatprep.subr.bf16.mxu0 0
      %2336 = vmatpush1.bf16.msra.mxu0 0
      %2337 = vmatprep.subr.bf16.mxu0 0
      %2338 = vmatpush1.bf16.msra.mxu0 0
      %2339 = vmatprep.subr.bf16.mxu0 0
      %2340 = vmatpush1.bf16.msra.mxu0 0
      %2341 = vmatprep.subr.bf16.mxu0 0
      %2342 = vmatpush1.bf16.msra.mxu0 0
      %2343 = vmatprep.subr.bf16.mxu0 0
      %2344 = vmatpush1.bf16.msra.mxu0 0
      %2345 = vmatprep.subr.bf16.mxu0 0
      %2346 = vmatpush1.bf16.msra.mxu0 0
      %2347 = vmatprep.subr.bf16.mxu0 0
      %2348 = vmatpush1.bf16.msra.mxu0 %v2331
      %2349 = vmatprep.subr.bf16.mxu0 0
      %2350 = vmatpush2.bf16.msra.mxu0 0
      %2351 = vmatprep.subr.bf16.mxu0 0
      %2352 = vmatpush2.bf16.msra.mxu0 0
      %2353 = vmatprep.subr.bf16.mxu0 0
      %2354 = vmatpush2.bf16.msra.mxu0 0
      %2355 = vmatprep.subr.bf16.mxu0 0
      %2356 = vmatpush2.bf16.msra.mxu0 0
      %2357 = vmatprep.subr.bf16.mxu0 0
      %2358 = vmatpush2.bf16.msra.mxu0 0
      %2359 = vmatprep.subr.bf16.mxu0 0
      %2360 = vmatpush2.bf16.msra.mxu0 0
      %2361 = vmatprep.subr.bf16.mxu0 0
      %2362 = vmatpush2.bf16.msra.mxu0 0
      %2363 = vmatprep.subr.bf16.mxu0 0
      %2364 = vmatpush2.bf16.msra.mxu0 0
      %2365 = vmatprep.mubr.bf16.mxu0 0
      %2366 = vmatmul.mubr.bf16.gmra.mxu0 %v2328
      %v2367 = vpop.f32.mrf.mxu0
      %v2368 = vadd.f32 0.0, %v2367
      %v2369 = vpop.f32.mrf.mxu0
      %v2370 = vpop.f32.mrf.mxu0
      %v2371 = vpop.f32.mrf.mxu0
      %2372 = vdwg.mxu0
      %v2374 = vsel %vm2046, %v1845, 0
      %v2377 = vand.u32 %v2045, %v2053
      %2379 = vmatprep.subr.bf16.mxu0 0
      %2380 = vmatpush1.bf16.msra.mxu0 0
      %2381 = vmatprep.subr.bf16.mxu0 0
      %2382 = vmatpush1.bf16.msra.mxu0 0
      %2383 = vmatprep.subr.bf16.mxu0 0
      %2384 = vmatpush1.bf16.msra.mxu0 0
      %2385 = vmatprep.subr.bf16.mxu0 0
      %2386 = vmatpush1.bf16.msra.mxu0 0
      %2387 = vmatprep.subr.bf16.mxu0 0
      %2388 = vmatpush1.bf16.msra.mxu0 0
      %2389 = vmatprep.subr.bf16.mxu0 0
      %2390 = vmatpush1.bf16.msra.mxu0 0
      %2391 = vmatprep.subr.bf16.mxu0 0
      %2392 = vmatpush1.bf16.msra.mxu0 0
      %2393 = vmatprep.subr.bf16.mxu0 0
      %2394 = vmatpush1.bf16.msra.mxu0 %v2377
      %2395 = vmatprep.subr.bf16.mxu0 0
      %2396 = vmatpush2.bf16.msra.mxu0 0
      %2397 = vmatprep.subr.bf16.mxu0 0
      %2398 = vmatpush2.bf16.msra.mxu0 0
      %2399 = vmatprep.subr.bf16.mxu0 0
      %2400 = vmatpush2.bf16.msra.mxu0 0
      %2401 = vmatprep.subr.bf16.mxu0 0
      %2402 = vmatpush2.bf16.msra.mxu0 0
      %2403 = vmatprep.subr.bf16.mxu0 0
      %2404 = vmatpush2.bf16.msra.mxu0 0
      %2405 = vmatprep.subr.bf16.mxu0 0
      %2406 = vmatpush2.bf16.msra.mxu0 0
      %2407 = vmatprep.subr.bf16.mxu0 0
      %2408 = vmatpush2.bf16.msra.mxu0 0
      %2409 = vmatprep.subr.bf16.mxu0 0
      %2410 = vmatpush2.bf16.msra.mxu0 0
      %2411 = vmatprep.mubr.bf16.mxu0 0
      %2412 = vmatmul.mubr.bf16.gmra.mxu0 %v2374
      %v2413 = vpop.f32.mrf.mxu0
      %v2414 = vadd.f32 0.0, %v2413
      %v2415 = vpop.f32.mrf.mxu0
      %v2416 = vpop.f32.mrf.mxu0
      %v2417 = vpop.f32.mrf.mxu0
      %2418 = vdwg.mxu0
      %2419 = vrot.lane.b32.xlu0 %v1341, 96
      %v2420 = vpop.permute.xlu0 %2419
      %2421 = vrot.lane.b32.xlu0 %v1341, 32
      %v2422 = vpop.permute.xlu0 %2421
      %v2424 = vsel %vm791, %v2420, 0
      %v2427 = vsel %vm791, %v2422, 0
      %2429 = vmatprep.subr.bf16.mxu0 0
      %2430 = vmatpush1.bf16.xpose.msra.mxu0 0
      %2431 = vmatprep.subr.bf16.mxu0 0
      %2432 = vmatpush1.bf16.xpose.msra.mxu0 0
      %2433 = vmatprep.subr.bf16.mxu0 0
      %2434 = vmatpush1.bf16.xpose.msra.mxu0 0
      %2435 = vmatprep.subr.bf16.mxu0 0
      %2436 = vmatpush1.bf16.xpose.msra.mxu0 0
      %2437 = vmatprep.subr.bf16.mxu0 0
      %2438 = vmatpush1.bf16.xpose.msra.mxu0 0
      %2439 = vmatprep.subr.bf16.mxu0 0
      %2440 = vmatpush1.bf16.xpose.msra.mxu0 0
      %2441 = vmatprep.subr.bf16.mxu0 0
      %2442 = vmatpush1.bf16.xpose.msra.mxu0 0
      %2443 = vmatprep.subr.bf16.mxu0 0
      %2444 = vmatpush1.bf16.xpose.msra.mxu0 %v2427
      %2445 = vmatprep.subr.bf16.mxu0 0
      %2446 = vmatpush2.bf16.xpose.msra.mxu0 0
      %2447 = vmatprep.subr.bf16.mxu0 0
      %2448 = vmatpush2.bf16.xpose.msra.mxu0 0
      %2449 = vmatprep.subr.bf16.mxu0 0
      %2450 = vmatpush2.bf16.xpose.msra.mxu0 0
      %2451 = vmatprep.subr.bf16.mxu0 0
      %2452 = vmatpush2.bf16.xpose.msra.mxu0 0
      %2453 = vmatprep.subr.bf16.mxu0 0
      %2454 = vmatpush2.bf16.xpose.msra.mxu0 0
      %2455 = vmatprep.subr.bf16.mxu0 0
      %2456 = vmatpush2.bf16.xpose.msra.mxu0 0
      %2457 = vmatprep.subr.bf16.mxu0 0
      %2458 = vmatpush2.bf16.xpose.msra.mxu0 0
      %2459 = vmatprep.subr.bf16.mxu0 0
      %2460 = vmatpush2.bf16.xpose.msra.mxu0 0
      %2461 = vmatprep.mubr.bf16.mxu0 0
      %2462 = vmatmul.mubr.bf16.gmra.mxu0 %v2424
      %v2463 = vpop.f32.mrf.mxu0
      %v2464 = vadd.f32 0.0, %v2463
      %v2465 = vpop.f32.mrf.mxu0
      %v2466 = vpop.f32.mrf.mxu0
      %v2467 = vpop.f32.mrf.mxu0
      %2468 = vdwg.mxu0
      %2469 = vrot.lane.b32.xlu0 %v1342, 96
      %v2470 = vpop.permute.xlu0 %2469
      %2471 = vrot.lane.b32.xlu0 %v1342, 32
      %v2472 = vpop.permute.xlu0 %2471
      %v2474 = vsel %vm791, %v2470, 0
      %v2477 = vsel %vm791, %v2472, 0
      %2479 = vmatprep.subr.bf16.mxu0 0
      %2480 = vmatpush1.bf16.xpose.msra.mxu0 0
      %2481 = vmatprep.subr.bf16.mxu0 0
      %2482 = vmatpush1.bf16.xpose.msra.mxu0 0
      %2483 = vmatprep.subr.bf16.mxu0 0
      %2484 = vmatpush1.bf16.xpose.msra.mxu0 0
      %2485 = vmatprep.subr.bf16.mxu0 0
      %2486 = vmatpush1.bf16.xpose.msra.mxu0 0
      %2487 = vmatprep.subr.bf16.mxu0 0
      %2488 = vmatpush1.bf16.xpose.msra.mxu0 0
      %2489 = vmatprep.subr.bf16.mxu0 0
      %2490 = vmatpush1.bf16.xpose.msra.mxu0 0
      %2491 = vmatprep.subr.bf16.mxu0 0
      %2492 = vmatpush1.bf16.xpose.msra.mxu0 0
      %2493 = vmatprep.subr.bf16.mxu0 0
      %2494 = vmatpush1.bf16.xpose.msra.mxu0 %v2477
      %2495 = vmatprep.subr.bf16.mxu0 0
      %2496 = vmatpush2.bf16.xpose.msra.mxu0 0
      %2497 = vmatprep.subr.bf16.mxu0 0
      %2498 = vmatpush2.bf16.xpose.msra.mxu0 0
      %2499 = vmatprep.subr.bf16.mxu0 0
      %2500 = vmatpush2.bf16.xpose.msra.mxu0 0
      %2501 = vmatprep.subr.bf16.mxu0 0
      %2502 = vmatpush2.bf16.xpose.msra.mxu0 0
      %2503 = vmatprep.subr.bf16.mxu0 0
      %2504 = vmatpush2.bf16.xpose.msra.mxu0 0
      %2505 = vmatprep.subr.bf16.mxu0 0
      %2506 = vmatpush2.bf16.xpose.msra.mxu0 0
      %2507 = vmatprep.subr.bf16.mxu0 0
      %2508 = vmatpush2.bf16.xpose.msra.mxu0 0
      %2509 = vmatprep.subr.bf16.mxu0 0
      %2510 = vmatpush2.bf16.xpose.msra.mxu0 0
      %2511 = vmatprep.mubr.bf16.mxu0 0
      %2512 = vmatmul.mubr.bf16.gmra.mxu0 %v2474
      %v2513 = vpop.f32.mrf.mxu0
      %v2514 = vadd.f32 0.0, %v2513
      %v2515 = vpop.f32.mrf.mxu0
      %v2516 = vpop.f32.mrf.mxu0
      %v2517 = vpop.f32.mrf.mxu0
      %2518 = vdwg.mxu0
      %2519 = vrot.lane.b32.xlu0 %v1343, 96
      %v2520 = vpop.permute.xlu0 %2519
      %2521 = vrot.lane.b32.xlu0 %v1343, 32
      %v2522 = vpop.permute.xlu0 %2521
      %v2524 = vsel %vm791, %v2520, 0
      %v2527 = vsel %vm791, %v2522, 0
      %2529 = vmatprep.subr.bf16.mxu0 0
      %2530 = vmatpush1.bf16.xpose.msra.mxu0 0
      %2531 = vmatprep.subr.bf16.mxu0 0
      %2532 = vmatpush1.bf16.xpose.msra.mxu0 0
      %2533 = vmatprep.subr.bf16.mxu0 0
      %2534 = vmatpush1.bf16.xpose.msra.mxu0 0
      %2535 = vmatprep.subr.bf16.mxu0 0
      %2536 = vmatpush1.bf16.xpose.msra.mxu0 0
      %2537 = vmatprep.subr.bf16.mxu0 0
      %2538 = vmatpush1.bf16.xpose.msra.mxu0 0
      %2539 = vmatprep.subr.bf16.mxu0 0
      %2540 = vmatpush1.bf16.xpose.msra.mxu0 0
      %2541 = vmatprep.subr.bf16.mxu0 0
      %2542 = vmatpush1.bf16.xpose.msra.mxu0 0
      %2543 = vmatprep.subr.bf16.mxu0 0
      %2544 = vmatpush1.bf16.xpose.msra.mxu0 %v2527
      %2545 = vmatprep.subr.bf16.mxu0 0
      %2546 = vmatpush2.bf16.xpose.msra.mxu0 0
      %2547 = vmatprep.subr.bf16.mxu0 0
      %2548 = vmatpush2.bf16.xpose.msra.mxu0 0
      %2549 = vmatprep.subr.bf16.mxu0 0
      %2550 = vmatpush2.bf16.xpose.msra.mxu0 0
      %2551 = vmatprep.subr.bf16.mxu0 0
      %2552 = vmatpush2.bf16.xpose.msra.mxu0 0
      %2553 = vmatprep.subr.bf16.mxu0 0
      %2554 = vmatpush2.bf16.xpose.msra.mxu0 0
      %2555 = vmatprep.subr.bf16.mxu0 0
      %2556 = vmatpush2.bf16.xpose.msra.mxu0 0
      %2557 = vmatprep.subr.bf16.mxu0 0
      %2558 = vmatpush2.bf16.xpose.msra.mxu0 0
      %2559 = vmatprep.subr.bf16.mxu0 0
      %2560 = vmatpush2.bf16.xpose.msra.mxu0 0
      %2561 = vmatprep.mubr.bf16.mxu0 0
      %2562 = vmatmul.mubr.bf16.gmra.mxu0 %v2524
      %v2563 = vpop.f32.mrf.mxu0
      %v2564 = vadd.f32 0.0, %v2563
      %v2565 = vpop.f32.mrf.mxu0
      %v2566 = vpop.f32.mrf.mxu0
      %v2567 = vpop.f32.mrf.mxu0
      %2568 = vdwg.mxu0
      %2569 = vrot.lane.b32.xlu0 %v1344, 96
      %v2570 = vpop.permute.xlu0 %2569
      %2571 = vrot.lane.b32.xlu0 %v1344, 32
      %v2572 = vpop.permute.xlu0 %2571
      %v2574 = vsel %vm791, %v2570, 0
      %v2577 = vsel %vm791, %v2572, 0
      %2579 = vmatprep.subr.bf16.mxu0 0
      %2580 = vmatpush1.bf16.xpose.msra.mxu0 0
      %2581 = vmatprep.subr.bf16.mxu0 0
      %2582 = vmatpush1.bf16.xpose.msra.mxu0 0
      %2583 = vmatprep.subr.bf16.mxu0 0
      %2584 = vmatpush1.bf16.xpose.msra.mxu0 0
      %2585 = vmatprep.subr.bf16.mxu0 0
      %2586 = vmatpush1.bf16.xpose.msra.mxu0 0
      %2587 = vmatprep.subr.bf16.mxu0 0
      %2588 = vmatpush1.bf16.xpose.msra.mxu0 0
      %2589 = vmatprep.subr.bf16.mxu0 0
      %2590 = vmatpush1.bf16.xpose.msra.mxu0 0
      %2591 = vmatprep.subr.bf16.mxu0 0
      %2592 = vmatpush1.bf16.xpose.msra.mxu0 0
      %2593 = vmatprep.subr.bf16.mxu0 0
      %2594 = vmatpush1.bf16.xpose.msra.mxu0 %v2577
      %2595 = vmatprep.subr.bf16.mxu0 0
      %2596 = vmatpush2.bf16.xpose.msra.mxu0 0
      %2597 = vmatprep.subr.bf16.mxu0 0
      %2598 = vmatpush2.bf16.xpose.msra.mxu0 0
      %2599 = vmatprep.subr.bf16.mxu0 0
      %2600 = vmatpush2.bf16.xpose.msra.mxu0 0
      %2601 = vmatprep.subr.bf16.mxu0 0
      %2602 = vmatpush2.bf16.xpose.msra.mxu0 0
      %2603 = vmatprep.subr.bf16.mxu0 0
      %2604 = vmatpush2.bf16.xpose.msra.mxu0 0
      %2605 = vmatprep.subr.bf16.mxu0 0
      %2606 = vmatpush2.bf16.xpose.msra.mxu0 0
      %2607 = vmatprep.subr.bf16.mxu0 0
      %2608 = vmatpush2.bf16.xpose.msra.mxu0 0
      %2609 = vmatprep.subr.bf16.mxu0 0
      %2610 = vmatpush2.bf16.xpose.msra.mxu0 0
      %2611 = vmatprep.mubr.bf16.mxu0 0
      %2612 = vmatmul.mubr.bf16.gmra.mxu0 %v2574
      %v2613 = vpop.f32.mrf.mxu0
      %v2614 = vadd.f32 0.0, %v2613
      %v2615 = vpop.f32.mrf.mxu0
      %v2616 = vpop.f32.mrf.mxu0
      %v2617 = vpop.f32.mrf.mxu0
      %2618 = vdwg.mxu0
      %2619 = vrot.lane.b32.xlu0 %v1345, 96
      %v2620 = vpop.permute.xlu0 %2619
      %2621 = vrot.lane.b32.xlu0 %v1345, 32
      %v2622 = vpop.permute.xlu0 %2621
      %v2624 = vsel %vm791, %v2620, 0
      %v2627 = vsel %vm791, %v2622, 0
      %2629 = vmatprep.subr.bf16.mxu0 0
      %2630 = vmatpush1.bf16.xpose.msra.mxu0 0
      %2631 = vmatprep.subr.bf16.mxu0 0
      %2632 = vmatpush1.bf16.xpose.msra.mxu0 0
      %2633 = vmatprep.subr.bf16.mxu0 0
      %2634 = vmatpush1.bf16.xpose.msra.mxu0 0
      %2635 = vmatprep.subr.bf16.mxu0 0
      %2636 = vmatpush1.bf16.xpose.msra.mxu0 0
      %2637 = vmatprep.subr.bf16.mxu0 0
      %2638 = vmatpush1.bf16.xpose.msra.mxu0 0
      %2639 = vmatprep.subr.bf16.mxu0 0
      %2640 = vmatpush1.bf16.xpose.msra.mxu0 0
      %2641 = vmatprep.subr.bf16.mxu0 0
      %2642 = vmatpush1.bf16.xpose.msra.mxu0 0
      %2643 = vmatprep.subr.bf16.mxu0 0
      %2644 = vmatpush1.bf16.xpose.msra.mxu0 %v2627
      %2645 = vmatprep.subr.bf16.mxu0 0
      %2646 = vmatpush2.bf16.xpose.msra.mxu0 0
      %2647 = vmatprep.subr.bf16.mxu0 0
      %2648 = vmatpush2.bf16.xpose.msra.mxu0 0
      %2649 = vmatprep.subr.bf16.mxu0 0
      %2650 = vmatpush2.bf16.xpose.msra.mxu0 0
      %2651 = vmatprep.subr.bf16.mxu0 0
      %2652 = vmatpush2.bf16.xpose.msra.mxu0 0
      %2653 = vmatprep.subr.bf16.mxu0 0
      %2654 = vmatpush2.bf16.xpose.msra.mxu0 0
      %2655 = vmatprep.subr.bf16.mxu0 0
      %2656 = vmatpush2.bf16.xpose.msra.mxu0 0
      %2657 = vmatprep.subr.bf16.mxu0 0
      %2658 = vmatpush2.bf16.xpose.msra.mxu0 0
      %2659 = vmatprep.subr.bf16.mxu0 0
      %2660 = vmatpush2.bf16.xpose.msra.mxu0 0
      %2661 = vmatprep.mubr.bf16.mxu0 0
      %2662 = vmatmul.mubr.bf16.gmra.mxu0 %v2624
      %v2663 = vpop.f32.mrf.mxu0
      %v2664 = vadd.f32 0.0, %v2663
      %v2665 = vpop.f32.mrf.mxu0
      %v2666 = vpop.f32.mrf.mxu0
      %v2667 = vpop.f32.mrf.mxu0
      %2668 = vdwg.mxu0
      %2669 = vrot.lane.b32.xlu0 %v1346, 96
      %v2670 = vpop.permute.xlu0 %2669
      %2671 = vrot.lane.b32.xlu0 %v1346, 32
      %v2672 = vpop.permute.xlu0 %2671
      %v2674 = vsel %vm791, %v2670, 0
      %v2677 = vsel %vm791, %v2672, 0
      %2679 = vmatprep.subr.bf16.mxu0 0
      %2680 = vmatpush1.bf16.xpose.msra.mxu0 0
      %2681 = vmatprep.subr.bf16.mxu0 0
      %2682 = vmatpush1.bf16.xpose.msra.mxu0 0
      %2683 = vmatprep.subr.bf16.mxu0 0
      %2684 = vmatpush1.bf16.xpose.msra.mxu0 0
      %2685 = vmatprep.subr.bf16.mxu0 0
      %2686 = vmatpush1.bf16.xpose.msra.mxu0 0
      %2687 = vmatprep.subr.bf16.mxu0 0
      %2688 = vmatpush1.bf16.xpose.msra.mxu0 0
      %2689 = vmatprep.subr.bf16.mxu0 0
      %2690 = vmatpush1.bf16.xpose.msra.mxu0 0
      %2691 = vmatprep.subr.bf16.mxu0 0
      %2692 = vmatpush1.bf16.xpose.msra.mxu0 0
      %2693 = vmatprep.subr.bf16.mxu0 0
      %2694 = vmatpush1.bf16.xpose.msra.mxu0 %v2677
      %2695 = vmatprep.subr.bf16.mxu0 0
      %2696 = vmatpush2.bf16.xpose.msra.mxu0 0
      %2697 = vmatprep.subr.bf16.mxu0 0
      %2698 = vmatpush2.bf16.xpose.msra.mxu0 0
      %2699 = vmatprep.subr.bf16.mxu0 0
      %2700 = vmatpush2.bf16.xpose.msra.mxu0 0
      %2701 = vmatprep.subr.bf16.mxu0 0
      %2702 = vmatpush2.bf16.xpose.msra.mxu0 0
      %2703 = vmatprep.subr.bf16.mxu0 0
      %2704 = vmatpush2.bf16.xpose.msra.mxu0 0
      %2705 = vmatprep.subr.bf16.mxu0 0
      %2706 = vmatpush2.bf16.xpose.msra.mxu0 0
      %2707 = vmatprep.subr.bf16.mxu0 0
      %2708 = vmatpush2.bf16.xpose.msra.mxu0 0
      %2709 = vmatprep.subr.bf16.mxu0 0
      %2710 = vmatpush2.bf16.xpose.msra.mxu0 0
      %2711 = vmatprep.mubr.bf16.mxu0 0
      %2712 = vmatmul.mubr.bf16.gmra.mxu0 %v2674
      %v2713 = vpop.f32.mrf.mxu0
      %v2714 = vadd.f32 0.0, %v2713
      %v2715 = vpop.f32.mrf.mxu0
      %v2716 = vpop.f32.mrf.mxu0
      %v2717 = vpop.f32.mrf.mxu0
      %2718 = vdwg.mxu0
      %2719 = vrot.lane.b32.xlu0 %v1347, 96
      %v2720 = vpop.permute.xlu0 %2719
      %2721 = vrot.lane.b32.xlu0 %v1347, 32
      %v2722 = vpop.permute.xlu0 %2721
      %v2724 = vsel %vm791, %v2720, 0
      %v2727 = vsel %vm791, %v2722, 0
      %2729 = vmatprep.subr.bf16.mxu0 0
      %2730 = vmatpush1.bf16.xpose.msra.mxu0 0
      %2731 = vmatprep.subr.bf16.mxu0 0
      %2732 = vmatpush1.bf16.xpose.msra.mxu0 0
      %2733 = vmatprep.subr.bf16.mxu0 0
      %2734 = vmatpush1.bf16.xpose.msra.mxu0 0
      %2735 = vmatprep.subr.bf16.mxu0 0
      %2736 = vmatpush1.bf16.xpose.msra.mxu0 0
      %2737 = vmatprep.subr.bf16.mxu0 0
      %2738 = vmatpush1.bf16.xpose.msra.mxu0 0
      %2739 = vmatprep.subr.bf16.mxu0 0
      %2740 = vmatpush1.bf16.xpose.msra.mxu0 0
      %2741 = vmatprep.subr.bf16.mxu0 0
      %2742 = vmatpush1.bf16.xpose.msra.mxu0 0
      %2743 = vmatprep.subr.bf16.mxu0 0
      %2744 = vmatpush1.bf16.xpose.msra.mxu0 %v2727
      %2745 = vmatprep.subr.bf16.mxu0 0
      %2746 = vmatpush2.bf16.xpose.msra.mxu0 0
      %2747 = vmatprep.subr.bf16.mxu0 0
      %2748 = vmatpush2.bf16.xpose.msra.mxu0 0
      %2749 = vmatprep.subr.bf16.mxu0 0
      %2750 = vmatpush2.bf16.xpose.msra.mxu0 0
      %2751 = vmatprep.subr.bf16.mxu0 0
      %2752 = vmatpush2.bf16.xpose.msra.mxu0 0
      %2753 = vmatprep.subr.bf16.mxu0 0
      %2754 = vmatpush2.bf16.xpose.msra.mxu0 0
      %2755 = vmatprep.subr.bf16.mxu0 0
      %2756 = vmatpush2.bf16.xpose.msra.mxu0 0
      %2757 = vmatprep.subr.bf16.mxu0 0
      %2758 = vmatpush2.bf16.xpose.msra.mxu0 0
      %2759 = vmatprep.subr.bf16.mxu0 0
      %2760 = vmatpush2.bf16.xpose.msra.mxu0 0
      %2761 = vmatprep.mubr.bf16.mxu0 0
      %2762 = vmatmul.mubr.bf16.gmra.mxu0 %v2724
      %v2763 = vpop.f32.mrf.mxu0
      %v2764 = vadd.f32 0.0, %v2763
      %v2765 = vpop.f32.mrf.mxu0
      %v2766 = vpop.f32.mrf.mxu0
      %v2767 = vpop.f32.mrf.mxu0
      %2768 = vdwg.mxu0
      %2769 = vrot.lane.b32.xlu0 %v1348, 96
      %v2770 = vpop.permute.xlu0 %2769
      %2771 = vrot.lane.b32.xlu0 %v1348, 32
      %v2772 = vpop.permute.xlu0 %2771
      %v2774 = vsel %vm791, %v2770, 0
      %v2777 = vsel %vm791, %v2772, 0
      %2779 = vmatprep.subr.bf16.mxu0 0
      %2780 = vmatpush1.bf16.xpose.msra.mxu0 0
      %2781 = vmatprep.subr.bf16.mxu0 0
      %2782 = vmatpush1.bf16.xpose.msra.mxu0 0
      %2783 = vmatprep.subr.bf16.mxu0 0
      %2784 = vmatpush1.bf16.xpose.msra.mxu0 0
      %2785 = vmatprep.subr.bf16.mxu0 0
      %2786 = vmatpush1.bf16.xpose.msra.mxu0 0
      %2787 = vmatprep.subr.bf16.mxu0 0
      %2788 = vmatpush1.bf16.xpose.msra.mxu0 0
      %2789 = vmatprep.subr.bf16.mxu0 0
      %2790 = vmatpush1.bf16.xpose.msra.mxu0 0
      %2791 = vmatprep.subr.bf16.mxu0 0
      %2792 = vmatpush1.bf16.xpose.msra.mxu0 0
      %2793 = vmatprep.subr.bf16.mxu0 0
      %2794 = vmatpush1.bf16.xpose.msra.mxu0 %v2777
      %2795 = vmatprep.subr.bf16.mxu0 0
      %2796 = vmatpush2.bf16.xpose.msra.mxu0 0
      %2797 = vmatprep.subr.bf16.mxu0 0
      %2798 = vmatpush2.bf16.xpose.msra.mxu0 0
      %2799 = vmatprep.subr.bf16.mxu0 0
      %2800 = vmatpush2.bf16.xpose.msra.mxu0 0
      %2801 = vmatprep.subr.bf16.mxu0 0
      %2802 = vmatpush2.bf16.xpose.msra.mxu0 0
      %2803 = vmatprep.subr.bf16.mxu0 0
      %2804 = vmatpush2.bf16.xpose.msra.mxu0 0
      %2805 = vmatprep.subr.bf16.mxu0 0
      %2806 = vmatpush2.bf16.xpose.msra.mxu0 0
      %2807 = vmatprep.subr.bf16.mxu0 0
      %2808 = vmatpush2.bf16.xpose.msra.mxu0 0
      %2809 = vmatprep.subr.bf16.mxu0 0
      %2810 = vmatpush2.bf16.xpose.msra.mxu0 0
      %2811 = vmatprep.mubr.bf16.mxu0 0
      %2812 = vmatmul.mubr.bf16.gmra.mxu0 %v2774
      %v2813 = vpop.f32.mrf.mxu0
      %v2814 = vadd.f32 0.0, %v2813
      %v2815 = vpop.f32.mrf.mxu0
      %v2816 = vpop.f32.mrf.mxu0
      %v2817 = vpop.f32.mrf.mxu0
      %2818 = vdwg.mxu0
      %v2819 = vmul.f32 %v2464, 0.17677669
      %v2820 = vmul.f32 %v2514, 0.17677669
      %v2821 = vmul.f32 %v2564, 0.17677669
      %v2822 = vmul.f32 %v2614, 0.17677669
      %v2823 = vmul.f32 %v2664, 0.17677669
      %v2824 = vmul.f32 %v2714, 0.17677669
      %v2825 = vmul.f32 %v2764, 0.17677669
      %v2826 = vmul.f32 %v2814, 0.17677669
      %v2827 = vsel %vm1749, %v2819, -inf
      %2828 = vmax.xlane.f32.xlu0 %v2827
      %v2829 = vpop.xlane.xlu0 %2828
      %v2830 = vsel %vm1749, %v2820, -inf
      %2831 = vmax.xlane.f32.xlu0 %v2830
      %v2832 = vpop.xlane.xlu0 %2831
      %v2833 = vsel %vm1749, %v2821, -inf
      %2834 = vmax.xlane.f32.xlu0 %v2833
      %v2835 = vpop.xlane.xlu0 %2834
      %v2836 = vsel %vm1749, %v2822, -inf
      %2837 = vmax.xlane.f32.xlu0 %v2836
      %v2838 = vpop.xlane.xlu0 %2837
      %v2839 = vsel %vm1749, %v2823, -inf
      %2840 = vmax.xlane.f32.xlu0 %v2839
      %v2841 = vpop.xlane.xlu0 %2840
      %v2842 = vsel %vm1749, %v2824, -inf
      %2843 = vmax.xlane.f32.xlu0 %v2842
      %v2844 = vpop.xlane.xlu0 %2843
      %v2845 = vsel %vm1749, %v2825, -inf
      %2846 = vmax.xlane.f32.xlu0 %v2845
      %v2847 = vpop.xlane.xlu0 %2846
      %v2848 = vsel %vm1749, %v2826, -inf
      %2849 = vmax.xlane.f32.xlu0 %v2848
      %v2850 = vpop.xlane.xlu0 %2849
      %v2851 = vsub.f32 %v2819, %v2829
      %v2852 = vsub.f32 %v2820, %v2832
      %v2853 = vsub.f32 %v2821, %v2835
      %v2854 = vsub.f32 %v2822, %v2838
      %v2855 = vsub.f32 %v2823, %v2841
      %v2856 = vsub.f32 %v2824, %v2844
      %v2857 = vsub.f32 %v2825, %v2847
      %v2858 = vsub.f32 %v2826, %v2850
      %v2859 = vmul.f32 %v2851, 1.442695
      %v2860 = vpow.pop %v2859
      %v2861 = vmul.f32 %v2852, 1.442695
      %v2862 = vpow.pop %v2861
      %v2863 = vmul.f32 %v2853, 1.442695
      %v2864 = vpow.pop %v2863
      %v2865 = vmul.f32 %v2854, 1.442695
      %v2866 = vpow.pop %v2865
      %v2867 = vmul.f32 %v2855, 1.442695
      %v2868 = vpow.pop %v2867
      %v2869 = vmul.f32 %v2856, 1.442695
      %v2870 = vpow.pop %v2869
      %v2871 = vmul.f32 %v2857, 1.442695
      %v2872 = vpow.pop %v2871
      %v2873 = vmul.f32 %v2858, 1.442695
      %v2874 = vpow.pop %v2873
      %v2875 = vsel %vm1749, %v2860, 0.0
      %2876 = vadd.xlane.f32.xlu0 %v2875
      %v2877 = vpop.xlane.xlu0 %2876
      %v2878 = vsel %vm1749, %v2862, 0.0
      %2879 = vadd.xlane.f32.xlu0 %v2878
      %v2880 = vpop.xlane.xlu0 %2879
      %v2881 = vsel %vm1749, %v2864, 0.0
      %2882 = vadd.xlane.f32.xlu0 %v2881
      %v2883 = vpop.xlane.xlu0 %2882
      %v2884 = vsel %vm1749, %v2866, 0.0
      %2885 = vadd.xlane.f32.xlu0 %v2884
      %v2886 = vpop.xlane.xlu0 %2885
      %v2887 = vsel %vm1749, %v2868, 0.0
      %2888 = vadd.xlane.f32.xlu0 %v2887
      %v2889 = vpop.xlane.xlu0 %2888
      %v2890 = vsel %vm1749, %v2870, 0.0
      %2891 = vadd.xlane.f32.xlu0 %v2890
      %v2892 = vpop.xlane.xlu0 %2891
      %v2893 = vsel %vm1749, %v2872, 0.0
      %2894 = vadd.xlane.f32.xlu0 %v2893
      %v2895 = vpop.xlane.xlu0 %2894
      %v2896 = vsel %vm1749, %v2874, 0.0
      %2897 = vadd.xlane.f32.xlu0 %v2896
      %v2898 = vpop.xlane.xlu0 %2897
      %v2899 = vrcp.pop %v2877
      %v2900 = vrcp.pop %v2880
      %v2901 = vrcp.pop %v2883
      %v2902 = vrcp.pop %v2886
      %v2903 = vrcp.pop %v2889
      %v2904 = vrcp.pop %v2892
      %v2905 = vrcp.pop %v2895
      %v2906 = vrcp.pop %v2898
      %v2907 = vmul.f32 %v2860, %v2899
      %v2908 = vmul.f32 %v2862, %v2900
      %v2909 = vmul.f32 %v2864, %v2901
      %v2910 = vmul.f32 %v2866, %v2902
      %v2911 = vmul.f32 %v2868, %v2903
      %v2912 = vmul.f32 %v2870, %v2904
      %v2913 = vmul.f32 %v2872, %v2905
      %v2914 = vmul.f32 %v2874, %v2906
      %v2915 = vpack.c.bf16 %v2907, %v2907
      %v2916 = vpack.c.bf16 %v2908, %v2908
      %v2917 = vpack.c.bf16 %v2909, %v2909
      %v2918 = vpack.c.bf16 %v2910, %v2910
      %v2919 = vpack.c.bf16 %v2911, %v2911
      %v2920 = vpack.c.bf16 %v2912, %v2912
      %v2921 = vpack.c.bf16 %v2913, %v2913
      %v2922 = vpack.c.bf16 %v2914, %v2914
      %2924 = vrot.lane.b32.xlu0 %v2038, 96
      %v2925 = vpop.permute.xlu0 %2924
      %v2927 = vsel %vm2046, %v2915, 0
      %v2930 = vand.u32 %v2925, %v2053
      %2932 = vmatprep.subr.bf16.mxu0 0
      %2933 = vmatpush1.bf16.msra.mxu0 0
      %2934 = vmatprep.subr.bf16.mxu0 0
      %2935 = vmatpush1.bf16.msra.mxu0 0
      %2936 = vmatprep.subr.bf16.mxu0 0
      %2937 = vmatpush1.bf16.msra.mxu0 0
      %2938 = vmatprep.subr.bf16.mxu0 0
      %2939 = vmatpush1.bf16.msra.mxu0 0
      %2940 = vmatprep.subr.bf16.mxu0 0
      %2941 = vmatpush1.bf16.msra.mxu0 0
      %2942 = vmatprep.subr.bf16.mxu0 0
      %2943 = vmatpush1.bf16.msra.mxu0 0
      %2944 = vmatprep.subr.bf16.mxu0 0
      %2945 = vmatpush1.bf16.msra.mxu0 0
      %2946 = vmatprep.subr.bf16.mxu0 0
      %2947 = vmatpush1.bf16.msra.mxu0 %v2930
      %2948 = vmatprep.subr.bf16.mxu0 0
      %2949 = vmatpush2.bf16.msra.mxu0 0
      %2950 = vmatprep.subr.bf16.mxu0 0
      %2951 = vmatpush2.bf16.msra.mxu0 0
      %2952 = vmatprep.subr.bf16.mxu0 0
      %2953 = vmatpush2.bf16.msra.mxu0 0
      %2954 = vmatprep.subr.bf16.mxu0 0
      %2955 = vmatpush2.bf16.msra.mxu0 0
      %2956 = vmatprep.subr.bf16.mxu0 0
      %2957 = vmatpush2.bf16.msra.mxu0 0
      %2958 = vmatprep.subr.bf16.mxu0 0
      %2959 = vmatpush2.bf16.msra.mxu0 0
      %2960 = vmatprep.subr.bf16.mxu0 0
      %2961 = vmatpush2.bf16.msra.mxu0 0
      %2962 = vmatprep.subr.bf16.mxu0 0
      %2963 = vmatpush2.bf16.msra.mxu0 0
      %2964 = vmatprep.mubr.bf16.mxu0 0
      %2965 = vmatmul.mubr.bf16.gmra.mxu0 %v2927
      %v2966 = vpop.f32.mrf.mxu0
      %v2967 = vadd.f32 0.0, %v2966
      %v2968 = vpop.f32.mrf.mxu0
      %v2969 = vpop.f32.mrf.mxu0
      %v2970 = vpop.f32.mrf.mxu0
      %2971 = vdwg.mxu0
      %2973 = vrot.lane.b32.xlu0 %v2039, 96
      %v2974 = vpop.permute.xlu0 %2973
      %v2976 = vsel %vm2046, %v2916, 0
      %v2979 = vand.u32 %v2974, %v2053
      %2981 = vmatprep.subr.bf16.mxu0 0
      %2982 = vmatpush1.bf16.msra.mxu0 0
      %2983 = vmatprep.subr.bf16.mxu0 0
      %2984 = vmatpush1.bf16.msra.mxu0 0
      %2985 = vmatprep.subr.bf16.mxu0 0
      %2986 = vmatpush1.bf16.msra.mxu0 0
      %2987 = vmatprep.subr.bf16.mxu0 0
      %2988 = vmatpush1.bf16.msra.mxu0 0
      %2989 = vmatprep.subr.bf16.mxu0 0
      %2990 = vmatpush1.bf16.msra.mxu0 0
      %2991 = vmatprep.subr.bf16.mxu0 0
      %2992 = vmatpush1.bf16.msra.mxu0 0
      %2993 = vmatprep.subr.bf16.mxu0 0
      %2994 = vmatpush1.bf16.msra.mxu0 0
      %2995 = vmatprep.subr.bf16.mxu0 0
      %2996 = vmatpush1.bf16.msra.mxu0 %v2979
      %2997 = vmatprep.subr.bf16.mxu0 0
      %2998 = vmatpush2.bf16.msra.mxu0 0
      %2999 = vmatprep.subr.bf16.mxu0 0
      %3000 = vmatpush2.bf16.msra.mxu0 0
      %3001 = vmatprep.subr.bf16.mxu0 0
      %3002 = vmatpush2.bf16.msra.mxu0 0
      %3003 = vmatprep.subr.bf16.mxu0 0
      %3004 = vmatpush2.bf16.msra.mxu0 0
      %3005 = vmatprep.subr.bf16.mxu0 0
      %3006 = vmatpush2.bf16.msra.mxu0 0
      %3007 = vmatprep.subr.bf16.mxu0 0
      %3008 = vmatpush2.bf16.msra.mxu0 0
      %3009 = vmatprep.subr.bf16.mxu0 0
      %3010 = vmatpush2.bf16.msra.mxu0 0
      %3011 = vmatprep.subr.bf16.mxu0 0
      %3012 = vmatpush2.bf16.msra.mxu0 0
      %3013 = vmatprep.mubr.bf16.mxu0 0
      %3014 = vmatmul.mubr.bf16.gmra.mxu0 %v2976
      %v3015 = vpop.f32.mrf.mxu0
      %v3016 = vadd.f32 0.0, %v3015
      %v3017 = vpop.f32.mrf.mxu0
      %v3018 = vpop.f32.mrf.mxu0
      %v3019 = vpop.f32.mrf.mxu0
      %3020 = vdwg.mxu0
      %3022 = vrot.lane.b32.xlu0 %v2040, 96
      %v3023 = vpop.permute.xlu0 %3022
      %v3025 = vsel %vm2046, %v2917, 0
      %v3028 = vand.u32 %v3023, %v2053
      %3030 = vmatprep.subr.bf16.mxu0 0
      %3031 = vmatpush1.bf16.msra.mxu0 0
      %3032 = vmatprep.subr.bf16.mxu0 0
      %3033 = vmatpush1.bf16.msra.mxu0 0
      %3034 = vmatprep.subr.bf16.mxu0 0
      %3035 = vmatpush1.bf16.msra.mxu0 0
      %3036 = vmatprep.subr.bf16.mxu0 0
      %3037 = vmatpush1.bf16.msra.mxu0 0
      %3038 = vmatprep.subr.bf16.mxu0 0
      %3039 = vmatpush1.bf16.msra.mxu0 0
      %3040 = vmatprep.subr.bf16.mxu0 0
      %3041 = vmatpush1.bf16.msra.mxu0 0
      %3042 = vmatprep.subr.bf16.mxu0 0
      %3043 = vmatpush1.bf16.msra.mxu0 0
      %3044 = vmatprep.subr.bf16.mxu0 0
      %3045 = vmatpush1.bf16.msra.mxu0 %v3028
      %3046 = vmatprep.subr.bf16.mxu0 0
      %3047 = vmatpush2.bf16.msra.mxu0 0
      %3048 = vmatprep.subr.bf16.mxu0 0
      %3049 = vmatpush2.bf16.msra.mxu0 0
      %3050 = vmatprep.subr.bf16.mxu0 0
      %3051 = vmatpush2.bf16.msra.mxu0 0
      %3052 = vmatprep.subr.bf16.mxu0 0
      %3053 = vmatpush2.bf16.msra.mxu0 0
      %3054 = vmatprep.subr.bf16.mxu0 0
      %3055 = vmatpush2.bf16.msra.mxu0 0
      %3056 = vmatprep.subr.bf16.mxu0 0
      %3057 = vmatpush2.bf16.msra.mxu0 0
      %3058 = vmatprep.subr.bf16.mxu0 0
      %3059 = vmatpush2.bf16.msra.mxu0 0
      %3060 = vmatprep.subr.bf16.mxu0 0
      %3061 = vmatpush2.bf16.msra.mxu0 0
      %3062 = vmatprep.mubr.bf16.mxu0 0
      %3063 = vmatmul.mubr.bf16.gmra.mxu0 %v3025
      %v3064 = vpop.f32.mrf.mxu0
      %v3065 = vadd.f32 0.0, %v3064
      %v3066 = vpop.f32.mrf.mxu0
      %v3067 = vpop.f32.mrf.mxu0
      %v3068 = vpop.f32.mrf.mxu0
      %3069 = vdwg.mxu0
      %3071 = vrot.lane.b32.xlu0 %v2041, 96
      %v3072 = vpop.permute.xlu0 %3071
      %v3074 = vsel %vm2046, %v2918, 0
      %v3077 = vand.u32 %v3072, %v2053
      %3079 = vmatprep.subr.bf16.mxu0 0
      %3080 = vmatpush1.bf16.msra.mxu0 0
      %3081 = vmatprep.subr.bf16.mxu0 0
      %3082 = vmatpush1.bf16.msra.mxu0 0
      %3083 = vmatprep.subr.bf16.mxu0 0
      %3084 = vmatpush1.bf16.msra.mxu0 0
      %3085 = vmatprep.subr.bf16.mxu0 0
      %3086 = vmatpush1.bf16.msra.mxu0 0
      %3087 = vmatprep.subr.bf16.mxu0 0
      %3088 = vmatpush1.bf16.msra.mxu0 0
      %3089 = vmatprep.subr.bf16.mxu0 0
      %3090 = vmatpush1.bf16.msra.mxu0 0
      %3091 = vmatprep.subr.bf16.mxu0 0
      %3092 = vmatpush1.bf16.msra.mxu0 0
      %3093 = vmatprep.subr.bf16.mxu0 0
      %3094 = vmatpush1.bf16.msra.mxu0 %v3077
      %3095 = vmatprep.subr.bf16.mxu0 0
      %3096 = vmatpush2.bf16.msra.mxu0 0
      %3097 = vmatprep.subr.bf16.mxu0 0
      %3098 = vmatpush2.bf16.msra.mxu0 0
      %3099 = vmatprep.subr.bf16.mxu0 0
      %3100 = vmatpush2.bf16.msra.mxu0 0
      %3101 = vmatprep.subr.bf16.mxu0 0
      %3102 = vmatpush2.bf16.msra.mxu0 0
      %3103 = vmatprep.subr.bf16.mxu0 0
      %3104 = vmatpush2.bf16.msra.mxu0 0
      %3105 = vmatprep.subr.bf16.mxu0 0
      %3106 = vmatpush2.bf16.msra.mxu0 0
      %3107 = vmatprep.subr.bf16.mxu0 0
      %3108 = vmatpush2.bf16.msra.mxu0 0
      %3109 = vmatprep.subr.bf16.mxu0 0
      %3110 = vmatpush2.bf16.msra.mxu0 0
      %3111 = vmatprep.mubr.bf16.mxu0 0
      %3112 = vmatmul.mubr.bf16.gmra.mxu0 %v3074
      %v3113 = vpop.f32.mrf.mxu0
      %v3114 = vadd.f32 0.0, %v3113
      %v3115 = vpop.f32.mrf.mxu0
      %v3116 = vpop.f32.mrf.mxu0
      %v3117 = vpop.f32.mrf.mxu0
      %3118 = vdwg.mxu0
      %3120 = vrot.lane.b32.xlu0 %v2042, 96
      %v3121 = vpop.permute.xlu0 %3120
      %v3123 = vsel %vm2046, %v2919, 0
      %v3126 = vand.u32 %v3121, %v2053
      %3128 = vmatprep.subr.bf16.mxu0 0
      %3129 = vmatpush1.bf16.msra.mxu0 0
      %3130 = vmatprep.subr.bf16.mxu0 0
      %3131 = vmatpush1.bf16.msra.mxu0 0
      %3132 = vmatprep.subr.bf16.mxu0 0
      %3133 = vmatpush1.bf16.msra.mxu0 0
      %3134 = vmatprep.subr.bf16.mxu0 0
      %3135 = vmatpush1.bf16.msra.mxu0 0
      %3136 = vmatprep.subr.bf16.mxu0 0
      %3137 = vmatpush1.bf16.msra.mxu0 0
      %3138 = vmatprep.subr.bf16.mxu0 0
      %3139 = vmatpush1.bf16.msra.mxu0 0
      %3140 = vmatprep.subr.bf16.mxu0 0
      %3141 = vmatpush1.bf16.msra.mxu0 0
      %3142 = vmatprep.subr.bf16.mxu0 0
      %3143 = vmatpush1.bf16.msra.mxu0 %v3126
      %3144 = vmatprep.subr.bf16.mxu0 0
      %3145 = vmatpush2.bf16.msra.mxu0 0
      %3146 = vmatprep.subr.bf16.mxu0 0
      %3147 = vmatpush2.bf16.msra.mxu0 0
      %3148 = vmatprep.subr.bf16.mxu0 0
      %3149 = vmatpush2.bf16.msra.mxu0 0
      %3150 = vmatprep.subr.bf16.mxu0 0
      %3151 = vmatpush2.bf16.msra.mxu0 0
      %3152 = vmatprep.subr.bf16.mxu0 0
      %3153 = vmatpush2.bf16.msra.mxu0 0
      %3154 = vmatprep.subr.bf16.mxu0 0
      %3155 = vmatpush2.bf16.msra.mxu0 0
      %3156 = vmatprep.subr.bf16.mxu0 0
      %3157 = vmatpush2.bf16.msra.mxu0 0
      %3158 = vmatprep.subr.bf16.mxu0 0
      %3159 = vmatpush2.bf16.msra.mxu0 0
      %3160 = vmatprep.mubr.bf16.mxu0 0
      %3161 = vmatmul.mubr.bf16.gmra.mxu0 %v3123
      %v3162 = vpop.f32.mrf.mxu0
      %v3163 = vadd.f32 0.0, %v3162
      %v3164 = vpop.f32.mrf.mxu0
      %v3165 = vpop.f32.mrf.mxu0
      %v3166 = vpop.f32.mrf.mxu0
      %3167 = vdwg.mxu0
      %3169 = vrot.lane.b32.xlu0 %v2043, 96
      %v3170 = vpop.permute.xlu0 %3169
      %v3172 = vsel %vm2046, %v2920, 0
      %v3175 = vand.u32 %v3170, %v2053
      %3177 = vmatprep.subr.bf16.mxu0 0
      %3178 = vmatpush1.bf16.msra.mxu0 0
      %3179 = vmatprep.subr.bf16.mxu0 0
      %3180 = vmatpush1.bf16.msra.mxu0 0
      %3181 = vmatprep.subr.bf16.mxu0 0
      %3182 = vmatpush1.bf16.msra.mxu0 0
      %3183 = vmatprep.subr.bf16.mxu0 0
      %3184 = vmatpush1.bf16.msra.mxu0 0
      %3185 = vmatprep.subr.bf16.mxu0 0
      %3186 = vmatpush1.bf16.msra.mxu0 0
      %3187 = vmatprep.subr.bf16.mxu0 0
      %3188 = vmatpush1.bf16.msra.mxu0 0
      %3189 = vmatprep.subr.bf16.mxu0 0
      %3190 = vmatpush1.bf16.msra.mxu0 0
      %3191 = vmatprep.subr.bf16.mxu0 0
      %3192 = vmatpush1.bf16.msra.mxu0 %v3175
      %3193 = vmatprep.subr.bf16.mxu0 0
      %3194 = vmatpush2.bf16.msra.mxu0 0
      %3195 = vmatprep.subr.bf16.mxu0 0
      %3196 = vmatpush2.bf16.msra.mxu0 0
      %3197 = vmatprep.subr.bf16.mxu0 0
      %3198 = vmatpush2.bf16.msra.mxu0 0
      %3199 = vmatprep.subr.bf16.mxu0 0
      %3200 = vmatpush2.bf16.msra.mxu0 0
      %3201 = vmatprep.subr.bf16.mxu0 0
      %3202 = vmatpush2.bf16.msra.mxu0 0
      %3203 = vmatprep.subr.bf16.mxu0 0
      %3204 = vmatpush2.bf16.msra.mxu0 0
      %3205 = vmatprep.subr.bf16.mxu0 0
      %3206 = vmatpush2.bf16.msra.mxu0 0
      %3207 = vmatprep.subr.bf16.mxu0 0
      %3208 = vmatpush2.bf16.msra.mxu0 0
      %3209 = vmatprep.mubr.bf16.mxu0 0
      %3210 = vmatmul.mubr.bf16.gmra.mxu0 %v3172
      %v3211 = vpop.f32.mrf.mxu0
      %v3212 = vadd.f32 0.0, %v3211
      %v3213 = vpop.f32.mrf.mxu0
      %v3214 = vpop.f32.mrf.mxu0
      %v3215 = vpop.f32.mrf.mxu0
      %3216 = vdwg.mxu0
      %3218 = vrot.lane.b32.xlu0 %v2044, 96
      %v3219 = vpop.permute.xlu0 %3218
      %v3221 = vsel %vm2046, %v2921, 0
      %v3224 = vand.u32 %v3219, %v2053
      %3226 = vmatprep.subr.bf16.mxu0 0
      %3227 = vmatpush1.bf16.msra.mxu0 0
      %3228 = vmatprep.subr.bf16.mxu0 0
      %3229 = vmatpush1.bf16.msra.mxu0 0
      %3230 = vmatprep.subr.bf16.mxu0 0
      %3231 = vmatpush1.bf16.msra.mxu0 0
      %3232 = vmatprep.subr.bf16.mxu0 0
      %3233 = vmatpush1.bf16.msra.mxu0 0
      %3234 = vmatprep.subr.bf16.mxu0 0
      %3235 = vmatpush1.bf16.msra.mxu0 0
      %3236 = vmatprep.subr.bf16.mxu0 0
      %3237 = vmatpush1.bf16.msra.mxu0 0
      %3238 = vmatprep.subr.bf16.mxu0 0
      %3239 = vmatpush1.bf16.msra.mxu0 0
      %3240 = vmatprep.subr.bf16.mxu0 0
      %3241 = vmatpush1.bf16.msra.mxu0 %v3224
      %3242 = vmatprep.subr.bf16.mxu0 0
      %3243 = vmatpush2.bf16.msra.mxu0 0
      %3244 = vmatprep.subr.bf16.mxu0 0
      %3245 = vmatpush2.bf16.msra.mxu0 0
      %3246 = vmatprep.subr.bf16.mxu0 0
      %3247 = vmatpush2.bf16.msra.mxu0 0
      %3248 = vmatprep.subr.bf16.mxu0 0
      %3249 = vmatpush2.bf16.msra.mxu0 0
      %3250 = vmatprep.subr.bf16.mxu0 0
      %3251 = vmatpush2.bf16.msra.mxu0 0
      %3252 = vmatprep.subr.bf16.mxu0 0
      %3253 = vmatpush2.bf16.msra.mxu0 0
      %3254 = vmatprep.subr.bf16.mxu0 0
      %3255 = vmatpush2.bf16.msra.mxu0 0
      %3256 = vmatprep.subr.bf16.mxu0 0
      %3257 = vmatpush2.bf16.msra.mxu0 0
      %3258 = vmatprep.mubr.bf16.mxu0 0
      %3259 = vmatmul.mubr.bf16.gmra.mxu0 %v3221
      %v3260 = vpop.f32.mrf.mxu0
      %v3261 = vadd.f32 0.0, %v3260
      %v3262 = vpop.f32.mrf.mxu0
      %v3263 = vpop.f32.mrf.mxu0
      %v3264 = vpop.f32.mrf.mxu0
      %3265 = vdwg.mxu0
      %3267 = vrot.lane.b32.xlu0 %v2045, 96
      %v3268 = vpop.permute.xlu0 %3267
      %v3270 = vsel %vm2046, %v2922, 0
      %v3273 = vand.u32 %v3268, %v2053
      %3275 = vmatprep.subr.bf16.mxu0 0
      %3276 = vmatpush1.bf16.msra.mxu0 0
      %3277 = vmatprep.subr.bf16.mxu0 0
      %3278 = vmatpush1.bf16.msra.mxu0 0
      %3279 = vmatprep.subr.bf16.mxu0 0
      %3280 = vmatpush1.bf16.msra.mxu0 0
      %3281 = vmatprep.subr.bf16.mxu0 0
      %3282 = vmatpush1.bf16.msra.mxu0 0
      %3283 = vmatprep.subr.bf16.mxu0 0
      %3284 = vmatpush1.bf16.msra.mxu0 0
      %3285 = vmatprep.subr.bf16.mxu0 0
      %3286 = vmatpush1.bf16.msra.mxu0 0
      %3287 = vmatprep.subr.bf16.mxu0 0
      %3288 = vmatpush1.bf16.msra.mxu0 0
      %3289 = vmatprep.subr.bf16.mxu0 0
      %3290 = vmatpush1.bf16.msra.mxu0 %v3273
      %3291 = vmatprep.subr.bf16.mxu0 0
      %3292 = vmatpush2.bf16.msra.mxu0 0
      %3293 = vmatprep.subr.bf16.mxu0 0
      %3294 = vmatpush2.bf16.msra.mxu0 0
      %3295 = vmatprep.subr.bf16.mxu0 0
      %3296 = vmatpush2.bf16.msra.mxu0 0
      %3297 = vmatprep.subr.bf16.mxu0 0
      %3298 = vmatpush2.bf16.msra.mxu0 0
      %3299 = vmatprep.subr.bf16.mxu0 0
      %3300 = vmatpush2.bf16.msra.mxu0 0
      %3301 = vmatprep.subr.bf16.mxu0 0
      %3302 = vmatpush2.bf16.msra.mxu0 0
      %3303 = vmatprep.subr.bf16.mxu0 0
      %3304 = vmatpush2.bf16.msra.mxu0 0
      %3305 = vmatprep.subr.bf16.mxu0 0
      %3306 = vmatpush2.bf16.msra.mxu0 0
      %3307 = vmatprep.mubr.bf16.mxu0 0
      %3308 = vmatmul.mubr.bf16.gmra.mxu0 %v3270
      %v3309 = vpop.f32.mrf.mxu0
      %v3310 = vadd.f32 0.0, %v3309
      %v3311 = vpop.f32.mrf.mxu0
      %v3312 = vpop.f32.mrf.mxu0
      %v3313 = vpop.f32.mrf.mxu0
      %3314 = vdwg.mxu0
      %3323 = vrot.lane.b32.xlu0 %v2967, 32
      %v3324 = vpop.permute.xlu0 %3323
      %3325 = vrot.lane.b32.xlu0 %v3016, 32
      %v3326 = vpop.permute.xlu0 %3325
      %3327 = vrot.lane.b32.xlu0 %v3065, 32
      %v3328 = vpop.permute.xlu0 %3327
      %3329 = vrot.lane.b32.xlu0 %v3114, 32
      %v3330 = vpop.permute.xlu0 %3329
      %3331 = vrot.lane.b32.xlu0 %v3163, 32
      %v3332 = vpop.permute.xlu0 %3331
      %3333 = vrot.lane.b32.xlu0 %v3212, 32
      %v3334 = vpop.permute.xlu0 %3333
      %3335 = vrot.lane.b32.xlu0 %v3261, 32
      %v3336 = vpop.permute.xlu0 %3335
      %3337 = vrot.lane.b32.xlu0 %v3310, 32
      %v3338 = vpop.permute.xlu0 %3337
      %v3347 = vsel %vm791, %v2092, %v3324
      %v3348 = vsel %vm791, %v2138, %v3326
      %v3349 = vsel %vm791, %v2184, %v3328
      %v3350 = vsel %vm791, %v2230, %v3330
      %v3351 = vsel %vm791, %v2276, %v3332
      %v3352 = vsel %vm791, %v2322, %v3334
      %v3353 = vsel %vm791, %v2368, %v3336
      %v3354 = vsel %vm791, %v2414, %v3338
      %v3364 = vunpack.c.l.s4 1966171168
      %v3365 = vunpack.c.0.s8 %v3364
      %v3366 = vlaneseq
      %v3367 = vshrl.u32 %v3366, 7
      %v3368 = vsub.s32 %v3365, %v3367
      %v3369 = vrot.slane %v3347, %v3368
      %v3370 = vcombine.high %v3369, %v3369
      %v3372 = vunpack.c.l.s4 1966171168
      %v3373 = vunpack.c.0.s8 %v3372
      %v3374 = vlaneseq
      %v3375 = vshrl.u32 %v3374, 7
      %v3376 = vsub.s32 %v3373, %v3375
      %v3377 = vrot.slane %v3369, %v3376
      %v3379 = vunpack.c.l.s4 1966171168
      %v3380 = vunpack.c.0.s8 %v3379
      %v3381 = vlaneseq
      %v3382 = vshrl.u32 %v3381, 7
      %v3383 = vsub.s32 %v3380, %v3382
      %v3384 = vrot.slane %v3370, %v3383
      %v3385 = vcombine.high %v3377, %v3377
      %v3387 = vunpack.c.l.s4 1966171168
      %v3388 = vunpack.c.0.s8 %v3387
      %v3389 = vlaneseq
      %v3390 = vshrl.u32 %v3389, 7
      %v3391 = vsub.s32 %v3388, %v3390
      %v3392 = vrot.slane %v3348, %v3391
      %v3393 = vcombine.high %v3392, %v3392
      %v3395 = vunpack.c.l.s4 1966171168
      %v3396 = vunpack.c.0.s8 %v3395
      %v3397 = vlaneseq
      %v3398 = vshrl.u32 %v3397, 7
      %v3399 = vsub.s32 %v3396, %v3398
      %v3400 = vrot.slane %v3392, %v3399
      %v3402 = vunpack.c.l.s4 1966171168
      %v3403 = vunpack.c.0.s8 %v3402
      %v3404 = vlaneseq
      %v3405 = vshrl.u32 %v3404, 7
      %v3406 = vsub.s32 %v3403, %v3405
      %v3407 = vrot.slane %v3393, %v3406
      %v3408 = vcombine.high %v3400, %v3400
      %v3410 = vunpack.c.l.s4 1966171168
      %v3411 = vunpack.c.0.s8 %v3410
      %v3412 = vlaneseq
      %v3413 = vshrl.u32 %v3412, 7
      %v3414 = vsub.s32 %v3411, %v3413
      %v3415 = vrot.slane %v3349, %v3414
      %v3416 = vcombine.high %v3415, %v3415
      %v3418 = vunpack.c.l.s4 1966171168
      %v3419 = vunpack.c.0.s8 %v3418
      %v3420 = vlaneseq
      %v3421 = vshrl.u32 %v3420, 7
      %v3422 = vsub.s32 %v3419, %v3421
      %v3423 = vrot.slane %v3415, %v3422
      %v3425 = vunpack.c.l.s4 1966171168
      %v3426 = vunpack.c.0.s8 %v3425
      %v3427 = vlaneseq
      %v3428 = vshrl.u32 %v3427, 7
      %v3429 = vsub.s32 %v3426, %v3428
      %v3430 = vrot.slane %v3416, %v3429
      %v3431 = vcombine.high %v3423, %v3423
      %v3433 = vunpack.c.l.s4 1966171168
      %v3434 = vunpack.c.0.s8 %v3433
      %v3435 = vlaneseq
      %v3436 = vshrl.u32 %v3435, 7
      %v3437 = vsub.s32 %v3434, %v3436
      %v3438 = vrot.slane %v3350, %v3437
      %v3439 = vcombine.high %v3438, %v3438
      %v3441 = vunpack.c.l.s4 1966171168
      %v3442 = vunpack.c.0.s8 %v3441
      %v3443 = vlaneseq
      %v3444 = vshrl.u32 %v3443, 7
      %v3445 = vsub.s32 %v3442, %v3444
      %v3446 = vrot.slane %v3438, %v3445
      %v3448 = vunpack.c.l.s4 1966171168
      %v3449 = vunpack.c.0.s8 %v3448
      %v3450 = vlaneseq
      %v3451 = vshrl.u32 %v3450, 7
      %v3452 = vsub.s32 %v3449, %v3451
      %v3453 = vrot.slane %v3439, %v3452
      %v3454 = vcombine.high %v3446, %v3446
      %v3456 = vunpack.c.l.s4 1966171168
      %v3457 = vunpack.c.0.s8 %v3456
      %v3458 = vlaneseq
      %v3459 = vshrl.u32 %v3458, 7
      %v3460 = vsub.s32 %v3457, %v3459
      %v3461 = vrot.slane %v3351, %v3460
      %v3462 = vcombine.high %v3461, %v3461
      %v3464 = vunpack.c.l.s4 1966171168
      %v3465 = vunpack.c.0.s8 %v3464
      %v3466 = vlaneseq
      %v3467 = vshrl.u32 %v3466, 7
      %v3468 = vsub.s32 %v3465, %v3467
      %v3469 = vrot.slane %v3461, %v3468
      %v3471 = vunpack.c.l.s4 1966171168
      %v3472 = vunpack.c.0.s8 %v3471
      %v3473 = vlaneseq
      %v3474 = vshrl.u32 %v3473, 7
      %v3475 = vsub.s32 %v3472, %v3474
      %v3476 = vrot.slane %v3462, %v3475
      %v3477 = vcombine.high %v3469, %v3469
      %v3479 = vunpack.c.l.s4 1966171168
      %v3480 = vunpack.c.0.s8 %v3479
      %v3481 = vlaneseq
      %v3482 = vshrl.u32 %v3481, 7
      %v3483 = vsub.s32 %v3480, %v3482
      %v3484 = vrot.slane %v3352, %v3483
      %v3485 = vcombine.high %v3484, %v3484
      %v3487 = vunpack.c.l.s4 1966171168
      %v3488 = vunpack.c.0.s8 %v3487
      %v3489 = vlaneseq
      %v3490 = vshrl.u32 %v3489, 7
      %v3491 = vsub.s32 %v3488, %v3490
      %v3492 = vrot.slane %v3484, %v3491
      %v3494 = vunpack.c.l.s4 1966171168
      %v3495 = vunpack.c.0.s8 %v3494
      %v3496 = vlaneseq
      %v3497 = vshrl.u32 %v3496, 7
      %v3498 = vsub.s32 %v3495, %v3497
      %v3499 = vrot.slane %v3485, %v3498
      %v3500 = vcombine.high %v3492, %v3492
      %v3502 = vunpack.c.l.s4 1966171168
      %v3503 = vunpack.c.0.s8 %v3502
      %v3504 = vlaneseq
      %v3505 = vshrl.u32 %v3504, 7
      %v3506 = vsub.s32 %v3503, %v3505
      %v3507 = vrot.slane %v3353, %v3506
      %v3508 = vcombine.high %v3507, %v3507
      %v3510 = vunpack.c.l.s4 1966171168
      %v3511 = vunpack.c.0.s8 %v3510
      %v3512 = vlaneseq
      %v3513 = vshrl.u32 %v3512, 7
      %v3514 = vsub.s32 %v3511, %v3513
      %v3515 = vrot.slane %v3507, %v3514
      %v3517 = vunpack.c.l.s4 1966171168
      %v3518 = vunpack.c.0.s8 %v3517
      %v3519 = vlaneseq
      %v3520 = vshrl.u32 %v3519, 7
      %v3521 = vsub.s32 %v3518, %v3520
      %v3522 = vrot.slane %v3508, %v3521
      %v3523 = vcombine.high %v3515, %v3515
      %v3525 = vunpack.c.l.s4 1966171168
      %v3526 = vunpack.c.0.s8 %v3525
      %v3527 = vlaneseq
      %v3528 = vshrl.u32 %v3527, 7
      %v3529 = vsub.s32 %v3526, %v3528
      %v3530 = vrot.slane %v3354, %v3529
      %v3531 = vcombine.high %v3530, %v3530
      %v3533 = vunpack.c.l.s4 1966171168
      %v3534 = vunpack.c.0.s8 %v3533
      %v3535 = vlaneseq
      %v3536 = vshrl.u32 %v3535, 7
      %v3537 = vsub.s32 %v3534, %v3536
      %v3538 = vrot.slane %v3530, %v3537
      %v3540 = vunpack.c.l.s4 1966171168
      %v3541 = vunpack.c.0.s8 %v3540
      %v3542 = vlaneseq
      %v3543 = vshrl.u32 %v3542, 7
      %v3544 = vsub.s32 %v3541, %v3543
      %v3545 = vrot.slane %v3531, %v3544
      %v3546 = vcombine.high %v3538, %v3538
      %v3547 = vcombine.low %v3377, %v3384
      %v3548 = vcombine.low %v3385, %v3400
      %v3549 = vcombine.low %v3407, %v3408
      %v3550 = vcombine.low %v3423, %v3430
      %v3552 = vunpack.c.l.s4 1966171168
      %v3553 = vunpack.c.0.s8 %v3552
      %v3554 = vlaneseq
      %v3555 = vshrl.u32 %v3554, 7
      %v3556 = vsub.s32 %v3553, %v3555
      %v3557 = vrot.slane %v3547, %v3556
      %v3559 = vunpack.c.l.s4 1966171168
      %v3560 = vunpack.c.0.s8 %v3559
      %v3561 = vlaneseq
      %v3562 = vshrl.u32 %v3561, 7
      %v3563 = vsub.s32 %v3560, %v3562
      %v3564 = vrot.slane %v3548, %v3563
      %v3566 = vunpack.c.l.s4 1966171168
      %v3567 = vunpack.c.0.s8 %v3566
      %v3568 = vlaneseq
      %v3569 = vshrl.u32 %v3568, 7
      %v3570 = vsub.s32 %v3567, %v3569
      %v3571 = vrot.slane %v3549, %v3570
      %v3573 = vunpack.c.l.s4 1966171168
      %v3574 = vunpack.c.0.s8 %v3573
      %v3575 = vlaneseq
      %v3576 = vshrl.u32 %v3575, 7
      %v3577 = vsub.s32 %v3574, %v3576
      %v3578 = vrot.slane %v3550, %v3577
      %v3579 = vcombine.low %v3557, %v3564
      %v3580 = vcombine.low %v3571, %v3578
      %v3582 = vunpack.c.l.s4 1966171168
      %v3583 = vunpack.c.0.s8 %v3582
      %v3584 = vlaneseq
      %v3585 = vshrl.u32 %v3584, 7
      %v3586 = vsub.s32 %v3583, %v3585
      %v3587 = vrot.slane %v3579, %v3586
      %v3589 = vunpack.c.l.s4 1966171168
      %v3590 = vunpack.c.0.s8 %v3589
      %v3591 = vlaneseq
      %v3592 = vshrl.u32 %v3591, 7
      %v3593 = vsub.s32 %v3590, %v3592
      %v3594 = vrot.slane %v3580, %v3593
      %v3595 = vcombine.low %v3587, %v3594
      %v3596 = vcombine.low %v3431, %v3446
      %v3597 = vcombine.low %v3453, %v3454
      %v3598 = vcombine.low %v3469, %v3476
      %v3599 = vcombine.low %v3477, %v3492
      %v3601 = vunpack.c.l.s4 1966171168
      %v3602 = vunpack.c.0.s8 %v3601
      %v3603 = vlaneseq
      %v3604 = vshrl.u32 %v3603, 7
      %v3605 = vsub.s32 %v3602, %v3604
      %v3606 = vrot.slane %v3596, %v3605
      %v3608 = vunpack.c.l.s4 1966171168
      %v3609 = vunpack.c.0.s8 %v3608
      %v3610 = vlaneseq
      %v3611 = vshrl.u32 %v3610, 7
      %v3612 = vsub.s32 %v3609, %v3611
      %v3613 = vrot.slane %v3597, %v3612
      %v3615 = vunpack.c.l.s4 1966171168
      %v3616 = vunpack.c.0.s8 %v3615
      %v3617 = vlaneseq
      %v3618 = vshrl.u32 %v3617, 7
      %v3619 = vsub.s32 %v3616, %v3618
      %v3620 = vrot.slane %v3598, %v3619
      %v3622 = vunpack.c.l.s4 1966171168
      %v3623 = vunpack.c.0.s8 %v3622
      %v3624 = vlaneseq
      %v3625 = vshrl.u32 %v3624, 7
      %v3626 = vsub.s32 %v3623, %v3625
      %v3627 = vrot.slane %v3599, %v3626
      %v3628 = vcombine.low %v3606, %v3613
      %v3629 = vcombine.low %v3620, %v3627
      %v3631 = vunpack.c.l.s4 1966171168
      %v3632 = vunpack.c.0.s8 %v3631
      %v3633 = vlaneseq
      %v3634 = vshrl.u32 %v3633, 7
      %v3635 = vsub.s32 %v3632, %v3634
      %v3636 = vrot.slane %v3628, %v3635
      %v3638 = vunpack.c.l.s4 1966171168
      %v3639 = vunpack.c.0.s8 %v3638
      %v3640 = vlaneseq
      %v3641 = vshrl.u32 %v3640, 7
      %v3642 = vsub.s32 %v3639, %v3641
      %v3643 = vrot.slane %v3629, %v3642
      %v3644 = vcombine.low %v3636, %v3643
      %v3645 = vcombine.low %v3499, %v3500
      %v3646 = vcombine.low %v3515, %v3522
      %v3647 = vcombine.low %v3523, %v3538
      %v3648 = vcombine.low %v3545, %v3546
      %v3650 = vunpack.c.l.s4 1966171168
      %v3651 = vunpack.c.0.s8 %v3650
      %v3652 = vlaneseq
      %v3653 = vshrl.u32 %v3652, 7
      %v3654 = vsub.s32 %v3651, %v3653
      %v3655 = vrot.slane %v3645, %v3654
      %v3657 = vunpack.c.l.s4 1966171168
      %v3658 = vunpack.c.0.s8 %v3657
      %v3659 = vlaneseq
      %v3660 = vshrl.u32 %v3659, 7
      %v3661 = vsub.s32 %v3658, %v3660
      %v3662 = vrot.slane %v3646, %v3661
      %v3664 = vunpack.c.l.s4 1966171168
      %v3665 = vunpack.c.0.s8 %v3664
      %v3666 = vlaneseq
      %v3667 = vshrl.u32 %v3666, 7
      %v3668 = vsub.s32 %v3665, %v3667
      %v3669 = vrot.slane %v3647, %v3668
      %v3671 = vunpack.c.l.s4 1966171168
      %v3672 = vunpack.c.0.s8 %v3671
      %v3673 = vlaneseq
      %v3674 = vshrl.u32 %v3673, 7
      %v3675 = vsub.s32 %v3672, %v3674
      %v3676 = vrot.slane %v3648, %v3675
      %v3677 = vcombine.low %v3655, %v3662
      %v3678 = vcombine.low %v3669, %v3676
      %v3680 = vunpack.c.l.s4 1966171168
      %v3681 = vunpack.c.0.s8 %v3680
      %v3682 = vlaneseq
      %v3683 = vshrl.u32 %v3682, 7
      %v3684 = vsub.s32 %v3681, %v3683
      %v3685 = vrot.slane %v3677, %v3684
      %v3687 = vunpack.c.l.s4 1966171168
      %v3688 = vunpack.c.0.s8 %v3687
      %v3689 = vlaneseq
      %v3690 = vshrl.u32 %v3689, 7
      %v3691 = vsub.s32 %v3688, %v3690
      %v3692 = vrot.slane %v3678, %v3691
      %v3693 = vcombine.low %v3685, %v3692
      %v3697 = vpack.c.bf16 %v3644, %v3595
      %v3698 = vpack.c.bf16 %v3693, %v3693
      %v3699 = vld [vmem:[%s2] sm:$0xf]
      %v3700 = vld [vmem:[%s2 + $0x4] sm:$0xf]
      %v3701 = vld [vmem:[%s2 + $0x8] sm:$0xf]
      %v3702 = vld [vmem:[%s2 + $0xc] sm:$0xf]
      %v3703 = vld [vmem:[%s2 + $0x10] sm:$0xf]
      %v3704 = vld [vmem:[%s2 + $0x14] sm:$0xf]
      %v3705 = vld [vmem:[%s2 + $0x18] sm:$0xf]
      %v3706 = vld [vmem:[%s2 + $0x1c] sm:$0xf]
      %v3707 = vld [vmem:[%s3] sm:$0x1]
      %v3709 = vlaneseq
      %v3710 = vshrl.u32 %v3709, 7
      %v3711 = vsub.s32 0, %v3710
      %v3712 = vrot.slane %v3707, %v3711
      %v3722 = vunpack.c.l.b16 %v3699
      %v3723 = vunpack.c.l.b16 %v3700
      %v3724 = vunpack.c.l.b16 %v3701
      %v3725 = vunpack.c.l.b16 %v3702
      %v3726 = vunpack.c.l.b16 %v3703
      %v3727 = vunpack.c.l.b16 %v3704
      %v3728 = vunpack.c.l.b16 %v3705
      %v3729 = vunpack.c.l.b16 %v3706
      %v3730 = vpack.c.b16 %v3723, %v3722
      %v3731 = vpack.c.b16 %v3725, %v3724
      %v3732 = vpack.c.b16 %v3727, %v3726
      %v3733 = vpack.c.b16 %v3729, %v3728
      %vm3738 = vcmask 523264
      %v3740 = vsel %vm3738, %v3697, 0
      %v3743 = vsel %vm3738, %v3698, 0
      %3745 = vmatprep.subr.bf16.mxu0 0
      %3746 = vmatpush1.bf16.msra.mxu0 0
      %3747 = vmatprep.subr.bf16.mxu0 0
      %3748 = vmatpush1.bf16.msra.mxu0 0
      %3749 = vmatprep.subr.bf16.mxu0 0
      %3750 = vmatpush1.bf16.msra.mxu0 0
      %3751 = vmatprep.subr.bf16.mxu0 0
      %3752 = vmatpush1.bf16.msra.mxu0 0
      %3753 = vmatprep.subr.bf16.mxu0 0
      %3754 = vmatpush1.bf16.msra.mxu0 %v3733
      %3755 = vmatprep.subr.bf16.mxu0 0
      %3756 = vmatpush1.bf16.msra.mxu0 %v3732
      %3757 = vmatprep.subr.bf16.mxu0 0
      %3758 = vmatpush1.bf16.msra.mxu0 %v3731
      %3759 = vmatprep.subr.bf16.mxu0 0
      %3760 = vmatpush1.bf16.msra.mxu0 %v3730
      %3761 = vmatprep.subr.bf16.mxu0 0
      %3762 = vmatpush2.bf16.msra.mxu0 0
      %3763 = vmatprep.subr.bf16.mxu0 0
      %3764 = vmatpush2.bf16.msra.mxu0 0
      %3765 = vmatprep.subr.bf16.mxu0 0
      %3766 = vmatpush2.bf16.msra.mxu0 0
      %3767 = vmatprep.subr.bf16.mxu0 0
      %3768 = vmatpush2.bf16.msra.mxu0 0
      %3769 = vmatprep.subr.bf16.mxu0 0
      %3770 = vmatpush2.bf16.msra.mxu0 0
      %3771 = vmatprep.subr.bf16.mxu0 0
      %3772 = vmatpush2.bf16.msra.mxu0 0
      %3773 = vmatprep.subr.bf16.mxu0 0
      %3774 = vmatpush2.bf16.msra.mxu0 0
      %3775 = vmatprep.subr.bf16.mxu0 0
      %3776 = vmatpush2.bf16.msra.mxu0 0
      %3777 = vmatprep.mubr.bf16.mxu0 0
      %3778 = vmatmul.mubr.bf16.gmra.mxu0 %v3740
      %v3779 = vpop.f32.mrf.mxu0
      %v3780 = vadd.f32 %v3712, %v3779
      %v3781 = vpop.f32.mrf.mxu0
      %v3782 = vpop.f32.mrf.mxu0
      %v3783 = vadd.f32 %v3712, %v3782
      %v3784 = vpop.f32.mrf.mxu0
      %3785 = vmatprep.mubr.bf16.mxu0 0
      %3786 = vmatmul.mubr.bf16.gmra.mxu0 %v3743
      %v3787 = vpop.f32.mrf.mxu0
      %v3788 = vadd.f32 %v3712, %v3787
      %v3789 = vpop.f32.mrf.mxu0
      %v3790 = vpop.f32.mrf.mxu0
      %v3791 = vpop.f32.mrf.mxu0
      %3792 = vdwg.mxu0
      %v3793 = vadd.f32 %v3780, %v663
      %v3794 = vadd.f32 %v3783, %v712
      %v3795 = vadd.f32 %v3788, %v761
      %v3796 = vld [vmem:[%s4] sm:$0x1]
      %v3797 = vld [vmem:[%s5] sm:$0x1]
      %v3798 = vsel %vm791, %v3793, 0.0
      %3799 = vadd.xlane.f32.xlu0 %v3798
      %v3800 = vpop.xlane.xlu0 %3799
      %v3801 = vsel %vm791, %v3794, 0.0
      %3802 = vadd.xlane.f32.xlu0 %v3801
      %v3803 = vpop.xlane.xlu0 %3802
      %v3804 = vsel %vm791, %v3795, 0.0
      %3805 = vadd.xlane.f32.xlu0 %v3804
      %v3806 = vpop.xlane.xlu0 %3805
      %v3807 = vrcp.pop 32.0
      %v3808 = vmul.f32 %v3800, %v3807
      %v3809 = vmul.f32 %v3803, %v3807
      %v3810 = vmul.f32 %v3806, %v3807
      %v3811 = vsub.f32 %v3793, %v3808
      %v3812 = vsub.f32 %v3794, %v3809
      %v3813 = vsub.f32 %v3795, %v3810
      %v3814 = vmul.f32 %v3811, %v3811
      %v3815 = vmul.f32 %v3812, %v3812
      %v3816 = vmul.f32 %v3813, %v3813
      %v3817 = vsel %vm791, %v3814, 0.0
      %3818 = vadd.xlane.f32.xlu0 %v3817
      %v3819 = vpop.xlane.xlu0 %3818
      %v3820 = vsel %vm791, %v3815, 0.0
      %3821 = vadd.xlane.f32.xlu0 %v3820
      %v3822 = vpop.xlane.xlu0 %3821
      %v3823 = vsel %vm791, %v3816, 0.0
      %3824 = vadd.xlane.f32.xlu0 %v3823
      %v3825 = vpop.xlane.xlu0 %3824
      %v3826 = vmul.f32 %v3819, %v3807
      %v3827 = vmul.f32 %v3822, %v3807
      %v3828 = vmul.f32 %v3825, %v3807
      %v3829 = vadd.f32 %v3826, 1e-05
      %v3830 = vadd.f32 %v3827, 1e-05
      %v3831 = vadd.f32 %v3828, 1e-05
      %v3832 = vrsqrt.pop %v3829
      %v3833 = vrsqrt.pop %v3830
      %v3834 = vrsqrt.pop %v3831
      %v3835 = vmul.f32 %v3811, %v3832
      %v3836 = vmul.f32 %v3812, %v3833
      %v3837 = vmul.f32 %v3813, %v3834
      %v3839 = vlaneseq
      %v3840 = vshrl.u32 %v3839, 7
      %v3841 = vsub.s32 0, %v3840
      %v3842 = vrot.slane %v3796, %v3841
      %v3844 = vmul.f32 %v3835, %v3842
      %v3845 = vmul.f32 %v3836, %v3842
      %v3846 = vmul.f32 %v3837, %v3842
      %v3848 = vlaneseq
      %v3849 = vshrl.u32 %v3848, 7
      %v3850 = vsub.s32 0, %v3849
      %v3851 = vrot.slane %v3797, %v3850
      %v3853 = vadd.f32 %v3844, %v3851
      %v3854 = vadd.f32 %v3845, %v3851
      %v3855 = vadd.f32 %v3846, %v3851
      %v3856 = vpack.c.bf16 %v3854, %v3853
      %v3857 = vpack.c.bf16 %v3855, %v3855
      %v3858 = vld [vmem:[%s6] sm:$0xf]
      %v3859 = vld [vmem:[%s6 + $0x4] sm:$0xf]
      %v3860 = vld [vmem:[%s6 + $0x8] sm:$0xf]
      %v3861 = vld [vmem:[%s6 + $0xc] sm:$0xf]
      %v3862 = vld [vmem:[%s7] sm:$0x1]
      %v3864 = vlaneseq
      %v3865 = vshrl.u32 %v3864, 7
      %v3866 = vsub.s32 0, %v3865
      %v3867 = vrot.slane %v3862, %v3866
      %v3873 = vunpack.c.l.b16 %v3858
      %v3874 = vunpack.c.l.b16 %v3859
      %v3875 = vunpack.c.l.b16 %v3860
      %v3876 = vunpack.c.l.b16 %v3861
      %v3877 = vpack.c.b16 %v3874, %v3873
      %v3878 = vpack.c.b16 %v3876, %v3875
      %v3882 = vsel %vm791, %v3856, 0
      %v3885 = vsel %vm791, %v3857, 0
      %3887 = vmatprep.subr.bf16.mxu0 0
      %3888 = vmatpush1.bf16.msra.mxu0 0
      %3889 = vmatprep.subr.bf16.mxu0 0
      %3890 = vmatpush1.bf16.msra.mxu0 0
      %3891 = vmatprep.subr.bf16.mxu0 0
      %3892 = vmatpush1.bf16.msra.mxu0 0
      %3893 = vmatprep.subr.bf16.mxu0 0
      %3894 = vmatpush1.bf16.msra.mxu0 0
      %3895 = vmatprep.subr.bf16.mxu0 0
      %3896 = vmatpush1.bf16.msra.mxu0 0
      %3897 = vmatprep.subr.bf16.mxu0 0
      %3898 = vmatpush1.bf16.msra.mxu0 0
      %3899 = vmatprep.subr.bf16.mxu0 0
      %3900 = vmatpush1.bf16.msra.mxu0 %v3878
      %3901 = vmatprep.subr.bf16.mxu0 0
      %3902 = vmatpush1.bf16.msra.mxu0 %v3877
      %3903 = vmatprep.subr.bf16.mxu0 0
      %3904 = vmatpush2.bf16.msra.mxu0 0
      %3905 = vmatprep.subr.bf16.mxu0 0
      %3906 = vmatpush2.bf16.msra.mxu0 0
      %3907 = vmatprep.subr.bf16.mxu0 0
      %3908 = vmatpush2.bf16.msra.mxu0 0
      %3909 = vmatprep.subr.bf16.mxu0 0
      %3910 = vmatpush2.bf16.msra.mxu0 0
      %3911 = vmatprep.subr.bf16.mxu0 0
      %3912 = vmatpush2.bf16.msra.mxu0 0
      %3913 = vmatprep.subr.bf16.mxu0 0
      %3914 = vmatpush2.bf16.msra.mxu0 0
      %3915 = vmatprep.subr.bf16.mxu0 0
      %3916 = vmatpush2.bf16.msra.mxu0 0
      %3917 = vmatprep.subr.bf16.mxu0 0
      %3918 = vmatpush2.bf16.msra.mxu0 0
      %3919 = vmatprep.mubr.bf16.mxu0 0
      %3920 = vmatmul.mubr.bf16.gmra.mxu0 %v3882
      %v3921 = vpop.f32.mrf.mxu0
      %v3922 = vadd.f32 %v3867, %v3921
      %v3923 = vpop.f32.mrf.mxu0
      %v3924 = vpop.f32.mrf.mxu0
      %v3925 = vadd.f32 %v3867, %v3924
      %v3926 = vpop.f32.mrf.mxu0
      %3927 = vmatprep.mubr.bf16.mxu0 0
      %3928 = vmatmul.mubr.bf16.gmra.mxu0 %v3885
      %v3929 = vpop.f32.mrf.mxu0
      %v3930 = vadd.f32 %v3867, %v3929
      %v3931 = vpop.f32.mrf.mxu0
      %v3932 = vpop.f32.mrf.mxu0
      %v3933 = vpop.f32.mrf.mxu0
      %3934 = vdwg.mxu0
      %v3935 = vmax.f32 %v3922, 0.0
      %v3936 = vmax.f32 %v3925, 0.0
      %v3937 = vmax.f32 %v3930, 0.0
      %v3938 = vpack.c.bf16 %v3936, %v3935
      %v3939 = vpack.c.bf16 %v3937, %v3937
      %v3940 = vld [vmem:[%s8] sm:$0xf]
      %v3941 = vld [vmem:[%s8 + $0x4] sm:$0xf]
      %v3942 = vld [vmem:[%s8 + $0x8] sm:$0xf]
      %v3943 = vld [vmem:[%s8 + $0xc] sm:$0xf]
      %v3944 = vld [vmem:[%s8 + $0x10] sm:$0xf]
      %v3945 = vld [vmem:[%s8 + $0x14] sm:$0xf]
      %v3946 = vld [vmem:[%s8 + $0x18] sm:$0xf]
      %v3947 = vld [vmem:[%s8 + $0x1c] sm:$0xf]
      %v3948 = vld [vmem:[%s8 + $0x20] sm:$0xf]
      %v3949 = vld [vmem:[%s8 + $0x24] sm:$0xf]
      %v3950 = vld [vmem:[%s8 + $0x28] sm:$0xf]
      %v3951 = vld [vmem:[%s8 + $0x2c] sm:$0xf]
      %v3952 = vld [vmem:[%s8 + $0x30] sm:$0xf]
      %v3953 = vld [vmem:[%s8 + $0x34] sm:$0xf]
      %v3954 = vld [vmem:[%s8 + $0x38] sm:$0xf]
      %v3955 = vld [vmem:[%s8 + $0x3c] sm:$0xf]
      %v3956 = vld [vmem:[%s9] sm:$0x1]
      %v3958 = vlaneseq
      %v3959 = vshrl.u32 %v3958, 7
      %v3960 = vsub.s32 0, %v3959
      %v3961 = vrot.slane %v3956, %v3960
      %v3979 = vunpack.c.l.b16 %v3940
      %v3980 = vunpack.c.l.b16 %v3941
      %v3981 = vunpack.c.l.b16 %v3942
      %v3982 = vunpack.c.l.b16 %v3943
      %v3983 = vunpack.c.l.b16 %v3944
      %v3984 = vunpack.c.l.b16 %v3945
      %v3985 = vunpack.c.l.b16 %v3946
      %v3986 = vunpack.c.l.b16 %v3947
      %v3987 = vunpack.c.l.b16 %v3948
      %v3988 = vunpack.c.l.b16 %v3949
      %v3989 = vunpack.c.l.b16 %v3950
      %v3990 = vunpack.c.l.b16 %v3951
      %v3991 = vunpack.c.l.b16 %v3952
      %v3992 = vunpack.c.l.b16 %v3953
      %v3993 = vunpack.c.l.b16 %v3954
      %v3994 = vunpack.c.l.b16 %v3955
      %v3995 = vpack.c.b16 %v3980, %v3979
      %v3996 = vpack.c.b16 %v3982, %v3981
      %v3997 = vpack.c.b16 %v3984, %v3983
      %v3998 = vpack.c.b16 %v3986, %v3985
      %v3999 = vpack.c.b16 %v3988, %v3987
      %v4000 = vpack.c.b16 %v3990, %v3989
      %v4001 = vpack.c.b16 %v3992, %v3991
      %v4002 = vpack.c.b16 %v3994, %v3993
      %4011 = vmatprep.subr.bf16.mxu0 0
      %4012 = vmatpush1.bf16.msra.mxu0 %v4002
      %4013 = vmatprep.subr.bf16.mxu0 0
      %4014 = vmatpush1.bf16.msra.mxu0 %v4001
      %4015 = vmatprep.subr.bf16.mxu0 0
      %4016 = vmatpush1.bf16.msra.mxu0 %v4000
      %4017 = vmatprep.subr.bf16.mxu0 0
      %4018 = vmatpush1.bf16.msra.mxu0 %v3999
      %4019 = vmatprep.subr.bf16.mxu0 0
      %4020 = vmatpush1.bf16.msra.mxu0 %v3998
      %4021 = vmatprep.subr.bf16.mxu0 0
      %4022 = vmatpush1.bf16.msra.mxu0 %v3997
      %4023 = vmatprep.subr.bf16.mxu0 0
      %4024 = vmatpush1.bf16.msra.mxu0 %v3996
      %4025 = vmatprep.subr.bf16.mxu0 0
      %4026 = vmatpush1.bf16.msra.mxu0 %v3995
      %4027 = vmatprep.subr.bf16.mxu0 0
      %4028 = vmatpush2.bf16.msra.mxu0 0
      %4029 = vmatprep.subr.bf16.mxu0 0
      %4030 = vmatpush2.bf16.msra.mxu0 0
      %4031 = vmatprep.subr.bf16.mxu0 0
      %4032 = vmatpush2.bf16.msra.mxu0 0
      %4033 = vmatprep.subr.bf16.mxu0 0
      %4034 = vmatpush2.bf16.msra.mxu0 0
      %4035 = vmatprep.subr.bf16.mxu0 0
      %4036 = vmatpush2.bf16.msra.mxu0 0
      %4037 = vmatprep.subr.bf16.mxu0 0
      %4038 = vmatpush2.bf16.msra.mxu0 0
      %4039 = vmatprep.subr.bf16.mxu0 0
      %4040 = vmatpush2.bf16.msra.mxu0 0
      %4041 = vmatprep.subr.bf16.mxu0 0
      %4042 = vmatpush2.bf16.msra.mxu0 0
      %4043 = vmatprep.mubr.bf16.mxu0 0
      %4044 = vmatmul.mubr.bf16.gmra.mxu0 %v3938
      %v4045 = vpop.f32.mrf.mxu0
      %v4046 = vadd.f32 %v3961, %v4045
      %v4047 = vpop.f32.mrf.mxu0
      %v4048 = vpop.f32.mrf.mxu0
      %v4049 = vadd.f32 %v3961, %v4048
      %v4050 = vpop.f32.mrf.mxu0
      %4051 = vmatprep.mubr.bf16.mxu0 0
      %4052 = vmatmul.mubr.bf16.gmra.mxu0 %v3939
      %v4053 = vpop.f32.mrf.mxu0
      %v4054 = vadd.f32 %v3961, %v4053
      %v4055 = vpop.f32.mrf.mxu0
      %v4056 = vpop.f32.mrf.mxu0
      %v4057 = vpop.f32.mrf.mxu0
      %4058 = vdwg.mxu0
      %v4059 = vadd.f32 %v4046, %v3853
      %v4060 = vadd.f32 %v4049, %v3854
      %v4061 = vadd.f32 %v4054, %v3855
      %v4062 = vld [vmem:[%s10] sm:$0x1]
      %v4063 = vld [vmem:[%s11] sm:$0x1]
      %v4064 = vsel %vm791, %v4059, 0.0
      %4065 = vadd.xlane.f32.xlu0 %v4064
      %v4066 = vpop.xlane.xlu0 %4065
      %v4067 = vsel %vm791, %v4060, 0.0
      %4068 = vadd.xlane.f32.xlu0 %v4067
      %v4069 = vpop.xlane.xlu0 %4068
      %v4070 = vsel %vm791, %v4061, 0.0
      %4071 = vadd.xlane.f32.xlu0 %v4070
      %v4072 = vpop.xlane.xlu0 %4071
      %v4073 = vmul.f32 %v4066, %v3807
      %v4074 = vmul.f32 %v4069, %v3807
      %v4075 = vmul.f32 %v4072, %v3807
      %v4076 = vsub.f32 %v4059, %v4073
      %v4077 = vsub.f32 %v4060, %v4074
      %v4078 = vsub.f32 %v4061, %v4075
      %v4079 = vmul.f32 %v4076, %v4076
      %v4080 = vmul.f32 %v4077, %v4077
      %v4081 = vmul.f32 %v4078, %v4078
      %v4082 = vsel %vm791, %v4079, 0.0
      %4083 = vadd.xlane.f32.xlu0 %v4082
      %v4084 = vpop.xlane.xlu0 %4083
      %v4085 = vsel %vm791, %v4080, 0.0
      %4086 = vadd.xlane.f32.xlu0 %v4085
      %v4087 = vpop.xlane.xlu0 %4086
      %v4088 = vsel %vm791, %v4081, 0.0
      %4089 = vadd.xlane.f32.xlu0 %v4088
      %v4090 = vpop.xlane.xlu0 %4089
      %v4091 = vmul.f32 %v4084, %v3807
      %v4092 = vmul.f32 %v4087, %v3807
      %v4093 = vmul.f32 %v4090, %v3807
      %v4094 = vadd.f32 %v4091, 1e-05
      %v4095 = vadd.f32 %v4092, 1e-05
      %v4096 = vadd.f32 %v4093, 1e-05
      %v4097 = vrsqrt.pop %v4094
      %v4098 = vrsqrt.pop %v4095
      %v4099 = vrsqrt.pop %v4096
      %v4100 = vmul.f32 %v4076, %v4097
      %v4101 = vmul.f32 %v4077, %v4098
      %v4102 = vmul.f32 %v4078, %v4099
      %v4104 = vlaneseq
      %v4105 = vshrl.u32 %v4104, 7
      %v4106 = vsub.s32 0, %v4105
      %v4107 = vrot.slane %v4062, %v4106
      %v4109 = vmul.f32 %v4100, %v4107
      %v4110 = vmul.f32 %v4101, %v4107
      %v4111 = vmul.f32 %v4102, %v4107
      %v4113 = vlaneseq
      %v4114 = vshrl.u32 %v4113, 7
      %v4115 = vsub.s32 0, %v4114
      %v4116 = vrot.slane %v4063, %v4115
      %v4118 = vadd.f32 %v4109, %v4116
      %v4119 = vadd.f32 %v4110, %v4116
      %v4120 = vadd.f32 %v4111, %v4116
      %v4124 = vcombine.high %v4118, %v4118
      %v4126 = vunpack.c.l.s4 1966171168
      %v4127 = vunpack.c.0.s8 %v4126
      %v4128 = vlaneseq
      %v4129 = vshrl.u32 %v4128, 7
      %v4130 = vsub.s32 %v4127, %v4129
      %v4131 = vrot.slane %v4118, %v4130
      %v4133 = vunpack.c.l.s4 1966171168
      %v4134 = vunpack.c.0.s8 %v4133
      %v4135 = vlaneseq
      %v4136 = vshrl.u32 %v4135, 7
      %v4137 = vsub.s32 %v4134, %v4136
      %v4138 = vrot.slane %v4124, %v4137
      %v4139 = vcombine.high %v4131, %v4131
      %v4140 = vcombine.high %v4138, %v4138
      %v4142 = vunpack.c.l.s4 1966171168
      %v4143 = vunpack.c.0.s8 %v4142
      %v4144 = vlaneseq
      %v4145 = vshrl.u32 %v4144, 7
      %v4146 = vsub.s32 %v4143, %v4145
      %v4147 = vrot.slane %v4131, %v4146
      %v4149 = vunpack.c.l.s4 1966171168
      %v4150 = vunpack.c.0.s8 %v4149
      %v4151 = vlaneseq
      %v4152 = vshrl.u32 %v4151, 7
      %v4153 = vsub.s32 %v4150, %v4152
      %v4154 = vrot.slane %v4138, %v4153
      %v4156 = vunpack.c.l.s4 1966171168
      %v4157 = vunpack.c.0.s8 %v4156
      %v4158 = vlaneseq
      %v4159 = vshrl.u32 %v4158, 7
      %v4160 = vsub.s32 %v4157, %v4159
      %v4161 = vrot.slane %v4139, %v4160
      %v4163 = vunpack.c.l.s4 1966171168
      %v4164 = vunpack.c.0.s8 %v4163
      %v4165 = vlaneseq
      %v4166 = vshrl.u32 %v4165, 7
      %v4167 = vsub.s32 %v4164, %v4166
      %v4168 = vrot.slane %v4140, %v4167
      %v4169 = vcombine.high %v4147, %v4147
      %v4170 = vcombine.high %v4154, %v4154
      %v4171 = vcombine.high %v4161, %v4161
      %v4172 = vcombine.high %v4168, %v4168
      %v4173 = vcombine.high %v4119, %v4119
      %v4175 = vunpack.c.l.s4 1966171168
      %v4176 = vunpack.c.0.s8 %v4175
      %v4177 = vlaneseq
      %v4178 = vshrl.u32 %v4177, 7
      %v4179 = vsub.s32 %v4176, %v4178
      %v4180 = vrot.slane %v4119, %v4179
      %v4182 = vunpack.c.l.s4 1966171168
      %v4183 = vunpack.c.0.s8 %v4182
      %v4184 = vlaneseq
      %v4185 = vshrl.u32 %v4184, 7
      %v4186 = vsub.s32 %v4183, %v4185
      %v4187 = vrot.slane %v4173, %v4186
      %v4188 = vcombine.high %v4180, %v4180
      %v4189 = vcombine.high %v4187, %v4187
      %v4191 = vunpack.c.l.s4 1966171168
      %v4192 = vunpack.c.0.s8 %v4191
      %v4193 = vlaneseq
      %v4194 = vshrl.u32 %v4193, 7
      %v4195 = vsub.s32 %v4192, %v4194
      %v4196 = vrot.slane %v4180, %v4195
      %v4198 = vunpack.c.l.s4 1966171168
      %v4199 = vunpack.c.0.s8 %v4198
      %v4200 = vlaneseq
      %v4201 = vshrl.u32 %v4200, 7
      %v4202 = vsub.s32 %v4199, %v4201
      %v4203 = vrot.slane %v4187, %v4202
      %v4205 = vunpack.c.l.s4 1966171168
      %v4206 = vunpack.c.0.s8 %v4205
      %v4207 = vlaneseq
      %v4208 = vshrl.u32 %v4207, 7
      %v4209 = vsub.s32 %v4206, %v4208
      %v4210 = vrot.slane %v4188, %v4209
      %v4212 = vunpack.c.l.s4 1966171168
      %v4213 = vunpack.c.0.s8 %v4212
      %v4214 = vlaneseq
      %v4215 = vshrl.u32 %v4214, 7
      %v4216 = vsub.s32 %v4213, %v4215
      %v4217 = vrot.slane %v4189, %v4216
      %v4218 = vcombine.high %v4196, %v4196
      %v4219 = vcombine.high %v4203, %v4203
      %v4220 = vcombine.high %v4210, %v4210
      %v4221 = vcombine.high %v4217, %v4217
      %v4222 = vcombine.high %v4120, %v4120
      %v4224 = vunpack.c.l.s4 1966171168
      %v4225 = vunpack.c.0.s8 %v4224
      %v4226 = vlaneseq
      %v4227 = vshrl.u32 %v4226, 7
      %v4228 = vsub.s32 %v4225, %v4227
      %v4229 = vrot.slane %v4120, %v4228
      %v4231 = vunpack.c.l.s4 1966171168
      %v4232 = vunpack.c.0.s8 %v4231
      %v4233 = vlaneseq
      %v4234 = vshrl.u32 %v4233, 7
      %v4235 = vsub.s32 %v4232, %v4234
      %v4236 = vrot.slane %v4222, %v4235
      %v4237 = vcombine.high %v4229, %v4229
      %v4238 = vcombine.high %v4236, %v4236
      %v4240 = vunpack.c.l.s4 1966171168
      %v4241 = vunpack.c.0.s8 %v4240
      %v4242 = vlaneseq
      %v4243 = vshrl.u32 %v4242, 7
      %v4244 = vsub.s32 %v4241, %v4243
      %v4245 = vrot.slane %v4229, %v4244
      %v4247 = vunpack.c.l.s4 1966171168
      %v4248 = vunpack.c.0.s8 %v4247
      %v4249 = vlaneseq
      %v4250 = vshrl.u32 %v4249, 7
      %v4251 = vsub.s32 %v4248, %v4250
      %v4252 = vrot.slane %v4236, %v4251
      %v4254 = vunpack.c.l.s4 1966171168
      %v4255 = vunpack.c.0.s8 %v4254
      %v4256 = vlaneseq
      %v4257 = vshrl.u32 %v4256, 7
      %v4258 = vsub.s32 %v4255, %v4257
      %v4259 = vrot.slane %v4237, %v4258
      %v4261 = vunpack.c.l.s4 1966171168
      %v4262 = vunpack.c.0.s8 %v4261
      %v4263 = vlaneseq
      %v4264 = vshrl.u32 %v4263, 7
      %v4265 = vsub.s32 %v4262, %v4264
      %v4266 = vrot.slane %v4238, %v4265
      %v4267 = vcombine.high %v4245, %v4245
      %v4268 = vcombine.high %v4252, %v4252
      %v4269 = vcombine.high %v4259, %v4259
      %v4270 = vcombine.high %v4266, %v4266
      %v4271 = vcombine.low %v4147, %v4161
      %v4273 = vunpack.c.l.s4 1966171168
      %v4274 = vunpack.c.0.s8 %v4273
      %v4275 = vlaneseq
      %v4276 = vshrl.u32 %v4275, 7
      %v4277 = vsub.s32 %v4274, %v4276
      %v4278 = vrot.slane %v4271, %v4277
      %v4280 = vunpack.c.l.s4 1966171168
      %v4281 = vunpack.c.0.s8 %v4280
      %v4282 = vlaneseq
      %v4283 = vshrl.u32 %v4282, 7
      %v4284 = vsub.s32 %v4281, %v4283
      %v4285 = vrot.slane %v4169, %v4284
      %v4286 = vcombine.low %v4278, %v4285
      %v4288 = vunpack.c.l.s4 1966171168
      %v4289 = vunpack.c.0.s8 %v4288
      %v4290 = vlaneseq
      %v4291 = vshrl.u32 %v4290, 7
      %v4292 = vsub.s32 %v4289, %v4291
      %v4293 = vrot.slane %v4286, %v4292
      %v4294 = vcombine.low %v4171, %v4154
      %v4296 = vunpack.c.l.s4 1966171168
      %v4297 = vunpack.c.0.s8 %v4296
      %v4298 = vlaneseq
      %v4299 = vshrl.u32 %v4298, 7
      %v4300 = vsub.s32 %v4297, %v4299
      %v4301 = vrot.slane %v4294, %v4300
      %v4303 = vunpack.c.l.s4 1966171168
      %v4304 = vunpack.c.0.s8 %v4303
      %v4305 = vlaneseq
      %v4306 = vshrl.u32 %v4305, 7
      %v4307 = vsub.s32 %v4304, %v4306
      %v4308 = vrot.slane %v4168, %v4307
      %v4309 = vcombine.low %v4301, %v4308
      %v4311 = vunpack.c.l.s4 1966171168
      %v4312 = vunpack.c.0.s8 %v4311
      %v4313 = vlaneseq
      %v4314 = vshrl.u32 %v4313, 7
      %v4315 = vsub.s32 %v4312, %v4314
      %v4316 = vrot.slane %v4309, %v4315
      %v4317 = vcombine.low %v4170, %v4172
      %v4319 = vunpack.c.l.s4 1966171168
      %v4320 = vunpack.c.0.s8 %v4319
      %v4321 = vlaneseq
      %v4322 = vshrl.u32 %v4321, 7
      %v4323 = vsub.s32 %v4320, %v4322
      %v4324 = vrot.slane %v4317, %v4323
      %v4326 = vunpack.c.l.s4 1966171168
      %v4327 = vunpack.c.0.s8 %v4326
      %v4328 = vlaneseq
      %v4329 = vshrl.u32 %v4328, 7
      %v4330 = vsub.s32 %v4327, %v4329
      %v4331 = vrot.slane %v4196, %v4330
      %v4332 = vcombine.low %v4324, %v4331
      %v4334 = vunpack.c.l.s4 1966171168
      %v4335 = vunpack.c.0.s8 %v4334
      %v4336 = vlaneseq
      %v4337 = vshrl.u32 %v4336, 7
      %v4338 = vsub.s32 %v4335, %v4337
      %v4339 = vrot.slane %v4332, %v4338
      %v4340 = vcombine.low %v4210, %v4218
      %v4342 = vunpack.c.l.s4 1966171168
      %v4343 = vunpack.c.0.s8 %v4342
      %v4344 = vlaneseq
      %v4345 = vshrl.u32 %v4344, 7
      %v4346 = vsub.s32 %v4343, %v4345
      %v4347 = vrot.slane %v4340, %v4346
      %v4349 = vunpack.c.l.s4 1966171168
      %v4350 = vunpack.c.0.s8 %v4349
      %v4351 = vlaneseq
      %v4352 = vshrl.u32 %v4351, 7
      %v4353 = vsub.s32 %v4350, %v4352
      %v4354 = vrot.slane %v4220, %v4353
      %v4355 = vcombine.low %v4347, %v4354
      %v4357 = vunpack.c.l.s4 1966171168
      %v4358 = vunpack.c.0.s8 %v4357
      %v4359 = vlaneseq
      %v4360 = vshrl.u32 %v4359, 7
      %v4361 = vsub.s32 %v4358, %v4360
      %v4362 = vrot.slane %v4355, %v4361
      %v4363 = vcombine.low %v4203, %v4217
      %v4365 = vunpack.c.l.s4 1966171168
      %v4366 = vunpack.c.0.s8 %v4365
      %v4367 = vlaneseq
      %v4368 = vshrl.u32 %v4367, 7
      %v4369 = vsub.s32 %v4366, %v4368
      %v4370 = vrot.slane %v4363, %v4369
      %v4372 = vunpack.c.l.s4 1966171168
      %v4373 = vunpack.c.0.s8 %v4372
      %v4374 = vlaneseq
      %v4375 = vshrl.u32 %v4374, 7
      %v4376 = vsub.s32 %v4373, %v4375
      %v4377 = vrot.slane %v4219, %v4376
      %v4378 = vcombine.low %v4370, %v4377
      %v4380 = vunpack.c.l.s4 1966171168
      %v4381 = vunpack.c.0.s8 %v4380
      %v4382 = vlaneseq
      %v4383 = vshrl.u32 %v4382, 7
      %v4384 = vsub.s32 %v4381, %v4383
      %v4385 = vrot.slane %v4378, %v4384
      %v4386 = vcombine.low %v4221, %v4245
      %v4388 = vunpack.c.l.s4 1966171168
      %v4389 = vunpack.c.0.s8 %v4388
      %v4390 = vlaneseq
      %v4391 = vshrl.u32 %v4390, 7
      %v4392 = vsub.s32 %v4389, %v4391
      %v4393 = vrot.slane %v4386, %v4392
      %v4395 = vunpack.c.l.s4 1966171168
      %v4396 = vunpack.c.0.s8 %v4395
      %v4397 = vlaneseq
      %v4398 = vshrl.u32 %v4397, 7
      %v4399 = vsub.s32 %v4396, %v4398
      %v4400 = vrot.slane %v4259, %v4399
      %v4401 = vcombine.low %v4393, %v4400
      %v4403 = vunpack.c.l.s4 1966171168
      %v4404 = vunpack.c.0.s8 %v4403
      %v4405 = vlaneseq
      %v4406 = vshrl.u32 %v4405, 7
      %v4407 = vsub.s32 %v4404, %v4406
      %v4408 = vrot.slane %v4401, %v4407
      %v4409 = vcombine.low %v4267, %v4269
      %v4411 = vunpack.c.l.s4 1966171168
      %v4412 = vunpack.c.0.s8 %v4411
      %v4413 = vlaneseq
      %v4414 = vshrl.u32 %v4413, 7
      %v4415 = vsub.s32 %v4412, %v4414
      %v4416 = vrot.slane %v4409, %v4415
      %v4418 = vunpack.c.l.s4 1966171168
      %v4419 = vunpack.c.0.s8 %v4418
      %v4420 = vlaneseq
      %v4421 = vshrl.u32 %v4420, 7
      %v4422 = vsub.s32 %v4419, %v4421
      %v4423 = vrot.slane %v4252, %v4422
      %v4424 = vcombine.low %v4416, %v4423
      %v4426 = vunpack.c.l.s4 1966171168
      %v4427 = vunpack.c.0.s8 %v4426
      %v4428 = vlaneseq
      %v4429 = vshrl.u32 %v4428, 7
      %v4430 = vsub.s32 %v4427, %v4429
      %v4431 = vrot.slane %v4424, %v4430
      %v4432 = vcombine.low %v4266, %v4268
      %v4434 = vunpack.c.l.s4 1966171168
      %v4435 = vunpack.c.0.s8 %v4434
      %v4436 = vlaneseq
      %v4437 = vshrl.u32 %v4436, 7
      %v4438 = vsub.s32 %v4435, %v4437
      %v4439 = vrot.slane %v4432, %v4438
      %v4441 = vunpack.c.l.s4 1966171168
      %v4442 = vunpack.c.0.s8 %v4441
      %v4443 = vlaneseq
      %v4444 = vshrl.u32 %v4443, 7
      %v4445 = vsub.s32 %v4442, %v4444
      %v4446 = vrot.slane %v4270, %v4445
      %v4447 = vcombine.low %v4439, %v4446
      %v4449 = vunpack.c.l.s4 1966171168
      %v4450 = vunpack.c.0.s8 %v4449
      %v4451 = vlaneseq
      %v4452 = vshrl.u32 %v4451, 7
      %v4453 = vsub.s32 %v4450, %v4452
      %v4454 = vrot.slane %v4447, %v4453
      %vm4463 = vcmask 256000
      %4464 = vst.msk [vmem:[%s413] sm:$0x7] %vm4463, %v4293
      %4465 = vst.msk [vmem:[%s413 + $0x4] sm:$0x7] %vm4463, %v4316
      %4466 = vst.msk [vmem:[%s413 + $0x8] sm:$0x7] %vm4463, %v4339
      %4467 = vst.msk [vmem:[%s413 + $0xc] sm:$0x7] %vm4463, %v4362
      %4468 = vst.msk [vmem:[%s413 + $0x10] sm:$0x7] %vm4463, %v4385
      %4469 = vst.msk [vmem:[%s413 + $0x14] sm:$0x7] %vm4463, %v4408
      %4470 = vst.msk [vmem:[%s413 + $0x18] sm:$0x7] %vm4463, %v4431
      %4471 = vst.msk [vmem:[%s413 + $0x1c] sm:$0x7] %vm4463, %v4454
      %p4472 = scmp.lt.s32.totalorder %s23, 1
      %s4473 = scalar_select %p4472, %s23, 1
      %s4474 = smul.addr %s4473, 8
      %s4475 = smul.addr %s4474, 4
      %s4476 = scalar_lea.vmem %s12, %s4475
      // Predicated region
      $region69: #{time_agent_transformer_forward.8} parent=67 // pred_check
        %p4477 = pneg %p298
      $region70: #{time_agent_transformer_forward.8} parent=67 // pred_check_branch
        %4479 = sbr.rel (%p4477) target = $region72
      $region71: #{time_agent_transformer_forward.8} parent=67 // pred_region
        _
      $region72: #{time_agent_transformer_forward.8} parent=67 // pred_fallthru
        _
    $region68: #{time_agent_transformer_forward.8} parent=5 // pred_fallthru
      _
    %p4480 = scmp.le.s32.totalorder 2, %s18
    // Predicated region
    $region73: #{time_agent_transformer_forward.8} parent=5 // pred_check
      %p4481 = pneg %p4480
    $region74: #{time_agent_transformer_forward.8} parent=5 // pred_check_branch
      %4483 = sbr.rel (%p4481) target = $region76
    $region75: #{time_agent_transformer_forward.8} parent=5 // pred_region
      %s4484 = ssub.s32 %s18, 2
      // Predicated region
      $region77: #{time_agent_transformer_forward.8} parent=75 // pred_check
        %p4485 = pneg %p304
      $region78: #{time_agent_transformer_forward.8} parent=75 // pred_check_branch
        %4487 = sbr.rel (%p4485) target = $region80
      $region79: #{time_agent_transformer_forward.8} parent=75 // pred_region
        %p4488 = scmp.lt.s32.totalorder %s24, 1
        %s4489 = scalar_select %p4488, %s24, 1
        %s4490 = smul.addr %s4489, 8
        %s4491 = smul.addr %s4490, 4
        %s4492 = scalar_lea.vmem %s12, %s4491
      $region80: #{time_agent_transformer_forward.8} parent=75 // pred_fallthru
        _
    $region76: #{time_agent_transformer_forward.8} parent=5 // pred_fallthru
      _
  $region6: #{time_agent_transformer_forward.8} parent=0 // loop_footer
    %s22 = sadd.s32 1, %s18
  $region7: #{time_agent_transformer_forward.8} parent=0 // loop_footer_branch
    %17 = sbr.rel target = $region3
  $region8: #{time_agent_transformer_forward.8} parent=0 // loop_exit
    _

</llo_original>
